<compile_context>
chip_gen: v7x
topology: tpu7x:2x2x1
jax: 0.10.0
libtpu: 0.0.40
codegen_flags: <defaults>
</compile_context>

<pallas_src>
import functools
import numpy as np

import jax
import jax.numpy as jnp
from jax import lax
from jax.experimental import pallas as pl
from jax.experimental.pallas import tpu as pltpu


# ---------------------------------------------------------------------------
# Fused Pallas kernel: one (batch, window-tile) slab per grid step
# ---------------------------------------------------------------------------

def _swin_block_kernel(xw_ref, xs_ref, mask_ref, relb_ref,
                       ln1w_ref, ln1b_ref,
                       wqkv_ref, bqkv_ref, wproj_ref, bproj_ref,
                       ln2w_ref, ln2b_ref,
                       w1_ref, b1_ref, w2_ref, b2_ref,
                       out_ref, ctx_ref,
                       *, num_heads, windows_per_tile, tokens_per_window):
    f32 = jnp.float32
    cdt = wqkv_ref.dtype                 # MXU operand dtype (bf16 prod / f32 check path)
    WT, N = windows_per_tile, tokens_per_window
    C = xw_ref.shape[-1]
    dh = C // num_heads
    inv_sqrt2 = np.float32(1.0 / np.sqrt(2.0))

    # ---- LayerNorm 1 (per-token; f32 statistics) ----
    xw = xw_ref[0].astype(f32)                                     # (T, C), window order
    mu = jnp.mean(xw, axis=-1, keepdims=True)
    var = jnp.mean((xw - mu) ** 2, axis=-1, keepdims=True)
    xn = (xw - mu) * lax.rsqrt(var + 1e-5)
    xn = xn * ln1w_ref[0] + ln1b_ref[0]

    # ---- Fused QKV: one lane-dense (T, C) @ (C, 3C) matmul; Q pre-scaled on host ----
    qkv = jnp.dot(xn.astype(cdt), wqkv_ref[...], preferred_element_type=f32)
    qkv = qkv + bqkv_ref[0]                                        # (T, 3C) f32
    qkv = qkv.reshape(WT, N, 3 * C)                                # window-batched view

    mask = mask_ref[...]                                           # (WT, N, N) f32

    # ---- Windowed MHSA: batched over the WT windows of this tile, loop over heads ----
    # TODO(synk): at production head counts switch to lax.fori_loop with dynamic lane
    #             slices to bound code size; the fused proj already removed the live
    #             accumulator chain.
    for h in range(num_heads):
        q = qkv[:, :, h * dh:(h + 1) * dh].astype(cdt)                      # (WT, N, dh)
        k = qkv[:, :, C + h * dh:C + (h + 1) * dh].astype(cdt)
        v = qkv[:, :, 2 * C + h * dh:2 * C + (h + 1) * dh].astype(cdt)
        s = lax.dot_general(q, k, (((2,), (2,)), ((0,), (0,))),
                            preferred_element_type=f32)                    # (WT, N, N)
        s = s + relb_ref[h][None] + mask                                    # f32 bias math
        s = s - jnp.max(s, axis=-1, keepdims=True)
        p = jnp.exp(s)
        denom = jnp.sum(p, axis=-1, keepdims=True)
        r = pl.reciprocal(denom, approx=True)                               # EUP slot
        r = r * (2.0 - denom * r)                                           # Newton step
        p = p * r
        ctx = lax.dot_general(p.astype(cdt), v, (((2,), (1,)), ((0,), (0,))),
                              preferred_element_type=f32)                   # (WT, N, dh)
        ctx_ref[:, :, h * dh:(h + 1) * dh] = ctx.astype(ctx_ref.dtype)

    # ---- Output projection: single (T, C) @ (C, C) matmul + residual 1 ----
    ctx2 = ctx_ref[...].reshape(WT * N, C)
    attn = jnp.dot(ctx2, wproj_ref[...], preferred_element_type=f32) + bproj_ref[0]
    hidden = xs_ref[0].astype(f32) + attn          # shortcut pre-permuted to window order

    # ---- LayerNorm 2 + MLP (exact GELU) + residual 2 ----
    mu2 = jnp.mean(hidden, axis=-1, keepdims=True)
    var2 = jnp.mean((hidden - mu2) ** 2, axis=-1, keepdims=True)
    hn = (hidden - mu2) * lax.rsqrt(var2 + 1e-5)
    hn = hn * ln2w_ref[0] + ln2b_ref[0]
    y = jnp.dot(hn.astype(cdt), w1_ref[...], preferred_element_type=f32) + b1_ref[0]
    y = 0.5 * y * (1.0 + lax.erf(y * inv_sqrt2))
    y = jnp.dot(y.astype(cdt), w2_ref[...], preferred_element_type=f32) + b2_ref[0]

    out_ref[...] = (y + hidden)[None].astype(out_ref.dtype)


# ---------------------------------------------------------------------------
# Host-side helpers (window partition / reverse, mask, relative position bias)
# ---------------------------------------------------------------------------

def _get_attn_mask_np(h, w, ws, ss):
    """Exact port of SwinTransformerBlock.get_attn_mask. Returns (nW, N, N) or None."""
    if ss <= 0:
        return None
    img = np.zeros((1, h, w, 1), dtype=np.float32)
    h_slices = (slice(0, -ws), slice(-ws, -ss), slice(-ss, None))
    w_slices = (slice(0, -ws), slice(-ws, -ss), slice(-ss, None))
    cnt = 0
    for hs in h_slices:
        for wsl in w_slices:
            img[:, hs, wsl, :] = cnt
            cnt += 1
    nh, nw = h // ws, w // ws
    mw = img.reshape(1, nh, ws, nw, ws, 1).transpose(0, 1, 3, 2, 4, 5).reshape(nh * nw, ws * ws)
    attn_mask = mw[:, None, :] - mw[:, :, None]
    attn_mask = np.where(attn_mask != 0, np.float32(-100.0), np.float32(0.0))
    return attn_mask.astype(np.float32)


def _relative_position_index_np(ws):
    coords = np.stack(np.meshgrid(np.arange(ws), np.arange(ws), indexing="ij"))
    cf = coords.reshape(2, -1)
    rel = cf[:, :, None] - cf[:, None, :]
    rel = rel.transpose(1, 2, 0).astype(np.int64)
    rel[..., 0] += ws - 1
    rel[..., 1] += ws - 1
    rel[..., 0] *= 2 * ws - 1
    return rel.sum(-1)                                                     # (N, N)


def _window_partition(x_img, ws):
    B, H, W, C = x_img.shape
    nh, nw = H // ws, W // ws
    return (x_img.reshape(B, nh, ws, nw, ws, C)
            .transpose(0, 1, 3, 2, 4, 5)
            .reshape(B * nh * nw, ws * ws, C))


def _window_reverse(windows, ws, H, W):
    nWB, N, C = windows.shape
    nh, nw = H // ws, W // ws
    B = nWB // (nh * nw)
    return (windows.reshape(B, nh, nw, ws, ws, C)
            .transpose(0, 1, 3, 2, 4, 5)
            .reshape(B, H, W, C))


# ---------------------------------------------------------------------------
# One-time parameter preparation (hoisted out of the forward pass)
# ---------------------------------------------------------------------------

def prepare_params(params, cfg, compute_dtype=jnp.bfloat16):
    """Fold the softmax scale into Q, gather the relative-position bias, build the
    shifted-window mask, and cast matmul weights to the MXU operand dtype (bf16 in
    production).  Biases / LN params / score biases stay f32."""
    C = cfg["dim"]
    H, W = cfg["input_resolution"]
    ws, ss = cfg["window_size"], cfg["shift_size"]
    nh = cfg["num_heads"]
    dh = C // nh
    N = ws * ws
    nW = (H // ws) * (W // ws)
    scale = np.float32(dh ** -0.5)
    cd = compute_dtype
    f32 = jnp.float32

    # Fold the attention scale into the Q columns of the fused QKV projection.
    col_scale = jnp.concatenate([jnp.full((C,), scale, f32), jnp.ones((2 * C,), f32)])
    wqkv = params["wqkv"].astype(f32) * col_scale[None, :]
    bqkv = params["bqkv"].reshape(1, -1).astype(f32) * col_scale[None, :]

    # Relative-position bias per head and shifted-window mask per window (NOT the dense
    # (nh, L, L) block-diagonal bias of v1).
    rpi = _relative_position_index_np(ws).reshape(-1)
    relb = params["rel_table"][rpi].reshape(N, N, nh).transpose(2, 0, 1).astype(f32)
    mask_np = _get_attn_mask_np(H, W, ws, ss)
    mask = jnp.zeros((nW, N, N), f32) if mask_np is None else jnp.asarray(mask_np)

    return {
        "mask": mask, "relb": relb,
        "ln1_w": params["ln1_w"].astype(f32), "ln1_b": params["ln1_b"].astype(f32),
        "wqkv": wqkv.astype(cd), "bqkv": bqkv,           # bias stays f32 (added post-MXU)
        "wproj": params["wproj"].astype(cd), "bproj": params["bproj"].astype(f32),
        "ln2_w": params["ln2_w"].astype(f32), "ln2_b": params["ln2_b"].astype(f32),
        "w1": params["w1"].astype(cd), "b1": params["b1"].astype(f32),
        "w2": params["w2"].astype(cd), "b2": params["b2"].astype(f32),
    }


# ---------------------------------------------------------------------------
# pallas_call wrapper + full block forward
# ---------------------------------------------------------------------------

def _choose_windows_per_tile(num_windows, tokens_per_window, target_rows=256):
    """Pick windows/tile so a grid step covers ~target_rows tokens, nW % WT == 0, and the
    window-tile grid axis has >= 2 steps when possible (pipelining + v7x megacore)."""
    wt = max(1, min(num_windows, target_rows // max(1, tokens_per_window)))
    while num_windows % wt:
        wt -= 1
    if wt == num_windows and num_windows > 1:
        for cand in range(num_windows // 2, 0, -1):
            if num_windows % cand == 0:
                wt = cand
                break
    return wt


def swin_block_pallas(xw, xs, prep, cfg, *, single_buffer_params=True):
    B, L, C = xw.shape
    nh = cfg["num_heads"]
    ws = cfg["window_size"]
    N = ws * ws
    nW = L // N
    WT = _choose_windows_per_tile(nW, N)
    T = WT * N
    n_tiles = nW // WT
    Hd = prep["w1"].shape[1]
    cdt = prep["wqkv"].dtype

    # Constant-index-map parameter inputs: request single-buffering (double-buffering them
    # is pure VMEM / DMA-descriptor waste).  Caller falls back if unsupported.
    pmode = pl.Buffered(1) if single_buffer_params else None

    def pspec(shape):
        cmap = (lambda b, t: (0, 0)) if len(shape) == 2 else (lambda b, t: (0, 0, 0))
        if pmode is None:
            return pl.BlockSpec(shape, cmap)
        return pl.BlockSpec(shape, cmap, pipeline_mode=pmode)

    kern = functools.partial(_swin_block_kernel, num_heads=nh,
                             windows_per_tile=WT, tokens_per_window=N)

    return pl.pallas_call(
        kern,
        out_shape=jax.ShapeDtypeStruct((B, L, C), xw.dtype),
        grid=(B, n_tiles),
        in_specs=[
            pl.BlockSpec((1, T, C), lambda b, t: (b, t, 0)),       # x (window order)
            pl.BlockSpec((1, T, C), lambda b, t: (b, t, 0)),       # shortcut (window order)
            pl.BlockSpec((WT, N, N), lambda b, t: (t, 0, 0)),      # shift-window mask
            pspec((nh, N, N)),                                     # rel-pos bias
            pspec((1, C)), pspec((1, C)),                          # ln1 w / b
            pspec((C, 3 * C)), pspec((1, 3 * C)),                  # Wqkv (Q pre-scaled), bqkv
            pspec((C, C)), pspec((1, C)),                          # Wproj, bproj
            pspec((1, C)), pspec((1, C)),                          # ln2 w / b
            pspec((C, Hd)), pspec((1, Hd)),                        # W1, b1
            pspec((Hd, C)), pspec((1, C)),                         # W2, b2
        ],
        out_specs=pl.BlockSpec((1, T, C), lambda b, t: (b, t, 0)),
        scratch_shapes=[pltpu.VMEM((WT, N, C), cdt)],              # per-head ctx slab
        compiler_params=pltpu.CompilerParams(
            dimension_semantics=("parallel", "parallel"),
            vmem_limit_bytes=48 * 1024 * 1024),   # explicit; fits v7x 64 MiB w/ headroom
    )(xw, xs, prep["mask"], prep["relb"],
      prep["ln1_w"], prep["ln1_b"], prep["wqkv"], prep["bqkv"],
      prep["wproj"], prep["bproj"], prep["ln2_w"], prep["ln2_b"],
      prep["w1"], prep["b1"], prep["w2"], prep["b2"])


def swin_block_forward(x, prep, cfg, *, single_buffer_params=True):
    B, L, C = x.shape
    H, W = cfg["input_resolution"]
    ws, ss = cfg["window_size"], cfg["shift_size"]
    x_img = x.reshape(B, H, W, C)

    # Reference quirk kept: attention windows come from the UN-shifted normed x; LN1 is
    # per-token so the raw x is partitioned here and LN1 is fused into the kernel.
    xw = _window_partition(x_img, ws).reshape(B, L, C)
    # Shortcut pre-permuted into the same computation order (roll + partition), so the
    # whole block is computed in window order and un-permuted once at the end.
    xs_img = jnp.roll(x_img, shift=(-ss, -ss), axis=(1, 2)) if ss > 0 else x_img
    xs = _window_partition(xs_img, ws).reshape(B, L, C)

    out_w = swin_block_pallas(xw, xs, prep, cfg,
                              single_buffer_params=single_buffer_params)

    out_img = _window_reverse(out_w.reshape(B * (L // (ws * ws)), ws * ws, C), ws, H, W)
    if ss > 0:
        out_img = jnp.roll(out_img, shift=(ss, ss), axis=(1, 2))
    return out_img.reshape(B, L, C)


# ---------------------------------------------------------------------------
# Pure-JAX reference (numerical sanity check)
# ---------------------------------------------------------------------------

def swin_block_reference(x, p, cfg):
    B, L, C = x.shape
    H, W = cfg["input_resolution"]
    ws, ss = cfg["window_size"], cfg["shift_size"]
    nh = cfg["num_heads"]
    dh = C // nh
    scale = dh ** -0.5
    nW, N = (H // ws) * (W // ws), ws * ws

    short = x
    mu = x.mean(-1, keepdims=True)
    var = ((x - mu) ** 2).mean(-1, keepdims=True)
    xn = (x - mu) / jnp.sqrt(var + 1e-5) * p["ln1_w"][0] + p["ln1_b"][0]
    xw = _window_partition(xn.reshape(B, H, W, C), ws)

    qkv = xw @ p["wqkv"] + p["bqkv"][0]
    q, k, v = qkv[..., :C], qkv[..., C:2 * C], qkv[..., 2 * C:]
    to_heads = lambda t: t.reshape(B * nW, N, nh, dh).transpose(0, 2, 1, 3)
    q, k, v = to_heads(q), to_heads(k), to_heads(v)
    s = jnp.einsum("bhid,bhjd->bhij", q, k) * scale

    rpi = _relative_position_index_np(ws).reshape(-1)
    rel_bias = p["rel_table"][rpi].reshape(N, N, nh).transpose(2, 0, 1)
    s = s + rel_bias[None]

    mask_np = _get_attn_mask_np(H, W, ws, ss)
    if mask_np is not None:
        mask = jnp.asarray(mask_np, dtype=x.dtype)
        s = s.reshape(B, nW, nh, N, N) + mask[None, :, None]
        s = s.reshape(B * nW, nh, N, N)

    probs = jax.nn.softmax(s, axis=-1)
    ctx = jnp.einsum("bhij,bhjd->bhid", probs, v).transpose(0, 2, 1, 3).reshape(B * nW, N, C)
    ctx = ctx @ p["wproj"] + p["bproj"][0]

    aw = _window_reverse(ctx, ws, H, W)
    if ss > 0:
        aw = jnp.roll(aw, shift=(ss, ss), axis=(1, 2))
    hidden = short + aw.reshape(B, L, C)

    mu2 = hidden.mean(-1, keepdims=True)
    var2 = ((hidden - mu2) ** 2).mean(-1, keepdims=True)
    hn = (hidden - mu2) / jnp.sqrt(var2 + 1e-5) * p["ln2_w"][0] + p["ln2_b"][0]
    y = hn @ p["w1"] + p["b1"][0]
    y = 0.5 * y * (1.0 + lax.erf(y / np.float32(np.sqrt(2.0))))
    y = y @ p["w2"] + p["b2"][0]
    return y + hidden


# ---------------------------------------------------------------------------
# Main
# ---------------------------------------------------------------------------

if __name__ == "__main__":
    cfg = dict(
        dim=32,
        input_resolution=(8, 8),
        num_heads=4,
        window_size=4,
        shift_size=2,
        mlp_ratio=2,
    )
    B = 2
    C = cfg["dim"]
    H, W = cfg["input_resolution"]
    L = H * W
    ws = cfg["window_size"]
    hidden_dim = C * cfg["mlp_ratio"]
    n_rel = (2 * ws - 1) * (2 * ws - 1)

    key = jax.random.PRNGKey(0)
    keys = jax.random.split(key, 8)

    params = {
        "ln1_w": jnp.ones((1, C), jnp.float32),
        "ln1_b": jnp.zeros((1, C), jnp.float32),
        "wqkv": jax.random.normal(keys[0], (C, 3 * C), jnp.float32) * 0.02,
        "bqkv": jax.random.normal(keys[1], (1, 3 * C), jnp.float32) * 0.02,
        "wproj": jax.random.normal(keys[2], (C, C), jnp.float32) * 0.02,
        "bproj": jax.random.normal(keys[3], (1, C), jnp.float32) * 0.02,
        "rel_table": jax.random.normal(keys[4], (n_rel, cfg["num_heads"]), jnp.float32) * 0.02,
        "ln2_w": jnp.ones((1, C), jnp.float32),
        "ln2_b": jnp.zeros((1, C), jnp.float32),
        "w1": jax.random.normal(keys[5], (C, hidden_dim), jnp.float32) * 0.02,
        "b1": jax.random.normal(keys[6], (1, hidden_dim), jnp.float32) * 0.02,
        "w2": jax.random.normal(keys[7], (hidden_dim, C), jnp.float32) * 0.02,
        "b2": jnp.zeros((1, C), jnp.float32),
    }

    x = jax.random.normal(jax.random.PRNGKey(42), (B, L, C), jnp.float32)
    ref = jax.block_until_ready(swin_block_reference(x, params, cfg))

    def run(prep_dict, single_buf):
        fwd = jax.jit(functools.partial(swin_block_forward, cfg=cfg,
                                        single_buffer_params=single_buf))
        return jax.block_until_ready(fwd(x, prep_dict))

    # 1) Structural correctness: f32 MXU operands must match the reference to 1e-3.
    #    Try single-buffered params (pl.Buffered(1)) first; fall back to the default
    #    pipeline mode if this JAX build rejects pipeline_mode on pallas_call specs.
    prep_f32 = prepare_params(params, cfg, compute_dtype=jnp.float32)
    out32, single_buf_used, last_exc = None, False, None
    for single_buf in (True, False):
        try:
            cand = run(prep_f32, single_buf)
        except Exception as exc:          # pl.Buffered(1) unsupported on this build
            last_exc = exc
            continue
        err = float(jnp.max(jnp.abs(cand - ref)))
        if err < 1e-3:
            out32, single_buf_used = cand, single_buf
            break
        last_exc = AssertionError(f"f32 kernel max abs err vs reference: {err}")
    if out32 is None:
        raise last_exc
    assert out32.shape == (B, L, C), out32.shape

    # 2) Production dtype policy: bf16 MXU operands, f32 accumulation / statistics.
    prep_bf16 = prepare_params(params, cfg, compute_dtype=jnp.bfloat16)
    out16 = run(prep_bf16, single_buf_used)
    err16 = float(jnp.max(jnp.abs(out16 - ref)))
    assert out16.shape == (B, L, C), out16.shape
    assert err16 < 5e-2, f"bf16 kernel max abs err vs reference: {err16}"

    print("KERNEL_OK")
</pallas_src>

<mosaic_0001>
module attributes {stable_mosaic.version = 11 : i64} {
  func.func @_swin_block_kernel(%arg0: i32, %arg1: i32, %arg2: memref<1x32x32xf32, #tpu.memory_space<vmem>>, %arg3: memref<1x32x32xf32, #tpu.memory_space<vmem>>, %arg4: memref<2x16x16xf32, #tpu.memory_space<vmem>>, %arg5: memref<4x16x16xf32, #tpu.memory_space<vmem>>, %arg6: memref<1x32xf32, #tpu.memory_space<vmem>>, %arg7: memref<1x32xf32, #tpu.memory_space<vmem>>, %arg8: memref<32x96xf32, #tpu.memory_space<vmem>>, %arg9: memref<1x96xf32, #tpu.memory_space<vmem>>, %arg10: memref<32x32xf32, #tpu.memory_space<vmem>>, %arg11: memref<1x32xf32, #tpu.memory_space<vmem>>, %arg12: memref<1x32xf32, #tpu.memory_space<vmem>>, %arg13: memref<1x32xf32, #tpu.memory_space<vmem>>, %arg14: memref<32x64xf32, #tpu.memory_space<vmem>>, %arg15: memref<1x64xf32, #tpu.memory_space<vmem>>, %arg16: memref<64x32xf32, #tpu.memory_space<vmem>>, %arg17: memref<1x32xf32, #tpu.memory_space<vmem>>, %arg18: memref<1x32x32xf32, #tpu.memory_space<vmem>>, %arg19: memref<2x16x32xf32, #tpu.memory_space<vmem>>) attributes {dimension_semantics = [#tpu.dimension_semantics<parallel>, #tpu.dimension_semantics<parallel>], iteration_bounds = array<i64: 2, 2>, scalar_prefetch = 0 : i64, scratch_operands = 1 : i64, tpu.core_type = #tpu.core_type<tc>, window_params = [{transform_indices = @transform_0, window_bounds = array<i64: 1, 32, 32>}, {transform_indices = @transform_1, window_bounds = array<i64: 1, 32, 32>}, {transform_indices = @transform_2, window_bounds = array<i64: 2, 16, 16>}, {pipeline_mode = #tpu.pipeline_mode<synchronous>, transform_indices = @transform_3, window_bounds = array<i64: 4, 16, 16>}, {pipeline_mode = #tpu.pipeline_mode<synchronous>, transform_indices = @transform_4, window_bounds = array<i64: 1, 32>}, {pipeline_mode = #tpu.pipeline_mode<synchronous>, transform_indices = @transform_5, window_bounds = array<i64: 1, 32>}, {pipeline_mode = #tpu.pipeline_mode<synchronous>, transform_indices = @transform_6, window_bounds = array<i64: 32, 96>}, {pipeline_mode = #tpu.pipeline_mode<synchronous>, transform_indices = @transform_7, window_bounds = array<i64: 1, 96>}, {pipeline_mode = #tpu.pipeline_mode<synchronous>, transform_indices = @transform_8, window_bounds = array<i64: 32, 32>}, {pipeline_mode = #tpu.pipeline_mode<synchronous>, transform_indices = @transform_9, window_bounds = array<i64: 1, 32>}, {pipeline_mode = #tpu.pipeline_mode<synchronous>, transform_indices = @transform_10, window_bounds = array<i64: 1, 32>}, {pipeline_mode = #tpu.pipeline_mode<synchronous>, transform_indices = @transform_11, window_bounds = array<i64: 1, 32>}, {pipeline_mode = #tpu.pipeline_mode<synchronous>, transform_indices = @transform_12, window_bounds = array<i64: 32, 64>}, {pipeline_mode = #tpu.pipeline_mode<synchronous>, transform_indices = @transform_13, window_bounds = array<i64: 1, 64>}, {pipeline_mode = #tpu.pipeline_mode<synchronous>, transform_indices = @transform_14, window_bounds = array<i64: 64, 32>}, {pipeline_mode = #tpu.pipeline_mode<synchronous>, transform_indices = @transform_15, window_bounds = array<i64: 1, 32>}, {transform_indices = @transform_16, window_bounds = array<i64: 1, 32, 32>}]} {
    %c0 = arith.constant 0 : index
    %c0_0 = arith.constant 0 : index
    %c0_1 = arith.constant 0 : index
    %0 = vector.load %arg2[%c0, %c0_0, %c0_1] : memref<1x32x32xf32, #tpu.memory_space<vmem>>, vector<1x32x32xf32>
    %1 = vector.shape_cast %0 : vector<1x32x32xf32> to vector<32x32xf32>
    %cst = arith.constant dense<0.000000e+00> : vector<32xf32>
    %2 = vector.multi_reduction <add>, %1, %cst [1] : vector<32x32xf32> to vector<32xf32>
    %3 = vector.shape_cast %2 : vector<32xf32> to vector<32x1xf32>
    %cst_2 = arith.constant 3.200000e+01 : f32
    %4 = vector.broadcast %cst_2 : f32 to vector<32x1xf32>
    %5 = arith.divf %3, %4 : vector<32x1xf32>
    %6 = vector.broadcast %5 : vector<32x1xf32> to vector<32x32xf32>
    %7 = arith.subf %1, %6 : vector<32x32xf32>
    %8 = arith.mulf %7, %7 : vector<32x32xf32>
    %cst_3 = arith.constant dense<0.000000e+00> : vector<32xf32>
    %9 = vector.multi_reduction <add>, %8, %cst_3 [1] : vector<32x32xf32> to vector<32xf32>
    %10 = vector.shape_cast %9 : vector<32xf32> to vector<32x1xf32>
    %cst_4 = arith.constant 3.200000e+01 : f32
    %11 = vector.broadcast %cst_4 : f32 to vector<32x1xf32>
    %12 = arith.divf %10, %11 : vector<32x1xf32>
    %13 = vector.broadcast %5 : vector<32x1xf32> to vector<32x32xf32>
    %14 = arith.subf %1, %13 : vector<32x32xf32>
    %cst_5 = arith.constant 9.99999974E-6 : f32
    %15 = vector.broadcast %cst_5 : f32 to vector<32x1xf32>
    %16 = arith.addf %12, %15 : vector<32x1xf32>
    %17 = math.rsqrt %16 : vector<32x1xf32>
    %18 = vector.broadcast %17 : vector<32x1xf32> to vector<32x32xf32>
    %19 = arith.mulf %14, %18 : vector<32x32xf32>
    %c0_6 = arith.constant 0 : index
    %c0_7 = arith.constant 0 : index
    %20 = vector.load %arg6[%c0_6, %c0_7] : memref<1x32xf32, #tpu.memory_space<vmem>>, vector<1x32xf32>
    %21 = vector.shape_cast %20 : vector<1x32xf32> to vector<32xf32>
    %22 = vector.shape_cast %21 : vector<32xf32> to vector<1x32xf32>
    %23 = vector.broadcast %22 : vector<1x32xf32> to vector<32x32xf32>
    %24 = arith.mulf %19, %23 : vector<32x32xf32>
    %c0_8 = arith.constant 0 : index
    %c0_9 = arith.constant 0 : index
    %25 = vector.load %arg7[%c0_8, %c0_9] : memref<1x32xf32, #tpu.memory_space<vmem>>, vector<1x32xf32>
    %26 = vector.shape_cast %25 : vector<1x32xf32> to vector<32xf32>
    %27 = vector.shape_cast %26 : vector<32xf32> to vector<1x32xf32>
    %28 = vector.broadcast %27 : vector<1x32xf32> to vector<32x32xf32>
    %29 = arith.addf %24, %28 : vector<32x32xf32>
    %c0_10 = arith.constant 0 : index
    %c0_11 = arith.constant 0 : index
    %30 = vector.load %arg8[%c0_10, %c0_11] : memref<32x96xf32, #tpu.memory_space<vmem>>, vector<32x96xf32>
    %cst_12 = arith.constant dense<0.000000e+00> : vector<32x96xf32>
    %31 = tpu.matmul %29, %30, %cst_12 {dimension_numbers = #tpu.dot_dimension_numbers<[1], [0], [0], [1], [0, 0, 1, 1], [], []>} : vector<32x32xf32>, vector<32x96xf32>, vector<32x96xf32> -> vector<32x96xf32>
    %c0_13 = arith.constant 0 : index
    %c0_14 = arith.constant 0 : index
    %32 = vector.load %arg9[%c0_13, %c0_14] : memref<1x96xf32, #tpu.memory_space<vmem>>, vector<1x96xf32>
    %33 = vector.shape_cast %32 : vector<1x96xf32> to vector<96xf32>
    %34 = vector.shape_cast %33 : vector<96xf32> to vector<1x96xf32>
    %35 = vector.broadcast %34 : vector<1x96xf32> to vector<32x96xf32>
    %36 = arith.addf %31, %35 : vector<32x96xf32>
    %37 = vector.shape_cast %36 : vector<32x96xf32> to vector<2x16x96xf32>
    %c0_15 = arith.constant 0 : index
    %c0_16 = arith.constant 0 : index
    %c0_17 = arith.constant 0 : index
    %38 = vector.load %arg4[%c0_15, %c0_16, %c0_17] : memref<2x16x16xf32, #tpu.memory_space<vmem>>, vector<2x16x16xf32>
    %39 = vector.extract_strided_slice %37 {offsets = [0, 0, 0], sizes = [2, 16, 8], strides = [1, 1, 1]} : vector<2x16x96xf32> to vector<2x16x8xf32>
    %40 = vector.extract_strided_slice %37 {offsets = [0, 0, 32], sizes = [2, 16, 8], strides = [1, 1, 1]} : vector<2x16x96xf32> to vector<2x16x8xf32>
    %41 = vector.extract_strided_slice %37 {offsets = [0, 0, 64], sizes = [2, 16, 8], strides = [1, 1, 1]} : vector<2x16x96xf32> to vector<2x16x8xf32>
    %cst_18 = arith.constant dense<0.000000e+00> : vector<2x16x16xf32>
    %42 = tpu.matmul %39, %40, %cst_18 {dimension_numbers = #tpu.dot_dimension_numbers<[2], [2], [1], [1], [0, 0, 0, 1, 1, 1], [0], [0]>} : vector<2x16x8xf32>, vector<2x16x8xf32>, vector<2x16x16xf32> -> vector<2x16x16xf32>
    %c0_19 = arith.constant 0 : index
    %c0_20 = arith.constant 0 : index
    %c0_21 = arith.constant 0 : index
    %43 = vector.load %arg5[%c0_19, %c0_20, %c0_21] : memref<4x16x16xf32, #tpu.memory_space<vmem>>, vector<1x16x16xf32>
    %44 = vector.shape_cast %43 : vector<1x16x16xf32> to vector<16x16xf32>
    %45 = vector.shape_cast %44 : vector<16x16xf32> to vector<1x16x16xf32>
    %46 = vector.broadcast %45 : vector<1x16x16xf32> to vector<2x16x16xf32>
    %47 = arith.addf %42, %46 : vector<2x16x16xf32>
    %48 = arith.addf %47, %38 : vector<2x16x16xf32>
    %cst_22 = arith.constant dense<0xFF800000> : vector<2x16xf32>
    %49 = vector.multi_reduction <maximumf>, %48, %cst_22 [2] : vector<2x16x16xf32> to vector<2x16xf32>
    %50 = vector.shape_cast %49 : vector<2x16xf32> to vector<2x16x1xf32>
    %51 = vector.broadcast %50 : vector<2x16x1xf32> to vector<2x16x16xf32>
    %52 = arith.subf %48, %51 : vector<2x16x16xf32>
    %53 = math.exp %52 : vector<2x16x16xf32>
    %cst_23 = arith.constant dense<0.000000e+00> : vector<2x16xf32>
    %54 = vector.multi_reduction <add>, %53, %cst_23 [2] : vector<2x16x16xf32> to vector<2x16xf32>
    %55 = vector.shape_cast %54 : vector<2x16xf32> to vector<2x16x1xf32>
    %56 = tpu.reciprocal %55 {approx = true} : vector<2x16x1xf32> -> vector<2x16x1xf32>
    %57 = arith.mulf %55, %56 : vector<2x16x1xf32>
    %cst_24 = arith.constant 2.000000e+00 : f32
    %58 = vector.broadcast %cst_24 : f32 to vector<2x16x1xf32>
    %59 = arith.subf %58, %57 : vector<2x16x1xf32>
    %60 = arith.mulf %56, %59 : vector<2x16x1xf32>
    %61 = vector.broadcast %60 : vector<2x16x1xf32> to vector<2x16x16xf32>
    %62 = arith.mulf %53, %61 : vector<2x16x16xf32>
    %cst_25 = arith.constant dense<0.000000e+00> : vector<2x16x8xf32>
    %63 = tpu.matmul %62, %41, %cst_25 {dimension_numbers = #tpu.dot_dimension_numbers<[2], [1], [1], [2], [0, 0, 0, 1, 1, 2], [0], [0]>} : vector<2x16x16xf32>, vector<2x16x8xf32>, vector<2x16x8xf32> -> vector<2x16x8xf32>
    %c0_26 = arith.constant 0 : index
    %c0_27 = arith.constant 0 : index
    %c0_28 = arith.constant 0 : index
    %64 = vector.load %arg19[%c0_26, %c0_27, %c0_28] : memref<2x16x32xf32, #tpu.memory_space<vmem>>, vector<2x16x8xf32>
    tpu.vector_store %arg19[%c0_26, %c0_27, %c0_28], %63 {strides = array<i32>} : memref<2x16x32xf32, #tpu.memory_space<vmem>>, vector<2x16x8xf32>,
    %65 = vector.extract_strided_slice %37 {offsets = [0, 0, 8], sizes = [2, 16, 8], strides = [1, 1, 1]} : vector<2x16x96xf32> to vector<2x16x8xf32>
    %66 = vector.extract_strided_slice %37 {offsets = [0, 0, 40], sizes = [2, 16, 8], strides = [1, 1, 1]} : vector<2x16x96xf32> to vector<2x16x8xf32>
    %67 = vector.extract_strided_slice %37 {offsets = [0, 0, 72], sizes = [2, 16, 8], strides = [1, 1, 1]} : vector<2x16x96xf32> to vector<2x16x8xf32>
    %cst_29 = arith.constant dense<0.000000e+00> : vector<2x16x16xf32>
    %68 = tpu.matmul %65, %66, %cst_29 {dimension_numbers = #tpu.dot_dimension_numbers<[2], [2], [1], [1], [0, 0, 0, 1, 1, 1], [0], [0]>} : vector<2x16x8xf32>, vector<2x16x8xf32>, vector<2x16x16xf32> -> vector<2x16x16xf32>
    %c1 = arith.constant 1 : index
    %c0_30 = arith.constant 0 : index
    %c0_31 = arith.constant 0 : index
    %69 = vector.load %arg5[%c1, %c0_30, %c0_31] : memref<4x16x16xf32, #tpu.memory_space<vmem>>, vector<1x16x16xf32>
    %70 = vector.shape_cast %69 : vector<1x16x16xf32> to vector<16x16xf32>
    %71 = vector.shape_cast %70 : vector<16x16xf32> to vector<1x16x16xf32>
    %72 = vector.broadcast %71 : vector<1x16x16xf32> to vector<2x16x16xf32>
    %73 = arith.addf %68, %72 : vector<2x16x16xf32>
    %74 = arith.addf %73, %38 : vector<2x16x16xf32>
    %cst_32 = arith.constant dense<0xFF800000> : vector<2x16xf32>
    %75 = vector.multi_reduction <maximumf>, %74, %cst_32 [2] : vector<2x16x16xf32> to vector<2x16xf32>
    %76 = vector.shape_cast %75 : vector<2x16xf32> to vector<2x16x1xf32>
    %77 = vector.broadcast %76 : vector<2x16x1xf32> to vector<2x16x16xf32>
    %78 = arith.subf %74, %77 : vector<2x16x16xf32>
    %79 = math.exp %78 : vector<2x16x16xf32>
    %cst_33 = arith.constant dense<0.000000e+00> : vector<2x16xf32>
    %80 = vector.multi_reduction <add>, %79, %cst_33 [2] : vector<2x16x16xf32> to vector<2x16xf32>
    %81 = vector.shape_cast %80 : vector<2x16xf32> to vector<2x16x1xf32>
    %82 = tpu.reciprocal %81 {approx = true} : vector<2x16x1xf32> -> vector<2x16x1xf32>
    %83 = arith.mulf %81, %82 : vector<2x16x1xf32>
    %cst_34 = arith.constant 2.000000e+00 : f32
    %84 = vector.broadcast %cst_34 : f32 to vector<2x16x1xf32>
    %85 = arith.subf %84, %83 : vector<2x16x1xf32>
    %86 = arith.mulf %82, %85 : vector<2x16x1xf32>
    %87 = vector.broadcast %86 : vector<2x16x1xf32> to vector<2x16x16xf32>
    %88 = arith.mulf %79, %87 : vector<2x16x16xf32>
    %cst_35 = arith.constant dense<0.000000e+00> : vector<2x16x8xf32>
    %89 = tpu.matmul %88, %67, %cst_35 {dimension_numbers = #tpu.dot_dimension_numbers<[2], [1], [1], [2], [0, 0, 0, 1, 1, 2], [0], [0]>} : vector<2x16x16xf32>, vector<2x16x8xf32>, vector<2x16x8xf32> -> vector<2x16x8xf32>
    %c0_36 = arith.constant 0 : index
    %c0_37 = arith.constant 0 : index
    %c8 = arith.constant 8 : index
    %90 = vector.load %arg19[%c0_36, %c0_37, %c8] : memref<2x16x32xf32, #tpu.memory_space<vmem>>, vector<2x16x8xf32>
    tpu.vector_store %arg19[%c0_36, %c0_37, %c8], %89 {strides = array<i32>} : memref<2x16x32xf32, #tpu.memory_space<vmem>>, vector<2x16x8xf32>,
    %91 = vector.extract_strided_slice %37 {offsets = [0, 0, 16], sizes = [2, 16, 8], strides = [1, 1, 1]} : vector<2x16x96xf32> to vector<2x16x8xf32>
    %92 = vector.extract_strided_slice %37 {offsets = [0, 0, 48], sizes = [2, 16, 8], strides = [1, 1, 1]} : vector<2x16x96xf32> to vector<2x16x8xf32>
    %93 = vector.extract_strided_slice %37 {offsets = [0, 0, 80], sizes = [2, 16, 8], strides = [1, 1, 1]} : vector<2x16x96xf32> to vector<2x16x8xf32>
    %cst_38 = arith.constant dense<0.000000e+00> : vector<2x16x16xf32>
    %94 = tpu.matmul %91, %92, %cst_38 {dimension_numbers = #tpu.dot_dimension_numbers<[2], [2], [1], [1], [0, 0, 0, 1, 1, 1], [0], [0]>} : vector<2x16x8xf32>, vector<2x16x8xf32>, vector<2x16x16xf32> -> vector<2x16x16xf32>
    %c2 = arith.constant 2 : index
    %c0_39 = arith.constant 0 : index
    %c0_40 = arith.constant 0 : index
    %95 = vector.load %arg5[%c2, %c0_39, %c0_40] : memref<4x16x16xf32, #tpu.memory_space<vmem>>, vector<1x16x16xf32>
    %96 = vector.shape_cast %95 : vector<1x16x16xf32> to vector<16x16xf32>
    %97 = vector.shape_cast %96 : vector<16x16xf32> to vector<1x16x16xf32>
    %98 = vector.broadcast %97 : vector<1x16x16xf32> to vector<2x16x16xf32>
    %99 = arith.addf %94, %98 : vector<2x16x16xf32>
    %100 = arith.addf %99, %38 : vector<2x16x16xf32>
    %cst_41 = arith.constant dense<0xFF800000> : vector<2x16xf32>
    %101 = vector.multi_reduction <maximumf>, %100, %cst_41 [2] : vector<2x16x16xf32> to vector<2x16xf32>
    %102 = vector.shape_cast %101 : vector<2x16xf32> to vector<2x16x1xf32>
    %103 = vector.broadcast %102 : vector<2x16x1xf32> to vector<2x16x16xf32>
    %104 = arith.subf %100, %103 : vector<2x16x16xf32>
    %105 = math.exp %104 : vector<2x16x16xf32>
    %cst_42 = arith.constant dense<0.000000e+00> : vector<2x16xf32>
    %106 = vector.multi_reduction <add>, %105, %cst_42 [2] : vector<2x16x16xf32> to vector<2x16xf32>
    %107 = vector.shape_cast %106 : vector<2x16xf32> to vector<2x16x1xf32>
    %108 = tpu.reciprocal %107 {approx = true} : vector<2x16x1xf32> -> vector<2x16x1xf32>
    %109 = arith.mulf %107, %108 : vector<2x16x1xf32>
    %cst_43 = arith.constant 2.000000e+00 : f32
    %110 = vector.broadcast %cst_43 : f32 to vector<2x16x1xf32>
    %111 = arith.subf %110, %109 : vector<2x16x1xf32>
    %112 = arith.mulf %108, %111 : vector<2x16x1xf32>
    %113 = vector.broadcast %112 : vector<2x16x1xf32> to vector<2x16x16xf32>
    %114 = arith.mulf %105, %113 : vector<2x16x16xf32>
    %cst_44 = arith.constant dense<0.000000e+00> : vector<2x16x8xf32>
    %115 = tpu.matmul %114, %93, %cst_44 {dimension_numbers = #tpu.dot_dimension_numbers<[2], [1], [1], [2], [0, 0, 0, 1, 1, 2], [0], [0]>} : vector<2x16x16xf32>, vector<2x16x8xf32>, vector<2x16x8xf32> -> vector<2x16x8xf32>
    %c0_45 = arith.constant 0 : index
    %c0_46 = arith.constant 0 : index
    %c16 = arith.constant 16 : index
    %116 = vector.load %arg19[%c0_45, %c0_46, %c16] : memref<2x16x32xf32, #tpu.memory_space<vmem>>, vector<2x16x8xf32>
    tpu.vector_store %arg19[%c0_45, %c0_46, %c16], %115 {strides = array<i32>} : memref<2x16x32xf32, #tpu.memory_space<vmem>>, vector<2x16x8xf32>,
    %117 = vector.extract_strided_slice %37 {offsets = [0, 0, 24], sizes = [2, 16, 8], strides = [1, 1, 1]} : vector<2x16x96xf32> to vector<2x16x8xf32>
    %118 = vector.extract_strided_slice %37 {offsets = [0, 0, 56], sizes = [2, 16, 8], strides = [1, 1, 1]} : vector<2x16x96xf32> to vector<2x16x8xf32>
    %119 = vector.extract_strided_slice %37 {offsets = [0, 0, 88], sizes = [2, 16, 8], strides = [1, 1, 1]} : vector<2x16x96xf32> to vector<2x16x8xf32>
    %cst_47 = arith.constant dense<0.000000e+00> : vector<2x16x16xf32>
    %120 = tpu.matmul %117, %118, %cst_47 {dimension_numbers = #tpu.dot_dimension_numbers<[2], [2], [1], [1], [0, 0, 0, 1, 1, 1], [0], [0]>} : vector<2x16x8xf32>, vector<2x16x8xf32>, vector<2x16x16xf32> -> vector<2x16x16xf32>
    %c3 = arith.constant 3 : index
    %c0_48 = arith.constant 0 : index
    %c0_49 = arith.constant 0 : index
    %121 = vector.load %arg5[%c3, %c0_48, %c0_49] : memref<4x16x16xf32, #tpu.memory_space<vmem>>, vector<1x16x16xf32>
    %122 = vector.shape_cast %121 : vector<1x16x16xf32> to vector<16x16xf32>
    %123 = vector.shape_cast %122 : vector<16x16xf32> to vector<1x16x16xf32>
    %124 = vector.broadcast %123 : vector<1x16x16xf32> to vector<2x16x16xf32>
    %125 = arith.addf %120, %124 : vector<2x16x16xf32>
    %126 = arith.addf %125, %38 : vector<2x16x16xf32>
    %cst_50 = arith.constant dense<0xFF800000> : vector<2x16xf32>
    %127 = vector.multi_reduction <maximumf>, %126, %cst_50 [2] : vector<2x16x16xf32> to vector<2x16xf32>
    %128 = vector.shape_cast %127 : vector<2x16xf32> to vector<2x16x1xf32>
    %129 = vector.broadcast %128 : vector<2x16x1xf32> to vector<2x16x16xf32>
    %130 = arith.subf %126, %129 : vector<2x16x16xf32>
    %131 = math.exp %130 : vector<2x16x16xf32>
    %cst_51 = arith.constant dense<0.000000e+00> : vector<2x16xf32>
    %132 = vector.multi_reduction <add>, %131, %cst_51 [2] : vector<2x16x16xf32> to vector<2x16xf32>
    %133 = vector.shape_cast %132 : vector<2x16xf32> to vector<2x16x1xf32>
    %134 = tpu.reciprocal %133 {approx = true} : vector<2x16x1xf32> -> vector<2x16x1xf32>
    %135 = arith.mulf %133, %134 : vector<2x16x1xf32>
    %cst_52 = arith.constant 2.000000e+00 : f32
    %136 = vector.broadcast %cst_52 : f32 to vector<2x16x1xf32>
    %137 = arith.subf %136, %135 : vector<2x16x1xf32>
    %138 = arith.mulf %134, %137 : vector<2x16x1xf32>
    %139 = vector.broadcast %138 : vector<2x16x1xf32> to vector<2x16x16xf32>
    %140 = arith.mulf %131, %139 : vector<2x16x16xf32>
    %cst_53 = arith.constant dense<0.000000e+00> : vector<2x16x8xf32>
    %141 = tpu.matmul %140, %119, %cst_53 {dimension_numbers = #tpu.dot_dimension_numbers<[2], [1], [1], [2], [0, 0, 0, 1, 1, 2], [0], [0]>} : vector<2x16x16xf32>, vector<2x16x8xf32>, vector<2x16x8xf32> -> vector<2x16x8xf32>
    %c0_54 = arith.constant 0 : index
    %c0_55 = arith.constant 0 : index
    %c24 = arith.constant 24 : index
    %142 = vector.load %arg19[%c0_54, %c0_55, %c24] : memref<2x16x32xf32, #tpu.memory_space<vmem>>, vector<2x16x8xf32>
    tpu.vector_store %arg19[%c0_54, %c0_55, %c24], %141 {strides = array<i32>} : memref<2x16x32xf32, #tpu.memory_space<vmem>>, vector<2x16x8xf32>,
    %c0_56 = arith.constant 0 : index
    %c0_57 = arith.constant 0 : index
    %c0_58 = arith.constant 0 : index
    %143 = vector.load %arg19[%c0_56, %c0_57, %c0_58] : memref<2x16x32xf32, #tpu.memory_space<vmem>>, vector<2x16x32xf32>
    %144 = vector.shape_cast %143 : vector<2x16x32xf32> to vector<32x32xf32>
    %c0_59 = arith.constant 0 : index
    %c0_60 = arith.constant 0 : index
    %145 = vector.load %arg10[%c0_59, %c0_60] : memref<32x32xf32, #tpu.memory_space<vmem>>, vector<32x32xf32>
    %cst_61 = arith.constant dense<0.000000e+00> : vector<32x32xf32>
    %146 = tpu.matmul %144, %145, %cst_61 {dimension_numbers = #tpu.dot_dimension_numbers<[1], [0], [0], [1], [0, 0, 1, 1], [], []>} : vector<32x32xf32>, vector<32x32xf32>, vector<32x32xf32> -> vector<32x32xf32>
    %c0_62 = arith.constant 0 : index
    %c0_63 = arith.constant 0 : index
    %147 = vector.load %arg11[%c0_62, %c0_63] : memref<1x32xf32, #tpu.memory_space<vmem>>, vector<1x32xf32>
    %148 = vector.shape_cast %147 : vector<1x32xf32> to vector<32xf32>
    %149 = vector.shape_cast %148 : vector<32xf32> to vector<1x32xf32>
    %150 = vector.broadcast %149 : vector<1x32xf32> to vector<32x32xf32>
    %151 = arith.addf %146, %150 : vector<32x32xf32>
    %c0_64 = arith.constant 0 : index
    %c0_65 = arith.constant 0 : index
    %c0_66 = arith.constant 0 : index
    %152 = vector.load %arg3[%c0_64, %c0_65, %c0_66] : memref<1x32x32xf32, #tpu.memory_space<vmem>>, vector<1x32x32xf32>
    %153 = vector.shape_cast %152 : vector<1x32x32xf32> to vector<32x32xf32>
    %154 = arith.addf %153, %151 : vector<32x32xf32>
    %cst_67 = arith.constant dense<0.000000e+00> : vector<32xf32>
    %155 = vector.multi_reduction <add>, %154, %cst_67 [1] : vector<32x32xf32> to vector<32xf32>
    %156 = vector.shape_cast %155 : vector<32xf32> to vector<32x1xf32>
    %cst_68 = arith.constant 3.200000e+01 : f32
    %157 = vector.broadcast %cst_68 : f32 to vector<32x1xf32>
    %158 = arith.divf %156, %157 : vector<32x1xf32>
    %159 = vector.broadcast %158 : vector<32x1xf32> to vector<32x32xf32>
    %160 = arith.subf %154, %159 : vector<32x32xf32>
    %161 = arith.mulf %160, %160 : vector<32x32xf32>
    %cst_69 = arith.constant dense<0.000000e+00> : vector<32xf32>
    %162 = vector.multi_reduction <add>, %161, %cst_69 [1] : vector<32x32xf32> to vector<32xf32>
    %163 = vector.shape_cast %162 : vector<32xf32> to vector<32x1xf32>
    %cst_70 = arith.constant 3.200000e+01 : f32
    %164 = vector.broadcast %cst_70 : f32 to vector<32x1xf32>
    %165 = arith.divf %163, %164 : vector<32x1xf32>
    %166 = vector.broadcast %158 : vector<32x1xf32> to vector<32x32xf32>
    %167 = arith.subf %154, %166 : vector<32x32xf32>
    %cst_71 = arith.constant 9.99999974E-6 : f32
    %168 = vector.broadcast %cst_71 : f32 to vector<32x1xf32>
    %169 = arith.addf %165, %168 : vector<32x1xf32>
    %170 = math.rsqrt %169 : vector<32x1xf32>
    %171 = vector.broadcast %170 : vector<32x1xf32> to vector<32x32xf32>
    %172 = arith.mulf %167, %171 : vector<32x32xf32>
    %c0_72 = arith.constant 0 : index
    %c0_73 = arith.constant 0 : index
    %173 = vector.load %arg12[%c0_72, %c0_73] : memref<1x32xf32, #tpu.memory_space<vmem>>, vector<1x32xf32>
    %174 = vector.shape_cast %173 : vector<1x32xf32> to vector<32xf32>
    %175 = vector.shape_cast %174 : vector<32xf32> to vector<1x32xf32>
    %176 = vector.broadcast %175 : vector<1x32xf32> to vector<32x32xf32>
    %177 = arith.mulf %172, %176 : vector<32x32xf32>
    %c0_74 = arith.constant 0 : index
    %c0_75 = arith.constant 0 : index
    %178 = vector.load %arg13[%c0_74, %c0_75] : memref<1x32xf32, #tpu.memory_space<vmem>>, vector<1x32xf32>
    %179 = vector.shape_cast %178 : vector<1x32xf32> to vector<32xf32>
    %180 = vector.shape_cast %179 : vector<32xf32> to vector<1x32xf32>
    %181 = vector.broadcast %180 : vector<1x32xf32> to vector<32x32xf32>
    %182 = arith.addf %177, %181 : vector<32x32xf32>
    %c0_76 = arith.constant 0 : index
    %c0_77 = arith.constant 0 : index
    %183 = vector.load %arg14[%c0_76, %c0_77] : memref<32x64xf32, #tpu.memory_space<vmem>>, vector<32x64xf32>
    %cst_78 = arith.constant dense<0.000000e+00> : vector<32x64xf32>
    %184 = tpu.matmul %182, %183, %cst_78 {dimension_numbers = #tpu.dot_dimension_numbers<[1], [0], [0], [1], [0, 0, 1, 1], [], []>} : vector<32x32xf32>, vector<32x64xf32>, vector<32x64xf32> -> vector<32x64xf32>
    %c0_79 = arith.constant 0 : index
    %c0_80 = arith.constant 0 : index
    %185 = vector.load %arg15[%c0_79, %c0_80] : memref<1x64xf32, #tpu.memory_space<vmem>>, vector<1x64xf32>
    %186 = vector.shape_cast %185 : vector<1x64xf32> to vector<64xf32>
    %187 = vector.shape_cast %186 : vector<64xf32> to vector<1x64xf32>
    %188 = vector.broadcast %187 : vector<1x64xf32> to vector<32x64xf32>
    %189 = arith.addf %184, %188 : vector<32x64xf32>
    %cst_81 = arith.constant 5.000000e-01 : f32
    %190 = vector.broadcast %cst_81 : f32 to vector<32x64xf32>
    %191 = arith.mulf %190, %189 : vector<32x64xf32>
    %cst_82 = arith.constant 0.707106769 : f32
    %192 = vector.broadcast %cst_82 : f32 to vector<32x64xf32>
    %193 = arith.mulf %189, %192 : vector<32x64xf32>
    %194 = math.erf %193 : vector<32x64xf32>
    %cst_83 = arith.constant 1.000000e+00 : f32
    %195 = vector.broadcast %cst_83 : f32 to vector<32x64xf32>
    %196 = arith.addf %195, %194 : vector<32x64xf32>
    %197 = arith.mulf %191, %196 : vector<32x64xf32>
    %c0_84 = arith.constant 0 : index
    %c0_85 = arith.constant 0 : index
    %198 = vector.load %arg16[%c0_84, %c0_85] : memref<64x32xf32, #tpu.memory_space<vmem>>, vector<64x32xf32>
    %cst_86 = arith.constant dense<0.000000e+00> : vector<32x32xf32>
    %199 = tpu.matmul %197, %198, %cst_86 {dimension_numbers = #tpu.dot_dimension_numbers<[1], [0], [0], [1], [0, 0, 1, 1], [], []>} : vector<32x64xf32>, vector<64x32xf32>, vector<32x32xf32> -> vector<32x32xf32>
    %c0_87 = arith.constant 0 : index
    %c0_88 = arith.constant 0 : index
    %200 = vector.load %arg17[%c0_87, %c0_88] : memref<1x32xf32, #tpu.memory_space<vmem>>, vector<1x32xf32>
    %201 = vector.shape_cast %200 : vector<1x32xf32> to vector<32xf32>
    %202 = vector.shape_cast %201 : vector<32xf32> to vector<1x32xf32>
    %203 = vector.broadcast %202 : vector<1x32xf32> to vector<32x32xf32>
    %204 = arith.addf %199, %203 : vector<32x32xf32>
    %205 = arith.addf %204, %154 : vector<32x32xf32>
    %206 = vector.shape_cast %205 : vector<32x32xf32> to vector<1x32x32xf32>
    %c0_89 = arith.constant 0 : index
    %c0_90 = arith.constant 0 : index
    %c0_91 = arith.constant 0 : index
    %207 = vector.load %arg18[%c0_89, %c0_90, %c0_91] : memref<1x32x32xf32, #tpu.memory_space<vmem>>, vector<1x32x32xf32>
    tpu.vector_store %arg18[%c0_89, %c0_90, %c0_91], %206 {strides = array<i32>} : memref<1x32x32xf32, #tpu.memory_space<vmem>>, vector<1x32x32xf32>,
    return
  }
  func.func @transform_0(%arg0: i32, %arg1: i32) -> (i32, i32, i32) {
    %c0_i32 = arith.constant 0 : i32
    %c0_i32_0 = arith.constant 0 : i32
    return %arg0, %arg1, %c0_i32 : i32, i32, i32
  }
  func.func @transform_1(%arg0: i32, %arg1: i32) -> (i32, i32, i32) {
    %c0_i32 = arith.constant 0 : i32
    %c0_i32_0 = arith.constant 0 : i32
    return %arg0, %arg1, %c0_i32 : i32, i32, i32
  }
  func.func @transform_2(%arg0: i32, %arg1: i32) -> (i32, i32, i32) {
    %c0_i32 = arith.constant 0 : i32
    %c0_i32_0 = arith.constant 0 : i32
    %c0_i32_1 = arith.constant 0 : i32
    return %arg1, %c0_i32, %c0_i32_0 : i32, i32, i32
  }
  func.func @transform_3(%arg0: i32, %arg1: i32) -> (i32, i32, i32) {
    %c0_i32 = arith.constant 0 : i32
    %c0_i32_0 = arith.constant 0 : i32
    %c0_i32_1 = arith.constant 0 : i32
    %c0_i32_2 = arith.constant 0 : i32
    return %c0_i32, %c0_i32_0, %c0_i32_1 : i32, i32, i32
  }
  func.func @transform_4(%arg0: i32, %arg1: i32) -> (i32, i32) {
    %c0_i32 = arith.constant 0 : i32
    %c0_i32_0 = arith.constant 0 : i32
    %c0_i32_1 = arith.constant 0 : i32
    return %c0_i32, %c0_i32_0 : i32, i32
  }
  func.func @transform_5(%arg0: i32, %arg1: i32) -> (i32, i32) {
    %c0_i32 = arith.constant 0 : i32
    %c0_i32_0 = arith.constant 0 : i32
    %c0_i32_1 = arith.constant 0 : i32
    return %c0_i32, %c0_i32_0 : i32, i32
  }
  func.func @transform_6(%arg0: i32, %arg1: i32) -> (i32, i32) {
    %c0_i32 = arith.constant 0 : i32
    %c0_i32_0 = arith.constant 0 : i32
    %c0_i32_1 = arith.constant 0 : i32
    return %c0_i32, %c0_i32_0 : i32, i32
  }
  func.func @transform_7(%arg0: i32, %arg1: i32) -> (i32, i32) {
    %c0_i32 = arith.constant 0 : i32
    %c0_i32_0 = arith.constant 0 : i32
    %c0_i32_1 = arith.constant 0 : i32
    return %c0_i32, %c0_i32_0 : i32, i32
  }
  func.func @transform_8(%arg0: i32, %arg1: i32) -> (i32, i32) {
    %c0_i32 = arith.constant 0 : i32
    %c0_i32_0 = arith.constant 0 : i32
    %c0_i32_1 = arith.constant 0 : i32
    return %c0_i32, %c0_i32_0 : i32, i32
  }
  func.func @transform_9(%arg0: i32, %arg1: i32) -> (i32, i32) {
    %c0_i32 = arith.constant 0 : i32
    %c0_i32_0 = arith.constant 0 : i32
    %c0_i32_1 = arith.constant 0 : i32
    return %c0_i32, %c0_i32_0 : i32, i32
  }
  func.func @transform_10(%arg0: i32, %arg1: i32) -> (i32, i32) {
    %c0_i32 = arith.constant 0 : i32
    %c0_i32_0 = arith.constant 0 : i32
    %c0_i32_1 = arith.constant 0 : i32
    return %c0_i32, %c0_i32_0 : i32, i32
  }
  func.func @transform_11(%arg0: i32, %arg1: i32) -> (i32, i32) {
    %c0_i32 = arith.constant 0 : i32
    %c0_i32_0 = arith.constant 0 : i32
    %c0_i32_1 = arith.constant 0 : i32
    return %c0_i32, %c0_i32_0 : i32, i32
  }
  func.func @transform_12(%arg0: i32, %arg1: i32) -> (i32, i32) {
    %c0_i32 = arith.constant 0 : i32
    %c0_i32_0 = arith.constant 0 : i32
    %c0_i32_1 = arith.constant 0 : i32
    return %c0_i32, %c0_i32_0 : i32, i32
  }
  func.func @transform_13(%arg0: i32, %arg1: i32) -> (i32, i32) {
    %c0_i32 = arith.constant 0 : i32
    %c0_i32_0 = arith.constant 0 : i32
    %c0_i32_1 = arith.constant 0 : i32
    return %c0_i32, %c0_i32_0 : i32, i32
  }
  func.func @transform_14(%arg0: i32, %arg1: i32) -> (i32, i32) {
    %c0_i32 = arith.constant 0 : i32
    %c0_i32_0 = arith.constant 0 : i32
    %c0_i32_1 = arith.constant 0 : i32
    return %c0_i32, %c0_i32_0 : i32, i32
  }
  func.func @transform_15(%arg0: i32, %arg1: i32) -> (i32, i32) {
    %c0_i32 = arith.constant 0 : i32
    %c0_i32_0 = arith.constant 0 : i32
    %c0_i32_1 = arith.constant 0 : i32
    return %c0_i32, %c0_i32_0 : i32, i32
  }
  func.func @transform_16(%arg0: i32, %arg1: i32) -> (i32, i32, i32) {
    %c0_i32 = arith.constant 0 : i32
    %c0_i32_0 = arith.constant 0 : i32
    return %arg0, %arg1, %c0_i32 : i32, i32, i32
  }
}

module attributes {stable_mosaic.version = 11 : i64} {
  func.func @_swin_block_kernel(%arg0: i32, %arg1: i32, %arg2: memref<1x32x32xf32, #tpu.memory_space<vmem>>, %arg3: memref<1x32x32xf32, #tpu.memory_space<vmem>>, %arg4: memref<2x16x16xf32, #tpu.memory_space<vmem>>, %arg5: memref<4x16x16xf32, #tpu.memory_space<vmem>>, %arg6: memref<1x32xf32, #tpu.memory_space<vmem>>, %arg7: memref<1x32xf32, #tpu.memory_space<vmem>>, %arg8: memref<32x96xf32, #tpu.memory_space<vmem>>, %arg9: memref<1x96xf32, #tpu.memory_space<vmem>>, %arg10: memref<32x32xf32, #tpu.memory_space<vmem>>, %arg11: memref<1x32xf32, #tpu.memory_space<vmem>>, %arg12: memref<1x32xf32, #tpu.memory_space<vmem>>, %arg13: memref<1x32xf32, #tpu.memory_space<vmem>>, %arg14: memref<32x64xf32, #tpu.memory_space<vmem>>, %arg15: memref<1x64xf32, #tpu.memory_space<vmem>>, %arg16: memref<64x32xf32, #tpu.memory_space<vmem>>, %arg17: memref<1x32xf32, #tpu.memory_space<vmem>>, %arg18: memref<1x32x32xf32, #tpu.memory_space<vmem>>, %arg19: memref<2x16x32xf32, #tpu.memory_space<vmem>>) attributes {dimension_semantics = [#tpu.dimension_semantics<parallel>, #tpu.dimension_semantics<parallel>], iteration_bounds = array<i64: 2, 2>, scalar_prefetch = 0 : i64, scratch_operands = 1 : i64, tpu.core_type = #tpu.core_type<tc>, window_params = [{transform_indices = @transform_0, window_bounds = array<i64: 1, 32, 32>}, {transform_indices = @transform_1, window_bounds = array<i64: 1, 32, 32>}, {transform_indices = @transform_2, window_bounds = array<i64: 2, 16, 16>}, {pipeline_mode = #tpu.pipeline_mode<synchronous>, transform_indices = @transform_3, window_bounds = array<i64: 4, 16, 16>}, {pipeline_mode = #tpu.pipeline_mode<synchronous>, transform_indices = @transform_4, window_bounds = array<i64: 1, 32>}, {pipeline_mode = #tpu.pipeline_mode<synchronous>, transform_indices = @transform_5, window_bounds = array<i64: 1, 32>}, {pipeline_mode = #tpu.pipeline_mode<synchronous>, transform_indices = @transform_6, window_bounds = array<i64: 32, 96>}, {pipeline_mode = #tpu.pipeline_mode<synchronous>, transform_indices = @transform_7, window_bounds = array<i64: 1, 96>}, {pipeline_mode = #tpu.pipeline_mode<synchronous>, transform_indices = @transform_8, window_bounds = array<i64: 32, 32>}, {pipeline_mode = #tpu.pipeline_mode<synchronous>, transform_indices = @transform_9, window_bounds = array<i64: 1, 32>}, {pipeline_mode = #tpu.pipeline_mode<synchronous>, transform_indices = @transform_10, window_bounds = array<i64: 1, 32>}, {pipeline_mode = #tpu.pipeline_mode<synchronous>, transform_indices = @transform_11, window_bounds = array<i64: 1, 32>}, {pipeline_mode = #tpu.pipeline_mode<synchronous>, transform_indices = @transform_12, window_bounds = array<i64: 32, 64>}, {pipeline_mode = #tpu.pipeline_mode<synchronous>, transform_indices = @transform_13, window_bounds = array<i64: 1, 64>}, {pipeline_mode = #tpu.pipeline_mode<synchronous>, transform_indices = @transform_14, window_bounds = array<i64: 64, 32>}, {pipeline_mode = #tpu.pipeline_mode<synchronous>, transform_indices = @transform_15, window_bounds = array<i64: 1, 32>}, {transform_indices = @transform_16, window_bounds = array<i64: 1, 32, 32>}]} {
    %c0 = arith.constant 0 : index
    %c0_0 = arith.constant 0 : index
    %c0_1 = arith.constant 0 : index
    %0 = vector.load %arg2[%c0, %c0_0, %c0_1] : memref<1x32x32xf32, #tpu.memory_space<vmem>>, vector<1x32x32xf32>
    %1 = vector.shape_cast %0 : vector<1x32x32xf32> to vector<32x32xf32>
    %cst = arith.constant dense<0.000000e+00> : vector<32xf32>
    %2 = vector.multi_reduction <add>, %1, %cst [1] : vector<32x32xf32> to vector<32xf32>
    %3 = vector.shape_cast %2 : vector<32xf32> to vector<32x1xf32>
    %cst_2 = arith.constant 3.200000e+01 : f32
    %4 = vector.broadcast %cst_2 : f32 to vector<32x1xf32>
    %5 = arith.divf %3, %4 : vector<32x1xf32>
    %6 = vector.broadcast %5 : vector<32x1xf32> to vector<32x32xf32>
    %7 = arith.subf %1, %6 : vector<32x32xf32>
    %8 = arith.mulf %7, %7 : vector<32x32xf32>
    %cst_3 = arith.constant dense<0.000000e+00> : vector<32xf32>
    %9 = vector.multi_reduction <add>, %8, %cst_3 [1] : vector<32x32xf32> to vector<32xf32>
    %10 = vector.shape_cast %9 : vector<32xf32> to vector<32x1xf32>
    %cst_4 = arith.constant 3.200000e+01 : f32
    %11 = vector.broadcast %cst_4 : f32 to vector<32x1xf32>
    %12 = arith.divf %10, %11 : vector<32x1xf32>
    %13 = vector.broadcast %5 : vector<32x1xf32> to vector<32x32xf32>
    %14 = arith.subf %1, %13 : vector<32x32xf32>
    %cst_5 = arith.constant 9.99999974E-6 : f32
    %15 = vector.broadcast %cst_5 : f32 to vector<32x1xf32>
    %16 = arith.addf %12, %15 : vector<32x1xf32>
    %17 = math.rsqrt %16 : vector<32x1xf32>
    %18 = vector.broadcast %17 : vector<32x1xf32> to vector<32x32xf32>
    %19 = arith.mulf %14, %18 : vector<32x32xf32>
    %c0_6 = arith.constant 0 : index
    %c0_7 = arith.constant 0 : index
    %20 = vector.load %arg6[%c0_6, %c0_7] : memref<1x32xf32, #tpu.memory_space<vmem>>, vector<1x32xf32>
    %21 = vector.shape_cast %20 : vector<1x32xf32> to vector<32xf32>
    %22 = vector.shape_cast %21 : vector<32xf32> to vector<1x32xf32>
    %23 = vector.broadcast %22 : vector<1x32xf32> to vector<32x32xf32>
    %24 = arith.mulf %19, %23 : vector<32x32xf32>
    %c0_8 = arith.constant 0 : index
    %c0_9 = arith.constant 0 : index
    %25 = vector.load %arg7[%c0_8, %c0_9] : memref<1x32xf32, #tpu.memory_space<vmem>>, vector<1x32xf32>
    %26 = vector.shape_cast %25 : vector<1x32xf32> to vector<32xf32>
    %27 = vector.shape_cast %26 : vector<32xf32> to vector<1x32xf32>
    %28 = vector.broadcast %27 : vector<1x32xf32> to vector<32x32xf32>
    %29 = arith.addf %24, %28 : vector<32x32xf32>
    %c0_10 = arith.constant 0 : index
    %c0_11 = arith.constant 0 : index
    %30 = vector.load %arg8[%c0_10, %c0_11] : memref<32x96xf32, #tpu.memory_space<vmem>>, vector<32x96xf32>
    %cst_12 = arith.constant dense<0.000000e+00> : vector<32x96xf32>
    %31 = tpu.matmul %29, %30, %cst_12 {dimension_numbers = #tpu.dot_dimension_numbers<[1], [0], [0], [1], [0, 0, 1, 1], [], []>} : vector<32x32xf32>, vector<32x96xf32>, vector<32x96xf32> -> vector<32x96xf32>
    %c0_13 = arith.constant 0 : index
    %c0_14 = arith.constant 0 : index
    %32 = vector.load %arg9[%c0_13, %c0_14] : memref<1x96xf32, #tpu.memory_space<vmem>>, vector<1x96xf32>
    %33 = vector.shape_cast %32 : vector<1x96xf32> to vector<96xf32>
    %34 = vector.shape_cast %33 : vector<96xf32> to vector<1x96xf32>
    %35 = vector.broadcast %34 : vector<1x96xf32> to vector<32x96xf32>
    %36 = arith.addf %31, %35 : vector<32x96xf32>
    %37 = vector.shape_cast %36 : vector<32x96xf32> to vector<2x16x96xf32>
    %c0_15 = arith.constant 0 : index
    %c0_16 = arith.constant 0 : index
    %c0_17 = arith.constant 0 : index
    %38 = vector.load %arg4[%c0_15, %c0_16, %c0_17] : memref<2x16x16xf32, #tpu.memory_space<vmem>>, vector<2x16x16xf32>
    %39 = vector.extract_strided_slice %37 {offsets = [0, 0, 0], sizes = [2, 16, 8], strides = [1, 1, 1]} : vector<2x16x96xf32> to vector<2x16x8xf32>
    %40 = vector.extract_strided_slice %37 {offsets = [0, 0, 32], sizes = [2, 16, 8], strides = [1, 1, 1]} : vector<2x16x96xf32> to vector<2x16x8xf32>
    %41 = vector.extract_strided_slice %37 {offsets = [0, 0, 64], sizes = [2, 16, 8], strides = [1, 1, 1]} : vector<2x16x96xf32> to vector<2x16x8xf32>
    %cst_18 = arith.constant dense<0.000000e+00> : vector<2x16x16xf32>
    %42 = tpu.matmul %39, %40, %cst_18 {dimension_numbers = #tpu.dot_dimension_numbers<[2], [2], [1], [1], [0, 0, 0, 1, 1, 1], [0], [0]>} : vector<2x16x8xf32>, vector<2x16x8xf32>, vector<2x16x16xf32> -> vector<2x16x16xf32>
    %c0_19 = arith.constant 0 : index
    %c0_20 = arith.constant 0 : index
    %c0_21 = arith.constant 0 : index
    %43 = vector.load %arg5[%c0_19, %c0_20, %c0_21] : memref<4x16x16xf32, #tpu.memory_space<vmem>>, vector<1x16x16xf32>
    %44 = vector.shape_cast %43 : vector<1x16x16xf32> to vector<16x16xf32>
    %45 = vector.shape_cast %44 : vector<16x16xf32> to vector<1x16x16xf32>
    %46 = vector.broadcast %45 : vector<1x16x16xf32> to vector<2x16x16xf32>
    %47 = arith.addf %42, %46 : vector<2x16x16xf32>
    %48 = arith.addf %47, %38 : vector<2x16x16xf32>
    %cst_22 = arith.constant dense<0xFF800000> : vector<2x16xf32>
    %49 = vector.multi_reduction <maximumf>, %48, %cst_22 [2] : vector<2x16x16xf32> to vector<2x16xf32>
    %50 = vector.shape_cast %49 : vector<2x16xf32> to vector<2x16x1xf32>
    %51 = vector.broadcast %50 : vector<2x16x1xf32> to vector<2x16x16xf32>
    %52 = arith.subf %48, %51 : vector<2x16x16xf32>
    %53 = math.exp %52 : vector<2x16x16xf32>
    %cst_23 = arith.constant dense<0.000000e+00> : vector<2x16xf32>
    %54 = vector.multi_reduction <add>, %53, %cst_23 [2] : vector<2x16x16xf32> to vector<2x16xf32>
    %55 = vector.shape_cast %54 : vector<2x16xf32> to vector<2x16x1xf32>
    %56 = tpu.reciprocal %55 {approx = true} : vector<2x16x1xf32> -> vector<2x16x1xf32>
    %57 = arith.mulf %55, %56 : vector<2x16x1xf32>
    %cst_24 = arith.constant 2.000000e+00 : f32
    %58 = vector.broadcast %cst_24 : f32 to vector<2x16x1xf32>
    %59 = arith.subf %58, %57 : vector<2x16x1xf32>
    %60 = arith.mulf %56, %59 : vector<2x16x1xf32>
    %61 = vector.broadcast %60 : vector<2x16x1xf32> to vector<2x16x16xf32>
    %62 = arith.mulf %53, %61 : vector<2x16x16xf32>
    %cst_25 = arith.constant dense<0.000000e+00> : vector<2x16x8xf32>
    %63 = tpu.matmul %62, %41, %cst_25 {dimension_numbers = #tpu.dot_dimension_numbers<[2], [1], [1], [2], [0, 0, 0, 1, 1, 2], [0], [0]>} : vector<2x16x16xf32>, vector<2x16x8xf32>, vector<2x16x8xf32> -> vector<2x16x8xf32>
    %c0_26 = arith.constant 0 : index
    %c0_27 = arith.constant 0 : index
    %c0_28 = arith.constant 0 : index
    %64 = vector.load %arg19[%c0_26, %c0_27, %c0_28] : memref<2x16x32xf32, #tpu.memory_space<vmem>>, vector<2x16x8xf32>
    tpu.vector_store %arg19[%c0_26, %c0_27, %c0_28], %63 {strides = array<i32>} : memref<2x16x32xf32, #tpu.memory_space<vmem>>, vector<2x16x8xf32>,
    %65 = vector.extract_strided_slice %37 {offsets = [0, 0, 8], sizes = [2, 16, 8], strides = [1, 1, 1]} : vector<2x16x96xf32> to vector<2x16x8xf32>
    %66 = vector.extract_strided_slice %37 {offsets = [0, 0, 40], sizes = [2, 16, 8], strides = [1, 1, 1]} : vector<2x16x96xf32> to vector<2x16x8xf32>
    %67 = vector.extract_strided_slice %37 {offsets = [0, 0, 72], sizes = [2, 16, 8], strides = [1, 1, 1]} : vector<2x16x96xf32> to vector<2x16x8xf32>
    %cst_29 = arith.constant dense<0.000000e+00> : vector<2x16x16xf32>
    %68 = tpu.matmul %65, %66, %cst_29 {dimension_numbers = #tpu.dot_dimension_numbers<[2], [2], [1], [1], [0, 0, 0, 1, 1, 1], [0], [0]>} : vector<2x16x8xf32>, vector<2x16x8xf32>, vector<2x16x16xf32> -> vector<2x16x16xf32>
    %c1 = arith.constant 1 : index
    %c0_30 = arith.constant 0 : index
    %c0_31 = arith.constant 0 : index
    %69 = vector.load %arg5[%c1, %c0_30, %c0_31] : memref<4x16x16xf32, #tpu.memory_space<vmem>>, vector<1x16x16xf32>
    %70 = vector.shape_cast %69 : vector<1x16x16xf32> to vector<16x16xf32>
    %71 = vector.shape_cast %70 : vector<16x16xf32> to vector<1x16x16xf32>
    %72 = vector.broadcast %71 : vector<1x16x16xf32> to vector<2x16x16xf32>
    %73 = arith.addf %68, %72 : vector<2x16x16xf32>
    %74 = arith.addf %73, %38 : vector<2x16x16xf32>
    %cst_32 = arith.constant dense<0xFF800000> : vector<2x16xf32>
    %75 = vector.multi_reduction <maximumf>, %74, %cst_32 [2] : vector<2x16x16xf32> to vector<2x16xf32>
    %76 = vector.shape_cast %75 : vector<2x16xf32> to vector<2x16x1xf32>
    %77 = vector.broadcast %76 : vector<2x16x1xf32> to vector<2x16x16xf32>
    %78 = arith.subf %74, %77 : vector<2x16x16xf32>
    %79 = math.exp %78 : vector<2x16x16xf32>
    %cst_33 = arith.constant dense<0.000000e+00> : vector<2x16xf32>
    %80 = vector.multi_reduction <add>, %79, %cst_33 [2] : vector<2x16x16xf32> to vector<2x16xf32>
    %81 = vector.shape_cast %80 : vector<2x16xf32> to vector<2x16x1xf32>
    %82 = tpu.reciprocal %81 {approx = true} : vector<2x16x1xf32> -> vector<2x16x1xf32>
    %83 = arith.mulf %81, %82 : vector<2x16x1xf32>
    %cst_34 = arith.constant 2.000000e+00 : f32
    %84 = vector.broadcast %cst_34 : f32 to vector<2x16x1xf32>
    %85 = arith.subf %84, %83 : vector<2x16x1xf32>
    %86 = arith.mulf %82, %85 : vector<2x16x1xf32>
    %87 = vector.broadcast %86 : vector<2x16x1xf32> to vector<2x16x16xf32>
    %88 = arith.mulf %79, %87 : vector<2x16x16xf32>
    %cst_35 = arith.constant dense<0.000000e+00> : vector<2x16x8xf32>
    %89 = tpu.matmul %88, %67, %cst_35 {dimension_numbers = #tpu.dot_dimension_numbers<[2], [1], [1], [2], [0, 0, 0, 1, 1, 2], [0], [0]>} : vector<2x16x16xf32>, vector<2x16x8xf32>, vector<2x16x8xf32> -> vector<2x16x8xf32>
    %c0_36 = arith.constant 0 : index
    %c0_37 = arith.constant 0 : index
    %c8 = arith.constant 8 : index
    %90 = vector.load %arg19[%c0_36, %c0_37, %c8] : memref<2x16x32xf32, #tpu.memory_space<vmem>>, vector<2x16x8xf32>
    tpu.vector_store %arg19[%c0_36, %c0_37, %c8], %89 {strides = array<i32>} : memref<2x16x32xf32, #tpu.memory_space<vmem>>, vector<2x16x8xf32>,
    %91 = vector.extract_strided_slice %37 {offsets = [0, 0, 16], sizes = [2, 16, 8], strides = [1, 1, 1]} : vector<2x16x96xf32> to vector<2x16x8xf32>
    %92 = vector.extract_strided_slice %37 {offsets = [0, 0, 48], sizes = [2, 16, 8], strides = [1, 1, 1]} : vector<2x16x96xf32> to vector<2x16x8xf32>
    %93 = vector.extract_strided_slice %37 {offsets = [0, 0, 80], sizes = [2, 16, 8], strides = [1, 1, 1]} : vector<2x16x96xf32> to vector<2x16x8xf32>
    %cst_38 = arith.constant dense<0.000000e+00> : vector<2x16x16xf32>
    %94 = tpu.matmul %91, %92, %cst_38 {dimension_numbers = #tpu.dot_dimension_numbers<[2], [2], [1], [1], [0, 0, 0, 1, 1, 1], [0], [0]>} : vector<2x16x8xf32>, vector<2x16x8xf32>, vector<2x16x16xf32> -> vector<2x16x16xf32>
    %c2 = arith.constant 2 : index
    %c0_39 = arith.constant 0 : index
    %c0_40 = arith.constant 0 : index
    %95 = vector.load %arg5[%c2, %c0_39, %c0_40] : memref<4x16x16xf32, #tpu.memory_space<vmem>>, vector<1x16x16xf32>
    %96 = vector.shape_cast %95 : vector<1x16x16xf32> to vector<16x16xf32>
    %97 = vector.shape_cast %96 : vector<16x16xf32> to vector<1x16x16xf32>
    %98 = vector.broadcast %97 : vector<1x16x16xf32> to vector<2x16x16xf32>
    %99 = arith.addf %94, %98 : vector<2x16x16xf32>
    %100 = arith.addf %99, %38 : vector<2x16x16xf32>
    %cst_41 = arith.constant dense<0xFF800000> : vector<2x16xf32>
    %101 = vector.multi_reduction <maximumf>, %100, %cst_41 [2] : vector<2x16x16xf32> to vector<2x16xf32>
    %102 = vector.shape_cast %101 : vector<2x16xf32> to vector<2x16x1xf32>
    %103 = vector.broadcast %102 : vector<2x16x1xf32> to vector<2x16x16xf32>
    %104 = arith.subf %100, %103 : vector<2x16x16xf32>
    %105 = math.exp %104 : vector<2x16x16xf32>
    %cst_42 = arith.constant dense<0.000000e+00> : vector<2x16xf32>
    %106 = vector.multi_reduction <add>, %105, %cst_42 [2] : vector<2x16x16xf32> to vector<2x16xf32>
    %107 = vector.shape_cast %106 : vector<2x16xf32> to vector<2x16x1xf32>
    %108 = tpu.reciprocal %107 {approx = true} : vector<2x16x1xf32> -> vector<2x16x1xf32>
    %109 = arith.mulf %107, %108 : vector<2x16x1xf32>
    %cst_43 = arith.constant 2.000000e+00 : f32
    %110 = vector.broadcast %cst_43 : f32 to vector<2x16x1xf32>
    %111 = arith.subf %110, %109 : vector<2x16x1xf32>
    %112 = arith.mulf %108, %111 : vector<2x16x1xf32>
    %113 = vector.broadcast %112 : vector<2x16x1xf32> to vector<2x16x16xf32>
    %114 = arith.mulf %105, %113 : vector<2x16x16xf32>
    %cst_44 = arith.constant dense<0.000000e+00> : vector<2x16x8xf32>
    %115 = tpu.matmul %114, %93, %cst_44 {dimension_numbers = #tpu.dot_dimension_numbers<[2], [1], [1], [2], [0, 0, 0, 1, 1, 2], [0], [0]>} : vector<2x16x16xf32>, vector<2x16x8xf32>, vector<2x16x8xf32> -> vector<2x16x8xf32>
    %c0_45 = arith.constant 0 : index
    %c0_46 = arith.constant 0 : index
    %c16 = arith.constant 16 : index
    %116 = vector.load %arg19[%c0_45, %c0_46, %c16] : memref<2x16x32xf32, #tpu.memory_space<vmem>>, vector<2x16x8xf32>
    tpu.vector_store %arg19[%c0_45, %c0_46, %c16], %115 {strides = array<i32>} : memref<2x16x32xf32, #tpu.memory_space<vmem>>, vector<2x16x8xf32>,
    %117 = vector.extract_strided_slice %37 {offsets = [0, 0, 24], sizes = [2, 16, 8], strides = [1, 1, 1]} : vector<2x16x96xf32> to vector<2x16x8xf32>
    %118 = vector.extract_strided_slice %37 {offsets = [0, 0, 56], sizes = [2, 16, 8], strides = [1, 1, 1]} : vector<2x16x96xf32> to vector<2x16x8xf32>
    %119 = vector.extract_strided_slice %37 {offsets = [0, 0, 88], sizes = [2, 16, 8], strides = [1, 1, 1]} : vector<2x16x96xf32> to vector<2x16x8xf32>
    %cst_47 = arith.constant dense<0.000000e+00> : vector<2x16x16xf32>
    %120 = tpu.matmul %117, %118, %cst_47 {dimension_numbers = #tpu.dot_dimension_numbers<[2], [2], [1], [1], [0, 0, 0, 1, 1, 1], [0], [0]>} : vector<2x16x8xf32>, vector<2x16x8xf32>, vector<2x16x16xf32> -> vector<2x16x16xf32>
    %c3 = arith.constant 3 : index
    %c0_48 = arith.constant 0 : index
    %c0_49 = arith.constant 0 : index
    %121 = vector.load %arg5[%c3, %c0_48, %c0_49] : memref<4x16x16xf32, #tpu.memory_space<vmem>>, vector<1x16x16xf32>
    %122 = vector.shape_cast %121 : vector<1x16x16xf32> to vector<16x16xf32>
    %123 = vector.shape_cast %122 : vector<16x16xf32> to vector<1x16x16xf32>
    %124 = vector.broadcast %123 : vector<1x16x16xf32> to vector<2x16x16xf32>
    %125 = arith.addf %120, %124 : vector<2x16x16xf32>
    %126 = arith.addf %125, %38 : vector<2x16x16xf32>
    %cst_50 = arith.constant dense<0xFF800000> : vector<2x16xf32>
    %127 = vector.multi_reduction <maximumf>, %126, %cst_50 [2] : vector<2x16x16xf32> to vector<2x16xf32>
    %128 = vector.shape_cast %127 : vector<2x16xf32> to vector<2x16x1xf32>
    %129 = vector.broadcast %128 : vector<2x16x1xf32> to vector<2x16x16xf32>
    %130 = arith.subf %126, %129 : vector<2x16x16xf32>
    %131 = math.exp %130 : vector<2x16x16xf32>
    %cst_51 = arith.constant dense<0.000000e+00> : vector<2x16xf32>
    %132 = vector.multi_reduction <add>, %131, %cst_51 [2] : vector<2x16x16xf32> to vector<2x16xf32>
    %133 = vector.shape_cast %132 : vector<2x16xf32> to vector<2x16x1xf32>
    %134 = tpu.reciprocal %133 {approx = true} : vector<2x16x1xf32> -> vector<2x16x1xf32>
    %135 = arith.mulf %133, %134 : vector<2x16x1xf32>
    %cst_52 = arith.constant 2.000000e+00 : f32
    %136 = vector.broadcast %cst_52 : f32 to vector<2x16x1xf32>
    %137 = arith.subf %136, %135 : vector<2x16x1xf32>
    %138 = arith.mulf %134, %137 : vector<2x16x1xf32>
    %139 = vector.broadcast %138 : vector<2x16x1xf32> to vector<2x16x16xf32>
    %140 = arith.mulf %131, %139 : vector<2x16x16xf32>
    %cst_53 = arith.constant dense<0.000000e+00> : vector<2x16x8xf32>
    %141 = tpu.matmul %140, %119, %cst_53 {dimension_numbers = #tpu.dot_dimension_numbers<[2], [1], [1], [2], [0, 0, 0, 1, 1, 2], [0], [0]>} : vector<2x16x16xf32>, vector<2x16x8xf32>, vector<2x16x8xf32> -> vector<2x16x8xf32>
    %c0_54 = arith.constant 0 : index
    %c0_55 = arith.constant 0 : index
    %c24 = arith.constant 24 : index
    %142 = vector.load %arg19[%c0_54, %c0_55, %c24] : memref<2x16x32xf32, #tpu.memory_space<vmem>>, vector<2x16x8xf32>
    tpu.vector_store %arg19[%c0_54, %c0_55, %c24], %141 {strides = array<i32>} : memref<2x16x32xf32, #tpu.memory_space<vmem>>, vector<2x16x8xf32>,
    %c0_56 = arith.constant 0 : index
    %c0_57 = arith.constant 0 : index
    %c0_58 = arith.constant 0 : index
    %143 = vector.load %arg19[%c0_56, %c0_57, %c0_58] : memref<2x16x32xf32, #tpu.memory_space<vmem>>, vector<2x16x32xf32>
    %144 = vector.shape_cast %143 : vector<2x16x32xf32> to vector<32x32xf32>
    %c0_59 = arith.constant 0 : index
    %c0_60 = arith.constant 0 : index
    %145 = vector.load %arg10[%c0_59, %c0_60] : memref<32x32xf32, #tpu.memory_space<vmem>>, vector<32x32xf32>
    %cst_61 = arith.constant dense<0.000000e+00> : vector<32x32xf32>
    %146 = tpu.matmul %144, %145, %cst_61 {dimension_numbers = #tpu.dot_dimension_numbers<[1], [0], [0], [1], [0, 0, 1, 1], [], []>} : vector<32x32xf32>, vector<32x32xf32>, vector<32x32xf32> -> vector<32x32xf32>
    %c0_62 = arith.constant 0 : index
    %c0_63 = arith.constant 0 : index
    %147 = vector.load %arg11[%c0_62, %c0_63] : memref<1x32xf32, #tpu.memory_space<vmem>>, vector<1x32xf32>
    %148 = vector.shape_cast %147 : vector<1x32xf32> to vector<32xf32>
    %149 = vector.shape_cast %148 : vector<32xf32> to vector<1x32xf32>
    %150 = vector.broadcast %149 : vector<1x32xf32> to vector<32x32xf32>
    %151 = arith.addf %146, %150 : vector<32x32xf32>
    %c0_64 = arith.constant 0 : index
    %c0_65 = arith.constant 0 : index
    %c0_66 = arith.constant 0 : index
    %152 = vector.load %arg3[%c0_64, %c0_65, %c0_66] : memref<1x32x32xf32, #tpu.memory_space<vmem>>, vector<1x32x32xf32>
    %153 = vector.shape_cast %152 : vector<1x32x32xf32> to vector<32x32xf32>
    %154 = arith.addf %153, %151 : vector<32x32xf32>
    %cst_67 = arith.constant dense<0.000000e+00> : vector<32xf32>
    %155 = vector.multi_reduction <add>, %154, %cst_67 [1] : vector<32x32xf32> to vector<32xf32>
    %156 = vector.shape_cast %155 : vector<32xf32> to vector<32x1xf32>
    %cst_68 = arith.constant 3.200000e+01 : f32
    %157 = vector.broadcast %cst_68 : f32 to vector<32x1xf32>
    %158 = arith.divf %156, %157 : vector<32x1xf32>
    %159 = vector.broadcast %158 : vector<32x1xf32> to vector<32x32xf32>
    %160 = arith.subf %154, %159 : vector<32x32xf32>
    %161 = arith.mulf %160, %160 : vector<32x32xf32>
    %cst_69 = arith.constant dense<0.000000e+00> : vector<32xf32>
    %162 = vector.multi_reduction <add>, %161, %cst_69 [1] : vector<32x32xf32> to vector<32xf32>
    %163 = vector.shape_cast %162 : vector<32xf32> to vector<32x1xf32>
    %cst_70 = arith.constant 3.200000e+01 : f32
    %164 = vector.broadcast %cst_70 : f32 to vector<32x1xf32>
    %165 = arith.divf %163, %164 : vector<32x1xf32>
    %166 = vector.broadcast %158 : vector<32x1xf32> to vector<32x32xf32>
    %167 = arith.subf %154, %166 : vector<32x32xf32>
    %cst_71 = arith.constant 9.99999974E-6 : f32
    %168 = vector.broadcast %cst_71 : f32 to vector<32x1xf32>
    %169 = arith.addf %165, %168 : vector<32x1xf32>
    %170 = math.rsqrt %169 : vector<32x1xf32>
    %171 = vector.broadcast %170 : vector<32x1xf32> to vector<32x32xf32>
    %172 = arith.mulf %167, %171 : vector<32x32xf32>
    %c0_72 = arith.constant 0 : index
    %c0_73 = arith.constant 0 : index
    %173 = vector.load %arg12[%c0_72, %c0_73] : memref<1x32xf32, #tpu.memory_space<vmem>>, vector<1x32xf32>
    %174 = vector.shape_cast %173 : vector<1x32xf32> to vector<32xf32>
    %175 = vector.shape_cast %174 : vector<32xf32> to vector<1x32xf32>
    %176 = vector.broadcast %175 : vector<1x32xf32> to vector<32x32xf32>
    %177 = arith.mulf %172, %176 : vector<32x32xf32>
    %c0_74 = arith.constant 0 : index
    %c0_75 = arith.constant 0 : index
    %178 = vector.load %arg13[%c0_74, %c0_75] : memref<1x32xf32, #tpu.memory_space<vmem>>, vector<1x32xf32>
    %179 = vector.shape_cast %178 : vector<1x32xf32> to vector<32xf32>
    %180 = vector.shape_cast %179 : vector<32xf32> to vector<1x32xf32>
    %181 = vector.broadcast %180 : vector<1x32xf32> to vector<32x32xf32>
    %182 = arith.addf %177, %181 : vector<32x32xf32>
    %c0_76 = arith.constant 0 : index
    %c0_77 = arith.constant 0 : index
    %183 = vector.load %arg14[%c0_76, %c0_77] : memref<32x64xf32, #tpu.memory_space<vmem>>, vector<32x64xf32>
    %cst_78 = arith.constant dense<0.000000e+00> : vector<32x64xf32>
    %184 = tpu.matmul %182, %183, %cst_78 {dimension_numbers = #tpu.dot_dimension_numbers<[1], [0], [0], [1], [0, 0, 1, 1], [], []>} : vector<32x32xf32>, vector<32x64xf32>, vector<32x64xf32> -> vector<32x64xf32>
    %c0_79 = arith.constant 0 : index
    %c0_80 = arith.constant 0 : index
    %185 = vector.load %arg15[%c0_79, %c0_80] : memref<1x64xf32, #tpu.memory_space<vmem>>, vector<1x64xf32>
    %186 = vector.shape_cast %185 : vector<1x64xf32> to vector<64xf32>
    %187 = vector.shape_cast %186 : vector<64xf32> to vector<1x64xf32>
    %188 = vector.broadcast %187 : vector<1x64xf32> to vector<32x64xf32>
    %189 = arith.addf %184, %188 : vector<32x64xf32>
    %cst_81 = arith.constant 5.000000e-01 : f32
    %190 = vector.broadcast %cst_81 : f32 to vector<32x64xf32>
    %191 = arith.mulf %190, %189 : vector<32x64xf32>
    %cst_82 = arith.constant 0.707106769 : f32
    %192 = vector.broadcast %cst_82 : f32 to vector<32x64xf32>
    %193 = arith.mulf %189, %192 : vector<32x64xf32>
    %194 = math.erf %193 : vector<32x64xf32>
    %cst_83 = arith.constant 1.000000e+00 : f32
    %195 = vector.broadcast %cst_83 : f32 to vector<32x64xf32>
    %196 = arith.addf %195, %194 : vector<32x64xf32>
    %197 = arith.mulf %191, %196 : vector<32x64xf32>
    %c0_84 = arith.constant 0 : index
    %c0_85 = arith.constant 0 : index
    %198 = vector.load %arg16[%c0_84, %c0_85] : memref<64x32xf32, #tpu.memory_space<vmem>>, vector<64x32xf32>
    %cst_86 = arith.constant dense<0.000000e+00> : vector<32x32xf32>
    %199 = tpu.matmul %197, %198, %cst_86 {dimension_numbers = #tpu.dot_dimension_numbers<[1], [0], [0], [1], [0, 0, 1, 1], [], []>} : vector<32x64xf32>, vector<64x32xf32>, vector<32x32xf32> -> vector<32x32xf32>
    %c0_87 = arith.constant 0 : index
    %c0_88 = arith.constant 0 : index
    %200 = vector.load %arg17[%c0_87, %c0_88] : memref<1x32xf32, #tpu.memory_space<vmem>>, vector<1x32xf32>
    %201 = vector.shape_cast %200 : vector<1x32xf32> to vector<32xf32>
    %202 = vector.shape_cast %201 : vector<32xf32> to vector<1x32xf32>
    %203 = vector.broadcast %202 : vector<1x32xf32> to vector<32x32xf32>
    %204 = arith.addf %199, %203 : vector<32x32xf32>
    %205 = arith.addf %204, %154 : vector<32x32xf32>
    %206 = vector.shape_cast %205 : vector<32x32xf32> to vector<1x32x32xf32>
    %c0_89 = arith.constant 0 : index
    %c0_90 = arith.constant 0 : index
    %c0_91 = arith.constant 0 : index
    %207 = vector.load %arg18[%c0_89, %c0_90, %c0_91] : memref<1x32x32xf32, #tpu.memory_space<vmem>>, vector<1x32x32xf32>
    tpu.vector_store %arg18[%c0_89, %c0_90, %c0_91], %206 {strides = array<i32>} : memref<1x32x32xf32, #tpu.memory_space<vmem>>, vector<1x32x32xf32>,
    return
  }
  func.func @transform_0(%arg0: i32, %arg1: i32) -> (i32, i32, i32) {
    %c0_i32 = arith.constant 0 : i32
    %c0_i32_0 = arith.constant 0 : i32
    return %arg0, %arg1, %c0_i32 : i32, i32, i32
  }
  func.func @transform_1(%arg0: i32, %arg1: i32) -> (i32, i32, i32) {
    %c0_i32 = arith.constant 0 : i32
    %c0_i32_0 = arith.constant 0 : i32
    return %arg0, %arg1, %c0_i32 : i32, i32, i32
  }
  func.func @transform_2(%arg0: i32, %arg1: i32) -> (i32, i32, i32) {
    %c0_i32 = arith.constant 0 : i32
    %c0_i32_0 = arith.constant 0 : i32
    %c0_i32_1 = arith.constant 0 : i32
    return %arg1, %c0_i32, %c0_i32_0 : i32, i32, i32
  }
  func.func @transform_3(%arg0: i32, %arg1: i32) -> (i32, i32, i32) {
    %c0_i32 = arith.constant 0 : i32
    %c0_i32_0 = arith.constant 0 : i32
    %c0_i32_1 = arith.constant 0 : i32
    %c0_i32_2 = arith.constant 0 : i32
    return %c0_i32, %c0_i32_0, %c0_i32_1 : i32, i32, i32
  }
  func.func @transform_4(%arg0: i32, %arg1: i32) -> (i32, i32) {
    %c0_i32 = arith.constant 0 : i32
    %c0_i32_0 = arith.constant 0 : i32
    %c0_i32_1 = arith.constant 0 : i32
    return %c0_i32, %c0_i32_0 : i32, i32
  }
  func.func @transform_5(%arg0: i32, %arg1: i32) -> (i32, i32) {
    %c0_i32 = arith.constant 0 : i32
    %c0_i32_0 = arith.constant 0 : i32
    %c0_i32_1 = arith.constant 0 : i32
    return %c0_i32, %c0_i32_0 : i32, i32
  }
  func.func @transform_6(%arg0: i32, %arg1: i32) -> (i32, i32) {
    %c0_i32 = arith.constant 0 : i32
    %c0_i32_0 = arith.constant 0 : i32
    %c0_i32_1 = arith.constant 0 : i32
    return %c0_i32, %c0_i32_0 : i32, i32
  }
  func.func @transform_7(%arg0: i32, %arg1: i32) -> (i32, i32) {
    %c0_i32 = arith.constant 0 : i32
    %c0_i32_0 = arith.constant 0 : i32
    %c0_i32_1 = arith.constant 0 : i32
    return %c0_i32, %c0_i32_0 : i32, i32
  }
  func.func @transform_8(%arg0: i32, %arg1: i32) -> (i32, i32) {
    %c0_i32 = arith.constant 0 : i32
    %c0_i32_0 = arith.constant 0 : i32
    %c0_i32_1 = arith.constant 0 : i32
    return %c0_i32, %c0_i32_0 : i32, i32
  }
  func.func @transform_9(%arg0: i32, %arg1: i32) -> (i32, i32) {
    %c0_i32 = arith.constant 0 : i32
    %c0_i32_0 = arith.constant 0 : i32
    %c0_i32_1 = arith.constant 0 : i32
    return %c0_i32, %c0_i32_0 : i32, i32
  }
  func.func @transform_10(%arg0: i32, %arg1: i32) -> (i32, i32) {
    %c0_i32 = arith.constant 0 : i32
    %c0_i32_0 = arith.constant 0 : i32
    %c0_i32_1 = arith.constant 0 : i32
    return %c0_i32, %c0_i32_0 : i32, i32
  }
  func.func @transform_11(%arg0: i32, %arg1: i32) -> (i32, i32) {
    %c0_i32 = arith.constant 0 : i32
    %c0_i32_0 = arith.constant 0 : i32
    %c0_i32_1 = arith.constant 0 : i32
    return %c0_i32, %c0_i32_0 : i32, i32
  }
  func.func @transform_12(%arg0: i32, %arg1: i32) -> (i32, i32) {
    %c0_i32 = arith.constant 0 : i32
    %c0_i32_0 = arith.constant 0 : i32
    %c0_i32_1 = arith.constant 0 : i32
    return %c0_i32, %c0_i32_0 : i32, i32
  }
  func.func @transform_13(%arg0: i32, %arg1: i32) -> (i32, i32) {
    %c0_i32 = arith.constant 0 : i32
    %c0_i32_0 = arith.constant 0 : i32
    %c0_i32_1 = arith.constant 0 : i32
    return %c0_i32, %c0_i32_0 : i32, i32
  }
  func.func @transform_14(%arg0: i32, %arg1: i32) -> (i32, i32) {
    %c0_i32 = arith.constant 0 : i32
    %c0_i32_0 = arith.constant 0 : i32
    %c0_i32_1 = arith.constant 0 : i32
    return %c0_i32, %c0_i32_0 : i32, i32
  }
  func.func @transform_15(%arg0: i32, %arg1: i32) -> (i32, i32) {
    %c0_i32 = arith.constant 0 : i32
    %c0_i32_0 = arith.constant 0 : i32
    %c0_i32_1 = arith.constant 0 : i32
    return %c0_i32, %c0_i32_0 : i32, i32
  }
  func.func @transform_16(%arg0: i32, %arg1: i32) -> (i32, i32, i32) {
    %c0_i32 = arith.constant 0 : i32
    %c0_i32_0 = arith.constant 0 : i32
    return %arg0, %arg1, %c0_i32 : i32, i32, i32
  }
}

</mosaic_0001>

<llo_original>
// kernel: swin_block_forward.1
$region0: #{swin_block_forward.1}
  #allocation0 [shape = 'u32[]', space=smem, size = 0x4, offset = 0x4, fixed_abs, tag = 'smem constant byte address 0x4 - core index']
  #allocation1 [shape = 'u32[144,128]{1,0:T(1,128)}', space=vmem, size = 0x12000, scoped, tag = 'internal scratch']
  #allocation2 [shape = 'f32[2,16,32]{2,1,0:T(8,128)}', space=vmem, size = 0x4000, scoped, tag = 'scratch operand']
  %s0 = inlined_call_operand.vmem [shape: f32[2,64,32], index: 0, kind: input, shape index: {}]
  %s1 = inlined_call_operand.vmem [shape: f32[2,64,32], index: 1, kind: input, shape index: {}]
  %s2 = inlined_call_operand.vmem [shape: f32[4,16,16], index: 2, kind: input, shape index: {}]
  %s3 = inlined_call_operand.vmem [shape: f32[4,16,16], index: 3, kind: input, shape index: {}]
  %s4 = inlined_call_operand.vmem [shape: f32[1,32], index: 4, kind: input, shape index: {}]
  %s5 = inlined_call_operand.vmem [shape: f32[1,32], index: 5, kind: input, shape index: {}]
  %s6 = inlined_call_operand.vmem [shape: f32[32,96], index: 6, kind: input, shape index: {}]
  %s7 = inlined_call_operand.vmem [shape: f32[1,96], index: 7, kind: input, shape index: {}]
  %s8 = inlined_call_operand.vmem [shape: f32[32,32], index: 8, kind: input, shape index: {}]
  %s9 = inlined_call_operand.vmem [shape: f32[1,32], index: 9, kind: input, shape index: {}]
  %s10 = inlined_call_operand.vmem [shape: f32[1,32], index: 10, kind: input, shape index: {}]
  %s11 = inlined_call_operand.vmem [shape: f32[1,32], index: 11, kind: input, shape index: {}]
  %s12 = inlined_call_operand.vmem [shape: f32[32,64], index: 12, kind: input, shape index: {}]
  %s13 = inlined_call_operand.vmem [shape: f32[1,64], index: 13, kind: input, shape index: {}]
  %s14 = inlined_call_operand.vmem [shape: f32[64,32], index: 14, kind: input, shape index: {}]
  %s15 = inlined_call_operand.vmem [shape: f32[1,32], index: 15, kind: input, shape index: {}]
  %s16 = inlined_call_operand.vmem [shape: f32[2,64,32], index: 16, kind: output, shape index: {}]
  %s17 = sld [smem:[#allocation0]]
  $region97: #{swin_block_forward.1} parent=0
    _
  %s19 = ssub.s32 1, %s17
  %s20 = scalar_select 0, %s19, %s17
  loop: start=0, step=1, limit=6
  $region2: #{swin_block_forward.1} parent=0 // loop_pre_header
    _
  $region3: #{swin_block_forward.1} parent=0 // loop_header
    %s22 = sphi 0, %s26
    %p23 = scmp.ge.s32.totalorder %s22, 6
    %s29 = sphi 0, %s41
    %s30 = sphi 0, %s37
    %s31 = sphi 0, %s29
    %s32 = sphi 0, %s30
    %s33 = sphi 0, %s31
    %s34 = sphi 0, %s32
    %s46 = sphi 0, %s48
    %s49 = sphi 0, %s46
    %s50 = sphi 0, %s49
    %s66 = sphi 0, %s50
    %s74 = sphi 0, %s76
    %s77 = sphi 0, %s74
    %s78 = sphi 0, %s77
    %s94 = sphi 0, %s78
    %s100 = sphi 0, %s102
    %s103 = sphi 0, %s100
    %s104 = sphi 0, %s103
    %s120 = sphi 0, %s104
    %s124 = sphi 0, %s124
    %s126 = sphi 0, %s124
    %s127 = sphi 0, %s126
    %s141 = sphi 0, %s127
    %s145 = sphi 0, %s145
    %s147 = sphi 0, %s145
    %s148 = sphi 0, %s147
    %s162 = sphi 0, %s148
    %s166 = sphi 0, %s166
    %s168 = sphi 0, %s166
    %s169 = sphi 0, %s168
    %s183 = sphi 0, %s169
    %s187 = sphi 0, %s187
    %s189 = sphi 0, %s187
    %s190 = sphi 0, %s189
    %s204 = sphi 0, %s190
    %s208 = sphi 0, %s208
    %s210 = sphi 0, %s208
    %s211 = sphi 0, %s210
    %s225 = sphi 0, %s211
    %s229 = sphi 0, %s229
    %s231 = sphi 0, %s229
    %s232 = sphi 0, %s231
    %s246 = sphi 0, %s232
    %s250 = sphi 0, %s250
    %s252 = sphi 0, %s250
    %s253 = sphi 0, %s252
    %s267 = sphi 0, %s253
    %s271 = sphi 0, %s271
    %s273 = sphi 0, %s271
    %s274 = sphi 0, %s273
    %s288 = sphi 0, %s274
    %s292 = sphi 0, %s292
    %s294 = sphi 0, %s292
    %s295 = sphi 0, %s294
    %s309 = sphi 0, %s295
    %s313 = sphi 0, %s313
    %s315 = sphi 0, %s313
    %s316 = sphi 0, %s315
    %s330 = sphi 0, %s316
    %s334 = sphi 0, %s334
    %s336 = sphi 0, %s334
    %s337 = sphi 0, %s336
    %s351 = sphi 0, %s337
    %s355 = sphi 0, %s355
    %s357 = sphi 0, %s355
    %s358 = sphi 0, %s357
    %s372 = sphi 0, %s358
    %s376 = sphi 0, %s376
    %s378 = sphi 0, %s376
    %s379 = sphi 0, %s378
    %s393 = sphi 0, %s379
    %s401 = sphi 0, %s403
    %s404 = sphi 0, %s401
    %s405 = sphi 0, %s404
    %s421 = sphi 0, %s405
  $region4: #{swin_block_forward.1} parent=0 // loop_header_branch
    %25 = sbr.rel (%p23) target = $region8
  $region5: #{swin_block_forward.1} parent=0 // loop_body
    %s27 = ssub.s32 %s22, 1
    %s28 = ssub.s32 %s22, 2
    %s35 = sadd.s32 1, %s30
    %p36 = scmp.ge.s32.totalorder %s35, 2
    %s37 = scalar_select %p36, 0, %s35
    %s38 = sadd.s32 1, %s29
    %s39 = scalar_select %p36, %s38, %s29
    %p40 = scmp.ge.s32.totalorder %s39, 2
    %s41 = scalar_select %p40, 0, %s39
    %s42 = ssub.s32 %s29, %s41
    %s43 = ssub.s32 %s30, %s37
    %s44 = sor.u32 %s42, %s43
    %p45 = scmp.eq.s32.totalorder %s44, 0
    %s47 = sadd.s32 %s46, 1
    %s48 = scalar_select %p45, %s46, %s47
    %p51 = pneg %p45
    %p52 = scmp.eq.s32.totalorder %s22, 3
    %p53 = por %p51, %p52
    %p54 = scmp.ne.s32.totalorder %s46, %s49
    %p55 = scmp.eq.s32.totalorder %s22, 0
    %p56 = por %p54, %p55
    %p57 = scmp.ne.s32.totalorder %s46, %s49
    %p58 = scmp.eq.s32.totalorder %s27, 3
    %p59 = por %p57, %p58
    %p60 = scmp.ne.s32.totalorder %s49, %s50
    %p61 = scmp.eq.s32.totalorder %s27, 0
    %p62 = por %p60, %p61
    %p63 = scmp.ne.s32.totalorder %s49, %s50
    %p64 = scmp.eq.s32.totalorder %s28, 3
    %p65 = por %p63, %p64
    %p67 = scmp.ne.s32.totalorder %s50, %s66
    %p68 = scmp.eq.s32.totalorder %s28, 0
    %p69 = por %p67, %p68
    %s70 = ssub.s32 %s29, %s41
    %s71 = ssub.s32 %s30, %s37
    %s72 = sor.u32 %s70, %s71
    %p73 = scmp.eq.s32.totalorder %s72, 0
    %s75 = sadd.s32 %s74, 1
    %s76 = scalar_select %p73, %s74, %s75
    %p79 = pneg %p73
    %p80 = scmp.eq.s32.totalorder %s22, 3
    %p81 = por %p79, %p80
    %p82 = scmp.ne.s32.totalorder %s74, %s77
    %p83 = scmp.eq.s32.totalorder %s22, 0
    %p84 = por %p82, %p83
    %p85 = scmp.ne.s32.totalorder %s74, %s77
    %p86 = scmp.eq.s32.totalorder %s27, 3
    %p87 = por %p85, %p86
    %p88 = scmp.ne.s32.totalorder %s77, %s78
    %p89 = scmp.eq.s32.totalorder %s27, 0
    %p90 = por %p88, %p89
    %p91 = scmp.ne.s32.totalorder %s77, %s78
    %p92 = scmp.eq.s32.totalorder %s28, 3
    %p93 = por %p91, %p92
    %p95 = scmp.ne.s32.totalorder %s78, %s94
    %p96 = scmp.eq.s32.totalorder %s28, 0
    %p97 = por %p95, %p96
    %s98 = ssub.s32 %s30, %s37
    %p99 = scmp.eq.s32.totalorder %s98, 0
    %s101 = sadd.s32 %s100, 1
    %s102 = scalar_select %p99, %s100, %s101
    %p105 = pneg %p99
    %p106 = scmp.eq.s32.totalorder %s22, 3
    %p107 = por %p105, %p106
    %p108 = scmp.ne.s32.totalorder %s100, %s103
    %p109 = scmp.eq.s32.totalorder %s22, 0
    %p110 = por %p108, %p109
    %p111 = scmp.ne.s32.totalorder %s100, %s103
    %p112 = scmp.eq.s32.totalorder %s27, 3
    %p113 = por %p111, %p112
    %p114 = scmp.ne.s32.totalorder %s103, %s104
    %p115 = scmp.eq.s32.totalorder %s27, 0
    %p116 = por %p114, %p115
    %p117 = scmp.ne.s32.totalorder %s103, %s104
    %p118 = scmp.eq.s32.totalorder %s28, 3
    %p119 = por %p117, %p118
    %p121 = scmp.ne.s32.totalorder %s104, %s120
    %p122 = scmp.eq.s32.totalorder %s28, 0
    %p123 = por %p121, %p122
    %s125 = sadd.s32 %s124, 1
    %p128 = scmp.eq.s32.totalorder %s22, 3
    %p129 = scmp.ne.s32.totalorder %s124, %s126
    %p130 = scmp.eq.s32.totalorder %s22, 0
    %p131 = por %p129, %p130
    %p132 = scmp.ne.s32.totalorder %s124, %s126
    %p133 = scmp.eq.s32.totalorder %s27, 3
    %p134 = por %p132, %p133
    %p135 = scmp.ne.s32.totalorder %s126, %s127
    %p136 = scmp.eq.s32.totalorder %s27, 0
    %p137 = por %p135, %p136
    %p138 = scmp.ne.s32.totalorder %s126, %s127
    %p139 = scmp.eq.s32.totalorder %s28, 3
    %p140 = por %p138, %p139
    %p142 = scmp.ne.s32.totalorder %s127, %s141
    %p143 = scmp.eq.s32.totalorder %s28, 0
    %p144 = por %p142, %p143
    %s146 = sadd.s32 %s145, 1
    %p149 = scmp.eq.s32.totalorder %s22, 3
    %p150 = scmp.ne.s32.totalorder %s145, %s147
    %p151 = scmp.eq.s32.totalorder %s22, 0
    %p152 = por %p150, %p151
    %p153 = scmp.ne.s32.totalorder %s145, %s147
    %p154 = scmp.eq.s32.totalorder %s27, 3
    %p155 = por %p153, %p154
    %p156 = scmp.ne.s32.totalorder %s147, %s148
    %p157 = scmp.eq.s32.totalorder %s27, 0
    %p158 = por %p156, %p157
    %p159 = scmp.ne.s32.totalorder %s147, %s148
    %p160 = scmp.eq.s32.totalorder %s28, 3
    %p161 = por %p159, %p160
    %p163 = scmp.ne.s32.totalorder %s148, %s162
    %p164 = scmp.eq.s32.totalorder %s28, 0
    %p165 = por %p163, %p164
    %s167 = sadd.s32 %s166, 1
    %p170 = scmp.eq.s32.totalorder %s22, 3
    %p171 = scmp.ne.s32.totalorder %s166, %s168
    %p172 = scmp.eq.s32.totalorder %s22, 0
    %p173 = por %p171, %p172
    %p174 = scmp.ne.s32.totalorder %s166, %s168
    %p175 = scmp.eq.s32.totalorder %s27, 3
    %p176 = por %p174, %p175
    %p177 = scmp.ne.s32.totalorder %s168, %s169
    %p178 = scmp.eq.s32.totalorder %s27, 0
    %p179 = por %p177, %p178
    %p180 = scmp.ne.s32.totalorder %s168, %s169
    %p181 = scmp.eq.s32.totalorder %s28, 3
    %p182 = por %p180, %p181
    %p184 = scmp.ne.s32.totalorder %s169, %s183
    %p185 = scmp.eq.s32.totalorder %s28, 0
    %p186 = por %p184, %p185
    %s188 = sadd.s32 %s187, 1
    %p191 = scmp.eq.s32.totalorder %s22, 3
    %p192 = scmp.ne.s32.totalorder %s187, %s189
    %p193 = scmp.eq.s32.totalorder %s22, 0
    %p194 = por %p192, %p193
    %p195 = scmp.ne.s32.totalorder %s187, %s189
    %p196 = scmp.eq.s32.totalorder %s27, 3
    %p197 = por %p195, %p196
    %p198 = scmp.ne.s32.totalorder %s189, %s190
    %p199 = scmp.eq.s32.totalorder %s27, 0
    %p200 = por %p198, %p199
    %p201 = scmp.ne.s32.totalorder %s189, %s190
    %p202 = scmp.eq.s32.totalorder %s28, 3
    %p203 = por %p201, %p202
    %p205 = scmp.ne.s32.totalorder %s190, %s204
    %p206 = scmp.eq.s32.totalorder %s28, 0
    %p207 = por %p205, %p206
    %s209 = sadd.s32 %s208, 1
    %p212 = scmp.eq.s32.totalorder %s22, 3
    %p213 = scmp.ne.s32.totalorder %s208, %s210
    %p214 = scmp.eq.s32.totalorder %s22, 0
    %p215 = por %p213, %p214
    %p216 = scmp.ne.s32.totalorder %s208, %s210
    %p217 = scmp.eq.s32.totalorder %s27, 3
    %p218 = por %p216, %p217
    %p219 = scmp.ne.s32.totalorder %s210, %s211
    %p220 = scmp.eq.s32.totalorder %s27, 0
    %p221 = por %p219, %p220
    %p222 = scmp.ne.s32.totalorder %s210, %s211
    %p223 = scmp.eq.s32.totalorder %s28, 3
    %p224 = por %p222, %p223
    %p226 = scmp.ne.s32.totalorder %s211, %s225
    %p227 = scmp.eq.s32.totalorder %s28, 0
    %p228 = por %p226, %p227
    %s230 = sadd.s32 %s229, 1
    %p233 = scmp.eq.s32.totalorder %s22, 3
    %p234 = scmp.ne.s32.totalorder %s229, %s231
    %p235 = scmp.eq.s32.totalorder %s22, 0
    %p236 = por %p234, %p235
    %p237 = scmp.ne.s32.totalorder %s229, %s231
    %p238 = scmp.eq.s32.totalorder %s27, 3
    %p239 = por %p237, %p238
    %p240 = scmp.ne.s32.totalorder %s231, %s232
    %p241 = scmp.eq.s32.totalorder %s27, 0
    %p242 = por %p240, %p241
    %p243 = scmp.ne.s32.totalorder %s231, %s232
    %p244 = scmp.eq.s32.totalorder %s28, 3
    %p245 = por %p243, %p244
    %p247 = scmp.ne.s32.totalorder %s232, %s246
    %p248 = scmp.eq.s32.totalorder %s28, 0
    %p249 = por %p247, %p248
    %s251 = sadd.s32 %s250, 1
    %p254 = scmp.eq.s32.totalorder %s22, 3
    %p255 = scmp.ne.s32.totalorder %s250, %s252
    %p256 = scmp.eq.s32.totalorder %s22, 0
    %p257 = por %p255, %p256
    %p258 = scmp.ne.s32.totalorder %s250, %s252
    %p259 = scmp.eq.s32.totalorder %s27, 3
    %p260 = por %p258, %p259
    %p261 = scmp.ne.s32.totalorder %s252, %s253
    %p262 = scmp.eq.s32.totalorder %s27, 0
    %p263 = por %p261, %p262
    %p264 = scmp.ne.s32.totalorder %s252, %s253
    %p265 = scmp.eq.s32.totalorder %s28, 3
    %p266 = por %p264, %p265
    %p268 = scmp.ne.s32.totalorder %s253, %s267
    %p269 = scmp.eq.s32.totalorder %s28, 0
    %p270 = por %p268, %p269
    %s272 = sadd.s32 %s271, 1
    %p275 = scmp.eq.s32.totalorder %s22, 3
    %p276 = scmp.ne.s32.totalorder %s271, %s273
    %p277 = scmp.eq.s32.totalorder %s22, 0
    %p278 = por %p276, %p277
    %p279 = scmp.ne.s32.totalorder %s271, %s273
    %p280 = scmp.eq.s32.totalorder %s27, 3
    %p281 = por %p279, %p280
    %p282 = scmp.ne.s32.totalorder %s273, %s274
    %p283 = scmp.eq.s32.totalorder %s27, 0
    %p284 = por %p282, %p283
    %p285 = scmp.ne.s32.totalorder %s273, %s274
    %p286 = scmp.eq.s32.totalorder %s28, 3
    %p287 = por %p285, %p286
    %p289 = scmp.ne.s32.totalorder %s274, %s288
    %p290 = scmp.eq.s32.totalorder %s28, 0
    %p291 = por %p289, %p290
    %s293 = sadd.s32 %s292, 1
    %p296 = scmp.eq.s32.totalorder %s22, 3
    %p297 = scmp.ne.s32.totalorder %s292, %s294
    %p298 = scmp.eq.s32.totalorder %s22, 0
    %p299 = por %p297, %p298
    %p300 = scmp.ne.s32.totalorder %s292, %s294
    %p301 = scmp.eq.s32.totalorder %s27, 3
    %p302 = por %p300, %p301
    %p303 = scmp.ne.s32.totalorder %s294, %s295
    %p304 = scmp.eq.s32.totalorder %s27, 0
    %p305 = por %p303, %p304
    %p306 = scmp.ne.s32.totalorder %s294, %s295
    %p307 = scmp.eq.s32.totalorder %s28, 3
    %p308 = por %p306, %p307
    %p310 = scmp.ne.s32.totalorder %s295, %s309
    %p311 = scmp.eq.s32.totalorder %s28, 0
    %p312 = por %p310, %p311
    %s314 = sadd.s32 %s313, 1
    %p317 = scmp.eq.s32.totalorder %s22, 3
    %p318 = scmp.ne.s32.totalorder %s313, %s315
    %p319 = scmp.eq.s32.totalorder %s22, 0
    %p320 = por %p318, %p319
    %p321 = scmp.ne.s32.totalorder %s313, %s315
    %p322 = scmp.eq.s32.totalorder %s27, 3
    %p323 = por %p321, %p322
    %p324 = scmp.ne.s32.totalorder %s315, %s316
    %p325 = scmp.eq.s32.totalorder %s27, 0
    %p326 = por %p324, %p325
    %p327 = scmp.ne.s32.totalorder %s315, %s316
    %p328 = scmp.eq.s32.totalorder %s28, 3
    %p329 = por %p327, %p328
    %p331 = scmp.ne.s32.totalorder %s316, %s330
    %p332 = scmp.eq.s32.totalorder %s28, 0
    %p333 = por %p331, %p332
    %s335 = sadd.s32 %s334, 1
    %p338 = scmp.eq.s32.totalorder %s22, 3
    %p339 = scmp.ne.s32.totalorder %s334, %s336
    %p340 = scmp.eq.s32.totalorder %s22, 0
    %p341 = por %p339, %p340
    %p342 = scmp.ne.s32.totalorder %s334, %s336
    %p343 = scmp.eq.s32.totalorder %s27, 3
    %p344 = por %p342, %p343
    %p345 = scmp.ne.s32.totalorder %s336, %s337
    %p346 = scmp.eq.s32.totalorder %s27, 0
    %p347 = por %p345, %p346
    %p348 = scmp.ne.s32.totalorder %s336, %s337
    %p349 = scmp.eq.s32.totalorder %s28, 3
    %p350 = por %p348, %p349
    %p352 = scmp.ne.s32.totalorder %s337, %s351
    %p353 = scmp.eq.s32.totalorder %s28, 0
    %p354 = por %p352, %p353
    %s356 = sadd.s32 %s355, 1
    %p359 = scmp.eq.s32.totalorder %s22, 3
    %p360 = scmp.ne.s32.totalorder %s355, %s357
    %p361 = scmp.eq.s32.totalorder %s22, 0
    %p362 = por %p360, %p361
    %p363 = scmp.ne.s32.totalorder %s355, %s357
    %p364 = scmp.eq.s32.totalorder %s27, 3
    %p365 = por %p363, %p364
    %p366 = scmp.ne.s32.totalorder %s357, %s358
    %p367 = scmp.eq.s32.totalorder %s27, 0
    %p368 = por %p366, %p367
    %p369 = scmp.ne.s32.totalorder %s357, %s358
    %p370 = scmp.eq.s32.totalorder %s28, 3
    %p371 = por %p369, %p370
    %p373 = scmp.ne.s32.totalorder %s358, %s372
    %p374 = scmp.eq.s32.totalorder %s28, 0
    %p375 = por %p373, %p374
    %s377 = sadd.s32 %s376, 1
    %p380 = scmp.eq.s32.totalorder %s22, 3
    %p381 = scmp.ne.s32.totalorder %s376, %s378
    %p382 = scmp.eq.s32.totalorder %s22, 0
    %p383 = por %p381, %p382
    %p384 = scmp.ne.s32.totalorder %s376, %s378
    %p385 = scmp.eq.s32.totalorder %s27, 3
    %p386 = por %p384, %p385
    %p387 = scmp.ne.s32.totalorder %s378, %s379
    %p388 = scmp.eq.s32.totalorder %s27, 0
    %p389 = por %p387, %p388
    %p390 = scmp.ne.s32.totalorder %s378, %s379
    %p391 = scmp.eq.s32.totalorder %s28, 3
    %p392 = por %p390, %p391
    %p394 = scmp.ne.s32.totalorder %s379, %s393
    %p395 = scmp.eq.s32.totalorder %s28, 0
    %p396 = por %p394, %p395
    %s397 = ssub.s32 %s29, %s41
    %s398 = ssub.s32 %s30, %s37
    %s399 = sor.u32 %s397, %s398
    %p400 = scmp.eq.s32.totalorder %s399, 0
    %s402 = sadd.s32 %s401, 1
    %s403 = scalar_select %p400, %s401, %s402
    %p406 = pneg %p400
    %p407 = scmp.eq.s32.totalorder %s22, 3
    %p408 = por %p406, %p407
    %p409 = scmp.ne.s32.totalorder %s401, %s404
    %p410 = scmp.eq.s32.totalorder %s22, 0
    %p411 = por %p409, %p410
    %p412 = scmp.ne.s32.totalorder %s401, %s404
    %p413 = scmp.eq.s32.totalorder %s27, 3
    %p414 = por %p412, %p413
    %p415 = scmp.ne.s32.totalorder %s404, %s405
    %p416 = scmp.eq.s32.totalorder %s27, 0
    %p417 = por %p415, %p416
    %p418 = scmp.ne.s32.totalorder %s404, %s405
    %p419 = scmp.eq.s32.totalorder %s28, 3
    %p420 = por %p418, %p419
    %p422 = scmp.ne.s32.totalorder %s405, %s421
    %p423 = scmp.eq.s32.totalorder %s28, 0
    %p424 = por %p422, %p423
    %p425 = scmp.le.s32.totalorder 1, %s22
    %p426 = scmp.lt.s32.totalorder %s22, 5
    %p427 = pnand %p425, %p426
    %p428 = pneg %p427
    // Predicated region
    $region9: #{swin_block_forward.1} parent=5 // pred_check
      _
    $region10: #{swin_block_forward.1} parent=5 // pred_check_branch
      %430 = sbr.rel (%p427) target = $region12
    $region11: #{swin_block_forward.1} parent=5 // pred_region
      %s431 = ssub.s32 %s22, 1
      // Predicated region
      $region13: #{swin_block_forward.1} parent=11 // pred_check
        %p432 = pneg %p137
      $region14: #{swin_block_forward.1} parent=11 // pred_check_branch
        %434 = sbr.rel (%p432) target = $region16
      $region15: #{swin_block_forward.1} parent=11 // pred_region
        _
      $region16: #{swin_block_forward.1} parent=11 // pred_fallthru
        _
      // Predicated region
      $region17: #{swin_block_forward.1} parent=11 // pred_check
        %p435 = pneg %p158
      $region18: #{swin_block_forward.1} parent=11 // pred_check_branch
        %437 = sbr.rel (%p435) target = $region20
      $region19: #{swin_block_forward.1} parent=11 // pred_region
        _
      $region20: #{swin_block_forward.1} parent=11 // pred_fallthru
        _
      // Predicated region
      $region21: #{swin_block_forward.1} parent=11 // pred_check
        %p438 = pneg %p179
      $region22: #{swin_block_forward.1} parent=11 // pred_check_branch
        %440 = sbr.rel (%p438) target = $region24
      $region23: #{swin_block_forward.1} parent=11 // pred_region
        _
      $region24: #{swin_block_forward.1} parent=11 // pred_fallthru
        _
      // Predicated region
      $region25: #{swin_block_forward.1} parent=11 // pred_check
        %p441 = pneg %p200
      $region26: #{swin_block_forward.1} parent=11 // pred_check_branch
        %443 = sbr.rel (%p441) target = $region28
      $region27: #{swin_block_forward.1} parent=11 // pred_region
        _
      $region28: #{swin_block_forward.1} parent=11 // pred_fallthru
        _
      // Predicated region
      $region29: #{swin_block_forward.1} parent=11 // pred_check
        %p444 = pneg %p221
      $region30: #{swin_block_forward.1} parent=11 // pred_check_branch
        %446 = sbr.rel (%p444) target = $region32
      $region31: #{swin_block_forward.1} parent=11 // pred_region
        _
      $region32: #{swin_block_forward.1} parent=11 // pred_fallthru
        _
      // Predicated region
      $region33: #{swin_block_forward.1} parent=11 // pred_check
        %p447 = pneg %p242
      $region34: #{swin_block_forward.1} parent=11 // pred_check_branch
        %449 = sbr.rel (%p447) target = $region36
      $region35: #{swin_block_forward.1} parent=11 // pred_region
        _
      $region36: #{swin_block_forward.1} parent=11 // pred_fallthru
        _
      // Predicated region
      $region37: #{swin_block_forward.1} parent=11 // pred_check
        %p450 = pneg %p263
      $region38: #{swin_block_forward.1} parent=11 // pred_check_branch
        %452 = sbr.rel (%p450) target = $region40
      $region39: #{swin_block_forward.1} parent=11 // pred_region
        _
      $region40: #{swin_block_forward.1} parent=11 // pred_fallthru
        _
      // Predicated region
      $region41: #{swin_block_forward.1} parent=11 // pred_check
        %p453 = pneg %p284
      $region42: #{swin_block_forward.1} parent=11 // pred_check_branch
        %455 = sbr.rel (%p453) target = $region44
      $region43: #{swin_block_forward.1} parent=11 // pred_region
        _
      $region44: #{swin_block_forward.1} parent=11 // pred_fallthru
        _
      // Predicated region
      $region45: #{swin_block_forward.1} parent=11 // pred_check
        %p456 = pneg %p305
      $region46: #{swin_block_forward.1} parent=11 // pred_check_branch
        %458 = sbr.rel (%p456) target = $region48
      $region47: #{swin_block_forward.1} parent=11 // pred_region
        _
      $region48: #{swin_block_forward.1} parent=11 // pred_fallthru
        _
      // Predicated region
      $region49: #{swin_block_forward.1} parent=11 // pred_check
        %p459 = pneg %p326
      $region50: #{swin_block_forward.1} parent=11 // pred_check_branch
        %461 = sbr.rel (%p459) target = $region52
      $region51: #{swin_block_forward.1} parent=11 // pred_region
        _
      $region52: #{swin_block_forward.1} parent=11 // pred_fallthru
        _
      // Predicated region
      $region53: #{swin_block_forward.1} parent=11 // pred_check
        %p462 = pneg %p347
      $region54: #{swin_block_forward.1} parent=11 // pred_check_branch
        %464 = sbr.rel (%p462) target = $region56
      $region55: #{swin_block_forward.1} parent=11 // pred_region
        _
      $region56: #{swin_block_forward.1} parent=11 // pred_fallthru
        _
      // Predicated region
      $region57: #{swin_block_forward.1} parent=11 // pred_check
        %p465 = pneg %p368
      $region58: #{swin_block_forward.1} parent=11 // pred_check_branch
        %467 = sbr.rel (%p465) target = $region60
      $region59: #{swin_block_forward.1} parent=11 // pred_region
        _
      $region60: #{swin_block_forward.1} parent=11 // pred_fallthru
        _
      // Predicated region
      $region61: #{swin_block_forward.1} parent=11 // pred_check
        %p468 = pneg %p389
      $region62: #{swin_block_forward.1} parent=11 // pred_check_branch
        %470 = sbr.rel (%p468) target = $region64
      $region63: #{swin_block_forward.1} parent=11 // pred_region
        _
      $region64: #{swin_block_forward.1} parent=11 // pred_fallthru
        _
    $region12: #{swin_block_forward.1} parent=5 // pred_fallthru
      _
    %p471 = scmp.lt.s32.totalorder %s22, 4
    // Predicated region
    $region65: #{swin_block_forward.1} parent=5 // pred_check
      %p472 = pneg %p471
    $region66: #{swin_block_forward.1} parent=5 // pred_check_branch
      %474 = sbr.rel (%p472) target = $region68
    $region67: #{swin_block_forward.1} parent=5 // pred_region
      // Predicated region
      $region69: #{swin_block_forward.1} parent=67 // pred_check
        %p475 = pneg %p56
      $region70: #{swin_block_forward.1} parent=67 // pred_check_branch
        %477 = sbr.rel (%p475) target = $region72
      $region71: #{swin_block_forward.1} parent=67 // pred_region
        %s478 = smul.u32 4, %s30
        %p479 = scmp.lt.s32.totalorder %s29, 1
        %s480 = scalar_select %p479, %s29, 1
        %p481 = scmp.lt.s32.totalorder %s478, 7
        %s482 = scalar_select %p481, %s478, 7
        %s483 = smul.addr %s480, 8
        %s484 = sadd.s32 %s482, %s483
        %s485 = smul.addr %s484, 8
        %s486 = scalar_lea.vmem %s0, %s485
        %s487 = smul.u32 4, %s30
      $region72: #{swin_block_forward.1} parent=67 // pred_fallthru
        _
      // Predicated region
      $region73: #{swin_block_forward.1} parent=67 // pred_check
        %p488 = pneg %p84
      $region74: #{swin_block_forward.1} parent=67 // pred_check_branch
        %490 = sbr.rel (%p488) target = $region76
      $region75: #{swin_block_forward.1} parent=67 // pred_region
        %s491 = smul.u32 4, %s30
        %p492 = scmp.lt.s32.totalorder %s29, 1
        %s493 = scalar_select %p492, %s29, 1
        %p494 = scmp.lt.s32.totalorder %s491, 7
        %s495 = scalar_select %p494, %s491, 7
        %s496 = smul.addr %s493, 8
        %s497 = sadd.s32 %s495, %s496
        %s498 = smul.addr %s497, 8
        %s499 = scalar_lea.vmem %s1, %s498
        %s500 = smul.u32 4, %s30
      $region76: #{swin_block_forward.1} parent=67 // pred_fallthru
        _
      // Predicated region
      $region77: #{swin_block_forward.1} parent=67 // pred_check
        %p501 = pneg %p110
      $region78: #{swin_block_forward.1} parent=67 // pred_check_branch
        %503 = sbr.rel (%p501) target = $region80
      $region79: #{swin_block_forward.1} parent=67 // pred_region
        %s504 = smul.u32 2, %s30
        %p505 = scmp.lt.s32.totalorder %s504, 3
        %s506 = scalar_select %p505, %s504, 3
        %s507 = smul.addr %s506, 2
        %s508 = smul.addr %s507, 8
        %s509 = scalar_lea.vmem %s2, %s508
        %s510 = smul.u32 2, %s30
      $region80: #{swin_block_forward.1} parent=67 // pred_fallthru
        _
    $region68: #{swin_block_forward.1} parent=5 // pred_fallthru
      _
    %p511 = scmp.le.s32.totalorder 1, %s22
    %p512 = scmp.lt.s32.totalorder %s22, 5
    %p513 = pnand %p511, %p512
    %p514 = pneg %p513
    // Predicated region
    $region81: #{swin_block_forward.1} parent=5 // pred_check
      _
    $region82: #{swin_block_forward.1} parent=5 // pred_check_branch
      %516 = sbr.rel (%p513) target = $region84
    $region83: #{swin_block_forward.1} parent=5 // pred_region
      %s517 = ssub.s32 %s22, 1
      %s518 = smul.u32 4, %s32
      %p519 = scmp.lt.s32.totalorder %s31, 1
      %s520 = scalar_select %p519, %s31, 1
      %p521 = scmp.lt.s32.totalorder %s518, 7
      %s522 = scalar_select %p521, %s518, 7
      %s523 = smul.addr %s520, 8
      %s524 = sadd.s32 %s522, %s523
      %s525 = smul.addr %s524, 8
      %s526 = scalar_lea.vmem %s0, %s525
      %p527 = pneg %p62
      %p528 = pneg %p59
      %s529 = smul.u32 4, %s32
      %p530 = scmp.lt.s32.totalorder %s31, 1
      %s531 = scalar_select %p530, %s31, 1
      %p532 = scmp.lt.s32.totalorder %s529, 7
      %s533 = scalar_select %p532, %s529, 7
      %s534 = smul.addr %s531, 8
      %s535 = sadd.s32 %s533, %s534
      %s536 = smul.addr %s535, 8
      %s537 = scalar_lea.vmem %s1, %s536
      %p538 = pneg %p90
      %p539 = pneg %p87
      %s540 = smul.u32 2, %s32
      %p541 = scmp.lt.s32.totalorder %s540, 3
      %s542 = scalar_select %p541, %s540, 3
      %s543 = smul.addr %s542, 2
      %s544 = smul.addr %s543, 8
      %s545 = scalar_lea.vmem %s2, %s544
      %p546 = pneg %p116
      %p547 = pneg %p113
      %p548 = pneg %p137
      %p549 = pneg %p134
      %p550 = pneg %p158
      %p551 = pneg %p155
      %p552 = pneg %p179
      %p553 = pneg %p176
      %p554 = pneg %p200
      %p555 = pneg %p197
      %p556 = pneg %p221
      %p557 = pneg %p218
      %p558 = pneg %p242
      %p559 = pneg %p239
      %p560 = pneg %p263
      %p561 = pneg %p260
      %p562 = pneg %p284
      %p563 = pneg %p281
      %p564 = pneg %p305
      %p565 = pneg %p302
      %p566 = pneg %p326
      %p567 = pneg %p323
      %p568 = pneg %p347
      %p569 = pneg %p344
      %p570 = pneg %p368
      %p571 = pneg %p365
      %p572 = pneg %p389
      %p573 = pneg %p386
      %p574 = pneg %p417
      %p575 = pneg %p414
      %s576 = smul.u32 4, %s32
      %p577 = scmp.lt.s32.totalorder %s31, 1
      %s578 = scalar_select %p577, %s31, 1
      %p579 = scmp.lt.s32.totalorder %s576, 7
      %s580 = scalar_select %p579, %s576, 7
      %s581 = smul.addr %s578, 8
      %s582 = sadd.s32 %s580, %s581
      %s583 = smul.addr %s582, 8
      %s584 = scalar_lea.vmem %s16, %s583
      %s585 = smul.u32 4, %s32
      %p586 = scmp.lt.s32.totalorder %s31, 1
      %s587 = scalar_select %p586, %s31, 1
      %p588 = scmp.lt.s32.totalorder %s585, 7
      %s589 = scalar_select %p588, %s585, 7
      %s590 = smul.addr %s587, 8
      %s591 = sadd.s32 %s589, %s590
      %s592 = smul.addr %s591, 8
      %s593 = scalar_lea.vmem %s0, %s592
      %s594 = smul.u32 4, %s32
      %s595 = smul.u32 4, %s32
      %p596 = scmp.lt.s32.totalorder %s31, 1
      %s597 = scalar_select %p596, %s31, 1
      %p598 = scmp.lt.s32.totalorder %s595, 7
      %s599 = scalar_select %p598, %s595, 7
      %s600 = smul.addr %s597, 8
      %s601 = sadd.s32 %s599, %s600
      %s602 = smul.addr %s601, 8
      %s603 = scalar_lea.vmem %s1, %s602
      %s604 = smul.u32 4, %s32
      %s605 = smul.u32 2, %s32
      %p606 = scmp.lt.s32.totalorder %s605, 3
      %s607 = scalar_select %p606, %s605, 3
      %s608 = smul.addr %s607, 2
      %s609 = smul.addr %s608, 8
      %s610 = scalar_lea.vmem %s2, %s609
      %s611 = smul.u32 2, %s32
      %s612 = smul.u32 4, %s32
      %p613 = scmp.lt.s32.totalorder %s31, 1
      %s614 = scalar_select %p613, %s31, 1
      %p615 = scmp.lt.s32.totalorder %s612, 7
      %s616 = scalar_select %p615, %s612, 7
      %s617 = smul.addr %s614, 8
      %s618 = sadd.s32 %s616, %s617
      %s619 = smul.addr %s618, 8
      %s620 = scalar_lea.vmem %s16, %s619
      %s621 = smul.u32 4, %s32
      %v622 = vld [vmem:[%s593] sm:$0xff]
      %v623 = vld [vmem:[%s593 + $0x8] sm:$0xff]
      %v624 = vld [vmem:[%s593 + $0x10] sm:$0xff]
      %v625 = vld [vmem:[%s593 + $0x18] sm:$0xff]
      %vm626 = vcmask 261120
      %v627 = vsel %vm626, %v622, 0.0
      %628 = vadd.xlane.f32.xlu0 %v627
      %v629 = vpop.xlane.xlu0 %628
      %v630 = vsel %vm626, %v623, 0.0
      %631 = vadd.xlane.f32.xlu0 %v630
      %v632 = vpop.xlane.xlu0 %631
      %v633 = vsel %vm626, %v624, 0.0
      %634 = vadd.xlane.f32.xlu0 %v633
      %v635 = vpop.xlane.xlu0 %634
      %v636 = vsel %vm626, %v625, 0.0
      %637 = vadd.xlane.f32.xlu0 %v636
      %v638 = vpop.xlane.xlu0 %637
      %v639 = vrcp.pop 32.0
      %v640 = vmul.f32 %v629, %v639
      %v641 = vmul.f32 %v632, %v639
      %v642 = vmul.f32 %v635, %v639
      %v643 = vmul.f32 %v638, %v639
      %v644 = vsub.f32 %v622, %v640
      %v645 = vsub.f32 %v623, %v641
      %v646 = vsub.f32 %v624, %v642
      %v647 = vsub.f32 %v625, %v643
      %v648 = vmul.f32 %v644, %v644
      %v649 = vmul.f32 %v645, %v645
      %v650 = vmul.f32 %v646, %v646
      %v651 = vmul.f32 %v647, %v647
      %v652 = vsel %vm626, %v648, 0.0
      %653 = vadd.xlane.f32.xlu0 %v652
      %v654 = vpop.xlane.xlu0 %653
      %v655 = vsel %vm626, %v649, 0.0
      %656 = vadd.xlane.f32.xlu0 %v655
      %v657 = vpop.xlane.xlu0 %656
      %v658 = vsel %vm626, %v650, 0.0
      %659 = vadd.xlane.f32.xlu0 %v658
      %v660 = vpop.xlane.xlu0 %659
      %v661 = vsel %vm626, %v651, 0.0
      %662 = vadd.xlane.f32.xlu0 %v661
      %v663 = vpop.xlane.xlu0 %662
      %v664 = vmul.f32 %v654, %v639
      %v665 = vmul.f32 %v657, %v639
      %v666 = vmul.f32 %v660, %v639
      %v667 = vmul.f32 %v663, %v639
      %v668 = vadd.f32 %v664, 1e-05
      %v669 = vadd.f32 %v665, 1e-05
      %v670 = vadd.f32 %v666, 1e-05
      %v671 = vadd.f32 %v667, 1e-05
      %v672 = vrsqrt.pop %v668
      %v673 = vrsqrt.pop %v669
      %v674 = vrsqrt.pop %v670
      %v675 = vrsqrt.pop %v671
      %v676 = vmul.f32 %v644, %v672
      %v677 = vmul.f32 %v645, %v673
      %v678 = vmul.f32 %v646, %v674
      %v679 = vmul.f32 %v647, %v675
      %v680 = vld [vmem:[%s4] sm:$0x1]
      %v682 = vlaneseq
      %v683 = vshrl.u32 %v682, 7
      %v684 = vsub.s32 0, %v683
      %v685 = vrot.slane %v680, %v684
      %v687 = vmul.f32 %v676, %v685
      %v688 = vmul.f32 %v677, %v685
      %v689 = vmul.f32 %v678, %v685
      %v690 = vmul.f32 %v679, %v685
      %v691 = vld [vmem:[%s5] sm:$0x1]
      %v693 = vlaneseq
      %v694 = vshrl.u32 %v693, 7
      %v695 = vsub.s32 0, %v694
      %v696 = vrot.slane %v691, %v695
      %v698 = vadd.f32 %v687, %v696
      %v699 = vadd.f32 %v688, %v696
      %v700 = vadd.f32 %v689, %v696
      %v701 = vadd.f32 %v690, %v696
      %v702 = vld [vmem:[%s6] sm:$0xff]
      %v703 = vld [vmem:[%s6 + $0x8] sm:$0xff]
      %v704 = vld [vmem:[%s6 + $0x10] sm:$0xff]
      %v705 = vld [vmem:[%s6 + $0x18] sm:$0xff]
      %v706 = vld [vmem:[%s7] sm:$0x1]
      %v708 = vlaneseq
      %v709 = vshrl.u32 %v708, 7
      %v710 = vsub.s32 0, %v709
      %v711 = vrot.slane %v706, %v710
      %v714 = vsel %vm626, %v698, 0
      %v717 = vsel %vm626, %v699, 0
      %v720 = vsel %vm626, %v700, 0
      %v723 = vsel %vm626, %v701, 0
      %725 = vmatprep.subr.mxu0 0.0
      %726 = vmatpush1.msra.mxu0 %v702
      %727 = vmatprep.subr.mxu0 0.0
      %728 = vmatpush1.msra.mxu0 %v703
      %729 = vmatprep.subr.mxu0 0.0
      %730 = vmatpush1.msra.mxu0 %v704
      %731 = vmatprep.subr.mxu0 0.0
      %732 = vmatpush1.msra.mxu0 %v705
      %733 = vmatprep.subr.mxu0 0.0
      %734 = vmatpush1.msra.mxu0 0.0
      %735 = vmatprep.subr.mxu0 0.0
      %736 = vmatpush1.msra.mxu0 0.0
      %737 = vmatprep.subr.mxu0 0.0
      %738 = vmatpush1.msra.mxu0 0.0
      %739 = vmatprep.subr.mxu0 0.0
      %740 = vmatpush1.msra.mxu0 0.0
      %741 = vmatprep.subr.mxu0 0.0
      %742 = vmatpush1.msra.mxu0 0.0
      %743 = vmatprep.subr.mxu0 0.0
      %744 = vmatpush1.msra.mxu0 0.0
      %745 = vmatprep.subr.mxu0 0.0
      %746 = vmatpush1.msra.mxu0 0.0
      %747 = vmatprep.subr.mxu0 0.0
      %748 = vmatpush1.msra.mxu0 0.0
      %749 = vmatprep.subr.mxu0 0.0
      %750 = vmatpush1.msra.mxu0 0.0
      %751 = vmatprep.subr.mxu0 0.0
      %752 = vmatpush1.msra.mxu0 0.0
      %753 = vmatprep.subr.mxu0 0.0
      %754 = vmatpush1.msra.mxu0 0.0
      %755 = vmatprep.subr.mxu0 0.0
      %756 = vmatpush1.msra.mxu0 0.0
      %757 = vmatprep.subr.mxu0 0.0
      %758 = vmatpush1.msra.mxu0 0.0
      %759 = vmatprep.subr.mxu0 0.0
      %760 = vmatpush1.msra.mxu0 0.0
      %761 = vmatprep.subr.mxu0 0.0
      %762 = vmatpush1.msra.mxu0 0.0
      %763 = vmatprep.subr.mxu0 0.0
      %764 = vmatpush1.msra.mxu0 0.0
      %765 = vmatprep.subr.mxu0 0.0
      %766 = vmatpush1.msra.mxu0 0.0
      %767 = vmatprep.subr.mxu0 0.0
      %768 = vmatpush1.msra.mxu0 0.0
      %769 = vmatprep.subr.mxu0 0.0
      %770 = vmatpush1.msra.mxu0 0.0
      %771 = vmatprep.subr.mxu0 0.0
      %772 = vmatpush1.msra.mxu0 0.0
      %773 = vmatprep.subr.mxu0 0.0
      %774 = vmatpush1.msra.mxu0 0.0
      %775 = vmatprep.subr.mxu0 0.0
      %776 = vmatpush1.msra.mxu0 0.0
      %777 = vmatprep.subr.mxu0 0.0
      %778 = vmatpush1.msra.mxu0 0.0
      %779 = vmatprep.subr.mxu0 0.0
      %780 = vmatpush1.msra.mxu0 0.0
      %781 = vmatprep.subr.mxu0 0.0
      %782 = vmatpush1.msra.mxu0 0.0
      %783 = vmatprep.subr.mxu0 0.0
      %784 = vmatpush1.msra.mxu0 0.0
      %785 = vmatprep.subr.mxu0 0.0
      %786 = vmatpush1.msra.mxu0 0.0
      %787 = vmatprep.subr.mxu0 0.0
      %788 = vmatpush1.msra.mxu0 0.0
      %789 = vmatprep.mubr.f32.mxu0 0.0
      %790 = vmatmul.mubr.f32.gmra.mrb[0].mxu0 %v714
      %v791 = vpop.f32.mrb[0].mxu0
      %v792 = vadd.f32 %v711, %v791
      %v793 = vpop.f32.mrb[0].mxu0
      %794 = vmatprep.mubr.f32.mxu0 0.0
      %795 = vmatmul.mubr.f32.gmra.mrb[0].mxu0 %v717
      %v796 = vpop.f32.mrb[0].mxu0
      %v797 = vadd.f32 %v711, %v796
      %v798 = vpop.f32.mrb[0].mxu0
      %799 = vmatprep.mubr.f32.mxu0 0.0
      %800 = vmatmul.mubr.f32.gmra.mrb[0].mxu0 %v720
      %v801 = vpop.f32.mrb[0].mxu0
      %v802 = vadd.f32 %v711, %v801
      %v803 = vpop.f32.mrb[0].mxu0
      %804 = vmatprep.mubr.f32.mxu0 0.0
      %805 = vmatmul.mubr.f32.gmra.mrb[0].mxu0 %v723
      %v806 = vpop.f32.mrb[0].mxu0
      %v807 = vadd.f32 %v711, %v806
      %v808 = vpop.f32.mrb[0].mxu0
      %809 = vdwg.mxu0
      %v810 = vld [vmem:[%s610] sm:$0xff]
      %v811 = vld [vmem:[%s610 + $0x8] sm:$0xff]
      %v812 = vld [vmem:[%s610 + $0x10] sm:$0xff]
      %v813 = vld [vmem:[%s610 + $0x18] sm:$0xff]
      %v814 = vld [vmem:[%s3] sm:$0xff]
      %v815 = vld [vmem:[%s3 + $0x8] sm:$0xff]
      %818 = vrot.lane.b32.xlu0 %v792, 96
      %v819 = vpop.permute.xlu0 %818
      %820 = vrot.lane.b32.xlu0 %v797, 96
      %v821 = vpop.permute.xlu0 %820
      %vm822 = vcmask 64512
      %v823 = vsel %vm822, %v792, 0
      %v825 = vsel %vm822, %v797, 0
      %v827 = vsel %vm822, %v819, 0
      %v829 = vsel %vm822, %v821, 0
      %831 = vmatprep.subr.mxu0 0.0
      %832 = vmatpush1.xpose.msra.mxu0 %v827
      %833 = vmatprep.subr.mxu0 0.0
      %834 = vmatpush1.xpose.msra.mxu0 %v829
      %835 = vmatprep.subr.mxu0 0.0
      %836 = vmatpush1.xpose.msra.mxu0 0.0
      %837 = vmatprep.subr.mxu0 0.0
      %838 = vmatpush1.xpose.msra.mxu0 0.0
      %839 = vmatprep.subr.mxu0 0.0
      %840 = vmatpush1.xpose.msra.mxu0 0.0
      %841 = vmatprep.subr.mxu0 0.0
      %842 = vmatpush1.xpose.msra.mxu0 0.0
      %843 = vmatprep.subr.mxu0 0.0
      %844 = vmatpush1.xpose.msra.mxu0 0.0
      %845 = vmatprep.subr.mxu0 0.0
      %846 = vmatpush1.xpose.msra.mxu0 0.0
      %847 = vmatprep.subr.mxu0 0.0
      %848 = vmatpush1.xpose.msra.mxu0 0.0
      %849 = vmatprep.subr.mxu0 0.0
      %850 = vmatpush1.xpose.msra.mxu0 0.0
      %851 = vmatprep.subr.mxu0 0.0
      %852 = vmatpush1.xpose.msra.mxu0 0.0
      %853 = vmatprep.subr.mxu0 0.0
      %854 = vmatpush1.xpose.msra.mxu0 0.0
      %855 = vmatprep.subr.mxu0 0.0
      %856 = vmatpush1.xpose.msra.mxu0 0.0
      %857 = vmatprep.subr.mxu0 0.0
      %858 = vmatpush1.xpose.msra.mxu0 0.0
      %859 = vmatprep.subr.mxu0 0.0
      %860 = vmatpush1.xpose.msra.mxu0 0.0
      %861 = vmatprep.subr.mxu0 0.0
      %862 = vmatpush1.xpose.msra.mxu0 0.0
      %863 = vmatprep.subr.mxu0 0.0
      %864 = vmatpush1.xpose.msra.mxu0 0.0
      %865 = vmatprep.subr.mxu0 0.0
      %866 = vmatpush1.xpose.msra.mxu0 0.0
      %867 = vmatprep.subr.mxu0 0.0
      %868 = vmatpush1.xpose.msra.mxu0 0.0
      %869 = vmatprep.subr.mxu0 0.0
      %870 = vmatpush1.xpose.msra.mxu0 0.0
      %871 = vmatprep.subr.mxu0 0.0
      %872 = vmatpush1.xpose.msra.mxu0 0.0
      %873 = vmatprep.subr.mxu0 0.0
      %874 = vmatpush1.xpose.msra.mxu0 0.0
      %875 = vmatprep.subr.mxu0 0.0
      %876 = vmatpush1.xpose.msra.mxu0 0.0
      %877 = vmatprep.subr.mxu0 0.0
      %878 = vmatpush1.xpose.msra.mxu0 0.0
      %879 = vmatprep.subr.mxu0 0.0
      %880 = vmatpush1.xpose.msra.mxu0 0.0
      %881 = vmatprep.subr.mxu0 0.0
      %882 = vmatpush1.xpose.msra.mxu0 0.0
      %883 = vmatprep.subr.mxu0 0.0
      %884 = vmatpush1.xpose.msra.mxu0 0.0
      %885 = vmatprep.subr.mxu0 0.0
      %886 = vmatpush1.xpose.msra.mxu0 0.0
      %887 = vmatprep.subr.mxu0 0.0
      %888 = vmatpush1.xpose.msra.mxu0 0.0
      %889 = vmatprep.subr.mxu0 0.0
      %890 = vmatpush1.xpose.msra.mxu0 0.0
      %891 = vmatprep.subr.mxu0 0.0
      %892 = vmatpush1.xpose.msra.mxu0 0.0
      %893 = vmatprep.subr.mxu0 0.0
      %894 = vmatpush1.xpose.msra.mxu0 0.0
      %895 = vmatprep.mubr.f32.mxu0 0.0
      %896 = vmatmul.mubr.f32.gmra.mrb[0].mxu0 %v823
      %v897 = vpop.f32.mrb[0].mxu0
      %v898 = vadd.f32 %v814, %v897
      %v899 = vpop.f32.mrb[0].mxu0
      %900 = vmatprep.mubr.f32.mxu0 0.0
      %901 = vmatmul.mubr.f32.gmra.mrb[0].mxu0 %v825
      %v902 = vpop.f32.mrb[0].mxu0
      %v903 = vadd.f32 %v815, %v902
      %v904 = vpop.f32.mrb[0].mxu0
      %905 = vdwg.mxu0
      %908 = vrot.lane.b32.xlu0 %v802, 96
      %v909 = vpop.permute.xlu0 %908
      %910 = vrot.lane.b32.xlu0 %v807, 96
      %v911 = vpop.permute.xlu0 %910
      %v912 = vsel %vm822, %v802, 0
      %v914 = vsel %vm822, %v807, 0
      %v916 = vsel %vm822, %v909, 0
      %v918 = vsel %vm822, %v911, 0
      %920 = vmatprep.subr.mxu0 0.0
      %921 = vmatpush1.xpose.msra.mxu0 %v916
      %922 = vmatprep.subr.mxu0 0.0
      %923 = vmatpush1.xpose.msra.mxu0 %v918
      %924 = vmatprep.subr.mxu0 0.0
      %925 = vmatpush1.xpose.msra.mxu0 0.0
      %926 = vmatprep.subr.mxu0 0.0
      %927 = vmatpush1.xpose.msra.mxu0 0.0
      %928 = vmatprep.subr.mxu0 0.0
      %929 = vmatpush1.xpose.msra.mxu0 0.0
      %930 = vmatprep.subr.mxu0 0.0
      %931 = vmatpush1.xpose.msra.mxu0 0.0
      %932 = vmatprep.subr.mxu0 0.0
      %933 = vmatpush1.xpose.msra.mxu0 0.0
      %934 = vmatprep.subr.mxu0 0.0
      %935 = vmatpush1.xpose.msra.mxu0 0.0
      %936 = vmatprep.subr.mxu0 0.0
      %937 = vmatpush1.xpose.msra.mxu0 0.0
      %938 = vmatprep.subr.mxu0 0.0
      %939 = vmatpush1.xpose.msra.mxu0 0.0
      %940 = vmatprep.subr.mxu0 0.0
      %941 = vmatpush1.xpose.msra.mxu0 0.0
      %942 = vmatprep.subr.mxu0 0.0
      %943 = vmatpush1.xpose.msra.mxu0 0.0
      %944 = vmatprep.subr.mxu0 0.0
      %945 = vmatpush1.xpose.msra.mxu0 0.0
      %946 = vmatprep.subr.mxu0 0.0
      %947 = vmatpush1.xpose.msra.mxu0 0.0
      %948 = vmatprep.subr.mxu0 0.0
      %949 = vmatpush1.xpose.msra.mxu0 0.0
      %950 = vmatprep.subr.mxu0 0.0
      %951 = vmatpush1.xpose.msra.mxu0 0.0
      %952 = vmatprep.subr.mxu0 0.0
      %953 = vmatpush1.xpose.msra.mxu0 0.0
      %954 = vmatprep.subr.mxu0 0.0
      %955 = vmatpush1.xpose.msra.mxu0 0.0
      %956 = vmatprep.subr.mxu0 0.0
      %957 = vmatpush1.xpose.msra.mxu0 0.0
      %958 = vmatprep.subr.mxu0 0.0
      %959 = vmatpush1.xpose.msra.mxu0 0.0
      %960 = vmatprep.subr.mxu0 0.0
      %961 = vmatpush1.xpose.msra.mxu0 0.0
      %962 = vmatprep.subr.mxu0 0.0
      %963 = vmatpush1.xpose.msra.mxu0 0.0
      %964 = vmatprep.subr.mxu0 0.0
      %965 = vmatpush1.xpose.msra.mxu0 0.0
      %966 = vmatprep.subr.mxu0 0.0
      %967 = vmatpush1.xpose.msra.mxu0 0.0
      %968 = vmatprep.subr.mxu0 0.0
      %969 = vmatpush1.xpose.msra.mxu0 0.0
      %970 = vmatprep.subr.mxu0 0.0
      %971 = vmatpush1.xpose.msra.mxu0 0.0
      %972 = vmatprep.subr.mxu0 0.0
      %973 = vmatpush1.xpose.msra.mxu0 0.0
      %974 = vmatprep.subr.mxu0 0.0
      %975 = vmatpush1.xpose.msra.mxu0 0.0
      %976 = vmatprep.subr.mxu0 0.0
      %977 = vmatpush1.xpose.msra.mxu0 0.0
      %978 = vmatprep.subr.mxu0 0.0
      %979 = vmatpush1.xpose.msra.mxu0 0.0
      %980 = vmatprep.subr.mxu0 0.0
      %981 = vmatpush1.xpose.msra.mxu0 0.0
      %982 = vmatprep.subr.mxu0 0.0
      %983 = vmatpush1.xpose.msra.mxu0 0.0
      %984 = vmatprep.mubr.f32.mxu0 0.0
      %985 = vmatmul.mubr.f32.gmra.mrb[0].mxu0 %v912
      %v986 = vpop.f32.mrb[0].mxu0
      %v987 = vadd.f32 %v814, %v986
      %v988 = vpop.f32.mrb[0].mxu0
      %989 = vmatprep.mubr.f32.mxu0 0.0
      %990 = vmatmul.mubr.f32.gmra.mrb[0].mxu0 %v914
      %v991 = vpop.f32.mrb[0].mxu0
      %v992 = vadd.f32 %v815, %v991
      %v993 = vpop.f32.mrb[0].mxu0
      %994 = vdwg.mxu0
      %v995 = vadd.f32 %v898, %v810
      %v996 = vadd.f32 %v903, %v811
      %v997 = vadd.f32 %v987, %v812
      %v998 = vadd.f32 %v992, %v813
      %vm999 = vcmask 130048
      %v1000 = vsel %vm999, %v995, -inf
      %1001 = vmax.xlane.f32.xlu0 %v1000
      %v1002 = vpop.xlane.xlu0 %1001
      %v1003 = vsel %vm999, %v996, -inf
      %1004 = vmax.xlane.f32.xlu0 %v1003
      %v1005 = vpop.xlane.xlu0 %1004
      %v1006 = vsel %vm999, %v997, -inf
      %1007 = vmax.xlane.f32.xlu0 %v1006
      %v1008 = vpop.xlane.xlu0 %1007
      %v1009 = vsel %vm999, %v998, -inf
      %1010 = vmax.xlane.f32.xlu0 %v1009
      %v1011 = vpop.xlane.xlu0 %1010
      %v1012 = vsub.f32 %v995, %v1002
      %v1013 = vsub.f32 %v996, %v1005
      %v1014 = vsub.f32 %v997, %v1008
      %v1015 = vsub.f32 %v998, %v1011
      %v1016 = vmul.f32 %v1012, 1.442695
      %v1017 = vpow.pop %v1016
      %v1018 = vmul.f32 %v1013, 1.442695
      %v1019 = vpow.pop %v1018
      %v1020 = vmul.f32 %v1014, 1.442695
      %v1021 = vpow.pop %v1020
      %v1022 = vmul.f32 %v1015, 1.442695
      %v1023 = vpow.pop %v1022
      %v1024 = vsel %vm999, %v1017, 0.0
      %1025 = vadd.xlane.f32.xlu0 %v1024
      %v1026 = vpop.xlane.xlu0 %1025
      %v1027 = vsel %vm999, %v1019, 0.0
      %1028 = vadd.xlane.f32.xlu0 %v1027
      %v1029 = vpop.xlane.xlu0 %1028
      %v1030 = vsel %vm999, %v1021, 0.0
      %1031 = vadd.xlane.f32.xlu0 %v1030
      %v1032 = vpop.xlane.xlu0 %1031
      %v1033 = vsel %vm999, %v1023, 0.0
      %1034 = vadd.xlane.f32.xlu0 %v1033
      %v1035 = vpop.xlane.xlu0 %1034
      %v1036 = vrcp.pop %v1026
      %v1037 = vrcp.pop %v1029
      %v1038 = vrcp.pop %v1032
      %v1039 = vrcp.pop %v1035
      %v1040 = vmul.f32 %v1026, %v1036
      %v1041 = vmul.f32 %v1029, %v1037
      %v1042 = vmul.f32 %v1032, %v1038
      %v1043 = vmul.f32 %v1035, %v1039
      %v1044 = vsub.f32 2.0, %v1040
      %v1045 = vsub.f32 2.0, %v1041
      %v1046 = vsub.f32 2.0, %v1042
      %v1047 = vsub.f32 2.0, %v1043
      %v1048 = vmul.f32 %v1036, %v1044
      %v1049 = vmul.f32 %v1037, %v1045
      %v1050 = vmul.f32 %v1038, %v1046
      %v1051 = vmul.f32 %v1039, %v1047
      %v1052 = vmul.f32 %v1017, %v1048
      %v1053 = vmul.f32 %v1019, %v1049
      %v1054 = vmul.f32 %v1021, %v1050
      %v1055 = vmul.f32 %v1023, %v1051
      %1056 = vrot.lane.b32.xlu0 %v792, 64
      %v1057 = vpop.permute.xlu0 %1056
      %1058 = vrot.lane.b32.xlu0 %v797, 64
      %v1059 = vpop.permute.xlu0 %1058
      %v1063 = vsel %vm999, %v1052, 0
      %v1066 = vsel %vm999, %v1053, 0
      %1068 = vmatprep.subr.mxu0 0.0
      %1069 = vmatpush1.msra.mxu0 %v1057
      %1070 = vmatprep.subr.mxu0 0.0
      %1071 = vmatpush1.msra.mxu0 %v1059
      %1072 = vmatprep.subr.mxu0 0.0
      %1073 = vmatpush1.msra.mxu0 0.0
      %1074 = vmatprep.subr.mxu0 0.0
      %1075 = vmatpush1.msra.mxu0 0.0
      %1076 = vmatprep.subr.mxu0 0.0
      %1077 = vmatpush1.msra.mxu0 0.0
      %1078 = vmatprep.subr.mxu0 0.0
      %1079 = vmatpush1.msra.mxu0 0.0
      %1080 = vmatprep.subr.mxu0 0.0
      %1081 = vmatpush1.msra.mxu0 0.0
      %1082 = vmatprep.subr.mxu0 0.0
      %1083 = vmatpush1.msra.mxu0 0.0
      %1084 = vmatprep.subr.mxu0 0.0
      %1085 = vmatpush1.msra.mxu0 0.0
      %1086 = vmatprep.subr.mxu0 0.0
      %1087 = vmatpush1.msra.mxu0 0.0
      %1088 = vmatprep.subr.mxu0 0.0
      %1089 = vmatpush1.msra.mxu0 0.0
      %1090 = vmatprep.subr.mxu0 0.0
      %1091 = vmatpush1.msra.mxu0 0.0
      %1092 = vmatprep.subr.mxu0 0.0
      %1093 = vmatpush1.msra.mxu0 0.0
      %1094 = vmatprep.subr.mxu0 0.0
      %1095 = vmatpush1.msra.mxu0 0.0
      %1096 = vmatprep.subr.mxu0 0.0
      %1097 = vmatpush1.msra.mxu0 0.0
      %1098 = vmatprep.subr.mxu0 0.0
      %1099 = vmatpush1.msra.mxu0 0.0
      %1100 = vmatprep.subr.mxu0 0.0
      %1101 = vmatpush1.msra.mxu0 0.0
      %1102 = vmatprep.subr.mxu0 0.0
      %1103 = vmatpush1.msra.mxu0 0.0
      %1104 = vmatprep.subr.mxu0 0.0
      %1105 = vmatpush1.msra.mxu0 0.0
      %1106 = vmatprep.subr.mxu0 0.0
      %1107 = vmatpush1.msra.mxu0 0.0
      %1108 = vmatprep.subr.mxu0 0.0
      %1109 = vmatpush1.msra.mxu0 0.0
      %1110 = vmatprep.subr.mxu0 0.0
      %1111 = vmatpush1.msra.mxu0 0.0
      %1112 = vmatprep.subr.mxu0 0.0
      %1113 = vmatpush1.msra.mxu0 0.0
      %1114 = vmatprep.subr.mxu0 0.0
      %1115 = vmatpush1.msra.mxu0 0.0
      %1116 = vmatprep.subr.mxu0 0.0
      %1117 = vmatpush1.msra.mxu0 0.0
      %1118 = vmatprep.subr.mxu0 0.0
      %1119 = vmatpush1.msra.mxu0 0.0
      %1120 = vmatprep.subr.mxu0 0.0
      %1121 = vmatpush1.msra.mxu0 0.0
      %1122 = vmatprep.subr.mxu0 0.0
      %1123 = vmatpush1.msra.mxu0 0.0
      %1124 = vmatprep.subr.mxu0 0.0
      %1125 = vmatpush1.msra.mxu0 0.0
      %1126 = vmatprep.subr.mxu0 0.0
      %1127 = vmatpush1.msra.mxu0 0.0
      %1128 = vmatprep.subr.mxu0 0.0
      %1129 = vmatpush1.msra.mxu0 0.0
      %1130 = vmatprep.subr.mxu0 0.0
      %1131 = vmatpush1.msra.mxu0 0.0
      %1132 = vmatprep.mubr.f32.mxu0 0.0
      %1133 = vmatmul.mubr.f32.gmra.mrb[0].mxu0 %v1063
      %v1134 = vpop.f32.mrb[0].mxu0
      %v1135 = vadd.f32 0.0, %v1134
      %v1136 = vpop.f32.mrb[0].mxu0
      %1137 = vmatprep.mubr.f32.mxu0 0.0
      %1138 = vmatmul.mubr.f32.gmra.mrb[0].mxu0 %v1066
      %v1139 = vpop.f32.mrb[0].mxu0
      %v1140 = vadd.f32 0.0, %v1139
      %v1141 = vpop.f32.mrb[0].mxu0
      %1142 = vdwg.mxu0
      %1143 = vrot.lane.b32.xlu0 %v802, 64
      %v1144 = vpop.permute.xlu0 %1143
      %1145 = vrot.lane.b32.xlu0 %v807, 64
      %v1146 = vpop.permute.xlu0 %1145
      %v1150 = vsel %vm999, %v1054, 0
      %v1153 = vsel %vm999, %v1055, 0
      %1155 = vmatprep.subr.mxu0 0.0
      %1156 = vmatpush1.msra.mxu0 %v1144
      %1157 = vmatprep.subr.mxu0 0.0
      %1158 = vmatpush1.msra.mxu0 %v1146
      %1159 = vmatprep.subr.mxu0 0.0
      %1160 = vmatpush1.msra.mxu0 0.0
      %1161 = vmatprep.subr.mxu0 0.0
      %1162 = vmatpush1.msra.mxu0 0.0
      %1163 = vmatprep.subr.mxu0 0.0
      %1164 = vmatpush1.msra.mxu0 0.0
      %1165 = vmatprep.subr.mxu0 0.0
      %1166 = vmatpush1.msra.mxu0 0.0
      %1167 = vmatprep.subr.mxu0 0.0
      %1168 = vmatpush1.msra.mxu0 0.0
      %1169 = vmatprep.subr.mxu0 0.0
      %1170 = vmatpush1.msra.mxu0 0.0
      %1171 = vmatprep.subr.mxu0 0.0
      %1172 = vmatpush1.msra.mxu0 0.0
      %1173 = vmatprep.subr.mxu0 0.0
      %1174 = vmatpush1.msra.mxu0 0.0
      %1175 = vmatprep.subr.mxu0 0.0
      %1176 = vmatpush1.msra.mxu0 0.0
      %1177 = vmatprep.subr.mxu0 0.0
      %1178 = vmatpush1.msra.mxu0 0.0
      %1179 = vmatprep.subr.mxu0 0.0
      %1180 = vmatpush1.msra.mxu0 0.0
      %1181 = vmatprep.subr.mxu0 0.0
      %1182 = vmatpush1.msra.mxu0 0.0
      %1183 = vmatprep.subr.mxu0 0.0
      %1184 = vmatpush1.msra.mxu0 0.0
      %1185 = vmatprep.subr.mxu0 0.0
      %1186 = vmatpush1.msra.mxu0 0.0
      %1187 = vmatprep.subr.mxu0 0.0
      %1188 = vmatpush1.msra.mxu0 0.0
      %1189 = vmatprep.subr.mxu0 0.0
      %1190 = vmatpush1.msra.mxu0 0.0
      %1191 = vmatprep.subr.mxu0 0.0
      %1192 = vmatpush1.msra.mxu0 0.0
      %1193 = vmatprep.subr.mxu0 0.0
      %1194 = vmatpush1.msra.mxu0 0.0
      %1195 = vmatprep.subr.mxu0 0.0
      %1196 = vmatpush1.msra.mxu0 0.0
      %1197 = vmatprep.subr.mxu0 0.0
      %1198 = vmatpush1.msra.mxu0 0.0
      %1199 = vmatprep.subr.mxu0 0.0
      %1200 = vmatpush1.msra.mxu0 0.0
      %1201 = vmatprep.subr.mxu0 0.0
      %1202 = vmatpush1.msra.mxu0 0.0
      %1203 = vmatprep.subr.mxu0 0.0
      %1204 = vmatpush1.msra.mxu0 0.0
      %1205 = vmatprep.subr.mxu0 0.0
      %1206 = vmatpush1.msra.mxu0 0.0
      %1207 = vmatprep.subr.mxu0 0.0
      %1208 = vmatpush1.msra.mxu0 0.0
      %1209 = vmatprep.subr.mxu0 0.0
      %1210 = vmatpush1.msra.mxu0 0.0
      %1211 = vmatprep.subr.mxu0 0.0
      %1212 = vmatpush1.msra.mxu0 0.0
      %1213 = vmatprep.subr.mxu0 0.0
      %1214 = vmatpush1.msra.mxu0 0.0
      %1215 = vmatprep.subr.mxu0 0.0
      %1216 = vmatpush1.msra.mxu0 0.0
      %1217 = vmatprep.subr.mxu0 0.0
      %1218 = vmatpush1.msra.mxu0 0.0
      %1219 = vmatprep.mubr.f32.mxu0 0.0
      %1220 = vmatmul.mubr.f32.gmra.mrb[0].mxu0 %v1150
      %v1221 = vpop.f32.mrb[0].mxu0
      %v1222 = vadd.f32 0.0, %v1221
      %v1223 = vpop.f32.mrb[0].mxu0
      %1224 = vmatprep.mubr.f32.mxu0 0.0
      %1225 = vmatmul.mubr.f32.gmra.mrb[0].mxu0 %v1153
      %v1226 = vpop.f32.mrb[0].mxu0
      %v1227 = vadd.f32 0.0, %v1226
      %v1228 = vpop.f32.mrb[0].mxu0
      %1229 = vdwg.mxu0
      %1230 = vst.msk [vmem:[#allocation2] sm:$0xff] %vm822, %v1135
      %1231 = vst.msk [vmem:[#allocation2 + $0x8] sm:$0xff] %vm822, %v1140
      %1232 = vst.msk [vmem:[#allocation2 + $0x10] sm:$0xff] %vm822, %v1222
      %1233 = vst.msk [vmem:[#allocation2 + $0x18] sm:$0xff] %vm822, %v1227
      %s1234 = scalar_lea.vmem %s3, 16
      %v1235 = vld [vmem:[%s1234] sm:$0xff]
      %v1236 = vld [vmem:[%s1234 + $0x8] sm:$0xff]
      %1237 = vrot.lane.b32.xlu0 %v792, 120
      %v1238 = vpop.permute.xlu0 %1237
      %1239 = vrot.lane.b32.xlu0 %v797, 120
      %v1240 = vpop.permute.xlu0 %1239
      %1241 = vrot.lane.b32.xlu0 %v792, 88
      %v1242 = vpop.permute.xlu0 %1241
      %1243 = vrot.lane.b32.xlu0 %v797, 88
      %v1244 = vpop.permute.xlu0 %1243
      %v1245 = vsel %vm822, %v1238, 0
      %v1247 = vsel %vm822, %v1240, 0
      %v1249 = vsel %vm822, %v1242, 0
      %v1251 = vsel %vm822, %v1244, 0
      %1253 = vmatprep.subr.mxu0 0.0
      %1254 = vmatpush1.xpose.msra.mxu0 %v1249
      %1255 = vmatprep.subr.mxu0 0.0
      %1256 = vmatpush1.xpose.msra.mxu0 %v1251
      %1257 = vmatprep.subr.mxu0 0.0
      %1258 = vmatpush1.xpose.msra.mxu0 0.0
      %1259 = vmatprep.subr.mxu0 0.0
      %1260 = vmatpush1.xpose.msra.mxu0 0.0
      %1261 = vmatprep.subr.mxu0 0.0
      %1262 = vmatpush1.xpose.msra.mxu0 0.0
      %1263 = vmatprep.subr.mxu0 0.0
      %1264 = vmatpush1.xpose.msra.mxu0 0.0
      %1265 = vmatprep.subr.mxu0 0.0
      %1266 = vmatpush1.xpose.msra.mxu0 0.0
      %1267 = vmatprep.subr.mxu0 0.0
      %1268 = vmatpush1.xpose.msra.mxu0 0.0
      %1269 = vmatprep.subr.mxu0 0.0
      %1270 = vmatpush1.xpose.msra.mxu0 0.0
      %1271 = vmatprep.subr.mxu0 0.0
      %1272 = vmatpush1.xpose.msra.mxu0 0.0
      %1273 = vmatprep.subr.mxu0 0.0
      %1274 = vmatpush1.xpose.msra.mxu0 0.0
      %1275 = vmatprep.subr.mxu0 0.0
      %1276 = vmatpush1.xpose.msra.mxu0 0.0
      %1277 = vmatprep.subr.mxu0 0.0
      %1278 = vmatpush1.xpose.msra.mxu0 0.0
      %1279 = vmatprep.subr.mxu0 0.0
      %1280 = vmatpush1.xpose.msra.mxu0 0.0
      %1281 = vmatprep.subr.mxu0 0.0
      %1282 = vmatpush1.xpose.msra.mxu0 0.0
      %1283 = vmatprep.subr.mxu0 0.0
      %1284 = vmatpush1.xpose.msra.mxu0 0.0
      %1285 = vmatprep.subr.mxu0 0.0
      %1286 = vmatpush1.xpose.msra.mxu0 0.0
      %1287 = vmatprep.subr.mxu0 0.0
      %1288 = vmatpush1.xpose.msra.mxu0 0.0
      %1289 = vmatprep.subr.mxu0 0.0
      %1290 = vmatpush1.xpose.msra.mxu0 0.0
      %1291 = vmatprep.subr.mxu0 0.0
      %1292 = vmatpush1.xpose.msra.mxu0 0.0
      %1293 = vmatprep.subr.mxu0 0.0
      %1294 = vmatpush1.xpose.msra.mxu0 0.0
      %1295 = vmatprep.subr.mxu0 0.0
      %1296 = vmatpush1.xpose.msra.mxu0 0.0
      %1297 = vmatprep.subr.mxu0 0.0
      %1298 = vmatpush1.xpose.msra.mxu0 0.0
      %1299 = vmatprep.subr.mxu0 0.0
      %1300 = vmatpush1.xpose.msra.mxu0 0.0
      %1301 = vmatprep.subr.mxu0 0.0
      %1302 = vmatpush1.xpose.msra.mxu0 0.0
      %1303 = vmatprep.subr.mxu0 0.0
      %1304 = vmatpush1.xpose.msra.mxu0 0.0
      %1305 = vmatprep.subr.mxu0 0.0
      %1306 = vmatpush1.xpose.msra.mxu0 0.0
      %1307 = vmatprep.subr.mxu0 0.0
      %1308 = vmatpush1.xpose.msra.mxu0 0.0
      %1309 = vmatprep.subr.mxu0 0.0
      %1310 = vmatpush1.xpose.msra.mxu0 0.0
      %1311 = vmatprep.subr.mxu0 0.0
      %1312 = vmatpush1.xpose.msra.mxu0 0.0
      %1313 = vmatprep.subr.mxu0 0.0
      %1314 = vmatpush1.xpose.msra.mxu0 0.0
      %1315 = vmatprep.subr.mxu0 0.0
      %1316 = vmatpush1.xpose.msra.mxu0 0.0
      %1317 = vmatprep.mubr.f32.mxu0 0.0
      %1318 = vmatmul.mubr.f32.gmra.mrb[0].mxu0 %v1245
      %v1319 = vpop.f32.mrb[0].mxu0
      %v1320 = vadd.f32 %v1235, %v1319
      %v1321 = vpop.f32.mrb[0].mxu0
      %1322 = vmatprep.mubr.f32.mxu0 0.0
      %1323 = vmatmul.mubr.f32.gmra.mrb[0].mxu0 %v1247
      %v1324 = vpop.f32.mrb[0].mxu0
      %v1325 = vadd.f32 %v1236, %v1324
      %v1326 = vpop.f32.mrb[0].mxu0
      %1327 = vdwg.mxu0
      %1328 = vrot.lane.b32.xlu0 %v802, 120
      %v1329 = vpop.permute.xlu0 %1328
      %1330 = vrot.lane.b32.xlu0 %v807, 120
      %v1331 = vpop.permute.xlu0 %1330
      %1332 = vrot.lane.b32.xlu0 %v802, 88
      %v1333 = vpop.permute.xlu0 %1332
      %1334 = vrot.lane.b32.xlu0 %v807, 88
      %v1335 = vpop.permute.xlu0 %1334
      %v1336 = vsel %vm822, %v1329, 0
      %v1338 = vsel %vm822, %v1331, 0
      %v1340 = vsel %vm822, %v1333, 0
      %v1342 = vsel %vm822, %v1335, 0
      %1344 = vmatprep.subr.mxu0 0.0
      %1345 = vmatpush1.xpose.msra.mxu0 %v1340
      %1346 = vmatprep.subr.mxu0 0.0
      %1347 = vmatpush1.xpose.msra.mxu0 %v1342
      %1348 = vmatprep.subr.mxu0 0.0
      %1349 = vmatpush1.xpose.msra.mxu0 0.0
      %1350 = vmatprep.subr.mxu0 0.0
      %1351 = vmatpush1.xpose.msra.mxu0 0.0
      %1352 = vmatprep.subr.mxu0 0.0
      %1353 = vmatpush1.xpose.msra.mxu0 0.0
      %1354 = vmatprep.subr.mxu0 0.0
      %1355 = vmatpush1.xpose.msra.mxu0 0.0
      %1356 = vmatprep.subr.mxu0 0.0
      %1357 = vmatpush1.xpose.msra.mxu0 0.0
      %1358 = vmatprep.subr.mxu0 0.0
      %1359 = vmatpush1.xpose.msra.mxu0 0.0
      %1360 = vmatprep.subr.mxu0 0.0
      %1361 = vmatpush1.xpose.msra.mxu0 0.0
      %1362 = vmatprep.subr.mxu0 0.0
      %1363 = vmatpush1.xpose.msra.mxu0 0.0
      %1364 = vmatprep.subr.mxu0 0.0
      %1365 = vmatpush1.xpose.msra.mxu0 0.0
      %1366 = vmatprep.subr.mxu0 0.0
      %1367 = vmatpush1.xpose.msra.mxu0 0.0
      %1368 = vmatprep.subr.mxu0 0.0
      %1369 = vmatpush1.xpose.msra.mxu0 0.0
      %1370 = vmatprep.subr.mxu0 0.0
      %1371 = vmatpush1.xpose.msra.mxu0 0.0
      %1372 = vmatprep.subr.mxu0 0.0
      %1373 = vmatpush1.xpose.msra.mxu0 0.0
      %1374 = vmatprep.subr.mxu0 0.0
      %1375 = vmatpush1.xpose.msra.mxu0 0.0
      %1376 = vmatprep.subr.mxu0 0.0
      %1377 = vmatpush1.xpose.msra.mxu0 0.0
      %1378 = vmatprep.subr.mxu0 0.0
      %1379 = vmatpush1.xpose.msra.mxu0 0.0
      %1380 = vmatprep.subr.mxu0 0.0
      %1381 = vmatpush1.xpose.msra.mxu0 0.0
      %1382 = vmatprep.subr.mxu0 0.0
      %1383 = vmatpush1.xpose.msra.mxu0 0.0
      %1384 = vmatprep.subr.mxu0 0.0
      %1385 = vmatpush1.xpose.msra.mxu0 0.0
      %1386 = vmatprep.subr.mxu0 0.0
      %1387 = vmatpush1.xpose.msra.mxu0 0.0
      %1388 = vmatprep.subr.mxu0 0.0
      %1389 = vmatpush1.xpose.msra.mxu0 0.0
      %1390 = vmatprep.subr.mxu0 0.0
      %1391 = vmatpush1.xpose.msra.mxu0 0.0
      %1392 = vmatprep.subr.mxu0 0.0
      %1393 = vmatpush1.xpose.msra.mxu0 0.0
      %1394 = vmatprep.subr.mxu0 0.0
      %1395 = vmatpush1.xpose.msra.mxu0 0.0
      %1396 = vmatprep.subr.mxu0 0.0
      %1397 = vmatpush1.xpose.msra.mxu0 0.0
      %1398 = vmatprep.subr.mxu0 0.0
      %1399 = vmatpush1.xpose.msra.mxu0 0.0
      %1400 = vmatprep.subr.mxu0 0.0
      %1401 = vmatpush1.xpose.msra.mxu0 0.0
      %1402 = vmatprep.subr.mxu0 0.0
      %1403 = vmatpush1.xpose.msra.mxu0 0.0
      %1404 = vmatprep.subr.mxu0 0.0
      %1405 = vmatpush1.xpose.msra.mxu0 0.0
      %1406 = vmatprep.subr.mxu0 0.0
      %1407 = vmatpush1.xpose.msra.mxu0 0.0
      %1408 = vmatprep.mubr.f32.mxu0 0.0
      %1409 = vmatmul.mubr.f32.gmra.mrb[0].mxu0 %v1336
      %v1410 = vpop.f32.mrb[0].mxu0
      %v1411 = vadd.f32 %v1235, %v1410
      %v1412 = vpop.f32.mrb[0].mxu0
      %1413 = vmatprep.mubr.f32.mxu0 0.0
      %1414 = vmatmul.mubr.f32.gmra.mrb[0].mxu0 %v1338
      %v1415 = vpop.f32.mrb[0].mxu0
      %v1416 = vadd.f32 %v1236, %v1415
      %v1417 = vpop.f32.mrb[0].mxu0
      %1418 = vdwg.mxu0
      %v1419 = vadd.f32 %v1320, %v810
      %v1420 = vadd.f32 %v1325, %v811
      %v1421 = vadd.f32 %v1411, %v812
      %v1422 = vadd.f32 %v1416, %v813
      %v1423 = vsel %vm999, %v1419, -inf
      %1424 = vmax.xlane.f32.xlu0 %v1423
      %v1425 = vpop.xlane.xlu0 %1424
      %v1426 = vsel %vm999, %v1420, -inf
      %1427 = vmax.xlane.f32.xlu0 %v1426
      %v1428 = vpop.xlane.xlu0 %1427
      %v1429 = vsel %vm999, %v1421, -inf
      %1430 = vmax.xlane.f32.xlu0 %v1429
      %v1431 = vpop.xlane.xlu0 %1430
      %v1432 = vsel %vm999, %v1422, -inf
      %1433 = vmax.xlane.f32.xlu0 %v1432
      %v1434 = vpop.xlane.xlu0 %1433
      %v1435 = vsub.f32 %v1419, %v1425
      %v1436 = vsub.f32 %v1420, %v1428
      %v1437 = vsub.f32 %v1421, %v1431
      %v1438 = vsub.f32 %v1422, %v1434
      %v1439 = vmul.f32 %v1435, 1.442695
      %v1440 = vpow.pop %v1439
      %v1441 = vmul.f32 %v1436, 1.442695
      %v1442 = vpow.pop %v1441
      %v1443 = vmul.f32 %v1437, 1.442695
      %v1444 = vpow.pop %v1443
      %v1445 = vmul.f32 %v1438, 1.442695
      %v1446 = vpow.pop %v1445
      %v1447 = vsel %vm999, %v1440, 0.0
      %1448 = vadd.xlane.f32.xlu0 %v1447
      %v1449 = vpop.xlane.xlu0 %1448
      %v1450 = vsel %vm999, %v1442, 0.0
      %1451 = vadd.xlane.f32.xlu0 %v1450
      %v1452 = vpop.xlane.xlu0 %1451
      %v1453 = vsel %vm999, %v1444, 0.0
      %1454 = vadd.xlane.f32.xlu0 %v1453
      %v1455 = vpop.xlane.xlu0 %1454
      %v1456 = vsel %vm999, %v1446, 0.0
      %1457 = vadd.xlane.f32.xlu0 %v1456
      %v1458 = vpop.xlane.xlu0 %1457
      %v1459 = vrcp.pop %v1449
      %v1460 = vrcp.pop %v1452
      %v1461 = vrcp.pop %v1455
      %v1462 = vrcp.pop %v1458
      %v1463 = vmul.f32 %v1449, %v1459
      %v1464 = vmul.f32 %v1452, %v1460
      %v1465 = vmul.f32 %v1455, %v1461
      %v1466 = vmul.f32 %v1458, %v1462
      %v1467 = vsub.f32 2.0, %v1463
      %v1468 = vsub.f32 2.0, %v1464
      %v1469 = vsub.f32 2.0, %v1465
      %v1470 = vsub.f32 2.0, %v1466
      %v1471 = vmul.f32 %v1459, %v1467
      %v1472 = vmul.f32 %v1460, %v1468
      %v1473 = vmul.f32 %v1461, %v1469
      %v1474 = vmul.f32 %v1462, %v1470
      %v1475 = vmul.f32 %v1440, %v1471
      %v1476 = vmul.f32 %v1442, %v1472
      %v1477 = vmul.f32 %v1444, %v1473
      %v1478 = vmul.f32 %v1446, %v1474
      %1479 = vrot.lane.b32.xlu0 %v792, 56
      %v1480 = vpop.permute.xlu0 %1479
      %1481 = vrot.lane.b32.xlu0 %v797, 56
      %v1482 = vpop.permute.xlu0 %1481
      %v1486 = vsel %vm999, %v1475, 0
      %v1489 = vsel %vm999, %v1476, 0
      %1491 = vmatprep.subr.mxu0 0.0
      %1492 = vmatpush1.msra.mxu0 %v1480
      %1493 = vmatprep.subr.mxu0 0.0
      %1494 = vmatpush1.msra.mxu0 %v1482
      %1495 = vmatprep.subr.mxu0 0.0
      %1496 = vmatpush1.msra.mxu0 0.0
      %1497 = vmatprep.subr.mxu0 0.0
      %1498 = vmatpush1.msra.mxu0 0.0
      %1499 = vmatprep.subr.mxu0 0.0
      %1500 = vmatpush1.msra.mxu0 0.0
      %1501 = vmatprep.subr.mxu0 0.0
      %1502 = vmatpush1.msra.mxu0 0.0
      %1503 = vmatprep.subr.mxu0 0.0
      %1504 = vmatpush1.msra.mxu0 0.0
      %1505 = vmatprep.subr.mxu0 0.0
      %1506 = vmatpush1.msra.mxu0 0.0
      %1507 = vmatprep.subr.mxu0 0.0
      %1508 = vmatpush1.msra.mxu0 0.0
      %1509 = vmatprep.subr.mxu0 0.0
      %1510 = vmatpush1.msra.mxu0 0.0
      %1511 = vmatprep.subr.mxu0 0.0
      %1512 = vmatpush1.msra.mxu0 0.0
      %1513 = vmatprep.subr.mxu0 0.0
      %1514 = vmatpush1.msra.mxu0 0.0
      %1515 = vmatprep.subr.mxu0 0.0
      %1516 = vmatpush1.msra.mxu0 0.0
      %1517 = vmatprep.subr.mxu0 0.0
      %1518 = vmatpush1.msra.mxu0 0.0
      %1519 = vmatprep.subr.mxu0 0.0
      %1520 = vmatpush1.msra.mxu0 0.0
      %1521 = vmatprep.subr.mxu0 0.0
      %1522 = vmatpush1.msra.mxu0 0.0
      %1523 = vmatprep.subr.mxu0 0.0
      %1524 = vmatpush1.msra.mxu0 0.0
      %1525 = vmatprep.subr.mxu0 0.0
      %1526 = vmatpush1.msra.mxu0 0.0
      %1527 = vmatprep.subr.mxu0 0.0
      %1528 = vmatpush1.msra.mxu0 0.0
      %1529 = vmatprep.subr.mxu0 0.0
      %1530 = vmatpush1.msra.mxu0 0.0
      %1531 = vmatprep.subr.mxu0 0.0
      %1532 = vmatpush1.msra.mxu0 0.0
      %1533 = vmatprep.subr.mxu0 0.0
      %1534 = vmatpush1.msra.mxu0 0.0
      %1535 = vmatprep.subr.mxu0 0.0
      %1536 = vmatpush1.msra.mxu0 0.0
      %1537 = vmatprep.subr.mxu0 0.0
      %1538 = vmatpush1.msra.mxu0 0.0
      %1539 = vmatprep.subr.mxu0 0.0
      %1540 = vmatpush1.msra.mxu0 0.0
      %1541 = vmatprep.subr.mxu0 0.0
      %1542 = vmatpush1.msra.mxu0 0.0
      %1543 = vmatprep.subr.mxu0 0.0
      %1544 = vmatpush1.msra.mxu0 0.0
      %1545 = vmatprep.subr.mxu0 0.0
      %1546 = vmatpush1.msra.mxu0 0.0
      %1547 = vmatprep.subr.mxu0 0.0
      %1548 = vmatpush1.msra.mxu0 0.0
      %1549 = vmatprep.subr.mxu0 0.0
      %1550 = vmatpush1.msra.mxu0 0.0
      %1551 = vmatprep.subr.mxu0 0.0
      %1552 = vmatpush1.msra.mxu0 0.0
      %1553 = vmatprep.subr.mxu0 0.0
      %1554 = vmatpush1.msra.mxu0 0.0
      %1555 = vmatprep.mubr.f32.mxu0 0.0
      %1556 = vmatmul.mubr.f32.gmra.mrb[0].mxu0 %v1486
      %v1557 = vpop.f32.mrb[0].mxu0
      %v1558 = vadd.f32 0.0, %v1557
      %v1559 = vpop.f32.mrb[0].mxu0
      %1560 = vmatprep.mubr.f32.mxu0 0.0
      %1561 = vmatmul.mubr.f32.gmra.mrb[0].mxu0 %v1489
      %v1562 = vpop.f32.mrb[0].mxu0
      %v1563 = vadd.f32 0.0, %v1562
      %v1564 = vpop.f32.mrb[0].mxu0
      %1565 = vdwg.mxu0
      %1566 = vrot.lane.b32.xlu0 %v802, 56
      %v1567 = vpop.permute.xlu0 %1566
      %1568 = vrot.lane.b32.xlu0 %v807, 56
      %v1569 = vpop.permute.xlu0 %1568
      %v1573 = vsel %vm999, %v1477, 0
      %v1576 = vsel %vm999, %v1478, 0
      %1578 = vmatprep.subr.mxu0 0.0
      %1579 = vmatpush1.msra.mxu0 %v1567
      %1580 = vmatprep.subr.mxu0 0.0
      %1581 = vmatpush1.msra.mxu0 %v1569
      %1582 = vmatprep.subr.mxu0 0.0
      %1583 = vmatpush1.msra.mxu0 0.0
      %1584 = vmatprep.subr.mxu0 0.0
      %1585 = vmatpush1.msra.mxu0 0.0
      %1586 = vmatprep.subr.mxu0 0.0
      %1587 = vmatpush1.msra.mxu0 0.0
      %1588 = vmatprep.subr.mxu0 0.0
      %1589 = vmatpush1.msra.mxu0 0.0
      %1590 = vmatprep.subr.mxu0 0.0
      %1591 = vmatpush1.msra.mxu0 0.0
      %1592 = vmatprep.subr.mxu0 0.0
      %1593 = vmatpush1.msra.mxu0 0.0
      %1594 = vmatprep.subr.mxu0 0.0
      %1595 = vmatpush1.msra.mxu0 0.0
      %1596 = vmatprep.subr.mxu0 0.0
      %1597 = vmatpush1.msra.mxu0 0.0
      %1598 = vmatprep.subr.mxu0 0.0
      %1599 = vmatpush1.msra.mxu0 0.0
      %1600 = vmatprep.subr.mxu0 0.0
      %1601 = vmatpush1.msra.mxu0 0.0
      %1602 = vmatprep.subr.mxu0 0.0
      %1603 = vmatpush1.msra.mxu0 0.0
      %1604 = vmatprep.subr.mxu0 0.0
      %1605 = vmatpush1.msra.mxu0 0.0
      %1606 = vmatprep.subr.mxu0 0.0
      %1607 = vmatpush1.msra.mxu0 0.0
      %1608 = vmatprep.subr.mxu0 0.0
      %1609 = vmatpush1.msra.mxu0 0.0
      %1610 = vmatprep.subr.mxu0 0.0
      %1611 = vmatpush1.msra.mxu0 0.0
      %1612 = vmatprep.subr.mxu0 0.0
      %1613 = vmatpush1.msra.mxu0 0.0
      %1614 = vmatprep.subr.mxu0 0.0
      %1615 = vmatpush1.msra.mxu0 0.0
      %1616 = vmatprep.subr.mxu0 0.0
      %1617 = vmatpush1.msra.mxu0 0.0
      %1618 = vmatprep.subr.mxu0 0.0
      %1619 = vmatpush1.msra.mxu0 0.0
      %1620 = vmatprep.subr.mxu0 0.0
      %1621 = vmatpush1.msra.mxu0 0.0
      %1622 = vmatprep.subr.mxu0 0.0
      %1623 = vmatpush1.msra.mxu0 0.0
      %1624 = vmatprep.subr.mxu0 0.0
      %1625 = vmatpush1.msra.mxu0 0.0
      %1626 = vmatprep.subr.mxu0 0.0
      %1627 = vmatpush1.msra.mxu0 0.0
      %1628 = vmatprep.subr.mxu0 0.0
      %1629 = vmatpush1.msra.mxu0 0.0
      %1630 = vmatprep.subr.mxu0 0.0
      %1631 = vmatpush1.msra.mxu0 0.0
      %1632 = vmatprep.subr.mxu0 0.0
      %1633 = vmatpush1.msra.mxu0 0.0
      %1634 = vmatprep.subr.mxu0 0.0
      %1635 = vmatpush1.msra.mxu0 0.0
      %1636 = vmatprep.subr.mxu0 0.0
      %1637 = vmatpush1.msra.mxu0 0.0
      %1638 = vmatprep.subr.mxu0 0.0
      %1639 = vmatpush1.msra.mxu0 0.0
      %1640 = vmatprep.subr.mxu0 0.0
      %1641 = vmatpush1.msra.mxu0 0.0
      %1642 = vmatprep.mubr.f32.mxu0 0.0
      %1643 = vmatmul.mubr.f32.gmra.mrb[0].mxu0 %v1573
      %v1644 = vpop.f32.mrb[0].mxu0
      %v1645 = vadd.f32 0.0, %v1644
      %v1646 = vpop.f32.mrb[0].mxu0
      %1647 = vmatprep.mubr.f32.mxu0 0.0
      %1648 = vmatmul.mubr.f32.gmra.mrb[0].mxu0 %v1576
      %v1649 = vpop.f32.mrb[0].mxu0
      %v1650 = vadd.f32 0.0, %v1649
      %v1651 = vpop.f32.mrb[0].mxu0
      %1652 = vdwg.mxu0
      %1657 = vrot.lane.b32.xlu0 %v1558, 8
      %v1658 = vpop.permute.xlu0 %1657
      %1659 = vrot.lane.b32.xlu0 %v1563, 8
      %v1660 = vpop.permute.xlu0 %1659
      %1661 = vrot.lane.b32.xlu0 %v1645, 8
      %v1662 = vpop.permute.xlu0 %1661
      %1663 = vrot.lane.b32.xlu0 %v1650, 8
      %v1664 = vpop.permute.xlu0 %1663
      %vm1669 = vcmask 130112
      %1670 = vst.msk [vmem:[#allocation2] sm:$0xff] %vm1669, %v1658
      %1671 = vst.msk [vmem:[#allocation2 + $0x8] sm:$0xff] %vm1669, %v1660
      %1672 = vst.msk [vmem:[#allocation2 + $0x10] sm:$0xff] %vm1669, %v1662
      %1673 = vst.msk [vmem:[#allocation2 + $0x18] sm:$0xff] %vm1669, %v1664
      %s1674 = scalar_lea.vmem %s3, 32
      %v1675 = vld [vmem:[%s1674] sm:$0xff]
      %v1676 = vld [vmem:[%s1674 + $0x8] sm:$0xff]
      %1677 = vrot.lane.b32.xlu0 %v792, 112
      %v1678 = vpop.permute.xlu0 %1677
      %1679 = vrot.lane.b32.xlu0 %v797, 112
      %v1680 = vpop.permute.xlu0 %1679
      %1681 = vrot.lane.b32.xlu0 %v792, 80
      %v1682 = vpop.permute.xlu0 %1681
      %1683 = vrot.lane.b32.xlu0 %v797, 80
      %v1684 = vpop.permute.xlu0 %1683
      %v1685 = vsel %vm822, %v1678, 0
      %v1687 = vsel %vm822, %v1680, 0
      %v1689 = vsel %vm822, %v1682, 0
      %v1691 = vsel %vm822, %v1684, 0
      %1693 = vmatprep.subr.mxu0 0.0
      %1694 = vmatpush1.xpose.msra.mxu0 %v1689
      %1695 = vmatprep.subr.mxu0 0.0
      %1696 = vmatpush1.xpose.msra.mxu0 %v1691
      %1697 = vmatprep.subr.mxu0 0.0
      %1698 = vmatpush1.xpose.msra.mxu0 0.0
      %1699 = vmatprep.subr.mxu0 0.0
      %1700 = vmatpush1.xpose.msra.mxu0 0.0
      %1701 = vmatprep.subr.mxu0 0.0
      %1702 = vmatpush1.xpose.msra.mxu0 0.0
      %1703 = vmatprep.subr.mxu0 0.0
      %1704 = vmatpush1.xpose.msra.mxu0 0.0
      %1705 = vmatprep.subr.mxu0 0.0
      %1706 = vmatpush1.xpose.msra.mxu0 0.0
      %1707 = vmatprep.subr.mxu0 0.0
      %1708 = vmatpush1.xpose.msra.mxu0 0.0
      %1709 = vmatprep.subr.mxu0 0.0
      %1710 = vmatpush1.xpose.msra.mxu0 0.0
      %1711 = vmatprep.subr.mxu0 0.0
      %1712 = vmatpush1.xpose.msra.mxu0 0.0
      %1713 = vmatprep.subr.mxu0 0.0
      %1714 = vmatpush1.xpose.msra.mxu0 0.0
      %1715 = vmatprep.subr.mxu0 0.0
      %1716 = vmatpush1.xpose.msra.mxu0 0.0
      %1717 = vmatprep.subr.mxu0 0.0
      %1718 = vmatpush1.xpose.msra.mxu0 0.0
      %1719 = vmatprep.subr.mxu0 0.0
      %1720 = vmatpush1.xpose.msra.mxu0 0.0
      %1721 = vmatprep.subr.mxu0 0.0
      %1722 = vmatpush1.xpose.msra.mxu0 0.0
      %1723 = vmatprep.subr.mxu0 0.0
      %1724 = vmatpush1.xpose.msra.mxu0 0.0
      %1725 = vmatprep.subr.mxu0 0.0
      %1726 = vmatpush1.xpose.msra.mxu0 0.0
      %1727 = vmatprep.subr.mxu0 0.0
      %1728 = vmatpush1.xpose.msra.mxu0 0.0
      %1729 = vmatprep.subr.mxu0 0.0
      %1730 = vmatpush1.xpose.msra.mxu0 0.0
      %1731 = vmatprep.subr.mxu0 0.0
      %1732 = vmatpush1.xpose.msra.mxu0 0.0
      %1733 = vmatprep.subr.mxu0 0.0
      %1734 = vmatpush1.xpose.msra.mxu0 0.0
      %1735 = vmatprep.subr.mxu0 0.0
      %1736 = vmatpush1.xpose.msra.mxu0 0.0
      %1737 = vmatprep.subr.mxu0 0.0
      %1738 = vmatpush1.xpose.msra.mxu0 0.0
      %1739 = vmatprep.subr.mxu0 0.0
      %1740 = vmatpush1.xpose.msra.mxu0 0.0
      %1741 = vmatprep.subr.mxu0 0.0
      %1742 = vmatpush1.xpose.msra.mxu0 0.0
      %1743 = vmatprep.subr.mxu0 0.0
      %1744 = vmatpush1.xpose.msra.mxu0 0.0
      %1745 = vmatprep.subr.mxu0 0.0
      %1746 = vmatpush1.xpose.msra.mxu0 0.0
      %1747 = vmatprep.subr.mxu0 0.0
      %1748 = vmatpush1.xpose.msra.mxu0 0.0
      %1749 = vmatprep.subr.mxu0 0.0
      %1750 = vmatpush1.xpose.msra.mxu0 0.0
      %1751 = vmatprep.subr.mxu0 0.0
      %1752 = vmatpush1.xpose.msra.mxu0 0.0
      %1753 = vmatprep.subr.mxu0 0.0
      %1754 = vmatpush1.xpose.msra.mxu0 0.0
      %1755 = vmatprep.subr.mxu0 0.0
      %1756 = vmatpush1.xpose.msra.mxu0 0.0
      %1757 = vmatprep.mubr.f32.mxu0 0.0
      %1758 = vmatmul.mubr.f32.gmra.mrb[0].mxu0 %v1685
      %v1759 = vpop.f32.mrb[0].mxu0
      %v1760 = vadd.f32 %v1675, %v1759
      %v1761 = vpop.f32.mrb[0].mxu0
      %1762 = vmatprep.mubr.f32.mxu0 0.0
      %1763 = vmatmul.mubr.f32.gmra.mrb[0].mxu0 %v1687
      %v1764 = vpop.f32.mrb[0].mxu0
      %v1765 = vadd.f32 %v1676, %v1764
      %v1766 = vpop.f32.mrb[0].mxu0
      %1767 = vdwg.mxu0
      %1768 = vrot.lane.b32.xlu0 %v802, 112
      %v1769 = vpop.permute.xlu0 %1768
      %1770 = vrot.lane.b32.xlu0 %v807, 112
      %v1771 = vpop.permute.xlu0 %1770
      %1772 = vrot.lane.b32.xlu0 %v802, 80
      %v1773 = vpop.permute.xlu0 %1772
      %1774 = vrot.lane.b32.xlu0 %v807, 80
      %v1775 = vpop.permute.xlu0 %1774
      %v1776 = vsel %vm822, %v1769, 0
      %v1778 = vsel %vm822, %v1771, 0
      %v1780 = vsel %vm822, %v1773, 0
      %v1782 = vsel %vm822, %v1775, 0
      %1784 = vmatprep.subr.mxu0 0.0
      %1785 = vmatpush1.xpose.msra.mxu0 %v1780
      %1786 = vmatprep.subr.mxu0 0.0
      %1787 = vmatpush1.xpose.msra.mxu0 %v1782
      %1788 = vmatprep.subr.mxu0 0.0
      %1789 = vmatpush1.xpose.msra.mxu0 0.0
      %1790 = vmatprep.subr.mxu0 0.0
      %1791 = vmatpush1.xpose.msra.mxu0 0.0
      %1792 = vmatprep.subr.mxu0 0.0
      %1793 = vmatpush1.xpose.msra.mxu0 0.0
      %1794 = vmatprep.subr.mxu0 0.0
      %1795 = vmatpush1.xpose.msra.mxu0 0.0
      %1796 = vmatprep.subr.mxu0 0.0
      %1797 = vmatpush1.xpose.msra.mxu0 0.0
      %1798 = vmatprep.subr.mxu0 0.0
      %1799 = vmatpush1.xpose.msra.mxu0 0.0
      %1800 = vmatprep.subr.mxu0 0.0
      %1801 = vmatpush1.xpose.msra.mxu0 0.0
      %1802 = vmatprep.subr.mxu0 0.0
      %1803 = vmatpush1.xpose.msra.mxu0 0.0
      %1804 = vmatprep.subr.mxu0 0.0
      %1805 = vmatpush1.xpose.msra.mxu0 0.0
      %1806 = vmatprep.subr.mxu0 0.0
      %1807 = vmatpush1.xpose.msra.mxu0 0.0
      %1808 = vmatprep.subr.mxu0 0.0
      %1809 = vmatpush1.xpose.msra.mxu0 0.0
      %1810 = vmatprep.subr.mxu0 0.0
      %1811 = vmatpush1.xpose.msra.mxu0 0.0
      %1812 = vmatprep.subr.mxu0 0.0
      %1813 = vmatpush1.xpose.msra.mxu0 0.0
      %1814 = vmatprep.subr.mxu0 0.0
      %1815 = vmatpush1.xpose.msra.mxu0 0.0
      %1816 = vmatprep.subr.mxu0 0.0
      %1817 = vmatpush1.xpose.msra.mxu0 0.0
      %1818 = vmatprep.subr.mxu0 0.0
      %1819 = vmatpush1.xpose.msra.mxu0 0.0
      %1820 = vmatprep.subr.mxu0 0.0
      %1821 = vmatpush1.xpose.msra.mxu0 0.0
      %1822 = vmatprep.subr.mxu0 0.0
      %1823 = vmatpush1.xpose.msra.mxu0 0.0
      %1824 = vmatprep.subr.mxu0 0.0
      %1825 = vmatpush1.xpose.msra.mxu0 0.0
      %1826 = vmatprep.subr.mxu0 0.0
      %1827 = vmatpush1.xpose.msra.mxu0 0.0
      %1828 = vmatprep.subr.mxu0 0.0
      %1829 = vmatpush1.xpose.msra.mxu0 0.0
      %1830 = vmatprep.subr.mxu0 0.0
      %1831 = vmatpush1.xpose.msra.mxu0 0.0
      %1832 = vmatprep.subr.mxu0 0.0
      %1833 = vmatpush1.xpose.msra.mxu0 0.0
      %1834 = vmatprep.subr.mxu0 0.0
      %1835 = vmatpush1.xpose.msra.mxu0 0.0
      %1836 = vmatprep.subr.mxu0 0.0
      %1837 = vmatpush1.xpose.msra.mxu0 0.0
      %1838 = vmatprep.subr.mxu0 0.0
      %1839 = vmatpush1.xpose.msra.mxu0 0.0
      %1840 = vmatprep.subr.mxu0 0.0
      %1841 = vmatpush1.xpose.msra.mxu0 0.0
      %1842 = vmatprep.subr.mxu0 0.0
      %1843 = vmatpush1.xpose.msra.mxu0 0.0
      %1844 = vmatprep.subr.mxu0 0.0
      %1845 = vmatpush1.xpose.msra.mxu0 0.0
      %1846 = vmatprep.subr.mxu0 0.0
      %1847 = vmatpush1.xpose.msra.mxu0 0.0
      %1848 = vmatprep.mubr.f32.mxu0 0.0
      %1849 = vmatmul.mubr.f32.gmra.mrb[0].mxu0 %v1776
      %v1850 = vpop.f32.mrb[0].mxu0
      %v1851 = vadd.f32 %v1675, %v1850
      %v1852 = vpop.f32.mrb[0].mxu0
      %1853 = vmatprep.mubr.f32.mxu0 0.0
      %1854 = vmatmul.mubr.f32.gmra.mrb[0].mxu0 %v1778
      %v1855 = vpop.f32.mrb[0].mxu0
      %v1856 = vadd.f32 %v1676, %v1855
      %v1857 = vpop.f32.mrb[0].mxu0
      %1858 = vdwg.mxu0
      %v1859 = vadd.f32 %v1760, %v810
      %v1860 = vadd.f32 %v1765, %v811
      %v1861 = vadd.f32 %v1851, %v812
      %v1862 = vadd.f32 %v1856, %v813
      %v1863 = vsel %vm999, %v1859, -inf
      %1864 = vmax.xlane.f32.xlu0 %v1863
      %v1865 = vpop.xlane.xlu0 %1864
      %v1866 = vsel %vm999, %v1860, -inf
      %1867 = vmax.xlane.f32.xlu0 %v1866
      %v1868 = vpop.xlane.xlu0 %1867
      %v1869 = vsel %vm999, %v1861, -inf
      %1870 = vmax.xlane.f32.xlu0 %v1869
      %v1871 = vpop.xlane.xlu0 %1870
      %v1872 = vsel %vm999, %v1862, -inf
      %1873 = vmax.xlane.f32.xlu0 %v1872
      %v1874 = vpop.xlane.xlu0 %1873
      %v1875 = vsub.f32 %v1859, %v1865
      %v1876 = vsub.f32 %v1860, %v1868
      %v1877 = vsub.f32 %v1861, %v1871
      %v1878 = vsub.f32 %v1862, %v1874
      %v1879 = vmul.f32 %v1875, 1.442695
      %v1880 = vpow.pop %v1879
      %v1881 = vmul.f32 %v1876, 1.442695
      %v1882 = vpow.pop %v1881
      %v1883 = vmul.f32 %v1877, 1.442695
      %v1884 = vpow.pop %v1883
      %v1885 = vmul.f32 %v1878, 1.442695
      %v1886 = vpow.pop %v1885
      %v1887 = vsel %vm999, %v1880, 0.0
      %1888 = vadd.xlane.f32.xlu0 %v1887
      %v1889 = vpop.xlane.xlu0 %1888
      %v1890 = vsel %vm999, %v1882, 0.0
      %1891 = vadd.xlane.f32.xlu0 %v1890
      %v1892 = vpop.xlane.xlu0 %1891
      %v1893 = vsel %vm999, %v1884, 0.0
      %1894 = vadd.xlane.f32.xlu0 %v1893
      %v1895 = vpop.xlane.xlu0 %1894
      %v1896 = vsel %vm999, %v1886, 0.0
      %1897 = vadd.xlane.f32.xlu0 %v1896
      %v1898 = vpop.xlane.xlu0 %1897
      %v1899 = vrcp.pop %v1889
      %v1900 = vrcp.pop %v1892
      %v1901 = vrcp.pop %v1895
      %v1902 = vrcp.pop %v1898
      %v1903 = vmul.f32 %v1889, %v1899
      %v1904 = vmul.f32 %v1892, %v1900
      %v1905 = vmul.f32 %v1895, %v1901
      %v1906 = vmul.f32 %v1898, %v1902
      %v1907 = vsub.f32 2.0, %v1903
      %v1908 = vsub.f32 2.0, %v1904
      %v1909 = vsub.f32 2.0, %v1905
      %v1910 = vsub.f32 2.0, %v1906
      %v1911 = vmul.f32 %v1899, %v1907
      %v1912 = vmul.f32 %v1900, %v1908
      %v1913 = vmul.f32 %v1901, %v1909
      %v1914 = vmul.f32 %v1902, %v1910
      %v1915 = vmul.f32 %v1880, %v1911
      %v1916 = vmul.f32 %v1882, %v1912
      %v1917 = vmul.f32 %v1884, %v1913
      %v1918 = vmul.f32 %v1886, %v1914
      %1919 = vrot.lane.b32.xlu0 %v792, 48
      %v1920 = vpop.permute.xlu0 %1919
      %1921 = vrot.lane.b32.xlu0 %v797, 48
      %v1922 = vpop.permute.xlu0 %1921
      %v1926 = vsel %vm999, %v1915, 0
      %v1929 = vsel %vm999, %v1916, 0
      %1931 = vmatprep.subr.mxu0 0.0
      %1932 = vmatpush1.msra.mxu0 %v1920
      %1933 = vmatprep.subr.mxu0 0.0
      %1934 = vmatpush1.msra.mxu0 %v1922
      %1935 = vmatprep.subr.mxu0 0.0
      %1936 = vmatpush1.msra.mxu0 0.0
      %1937 = vmatprep.subr.mxu0 0.0
      %1938 = vmatpush1.msra.mxu0 0.0
      %1939 = vmatprep.subr.mxu0 0.0
      %1940 = vmatpush1.msra.mxu0 0.0
      %1941 = vmatprep.subr.mxu0 0.0
      %1942 = vmatpush1.msra.mxu0 0.0
      %1943 = vmatprep.subr.mxu0 0.0
      %1944 = vmatpush1.msra.mxu0 0.0
      %1945 = vmatprep.subr.mxu0 0.0
      %1946 = vmatpush1.msra.mxu0 0.0
      %1947 = vmatprep.subr.mxu0 0.0
      %1948 = vmatpush1.msra.mxu0 0.0
      %1949 = vmatprep.subr.mxu0 0.0
      %1950 = vmatpush1.msra.mxu0 0.0
      %1951 = vmatprep.subr.mxu0 0.0
      %1952 = vmatpush1.msra.mxu0 0.0
      %1953 = vmatprep.subr.mxu0 0.0
      %1954 = vmatpush1.msra.mxu0 0.0
      %1955 = vmatprep.subr.mxu0 0.0
      %1956 = vmatpush1.msra.mxu0 0.0
      %1957 = vmatprep.subr.mxu0 0.0
      %1958 = vmatpush1.msra.mxu0 0.0
      %1959 = vmatprep.subr.mxu0 0.0
      %1960 = vmatpush1.msra.mxu0 0.0
      %1961 = vmatprep.subr.mxu0 0.0
      %1962 = vmatpush1.msra.mxu0 0.0
      %1963 = vmatprep.subr.mxu0 0.0
      %1964 = vmatpush1.msra.mxu0 0.0
      %1965 = vmatprep.subr.mxu0 0.0
      %1966 = vmatpush1.msra.mxu0 0.0
      %1967 = vmatprep.subr.mxu0 0.0
      %1968 = vmatpush1.msra.mxu0 0.0
      %1969 = vmatprep.subr.mxu0 0.0
      %1970 = vmatpush1.msra.mxu0 0.0
      %1971 = vmatprep.subr.mxu0 0.0
      %1972 = vmatpush1.msra.mxu0 0.0
      %1973 = vmatprep.subr.mxu0 0.0
      %1974 = vmatpush1.msra.mxu0 0.0
      %1975 = vmatprep.subr.mxu0 0.0
      %1976 = vmatpush1.msra.mxu0 0.0
      %1977 = vmatprep.subr.mxu0 0.0
      %1978 = vmatpush1.msra.mxu0 0.0
      %1979 = vmatprep.subr.mxu0 0.0
      %1980 = vmatpush1.msra.mxu0 0.0
      %1981 = vmatprep.subr.mxu0 0.0
      %1982 = vmatpush1.msra.mxu0 0.0
      %1983 = vmatprep.subr.mxu0 0.0
      %1984 = vmatpush1.msra.mxu0 0.0
      %1985 = vmatprep.subr.mxu0 0.0
      %1986 = vmatpush1.msra.mxu0 0.0
      %1987 = vmatprep.subr.mxu0 0.0
      %1988 = vmatpush1.msra.mxu0 0.0
      %1989 = vmatprep.subr.mxu0 0.0
      %1990 = vmatpush1.msra.mxu0 0.0
      %1991 = vmatprep.subr.mxu0 0.0
      %1992 = vmatpush1.msra.mxu0 0.0
      %1993 = vmatprep.subr.mxu0 0.0
      %1994 = vmatpush1.msra.mxu0 0.0
      %1995 = vmatprep.mubr.f32.mxu0 0.0
      %1996 = vmatmul.mubr.f32.gmra.mrb[0].mxu0 %v1926
      %v1997 = vpop.f32.mrb[0].mxu0
      %v1998 = vadd.f32 0.0, %v1997
      %v1999 = vpop.f32.mrb[0].mxu0
      %2000 = vmatprep.mubr.f32.mxu0 0.0
      %2001 = vmatmul.mubr.f32.gmra.mrb[0].mxu0 %v1929
      %v2002 = vpop.f32.mrb[0].mxu0
      %v2003 = vadd.f32 0.0, %v2002
      %v2004 = vpop.f32.mrb[0].mxu0
      %2005 = vdwg.mxu0
      %2006 = vrot.lane.b32.xlu0 %v802, 48
      %v2007 = vpop.permute.xlu0 %2006
      %2008 = vrot.lane.b32.xlu0 %v807, 48
      %v2009 = vpop.permute.xlu0 %2008
      %v2013 = vsel %vm999, %v1917, 0
      %v2016 = vsel %vm999, %v1918, 0
      %2018 = vmatprep.subr.mxu0 0.0
      %2019 = vmatpush1.msra.mxu0 %v2007
      %2020 = vmatprep.subr.mxu0 0.0
      %2021 = vmatpush1.msra.mxu0 %v2009
      %2022 = vmatprep.subr.mxu0 0.0
      %2023 = vmatpush1.msra.mxu0 0.0
      %2024 = vmatprep.subr.mxu0 0.0
      %2025 = vmatpush1.msra.mxu0 0.0
      %2026 = vmatprep.subr.mxu0 0.0
      %2027 = vmatpush1.msra.mxu0 0.0
      %2028 = vmatprep.subr.mxu0 0.0
      %2029 = vmatpush1.msra.mxu0 0.0
      %2030 = vmatprep.subr.mxu0 0.0
      %2031 = vmatpush1.msra.mxu0 0.0
      %2032 = vmatprep.subr.mxu0 0.0
      %2033 = vmatpush1.msra.mxu0 0.0
      %2034 = vmatprep.subr.mxu0 0.0
      %2035 = vmatpush1.msra.mxu0 0.0
      %2036 = vmatprep.subr.mxu0 0.0
      %2037 = vmatpush1.msra.mxu0 0.0
      %2038 = vmatprep.subr.mxu0 0.0
      %2039 = vmatpush1.msra.mxu0 0.0
      %2040 = vmatprep.subr.mxu0 0.0
      %2041 = vmatpush1.msra.mxu0 0.0
      %2042 = vmatprep.subr.mxu0 0.0
      %2043 = vmatpush1.msra.mxu0 0.0
      %2044 = vmatprep.subr.mxu0 0.0
      %2045 = vmatpush1.msra.mxu0 0.0
      %2046 = vmatprep.subr.mxu0 0.0
      %2047 = vmatpush1.msra.mxu0 0.0
      %2048 = vmatprep.subr.mxu0 0.0
      %2049 = vmatpush1.msra.mxu0 0.0
      %2050 = vmatprep.subr.mxu0 0.0
      %2051 = vmatpush1.msra.mxu0 0.0
      %2052 = vmatprep.subr.mxu0 0.0
      %2053 = vmatpush1.msra.mxu0 0.0
      %2054 = vmatprep.subr.mxu0 0.0
      %2055 = vmatpush1.msra.mxu0 0.0
      %2056 = vmatprep.subr.mxu0 0.0
      %2057 = vmatpush1.msra.mxu0 0.0
      %2058 = vmatprep.subr.mxu0 0.0
      %2059 = vmatpush1.msra.mxu0 0.0
      %2060 = vmatprep.subr.mxu0 0.0
      %2061 = vmatpush1.msra.mxu0 0.0
      %2062 = vmatprep.subr.mxu0 0.0
      %2063 = vmatpush1.msra.mxu0 0.0
      %2064 = vmatprep.subr.mxu0 0.0
      %2065 = vmatpush1.msra.mxu0 0.0
      %2066 = vmatprep.subr.mxu0 0.0
      %2067 = vmatpush1.msra.mxu0 0.0
      %2068 = vmatprep.subr.mxu0 0.0
      %2069 = vmatpush1.msra.mxu0 0.0
      %2070 = vmatprep.subr.mxu0 0.0
      %2071 = vmatpush1.msra.mxu0 0.0
      %2072 = vmatprep.subr.mxu0 0.0
      %2073 = vmatpush1.msra.mxu0 0.0
      %2074 = vmatprep.subr.mxu0 0.0
      %2075 = vmatpush1.msra.mxu0 0.0
      %2076 = vmatprep.subr.mxu0 0.0
      %2077 = vmatpush1.msra.mxu0 0.0
      %2078 = vmatprep.subr.mxu0 0.0
      %2079 = vmatpush1.msra.mxu0 0.0
      %2080 = vmatprep.subr.mxu0 0.0
      %2081 = vmatpush1.msra.mxu0 0.0
      %2082 = vmatprep.mubr.f32.mxu0 0.0
      %2083 = vmatmul.mubr.f32.gmra.mrb[0].mxu0 %v2013
      %v2084 = vpop.f32.mrb[0].mxu0
      %v2085 = vadd.f32 0.0, %v2084
      %v2086 = vpop.f32.mrb[0].mxu0
      %2087 = vmatprep.mubr.f32.mxu0 0.0
      %2088 = vmatmul.mubr.f32.gmra.mrb[0].mxu0 %v2016
      %v2089 = vpop.f32.mrb[0].mxu0
      %v2090 = vadd.f32 0.0, %v2089
      %v2091 = vpop.f32.mrb[0].mxu0
      %2092 = vdwg.mxu0
      %2097 = vrot.lane.b32.xlu0 %v1998, 16
      %v2098 = vpop.permute.xlu0 %2097
      %2099 = vrot.lane.b32.xlu0 %v2003, 16
      %v2100 = vpop.permute.xlu0 %2099
      %2101 = vrot.lane.b32.xlu0 %v2085, 16
      %v2102 = vpop.permute.xlu0 %2101
      %2103 = vrot.lane.b32.xlu0 %v2090, 16
      %v2104 = vpop.permute.xlu0 %2103
      %vm2109 = vcmask 195712
      %2110 = vst.msk [vmem:[#allocation2] sm:$0xff] %vm2109, %v2098
      %2111 = vst.msk [vmem:[#allocation2 + $0x8] sm:$0xff] %vm2109, %v2100
      %2112 = vst.msk [vmem:[#allocation2 + $0x10] sm:$0xff] %vm2109, %v2102
      %2113 = vst.msk [vmem:[#allocation2 + $0x18] sm:$0xff] %vm2109, %v2104
      %s2114 = scalar_lea.vmem %s3, 48
      %v2115 = vld [vmem:[%s2114] sm:$0xff]
      %v2116 = vld [vmem:[%s2114 + $0x8] sm:$0xff]
      %2117 = vrot.lane.b32.xlu0 %v792, 104
      %v2118 = vpop.permute.xlu0 %2117
      %2119 = vrot.lane.b32.xlu0 %v797, 104
      %v2120 = vpop.permute.xlu0 %2119
      %2121 = vrot.lane.b32.xlu0 %v792, 72
      %v2122 = vpop.permute.xlu0 %2121
      %2123 = vrot.lane.b32.xlu0 %v797, 72
      %v2124 = vpop.permute.xlu0 %2123
      %v2125 = vsel %vm822, %v2118, 0
      %v2127 = vsel %vm822, %v2120, 0
      %v2129 = vsel %vm822, %v2122, 0
      %v2131 = vsel %vm822, %v2124, 0
      %2133 = vmatprep.subr.mxu0 0.0
      %2134 = vmatpush1.xpose.msra.mxu0 %v2129
      %2135 = vmatprep.subr.mxu0 0.0
      %2136 = vmatpush1.xpose.msra.mxu0 %v2131
      %2137 = vmatprep.subr.mxu0 0.0
      %2138 = vmatpush1.xpose.msra.mxu0 0.0
      %2139 = vmatprep.subr.mxu0 0.0
      %2140 = vmatpush1.xpose.msra.mxu0 0.0
      %2141 = vmatprep.subr.mxu0 0.0
      %2142 = vmatpush1.xpose.msra.mxu0 0.0
      %2143 = vmatprep.subr.mxu0 0.0
      %2144 = vmatpush1.xpose.msra.mxu0 0.0
      %2145 = vmatprep.subr.mxu0 0.0
      %2146 = vmatpush1.xpose.msra.mxu0 0.0
      %2147 = vmatprep.subr.mxu0 0.0
      %2148 = vmatpush1.xpose.msra.mxu0 0.0
      %2149 = vmatprep.subr.mxu0 0.0
      %2150 = vmatpush1.xpose.msra.mxu0 0.0
      %2151 = vmatprep.subr.mxu0 0.0
      %2152 = vmatpush1.xpose.msra.mxu0 0.0
      %2153 = vmatprep.subr.mxu0 0.0
      %2154 = vmatpush1.xpose.msra.mxu0 0.0
      %2155 = vmatprep.subr.mxu0 0.0
      %2156 = vmatpush1.xpose.msra.mxu0 0.0
      %2157 = vmatprep.subr.mxu0 0.0
      %2158 = vmatpush1.xpose.msra.mxu0 0.0
      %2159 = vmatprep.subr.mxu0 0.0
      %2160 = vmatpush1.xpose.msra.mxu0 0.0
      %2161 = vmatprep.subr.mxu0 0.0
      %2162 = vmatpush1.xpose.msra.mxu0 0.0
      %2163 = vmatprep.subr.mxu0 0.0
      %2164 = vmatpush1.xpose.msra.mxu0 0.0
      %2165 = vmatprep.subr.mxu0 0.0
      %2166 = vmatpush1.xpose.msra.mxu0 0.0
      %2167 = vmatprep.subr.mxu0 0.0
      %2168 = vmatpush1.xpose.msra.mxu0 0.0
      %2169 = vmatprep.subr.mxu0 0.0
      %2170 = vmatpush1.xpose.msra.mxu0 0.0
      %2171 = vmatprep.subr.mxu0 0.0
      %2172 = vmatpush1.xpose.msra.mxu0 0.0
      %2173 = vmatprep.subr.mxu0 0.0
      %2174 = vmatpush1.xpose.msra.mxu0 0.0
      %2175 = vmatprep.subr.mxu0 0.0
      %2176 = vmatpush1.xpose.msra.mxu0 0.0
      %2177 = vmatprep.subr.mxu0 0.0
      %2178 = vmatpush1.xpose.msra.mxu0 0.0
      %2179 = vmatprep.subr.mxu0 0.0
      %2180 = vmatpush1.xpose.msra.mxu0 0.0
      %2181 = vmatprep.subr.mxu0 0.0
      %2182 = vmatpush1.xpose.msra.mxu0 0.0
      %2183 = vmatprep.subr.mxu0 0.0
      %2184 = vmatpush1.xpose.msra.mxu0 0.0
      %2185 = vmatprep.subr.mxu0 0.0
      %2186 = vmatpush1.xpose.msra.mxu0 0.0
      %2187 = vmatprep.subr.mxu0 0.0
      %2188 = vmatpush1.xpose.msra.mxu0 0.0
      %2189 = vmatprep.subr.mxu0 0.0
      %2190 = vmatpush1.xpose.msra.mxu0 0.0
      %2191 = vmatprep.subr.mxu0 0.0
      %2192 = vmatpush1.xpose.msra.mxu0 0.0
      %2193 = vmatprep.subr.mxu0 0.0
      %2194 = vmatpush1.xpose.msra.mxu0 0.0
      %2195 = vmatprep.subr.mxu0 0.0
      %2196 = vmatpush1.xpose.msra.mxu0 0.0
      %2197 = vmatprep.mubr.f32.mxu0 0.0
      %2198 = vmatmul.mubr.f32.gmra.mrb[0].mxu0 %v2125
      %v2199 = vpop.f32.mrb[0].mxu0
      %v2200 = vadd.f32 %v2115, %v2199
      %v2201 = vpop.f32.mrb[0].mxu0
      %2202 = vmatprep.mubr.f32.mxu0 0.0
      %2203 = vmatmul.mubr.f32.gmra.mrb[0].mxu0 %v2127
      %v2204 = vpop.f32.mrb[0].mxu0
      %v2205 = vadd.f32 %v2116, %v2204
      %v2206 = vpop.f32.mrb[0].mxu0
      %2207 = vdwg.mxu0
      %2208 = vrot.lane.b32.xlu0 %v802, 104
      %v2209 = vpop.permute.xlu0 %2208
      %2210 = vrot.lane.b32.xlu0 %v807, 104
      %v2211 = vpop.permute.xlu0 %2210
      %2212 = vrot.lane.b32.xlu0 %v802, 72
      %v2213 = vpop.permute.xlu0 %2212
      %2214 = vrot.lane.b32.xlu0 %v807, 72
      %v2215 = vpop.permute.xlu0 %2214
      %v2216 = vsel %vm822, %v2209, 0
      %v2218 = vsel %vm822, %v2211, 0
      %v2220 = vsel %vm822, %v2213, 0
      %v2222 = vsel %vm822, %v2215, 0
      %2224 = vmatprep.subr.mxu0 0.0
      %2225 = vmatpush1.xpose.msra.mxu0 %v2220
      %2226 = vmatprep.subr.mxu0 0.0
      %2227 = vmatpush1.xpose.msra.mxu0 %v2222
      %2228 = vmatprep.subr.mxu0 0.0
      %2229 = vmatpush1.xpose.msra.mxu0 0.0
      %2230 = vmatprep.subr.mxu0 0.0
      %2231 = vmatpush1.xpose.msra.mxu0 0.0
      %2232 = vmatprep.subr.mxu0 0.0
      %2233 = vmatpush1.xpose.msra.mxu0 0.0
      %2234 = vmatprep.subr.mxu0 0.0
      %2235 = vmatpush1.xpose.msra.mxu0 0.0
      %2236 = vmatprep.subr.mxu0 0.0
      %2237 = vmatpush1.xpose.msra.mxu0 0.0
      %2238 = vmatprep.subr.mxu0 0.0
      %2239 = vmatpush1.xpose.msra.mxu0 0.0
      %2240 = vmatprep.subr.mxu0 0.0
      %2241 = vmatpush1.xpose.msra.mxu0 0.0
      %2242 = vmatprep.subr.mxu0 0.0
      %2243 = vmatpush1.xpose.msra.mxu0 0.0
      %2244 = vmatprep.subr.mxu0 0.0
      %2245 = vmatpush1.xpose.msra.mxu0 0.0
      %2246 = vmatprep.subr.mxu0 0.0
      %2247 = vmatpush1.xpose.msra.mxu0 0.0
      %2248 = vmatprep.subr.mxu0 0.0
      %2249 = vmatpush1.xpose.msra.mxu0 0.0
      %2250 = vmatprep.subr.mxu0 0.0
      %2251 = vmatpush1.xpose.msra.mxu0 0.0
      %2252 = vmatprep.subr.mxu0 0.0
      %2253 = vmatpush1.xpose.msra.mxu0 0.0
      %2254 = vmatprep.subr.mxu0 0.0
      %2255 = vmatpush1.xpose.msra.mxu0 0.0
      %2256 = vmatprep.subr.mxu0 0.0
      %2257 = vmatpush1.xpose.msra.mxu0 0.0
      %2258 = vmatprep.subr.mxu0 0.0
      %2259 = vmatpush1.xpose.msra.mxu0 0.0
      %2260 = vmatprep.subr.mxu0 0.0
      %2261 = vmatpush1.xpose.msra.mxu0 0.0
      %2262 = vmatprep.subr.mxu0 0.0
      %2263 = vmatpush1.xpose.msra.mxu0 0.0
      %2264 = vmatprep.subr.mxu0 0.0
      %2265 = vmatpush1.xpose.msra.mxu0 0.0
      %2266 = vmatprep.subr.mxu0 0.0
      %2267 = vmatpush1.xpose.msra.mxu0 0.0
      %2268 = vmatprep.subr.mxu0 0.0
      %2269 = vmatpush1.xpose.msra.mxu0 0.0
      %2270 = vmatprep.subr.mxu0 0.0
      %2271 = vmatpush1.xpose.msra.mxu0 0.0
      %2272 = vmatprep.subr.mxu0 0.0
      %2273 = vmatpush1.xpose.msra.mxu0 0.0
      %2274 = vmatprep.subr.mxu0 0.0
      %2275 = vmatpush1.xpose.msra.mxu0 0.0
      %2276 = vmatprep.subr.mxu0 0.0
      %2277 = vmatpush1.xpose.msra.mxu0 0.0
      %2278 = vmatprep.subr.mxu0 0.0
      %2279 = vmatpush1.xpose.msra.mxu0 0.0
      %2280 = vmatprep.subr.mxu0 0.0
      %2281 = vmatpush1.xpose.msra.mxu0 0.0
      %2282 = vmatprep.subr.mxu0 0.0
      %2283 = vmatpush1.xpose.msra.mxu0 0.0
      %2284 = vmatprep.subr.mxu0 0.0
      %2285 = vmatpush1.xpose.msra.mxu0 0.0
      %2286 = vmatprep.subr.mxu0 0.0
      %2287 = vmatpush1.xpose.msra.mxu0 0.0
      %2288 = vmatprep.mubr.f32.mxu0 0.0
      %2289 = vmatmul.mubr.f32.gmra.mrb[0].mxu0 %v2216
      %v2290 = vpop.f32.mrb[0].mxu0
      %v2291 = vadd.f32 %v2115, %v2290
      %v2292 = vpop.f32.mrb[0].mxu0
      %2293 = vmatprep.mubr.f32.mxu0 0.0
      %2294 = vmatmul.mubr.f32.gmra.mrb[0].mxu0 %v2218
      %v2295 = vpop.f32.mrb[0].mxu0
      %v2296 = vadd.f32 %v2116, %v2295
      %v2297 = vpop.f32.mrb[0].mxu0
      %2298 = vdwg.mxu0
      %v2299 = vadd.f32 %v2200, %v810
      %v2300 = vadd.f32 %v2205, %v811
      %v2301 = vadd.f32 %v2291, %v812
      %v2302 = vadd.f32 %v2296, %v813
      %v2303 = vsel %vm999, %v2299, -inf
      %2304 = vmax.xlane.f32.xlu0 %v2303
      %v2305 = vpop.xlane.xlu0 %2304
      %v2306 = vsel %vm999, %v2300, -inf
      %2307 = vmax.xlane.f32.xlu0 %v2306
      %v2308 = vpop.xlane.xlu0 %2307
      %v2309 = vsel %vm999, %v2301, -inf
      %2310 = vmax.xlane.f32.xlu0 %v2309
      %v2311 = vpop.xlane.xlu0 %2310
      %v2312 = vsel %vm999, %v2302, -inf
      %2313 = vmax.xlane.f32.xlu0 %v2312
      %v2314 = vpop.xlane.xlu0 %2313
      %v2315 = vsub.f32 %v2299, %v2305
      %v2316 = vsub.f32 %v2300, %v2308
      %v2317 = vsub.f32 %v2301, %v2311
      %v2318 = vsub.f32 %v2302, %v2314
      %v2319 = vmul.f32 %v2315, 1.442695
      %v2320 = vpow.pop %v2319
      %v2321 = vmul.f32 %v2316, 1.442695
      %v2322 = vpow.pop %v2321
      %v2323 = vmul.f32 %v2317, 1.442695
      %v2324 = vpow.pop %v2323
      %v2325 = vmul.f32 %v2318, 1.442695
      %v2326 = vpow.pop %v2325
      %v2327 = vsel %vm999, %v2320, 0.0
      %2328 = vadd.xlane.f32.xlu0 %v2327
      %v2329 = vpop.xlane.xlu0 %2328
      %v2330 = vsel %vm999, %v2322, 0.0
      %2331 = vadd.xlane.f32.xlu0 %v2330
      %v2332 = vpop.xlane.xlu0 %2331
      %v2333 = vsel %vm999, %v2324, 0.0
      %2334 = vadd.xlane.f32.xlu0 %v2333
      %v2335 = vpop.xlane.xlu0 %2334
      %v2336 = vsel %vm999, %v2326, 0.0
      %2337 = vadd.xlane.f32.xlu0 %v2336
      %v2338 = vpop.xlane.xlu0 %2337
      %v2339 = vrcp.pop %v2329
      %v2340 = vrcp.pop %v2332
      %v2341 = vrcp.pop %v2335
      %v2342 = vrcp.pop %v2338
      %v2343 = vmul.f32 %v2329, %v2339
      %v2344 = vmul.f32 %v2332, %v2340
      %v2345 = vmul.f32 %v2335, %v2341
      %v2346 = vmul.f32 %v2338, %v2342
      %v2347 = vsub.f32 2.0, %v2343
      %v2348 = vsub.f32 2.0, %v2344
      %v2349 = vsub.f32 2.0, %v2345
      %v2350 = vsub.f32 2.0, %v2346
      %v2351 = vmul.f32 %v2339, %v2347
      %v2352 = vmul.f32 %v2340, %v2348
      %v2353 = vmul.f32 %v2341, %v2349
      %v2354 = vmul.f32 %v2342, %v2350
      %v2355 = vmul.f32 %v2320, %v2351
      %v2356 = vmul.f32 %v2322, %v2352
      %v2357 = vmul.f32 %v2324, %v2353
      %v2358 = vmul.f32 %v2326, %v2354
      %2359 = vrot.lane.b32.xlu0 %v792, 40
      %v2360 = vpop.permute.xlu0 %2359
      %2361 = vrot.lane.b32.xlu0 %v797, 40
      %v2362 = vpop.permute.xlu0 %2361
      %v2366 = vsel %vm999, %v2355, 0
      %v2369 = vsel %vm999, %v2356, 0
      %2371 = vmatprep.subr.mxu0 0.0
      %2372 = vmatpush1.msra.mxu0 %v2360
      %2373 = vmatprep.subr.mxu0 0.0
      %2374 = vmatpush1.msra.mxu0 %v2362
      %2375 = vmatprep.subr.mxu0 0.0
      %2376 = vmatpush1.msra.mxu0 0.0
      %2377 = vmatprep.subr.mxu0 0.0
      %2378 = vmatpush1.msra.mxu0 0.0
      %2379 = vmatprep.subr.mxu0 0.0
      %2380 = vmatpush1.msra.mxu0 0.0
      %2381 = vmatprep.subr.mxu0 0.0
      %2382 = vmatpush1.msra.mxu0 0.0
      %2383 = vmatprep.subr.mxu0 0.0
      %2384 = vmatpush1.msra.mxu0 0.0
      %2385 = vmatprep.subr.mxu0 0.0
      %2386 = vmatpush1.msra.mxu0 0.0
      %2387 = vmatprep.subr.mxu0 0.0
      %2388 = vmatpush1.msra.mxu0 0.0
      %2389 = vmatprep.subr.mxu0 0.0
      %2390 = vmatpush1.msra.mxu0 0.0
      %2391 = vmatprep.subr.mxu0 0.0
      %2392 = vmatpush1.msra.mxu0 0.0
      %2393 = vmatprep.subr.mxu0 0.0
      %2394 = vmatpush1.msra.mxu0 0.0
      %2395 = vmatprep.subr.mxu0 0.0
      %2396 = vmatpush1.msra.mxu0 0.0
      %2397 = vmatprep.subr.mxu0 0.0
      %2398 = vmatpush1.msra.mxu0 0.0
      %2399 = vmatprep.subr.mxu0 0.0
      %2400 = vmatpush1.msra.mxu0 0.0
      %2401 = vmatprep.subr.mxu0 0.0
      %2402 = vmatpush1.msra.mxu0 0.0
      %2403 = vmatprep.subr.mxu0 0.0
      %2404 = vmatpush1.msra.mxu0 0.0
      %2405 = vmatprep.subr.mxu0 0.0
      %2406 = vmatpush1.msra.mxu0 0.0
      %2407 = vmatprep.subr.mxu0 0.0
      %2408 = vmatpush1.msra.mxu0 0.0
      %2409 = vmatprep.subr.mxu0 0.0
      %2410 = vmatpush1.msra.mxu0 0.0
      %2411 = vmatprep.subr.mxu0 0.0
      %2412 = vmatpush1.msra.mxu0 0.0
      %2413 = vmatprep.subr.mxu0 0.0
      %2414 = vmatpush1.msra.mxu0 0.0
      %2415 = vmatprep.subr.mxu0 0.0
      %2416 = vmatpush1.msra.mxu0 0.0
      %2417 = vmatprep.subr.mxu0 0.0
      %2418 = vmatpush1.msra.mxu0 0.0
      %2419 = vmatprep.subr.mxu0 0.0
      %2420 = vmatpush1.msra.mxu0 0.0
      %2421 = vmatprep.subr.mxu0 0.0
      %2422 = vmatpush1.msra.mxu0 0.0
      %2423 = vmatprep.subr.mxu0 0.0
      %2424 = vmatpush1.msra.mxu0 0.0
      %2425 = vmatprep.subr.mxu0 0.0
      %2426 = vmatpush1.msra.mxu0 0.0
      %2427 = vmatprep.subr.mxu0 0.0
      %2428 = vmatpush1.msra.mxu0 0.0
      %2429 = vmatprep.subr.mxu0 0.0
      %2430 = vmatpush1.msra.mxu0 0.0
      %2431 = vmatprep.subr.mxu0 0.0
      %2432 = vmatpush1.msra.mxu0 0.0
      %2433 = vmatprep.subr.mxu0 0.0
      %2434 = vmatpush1.msra.mxu0 0.0
      %2435 = vmatprep.mubr.f32.mxu0 0.0
      %2436 = vmatmul.mubr.f32.gmra.mrb[0].mxu0 %v2366
      %v2437 = vpop.f32.mrb[0].mxu0
      %v2438 = vadd.f32 0.0, %v2437
      %v2439 = vpop.f32.mrb[0].mxu0
      %2440 = vmatprep.mubr.f32.mxu0 0.0
      %2441 = vmatmul.mubr.f32.gmra.mrb[0].mxu0 %v2369
      %v2442 = vpop.f32.mrb[0].mxu0
      %v2443 = vadd.f32 0.0, %v2442
      %v2444 = vpop.f32.mrb[0].mxu0
      %2445 = vdwg.mxu0
      %2446 = vrot.lane.b32.xlu0 %v802, 40
      %v2447 = vpop.permute.xlu0 %2446
      %2448 = vrot.lane.b32.xlu0 %v807, 40
      %v2449 = vpop.permute.xlu0 %2448
      %v2453 = vsel %vm999, %v2357, 0
      %v2456 = vsel %vm999, %v2358, 0
      %2458 = vmatprep.subr.mxu0 0.0
      %2459 = vmatpush1.msra.mxu0 %v2447
      %2460 = vmatprep.subr.mxu0 0.0
      %2461 = vmatpush1.msra.mxu0 %v2449
      %2462 = vmatprep.subr.mxu0 0.0
      %2463 = vmatpush1.msra.mxu0 0.0
      %2464 = vmatprep.subr.mxu0 0.0
      %2465 = vmatpush1.msra.mxu0 0.0
      %2466 = vmatprep.subr.mxu0 0.0
      %2467 = vmatpush1.msra.mxu0 0.0
      %2468 = vmatprep.subr.mxu0 0.0
      %2469 = vmatpush1.msra.mxu0 0.0
      %2470 = vmatprep.subr.mxu0 0.0
      %2471 = vmatpush1.msra.mxu0 0.0
      %2472 = vmatprep.subr.mxu0 0.0
      %2473 = vmatpush1.msra.mxu0 0.0
      %2474 = vmatprep.subr.mxu0 0.0
      %2475 = vmatpush1.msra.mxu0 0.0
      %2476 = vmatprep.subr.mxu0 0.0
      %2477 = vmatpush1.msra.mxu0 0.0
      %2478 = vmatprep.subr.mxu0 0.0
      %2479 = vmatpush1.msra.mxu0 0.0
      %2480 = vmatprep.subr.mxu0 0.0
      %2481 = vmatpush1.msra.mxu0 0.0
      %2482 = vmatprep.subr.mxu0 0.0
      %2483 = vmatpush1.msra.mxu0 0.0
      %2484 = vmatprep.subr.mxu0 0.0
      %2485 = vmatpush1.msra.mxu0 0.0
      %2486 = vmatprep.subr.mxu0 0.0
      %2487 = vmatpush1.msra.mxu0 0.0
      %2488 = vmatprep.subr.mxu0 0.0
      %2489 = vmatpush1.msra.mxu0 0.0
      %2490 = vmatprep.subr.mxu0 0.0
      %2491 = vmatpush1.msra.mxu0 0.0
      %2492 = vmatprep.subr.mxu0 0.0
      %2493 = vmatpush1.msra.mxu0 0.0
      %2494 = vmatprep.subr.mxu0 0.0
      %2495 = vmatpush1.msra.mxu0 0.0
      %2496 = vmatprep.subr.mxu0 0.0
      %2497 = vmatpush1.msra.mxu0 0.0
      %2498 = vmatprep.subr.mxu0 0.0
      %2499 = vmatpush1.msra.mxu0 0.0
      %2500 = vmatprep.subr.mxu0 0.0
      %2501 = vmatpush1.msra.mxu0 0.0
      %2502 = vmatprep.subr.mxu0 0.0
      %2503 = vmatpush1.msra.mxu0 0.0
      %2504 = vmatprep.subr.mxu0 0.0
      %2505 = vmatpush1.msra.mxu0 0.0
      %2506 = vmatprep.subr.mxu0 0.0
      %2507 = vmatpush1.msra.mxu0 0.0
      %2508 = vmatprep.subr.mxu0 0.0
      %2509 = vmatpush1.msra.mxu0 0.0
      %2510 = vmatprep.subr.mxu0 0.0
      %2511 = vmatpush1.msra.mxu0 0.0
      %2512 = vmatprep.subr.mxu0 0.0
      %2513 = vmatpush1.msra.mxu0 0.0
      %2514 = vmatprep.subr.mxu0 0.0
      %2515 = vmatpush1.msra.mxu0 0.0
      %2516 = vmatprep.subr.mxu0 0.0
      %2517 = vmatpush1.msra.mxu0 0.0
      %2518 = vmatprep.subr.mxu0 0.0
      %2519 = vmatpush1.msra.mxu0 0.0
      %2520 = vmatprep.subr.mxu0 0.0
      %2521 = vmatpush1.msra.mxu0 0.0
      %2522 = vmatprep.mubr.f32.mxu0 0.0
      %2523 = vmatmul.mubr.f32.gmra.mrb[0].mxu0 %v2453
      %v2524 = vpop.f32.mrb[0].mxu0
      %v2525 = vadd.f32 0.0, %v2524
      %v2526 = vpop.f32.mrb[0].mxu0
      %2527 = vmatprep.mubr.f32.mxu0 0.0
      %2528 = vmatmul.mubr.f32.gmra.mrb[0].mxu0 %v2456
      %v2529 = vpop.f32.mrb[0].mxu0
      %v2530 = vadd.f32 0.0, %v2529
      %v2531 = vpop.f32.mrb[0].mxu0
      %2532 = vdwg.mxu0
      %2537 = vrot.lane.b32.xlu0 %v2438, 24
      %v2538 = vpop.permute.xlu0 %2537
      %2539 = vrot.lane.b32.xlu0 %v2443, 24
      %v2540 = vpop.permute.xlu0 %2539
      %2541 = vrot.lane.b32.xlu0 %v2525, 24
      %v2542 = vpop.permute.xlu0 %2541
      %2543 = vrot.lane.b32.xlu0 %v2530, 24
      %v2544 = vpop.permute.xlu0 %2543
      %vm2549 = vcmask 261312
      %2550 = vst.msk [vmem:[#allocation2] sm:$0xff] %vm2549, %v2538
      %2551 = vst.msk [vmem:[#allocation2 + $0x8] sm:$0xff] %vm2549, %v2540
      %2552 = vst.msk [vmem:[#allocation2 + $0x10] sm:$0xff] %vm2549, %v2542
      %2553 = vst.msk [vmem:[#allocation2 + $0x18] sm:$0xff] %vm2549, %v2544
      %v2554 = vld [vmem:[#allocation2] sm:$0xff]
      %v2555 = vld [vmem:[#allocation2 + $0x8] sm:$0xff]
      %v2556 = vld [vmem:[#allocation2 + $0x10] sm:$0xff]
      %v2557 = vld [vmem:[#allocation2 + $0x18] sm:$0xff]
      %v2558 = vld [vmem:[%s8] sm:$0xff]
      %v2559 = vld [vmem:[%s8 + $0x8] sm:$0xff]
      %v2560 = vld [vmem:[%s8 + $0x10] sm:$0xff]
      %v2561 = vld [vmem:[%s8 + $0x18] sm:$0xff]
      %v2562 = vld [vmem:[%s9] sm:$0x1]
      %v2564 = vlaneseq
      %v2565 = vshrl.u32 %v2564, 7
      %v2566 = vsub.s32 0, %v2565
      %v2567 = vrot.slane %v2562, %v2566
      %v2570 = vsel %vm626, %v2554, 0
      %v2573 = vsel %vm626, %v2555, 0
      %v2576 = vsel %vm626, %v2556, 0
      %v2579 = vsel %vm626, %v2557, 0
      %2581 = vmatprep.subr.mxu0 0.0
      %2582 = vmatpush1.msra.mxu0 %v2558
      %2583 = vmatprep.subr.mxu0 0.0
      %2584 = vmatpush1.msra.mxu0 %v2559
      %2585 = vmatprep.subr.mxu0 0.0
      %2586 = vmatpush1.msra.mxu0 %v2560
      %2587 = vmatprep.subr.mxu0 0.0
      %2588 = vmatpush1.msra.mxu0 %v2561
      %2589 = vmatprep.subr.mxu0 0.0
      %2590 = vmatpush1.msra.mxu0 0.0
      %2591 = vmatprep.subr.mxu0 0.0
      %2592 = vmatpush1.msra.mxu0 0.0
      %2593 = vmatprep.subr.mxu0 0.0
      %2594 = vmatpush1.msra.mxu0 0.0
      %2595 = vmatprep.subr.mxu0 0.0
      %2596 = vmatpush1.msra.mxu0 0.0
      %2597 = vmatprep.subr.mxu0 0.0
      %2598 = vmatpush1.msra.mxu0 0.0
      %2599 = vmatprep.subr.mxu0 0.0
      %2600 = vmatpush1.msra.mxu0 0.0
      %2601 = vmatprep.subr.mxu0 0.0
      %2602 = vmatpush1.msra.mxu0 0.0
      %2603 = vmatprep.subr.mxu0 0.0
      %2604 = vmatpush1.msra.mxu0 0.0
      %2605 = vmatprep.subr.mxu0 0.0
      %2606 = vmatpush1.msra.mxu0 0.0
      %2607 = vmatprep.subr.mxu0 0.0
      %2608 = vmatpush1.msra.mxu0 0.0
      %2609 = vmatprep.subr.mxu0 0.0
      %2610 = vmatpush1.msra.mxu0 0.0
      %2611 = vmatprep.subr.mxu0 0.0
      %2612 = vmatpush1.msra.mxu0 0.0
      %2613 = vmatprep.subr.mxu0 0.0
      %2614 = vmatpush1.msra.mxu0 0.0
      %2615 = vmatprep.subr.mxu0 0.0
      %2616 = vmatpush1.msra.mxu0 0.0
      %2617 = vmatprep.subr.mxu0 0.0
      %2618 = vmatpush1.msra.mxu0 0.0
      %2619 = vmatprep.subr.mxu0 0.0
      %2620 = vmatpush1.msra.mxu0 0.0
      %2621 = vmatprep.subr.mxu0 0.0
      %2622 = vmatpush1.msra.mxu0 0.0
      %2623 = vmatprep.subr.mxu0 0.0
      %2624 = vmatpush1.msra.mxu0 0.0
      %2625 = vmatprep.subr.mxu0 0.0
      %2626 = vmatpush1.msra.mxu0 0.0
      %2627 = vmatprep.subr.mxu0 0.0
      %2628 = vmatpush1.msra.mxu0 0.0
      %2629 = vmatprep.subr.mxu0 0.0
      %2630 = vmatpush1.msra.mxu0 0.0
      %2631 = vmatprep.subr.mxu0 0.0
      %2632 = vmatpush1.msra.mxu0 0.0
      %2633 = vmatprep.subr.mxu0 0.0
      %2634 = vmatpush1.msra.mxu0 0.0
      %2635 = vmatprep.subr.mxu0 0.0
      %2636 = vmatpush1.msra.mxu0 0.0
      %2637 = vmatprep.subr.mxu0 0.0
      %2638 = vmatpush1.msra.mxu0 0.0
      %2639 = vmatprep.subr.mxu0 0.0
      %2640 = vmatpush1.msra.mxu0 0.0
      %2641 = vmatprep.subr.mxu0 0.0
      %2642 = vmatpush1.msra.mxu0 0.0
      %2643 = vmatprep.subr.mxu0 0.0
      %2644 = vmatpush1.msra.mxu0 0.0
      %2645 = vmatprep.mubr.f32.mxu0 0.0
      %2646 = vmatmul.mubr.f32.gmra.mrb[0].mxu0 %v2570
      %v2647 = vpop.f32.mrb[0].mxu0
      %v2648 = vadd.f32 %v2567, %v2647
      %v2649 = vpop.f32.mrb[0].mxu0
      %2650 = vmatprep.mubr.f32.mxu0 0.0
      %2651 = vmatmul.mubr.f32.gmra.mrb[0].mxu0 %v2573
      %v2652 = vpop.f32.mrb[0].mxu0
      %v2653 = vadd.f32 %v2567, %v2652
      %v2654 = vpop.f32.mrb[0].mxu0
      %2655 = vmatprep.mubr.f32.mxu0 0.0
      %2656 = vmatmul.mubr.f32.gmra.mrb[0].mxu0 %v2576
      %v2657 = vpop.f32.mrb[0].mxu0
      %v2658 = vadd.f32 %v2567, %v2657
      %v2659 = vpop.f32.mrb[0].mxu0
      %2660 = vmatprep.mubr.f32.mxu0 0.0
      %2661 = vmatmul.mubr.f32.gmra.mrb[0].mxu0 %v2579
      %v2662 = vpop.f32.mrb[0].mxu0
      %v2663 = vadd.f32 %v2567, %v2662
      %v2664 = vpop.f32.mrb[0].mxu0
      %2665 = vdwg.mxu0
      %v2666 = vld [vmem:[%s603] sm:$0xff]
      %v2667 = vld [vmem:[%s603 + $0x8] sm:$0xff]
      %v2668 = vld [vmem:[%s603 + $0x10] sm:$0xff]
      %v2669 = vld [vmem:[%s603 + $0x18] sm:$0xff]
      %v2670 = vadd.f32 %v2666, %v2648
      %v2671 = vadd.f32 %v2667, %v2653
      %v2672 = vadd.f32 %v2668, %v2658
      %v2673 = vadd.f32 %v2669, %v2663
      %v2674 = vsel %vm626, %v2670, 0.0
      %2675 = vadd.xlane.f32.xlu0 %v2674
      %v2676 = vpop.xlane.xlu0 %2675
      %v2677 = vsel %vm626, %v2671, 0.0
      %2678 = vadd.xlane.f32.xlu0 %v2677
      %v2679 = vpop.xlane.xlu0 %2678
      %v2680 = vsel %vm626, %v2672, 0.0
      %2681 = vadd.xlane.f32.xlu0 %v2680
      %v2682 = vpop.xlane.xlu0 %2681
      %v2683 = vsel %vm626, %v2673, 0.0
      %2684 = vadd.xlane.f32.xlu0 %v2683
      %v2685 = vpop.xlane.xlu0 %2684
      %v2686 = vmul.f32 %v2676, %v639
      %v2687 = vmul.f32 %v2679, %v639
      %v2688 = vmul.f32 %v2682, %v639
      %v2689 = vmul.f32 %v2685, %v639
      %v2690 = vsub.f32 %v2670, %v2686
      %v2691 = vsub.f32 %v2671, %v2687
      %v2692 = vsub.f32 %v2672, %v2688
      %v2693 = vsub.f32 %v2673, %v2689
      %v2694 = vmul.f32 %v2690, %v2690
      %v2695 = vmul.f32 %v2691, %v2691
      %v2696 = vmul.f32 %v2692, %v2692
      %v2697 = vmul.f32 %v2693, %v2693
      %v2698 = vsel %vm626, %v2694, 0.0
      %2699 = vadd.xlane.f32.xlu0 %v2698
      %v2700 = vpop.xlane.xlu0 %2699
      %v2701 = vsel %vm626, %v2695, 0.0
      %2702 = vadd.xlane.f32.xlu0 %v2701
      %v2703 = vpop.xlane.xlu0 %2702
      %v2704 = vsel %vm626, %v2696, 0.0
      %2705 = vadd.xlane.f32.xlu0 %v2704
      %v2706 = vpop.xlane.xlu0 %2705
      %v2707 = vsel %vm626, %v2697, 0.0
      %2708 = vadd.xlane.f32.xlu0 %v2707
      %v2709 = vpop.xlane.xlu0 %2708
      %v2710 = vmul.f32 %v2700, %v639
      %v2711 = vmul.f32 %v2703, %v639
      %v2712 = vmul.f32 %v2706, %v639
      %v2713 = vmul.f32 %v2709, %v639
      %v2714 = vadd.f32 %v2710, 1e-05
      %v2715 = vadd.f32 %v2711, 1e-05
      %v2716 = vadd.f32 %v2712, 1e-05
      %v2717 = vadd.f32 %v2713, 1e-05
      %v2718 = vrsqrt.pop %v2714
      %v2719 = vrsqrt.pop %v2715
      %v2720 = vrsqrt.pop %v2716
      %v2721 = vrsqrt.pop %v2717
      %v2722 = vmul.f32 %v2690, %v2718
      %v2723 = vmul.f32 %v2691, %v2719
      %v2724 = vmul.f32 %v2692, %v2720
      %v2725 = vmul.f32 %v2693, %v2721
      %v2726 = vld [vmem:[%s10] sm:$0x1]
      %v2728 = vlaneseq
      %v2729 = vshrl.u32 %v2728, 7
      %v2730 = vsub.s32 0, %v2729
      %v2731 = vrot.slane %v2726, %v2730
      %v2733 = vmul.f32 %v2722, %v2731
      %v2734 = vmul.f32 %v2723, %v2731
      %v2735 = vmul.f32 %v2724, %v2731
      %v2736 = vmul.f32 %v2725, %v2731
      %v2737 = vld [vmem:[%s11] sm:$0x1]
      %v2739 = vlaneseq
      %v2740 = vshrl.u32 %v2739, 7
      %v2741 = vsub.s32 0, %v2740
      %v2742 = vrot.slane %v2737, %v2741
      %v2744 = vadd.f32 %v2733, %v2742
      %v2745 = vadd.f32 %v2734, %v2742
      %v2746 = vadd.f32 %v2735, %v2742
      %v2747 = vadd.f32 %v2736, %v2742
      %v2748 = vld [vmem:[%s12] sm:$0xff]
      %v2749 = vld [vmem:[%s12 + $0x8] sm:$0xff]
      %v2750 = vld [vmem:[%s12 + $0x10] sm:$0xff]
      %v2751 = vld [vmem:[%s12 + $0x18] sm:$0xff]
      %v2752 = vld [vmem:[%s13] sm:$0x1]
      %v2754 = vlaneseq
      %v2755 = vshrl.u32 %v2754, 7
      %v2756 = vsub.s32 0, %v2755
      %v2757 = vrot.slane %v2752, %v2756
      %v2760 = vsel %vm626, %v2744, 0
      %v2763 = vsel %vm626, %v2745, 0
      %v2766 = vsel %vm626, %v2746, 0
      %v2769 = vsel %vm626, %v2747, 0
      %2771 = vmatprep.subr.mxu0 0.0
      %2772 = vmatpush1.msra.mxu0 %v2748
      %2773 = vmatprep.subr.mxu0 0.0
      %2774 = vmatpush1.msra.mxu0 %v2749
      %2775 = vmatprep.subr.mxu0 0.0
      %2776 = vmatpush1.msra.mxu0 %v2750
      %2777 = vmatprep.subr.mxu0 0.0
      %2778 = vmatpush1.msra.mxu0 %v2751
      %2779 = vmatprep.subr.mxu0 0.0
      %2780 = vmatpush1.msra.mxu0 0.0
      %2781 = vmatprep.subr.mxu0 0.0
      %2782 = vmatpush1.msra.mxu0 0.0
      %2783 = vmatprep.subr.mxu0 0.0
      %2784 = vmatpush1.msra.mxu0 0.0
      %2785 = vmatprep.subr.mxu0 0.0
      %2786 = vmatpush1.msra.mxu0 0.0
      %2787 = vmatprep.subr.mxu0 0.0
      %2788 = vmatpush1.msra.mxu0 0.0
      %2789 = vmatprep.subr.mxu0 0.0
      %2790 = vmatpush1.msra.mxu0 0.0
      %2791 = vmatprep.subr.mxu0 0.0
      %2792 = vmatpush1.msra.mxu0 0.0
      %2793 = vmatprep.subr.mxu0 0.0
      %2794 = vmatpush1.msra.mxu0 0.0
      %2795 = vmatprep.subr.mxu0 0.0
      %2796 = vmatpush1.msra.mxu0 0.0
      %2797 = vmatprep.subr.mxu0 0.0
      %2798 = vmatpush1.msra.mxu0 0.0
      %2799 = vmatprep.subr.mxu0 0.0
      %2800 = vmatpush1.msra.mxu0 0.0
      %2801 = vmatprep.subr.mxu0 0.0
      %2802 = vmatpush1.msra.mxu0 0.0
      %2803 = vmatprep.subr.mxu0 0.0
      %2804 = vmatpush1.msra.mxu0 0.0
      %2805 = vmatprep.subr.mxu0 0.0
      %2806 = vmatpush1.msra.mxu0 0.0
      %2807 = vmatprep.subr.mxu0 0.0
      %2808 = vmatpush1.msra.mxu0 0.0
      %2809 = vmatprep.subr.mxu0 0.0
      %2810 = vmatpush1.msra.mxu0 0.0
      %2811 = vmatprep.subr.mxu0 0.0
      %2812 = vmatpush1.msra.mxu0 0.0
      %2813 = vmatprep.subr.mxu0 0.0
      %2814 = vmatpush1.msra.mxu0 0.0
      %2815 = vmatprep.subr.mxu0 0.0
      %2816 = vmatpush1.msra.mxu0 0.0
      %2817 = vmatprep.subr.mxu0 0.0
      %2818 = vmatpush1.msra.mxu0 0.0
      %2819 = vmatprep.subr.mxu0 0.0
      %2820 = vmatpush1.msra.mxu0 0.0
      %2821 = vmatprep.subr.mxu0 0.0
      %2822 = vmatpush1.msra.mxu0 0.0
      %2823 = vmatprep.subr.mxu0 0.0
      %2824 = vmatpush1.msra.mxu0 0.0
      %2825 = vmatprep.subr.mxu0 0.0
      %2826 = vmatpush1.msra.mxu0 0.0
      %2827 = vmatprep.subr.mxu0 0.0
      %2828 = vmatpush1.msra.mxu0 0.0
      %2829 = vmatprep.subr.mxu0 0.0
      %2830 = vmatpush1.msra.mxu0 0.0
      %2831 = vmatprep.subr.mxu0 0.0
      %2832 = vmatpush1.msra.mxu0 0.0
      %2833 = vmatprep.subr.mxu0 0.0
      %2834 = vmatpush1.msra.mxu0 0.0
      %2835 = vmatprep.mubr.f32.mxu0 0.0
      %2836 = vmatmul.mubr.f32.gmra.mrb[0].mxu0 %v2760
      %v2837 = vpop.f32.mrb[0].mxu0
      %v2838 = vadd.f32 %v2757, %v2837
      %v2839 = vpop.f32.mrb[0].mxu0
      %2840 = vmatprep.mubr.f32.mxu0 0.0
      %2841 = vmatmul.mubr.f32.gmra.mrb[0].mxu0 %v2763
      %v2842 = vpop.f32.mrb[0].mxu0
      %v2843 = vadd.f32 %v2757, %v2842
      %v2844 = vpop.f32.mrb[0].mxu0
      %2845 = vmatprep.mubr.f32.mxu0 0.0
      %2846 = vmatmul.mubr.f32.gmra.mrb[0].mxu0 %v2766
      %v2847 = vpop.f32.mrb[0].mxu0
      %v2848 = vadd.f32 %v2757, %v2847
      %v2849 = vpop.f32.mrb[0].mxu0
      %2850 = vmatprep.mubr.f32.mxu0 0.0
      %2851 = vmatmul.mubr.f32.gmra.mrb[0].mxu0 %v2769
      %v2852 = vpop.f32.mrb[0].mxu0
      %v2853 = vadd.f32 %v2757, %v2852
      %v2854 = vpop.f32.mrb[0].mxu0
      %2855 = vdwg.mxu0
      %v2856 = vmul.f32 %v2838, 0.5
      %v2857 = vmul.f32 %v2843, 0.5
      %v2858 = vmul.f32 %v2848, 0.5
      %v2859 = vmul.f32 %v2853, 0.5
      %v2860 = vmul.f32 %v2838, 0.70710677
      %v2861 = vmul.f32 %v2843, 0.70710677
      %v2862 = vmul.f32 %v2848, 0.70710677
      %v2863 = vmul.f32 %v2853, 0.70710677
      %v2864 = verf.f32.pop %v2860
      %v2865 = verf.f32.pop %v2861
      %v2866 = verf.f32.pop %v2862
      %v2867 = verf.f32.pop %v2863
      %v2868 = vadd.f32 %v2864, 1.0
      %v2869 = vadd.f32 %v2865, 1.0
      %v2870 = vadd.f32 %v2866, 1.0
      %v2871 = vadd.f32 %v2867, 1.0
      %v2872 = vmul.f32 %v2856, %v2868
      %v2873 = vmul.f32 %v2857, %v2869
      %v2874 = vmul.f32 %v2858, %v2870
      %v2875 = vmul.f32 %v2859, %v2871
      %v2876 = vld [vmem:[%s14] sm:$0xff]
      %v2877 = vld [vmem:[%s14 + $0x8] sm:$0xff]
      %v2878 = vld [vmem:[%s14 + $0x10] sm:$0xff]
      %v2879 = vld [vmem:[%s14 + $0x18] sm:$0xff]
      %v2880 = vld [vmem:[%s14 + $0x20] sm:$0xff]
      %v2881 = vld [vmem:[%s14 + $0x28] sm:$0xff]
      %v2882 = vld [vmem:[%s14 + $0x30] sm:$0xff]
      %v2883 = vld [vmem:[%s14 + $0x38] sm:$0xff]
      %v2884 = vld [vmem:[%s15] sm:$0x1]
      %v2886 = vlaneseq
      %v2887 = vshrl.u32 %v2886, 7
      %v2888 = vsub.s32 0, %v2887
      %v2889 = vrot.slane %v2884, %v2888
      %vm2891 = vcmask 523264
      %v2893 = vsel %vm2891, %v2872, 0
      %v2896 = vsel %vm2891, %v2873, 0
      %v2899 = vsel %vm2891, %v2874, 0
      %v2902 = vsel %vm2891, %v2875, 0
      %2904 = vmatprep.subr.mxu0 0.0
      %2905 = vmatpush1.msra.mxu0 %v2876
      %2906 = vmatprep.subr.mxu0 0.0
      %2907 = vmatpush1.msra.mxu0 %v2877
      %2908 = vmatprep.subr.mxu0 0.0
      %2909 = vmatpush1.msra.mxu0 %v2878
      %2910 = vmatprep.subr.mxu0 0.0
      %2911 = vmatpush1.msra.mxu0 %v2879
      %2912 = vmatprep.subr.mxu0 0.0
      %2913 = vmatpush1.msra.mxu0 %v2880
      %2914 = vmatprep.subr.mxu0 0.0
      %2915 = vmatpush1.msra.mxu0 %v2881
      %2916 = vmatprep.subr.mxu0 0.0
      %2917 = vmatpush1.msra.mxu0 %v2882
      %2918 = vmatprep.subr.mxu0 0.0
      %2919 = vmatpush1.msra.mxu0 %v2883
      %2920 = vmatprep.subr.mxu0 0.0
      %2921 = vmatpush1.msra.mxu0 0.0
      %2922 = vmatprep.subr.mxu0 0.0
      %2923 = vmatpush1.msra.mxu0 0.0
      %2924 = vmatprep.subr.mxu0 0.0
      %2925 = vmatpush1.msra.mxu0 0.0
      %2926 = vmatprep.subr.mxu0 0.0
      %2927 = vmatpush1.msra.mxu0 0.0
      %2928 = vmatprep.subr.mxu0 0.0
      %2929 = vmatpush1.msra.mxu0 0.0
      %2930 = vmatprep.subr.mxu0 0.0
      %2931 = vmatpush1.msra.mxu0 0.0
      %2932 = vmatprep.subr.mxu0 0.0
      %2933 = vmatpush1.msra.mxu0 0.0
      %2934 = vmatprep.subr.mxu0 0.0
      %2935 = vmatpush1.msra.mxu0 0.0
      %2936 = vmatprep.subr.mxu0 0.0
      %2937 = vmatpush1.msra.mxu0 0.0
      %2938 = vmatprep.subr.mxu0 0.0
      %2939 = vmatpush1.msra.mxu0 0.0
      %2940 = vmatprep.subr.mxu0 0.0
      %2941 = vmatpush1.msra.mxu0 0.0
      %2942 = vmatprep.subr.mxu0 0.0
      %2943 = vmatpush1.msra.mxu0 0.0
      %2944 = vmatprep.subr.mxu0 0.0
      %2945 = vmatpush1.msra.mxu0 0.0
      %2946 = vmatprep.subr.mxu0 0.0
      %2947 = vmatpush1.msra.mxu0 0.0
      %2948 = vmatprep.subr.mxu0 0.0
      %2949 = vmatpush1.msra.mxu0 0.0
      %2950 = vmatprep.subr.mxu0 0.0
      %2951 = vmatpush1.msra.mxu0 0.0
      %2952 = vmatprep.subr.mxu0 0.0
      %2953 = vmatpush1.msra.mxu0 0.0
      %2954 = vmatprep.subr.mxu0 0.0
      %2955 = vmatpush1.msra.mxu0 0.0
      %2956 = vmatprep.subr.mxu0 0.0
      %2957 = vmatpush1.msra.mxu0 0.0
      %2958 = vmatprep.subr.mxu0 0.0
      %2959 = vmatpush1.msra.mxu0 0.0
      %2960 = vmatprep.subr.mxu0 0.0
      %2961 = vmatpush1.msra.mxu0 0.0
      %2962 = vmatprep.subr.mxu0 0.0
      %2963 = vmatpush1.msra.mxu0 0.0
      %2964 = vmatprep.subr.mxu0 0.0
      %2965 = vmatpush1.msra.mxu0 0.0
      %2966 = vmatprep.subr.mxu0 0.0
      %2967 = vmatpush1.msra.mxu0 0.0
      %2968 = vmatprep.mubr.f32.mxu0 0.0
      %2969 = vmatmul.mubr.f32.gmra.mrb[0].mxu0 %v2893
      %v2970 = vpop.f32.mrb[0].mxu0
      %v2971 = vadd.f32 %v2889, %v2970
      %v2972 = vpop.f32.mrb[0].mxu0
      %2973 = vmatprep.mubr.f32.mxu0 0.0
      %2974 = vmatmul.mubr.f32.gmra.mrb[0].mxu0 %v2896
      %v2975 = vpop.f32.mrb[0].mxu0
      %v2976 = vadd.f32 %v2889, %v2975
      %v2977 = vpop.f32.mrb[0].mxu0
      %2978 = vmatprep.mubr.f32.mxu0 0.0
      %2979 = vmatmul.mubr.f32.gmra.mrb[0].mxu0 %v2899
      %v2980 = vpop.f32.mrb[0].mxu0
      %v2981 = vadd.f32 %v2889, %v2980
      %v2982 = vpop.f32.mrb[0].mxu0
      %2983 = vmatprep.mubr.f32.mxu0 0.0
      %2984 = vmatmul.mubr.f32.gmra.mrb[0].mxu0 %v2902
      %v2985 = vpop.f32.mrb[0].mxu0
      %v2986 = vadd.f32 %v2889, %v2985
      %v2987 = vpop.f32.mrb[0].mxu0
      %2988 = vdwg.mxu0
      %v2989 = vadd.f32 %v2971, %v2670
      %v2990 = vadd.f32 %v2976, %v2671
      %v2991 = vadd.f32 %v2981, %v2672
      %v2992 = vadd.f32 %v2986, %v2673
      %2993 = vst.msk [vmem:[%s620] sm:$0xff] %vm626, %v2989
      %2994 = vst.msk [vmem:[%s620 + $0x8] sm:$0xff] %vm626, %v2990
      %2995 = vst.msk [vmem:[%s620 + $0x10] sm:$0xff] %vm626, %v2991
      %2996 = vst.msk [vmem:[%s620 + $0x18] sm:$0xff] %vm626, %v2992
      %s2997 = smul.u32 4, %s32
      %p2998 = scmp.lt.s32.totalorder %s31, 1
      %s2999 = scalar_select %p2998, %s31, 1
      %p3000 = scmp.lt.s32.totalorder %s2997, 7
      %s3001 = scalar_select %p3000, %s2997, 7
      %s3002 = smul.addr %s2999, 8
      %s3003 = sadd.s32 %s3001, %s3002
      %s3004 = smul.addr %s3003, 8
      %s3005 = scalar_lea.vmem %s16, %s3004
      // Predicated region
      $region85: #{swin_block_forward.1} parent=83 // pred_check
        %p3006 = pneg %p414
      $region86: #{swin_block_forward.1} parent=83 // pred_check_branch
        %3008 = sbr.rel (%p3006) target = $region88
      $region87: #{swin_block_forward.1} parent=83 // pred_region
        %s3009 = smul.u32 4, %s32
      $region88: #{swin_block_forward.1} parent=83 // pred_fallthru
        _
    $region84: #{swin_block_forward.1} parent=5 // pred_fallthru
      _
    %p3010 = scmp.le.s32.totalorder 2, %s22
    // Predicated region
    $region89: #{swin_block_forward.1} parent=5 // pred_check
      %p3011 = pneg %p3010
    $region90: #{swin_block_forward.1} parent=5 // pred_check_branch
      %3013 = sbr.rel (%p3011) target = $region92
    $region91: #{swin_block_forward.1} parent=5 // pred_region
      %s3014 = ssub.s32 %s22, 2
      // Predicated region
      $region93: #{swin_block_forward.1} parent=91 // pred_check
        %p3015 = pneg %p420
      $region94: #{swin_block_forward.1} parent=91 // pred_check_branch
        %3017 = sbr.rel (%p3015) target = $region96
      $region95: #{swin_block_forward.1} parent=91 // pred_region
        %s3018 = smul.u32 4, %s34
        %p3019 = scmp.lt.s32.totalorder %s33, 1
        %s3020 = scalar_select %p3019, %s33, 1
        %p3021 = scmp.lt.s32.totalorder %s3018, 7
        %s3022 = scalar_select %p3021, %s3018, 7
        %s3023 = smul.addr %s3020, 8
        %s3024 = sadd.s32 %s3022, %s3023
        %s3025 = smul.addr %s3024, 8
        %s3026 = scalar_lea.vmem %s16, %s3025
      $region96: #{swin_block_forward.1} parent=91 // pred_fallthru
        _
    $region92: #{swin_block_forward.1} parent=5 // pred_fallthru
      _
  $region6: #{swin_block_forward.1} parent=0 // loop_footer
    %s26 = sadd.s32 1, %s22
  $region7: #{swin_block_forward.1} parent=0 // loop_footer_branch
    %21 = sbr.rel target = $region3
  $region8: #{swin_block_forward.1} parent=0 // loop_exit
    _

// kernel: swin_block_forward.1
$region0: #{swin_block_forward.1}
  #allocation0 [shape = 'u32[]', space=smem, size = 0x4, offset = 0x4, fixed_abs, tag = 'smem constant byte address 0x4 - core index']
  #allocation1 [shape = 'u32[144,128]{1,0:T(1,128)}', space=vmem, size = 0x12000, scoped, tag = 'internal scratch']
  #allocation2 [shape = 'f32[2,16,32]{2,1,0:T(8,128)}', space=vmem, size = 0x4000, scoped, tag = 'scratch operand']
  %s0 = inlined_call_operand.vmem [shape: f32[2,64,32], index: 0, kind: input, shape index: {}]
  %s1 = inlined_call_operand.vmem [shape: f32[2,64,32], index: 1, kind: input, shape index: {}]
  %s2 = inlined_call_operand.vmem [shape: f32[4,16,16], index: 2, kind: input, shape index: {}]
  %s3 = inlined_call_operand.vmem [shape: f32[4,16,16], index: 3, kind: input, shape index: {}]
  %s4 = inlined_call_operand.vmem [shape: f32[1,32], index: 4, kind: input, shape index: {}]
  %s5 = inlined_call_operand.vmem [shape: f32[1,32], index: 5, kind: input, shape index: {}]
  %s6 = inlined_call_operand.vmem [shape: f32[32,96], index: 6, kind: input, shape index: {}]
  %s7 = inlined_call_operand.vmem [shape: f32[1,96], index: 7, kind: input, shape index: {}]
  %s8 = inlined_call_operand.vmem [shape: f32[32,32], index: 8, kind: input, shape index: {}]
  %s9 = inlined_call_operand.vmem [shape: f32[1,32], index: 9, kind: input, shape index: {}]
  %s10 = inlined_call_operand.vmem [shape: f32[1,32], index: 10, kind: input, shape index: {}]
  %s11 = inlined_call_operand.vmem [shape: f32[1,32], index: 11, kind: input, shape index: {}]
  %s12 = inlined_call_operand.vmem [shape: f32[32,64], index: 12, kind: input, shape index: {}]
  %s13 = inlined_call_operand.vmem [shape: f32[1,64], index: 13, kind: input, shape index: {}]
  %s14 = inlined_call_operand.vmem [shape: f32[64,32], index: 14, kind: input, shape index: {}]
  %s15 = inlined_call_operand.vmem [shape: f32[1,32], index: 15, kind: input, shape index: {}]
  %s16 = inlined_call_operand.vmem [shape: f32[2,64,32], index: 16, kind: output, shape index: {}]
  %s17 = sld [smem:[#allocation0]]
  $region97: #{swin_block_forward.1} parent=0
    _
  %s19 = ssub.s32 1, %s17
  %s20 = scalar_select 0, %s19, %s17
  loop: start=0, step=1, limit=6
  $region2: #{swin_block_forward.1} parent=0 // loop_pre_header
    _
  $region3: #{swin_block_forward.1} parent=0 // loop_header
    %s22 = sphi 0, %s26
    %p23 = scmp.ge.s32.totalorder %s22, 6
    %s29 = sphi 0, %s41
    %s30 = sphi 0, %s37
    %s31 = sphi 0, %s29
    %s32 = sphi 0, %s30
    %s33 = sphi 0, %s31
    %s34 = sphi 0, %s32
    %s46 = sphi 0, %s48
    %s49 = sphi 0, %s46
    %s50 = sphi 0, %s49
    %s66 = sphi 0, %s50
    %s74 = sphi 0, %s76
    %s77 = sphi 0, %s74
    %s78 = sphi 0, %s77
    %s94 = sphi 0, %s78
    %s100 = sphi 0, %s102
    %s103 = sphi 0, %s100
    %s104 = sphi 0, %s103
    %s120 = sphi 0, %s104
    %s124 = sphi 0, %s124
    %s126 = sphi 0, %s124
    %s127 = sphi 0, %s126
    %s141 = sphi 0, %s127
    %s145 = sphi 0, %s145
    %s147 = sphi 0, %s145
    %s148 = sphi 0, %s147
    %s162 = sphi 0, %s148
    %s166 = sphi 0, %s166
    %s168 = sphi 0, %s166
    %s169 = sphi 0, %s168
    %s183 = sphi 0, %s169
    %s187 = sphi 0, %s187
    %s189 = sphi 0, %s187
    %s190 = sphi 0, %s189
    %s204 = sphi 0, %s190
    %s208 = sphi 0, %s208
    %s210 = sphi 0, %s208
    %s211 = sphi 0, %s210
    %s225 = sphi 0, %s211
    %s229 = sphi 0, %s229
    %s231 = sphi 0, %s229
    %s232 = sphi 0, %s231
    %s246 = sphi 0, %s232
    %s250 = sphi 0, %s250
    %s252 = sphi 0, %s250
    %s253 = sphi 0, %s252
    %s267 = sphi 0, %s253
    %s271 = sphi 0, %s271
    %s273 = sphi 0, %s271
    %s274 = sphi 0, %s273
    %s288 = sphi 0, %s274
    %s292 = sphi 0, %s292
    %s294 = sphi 0, %s292
    %s295 = sphi 0, %s294
    %s309 = sphi 0, %s295
    %s313 = sphi 0, %s313
    %s315 = sphi 0, %s313
    %s316 = sphi 0, %s315
    %s330 = sphi 0, %s316
    %s334 = sphi 0, %s334
    %s336 = sphi 0, %s334
    %s337 = sphi 0, %s336
    %s351 = sphi 0, %s337
    %s355 = sphi 0, %s355
    %s357 = sphi 0, %s355
    %s358 = sphi 0, %s357
    %s372 = sphi 0, %s358
    %s376 = sphi 0, %s376
    %s378 = sphi 0, %s376
    %s379 = sphi 0, %s378
    %s393 = sphi 0, %s379
    %s401 = sphi 0, %s403
    %s404 = sphi 0, %s401
    %s405 = sphi 0, %s404
    %s421 = sphi 0, %s405
  $region4: #{swin_block_forward.1} parent=0 // loop_header_branch
    %25 = sbr.rel (%p23) target = $region8
  $region5: #{swin_block_forward.1} parent=0 // loop_body
    %s27 = ssub.s32 %s22, 1
    %s28 = ssub.s32 %s22, 2
    %s35 = sadd.s32 1, %s30
    %p36 = scmp.ge.s32.totalorder %s35, 2
    %s37 = scalar_select %p36, 0, %s35
    %s38 = sadd.s32 1, %s29
    %s39 = scalar_select %p36, %s38, %s29
    %p40 = scmp.ge.s32.totalorder %s39, 2
    %s41 = scalar_select %p40, 0, %s39
    %s42 = ssub.s32 %s29, %s41
    %s43 = ssub.s32 %s30, %s37
    %s44 = sor.u32 %s42, %s43
    %p45 = scmp.eq.s32.totalorder %s44, 0
    %s47 = sadd.s32 %s46, 1
    %s48 = scalar_select %p45, %s46, %s47
    %p51 = pneg %p45
    %p52 = scmp.eq.s32.totalorder %s22, 3
    %p53 = por %p51, %p52
    %p54 = scmp.ne.s32.totalorder %s46, %s49
    %p55 = scmp.eq.s32.totalorder %s22, 0
    %p56 = por %p54, %p55
    %p57 = scmp.ne.s32.totalorder %s46, %s49
    %p58 = scmp.eq.s32.totalorder %s27, 3
    %p59 = por %p57, %p58
    %p60 = scmp.ne.s32.totalorder %s49, %s50
    %p61 = scmp.eq.s32.totalorder %s27, 0
    %p62 = por %p60, %p61
    %p63 = scmp.ne.s32.totalorder %s49, %s50
    %p64 = scmp.eq.s32.totalorder %s28, 3
    %p65 = por %p63, %p64
    %p67 = scmp.ne.s32.totalorder %s50, %s66
    %p68 = scmp.eq.s32.totalorder %s28, 0
    %p69 = por %p67, %p68
    %s70 = ssub.s32 %s29, %s41
    %s71 = ssub.s32 %s30, %s37
    %s72 = sor.u32 %s70, %s71
    %p73 = scmp.eq.s32.totalorder %s72, 0
    %s75 = sadd.s32 %s74, 1
    %s76 = scalar_select %p73, %s74, %s75
    %p79 = pneg %p73
    %p80 = scmp.eq.s32.totalorder %s22, 3
    %p81 = por %p79, %p80
    %p82 = scmp.ne.s32.totalorder %s74, %s77
    %p83 = scmp.eq.s32.totalorder %s22, 0
    %p84 = por %p82, %p83
    %p85 = scmp.ne.s32.totalorder %s74, %s77
    %p86 = scmp.eq.s32.totalorder %s27, 3
    %p87 = por %p85, %p86
    %p88 = scmp.ne.s32.totalorder %s77, %s78
    %p89 = scmp.eq.s32.totalorder %s27, 0
    %p90 = por %p88, %p89
    %p91 = scmp.ne.s32.totalorder %s77, %s78
    %p92 = scmp.eq.s32.totalorder %s28, 3
    %p93 = por %p91, %p92
    %p95 = scmp.ne.s32.totalorder %s78, %s94
    %p96 = scmp.eq.s32.totalorder %s28, 0
    %p97 = por %p95, %p96
    %s98 = ssub.s32 %s30, %s37
    %p99 = scmp.eq.s32.totalorder %s98, 0
    %s101 = sadd.s32 %s100, 1
    %s102 = scalar_select %p99, %s100, %s101
    %p105 = pneg %p99
    %p106 = scmp.eq.s32.totalorder %s22, 3
    %p107 = por %p105, %p106
    %p108 = scmp.ne.s32.totalorder %s100, %s103
    %p109 = scmp.eq.s32.totalorder %s22, 0
    %p110 = por %p108, %p109
    %p111 = scmp.ne.s32.totalorder %s100, %s103
    %p112 = scmp.eq.s32.totalorder %s27, 3
    %p113 = por %p111, %p112
    %p114 = scmp.ne.s32.totalorder %s103, %s104
    %p115 = scmp.eq.s32.totalorder %s27, 0
    %p116 = por %p114, %p115
    %p117 = scmp.ne.s32.totalorder %s103, %s104
    %p118 = scmp.eq.s32.totalorder %s28, 3
    %p119 = por %p117, %p118
    %p121 = scmp.ne.s32.totalorder %s104, %s120
    %p122 = scmp.eq.s32.totalorder %s28, 0
    %p123 = por %p121, %p122
    %s125 = sadd.s32 %s124, 1
    %p128 = scmp.eq.s32.totalorder %s22, 3
    %p129 = scmp.ne.s32.totalorder %s124, %s126
    %p130 = scmp.eq.s32.totalorder %s22, 0
    %p131 = por %p129, %p130
    %p132 = scmp.ne.s32.totalorder %s124, %s126
    %p133 = scmp.eq.s32.totalorder %s27, 3
    %p134 = por %p132, %p133
    %p135 = scmp.ne.s32.totalorder %s126, %s127
    %p136 = scmp.eq.s32.totalorder %s27, 0
    %p137 = por %p135, %p136
    %p138 = scmp.ne.s32.totalorder %s126, %s127
    %p139 = scmp.eq.s32.totalorder %s28, 3
    %p140 = por %p138, %p139
    %p142 = scmp.ne.s32.totalorder %s127, %s141
    %p143 = scmp.eq.s32.totalorder %s28, 0
    %p144 = por %p142, %p143
    %s146 = sadd.s32 %s145, 1
    %p149 = scmp.eq.s32.totalorder %s22, 3
    %p150 = scmp.ne.s32.totalorder %s145, %s147
    %p151 = scmp.eq.s32.totalorder %s22, 0
    %p152 = por %p150, %p151
    %p153 = scmp.ne.s32.totalorder %s145, %s147
    %p154 = scmp.eq.s32.totalorder %s27, 3
    %p155 = por %p153, %p154
    %p156 = scmp.ne.s32.totalorder %s147, %s148
    %p157 = scmp.eq.s32.totalorder %s27, 0
    %p158 = por %p156, %p157
    %p159 = scmp.ne.s32.totalorder %s147, %s148
    %p160 = scmp.eq.s32.totalorder %s28, 3
    %p161 = por %p159, %p160
    %p163 = scmp.ne.s32.totalorder %s148, %s162
    %p164 = scmp.eq.s32.totalorder %s28, 0
    %p165 = por %p163, %p164
    %s167 = sadd.s32 %s166, 1
    %p170 = scmp.eq.s32.totalorder %s22, 3
    %p171 = scmp.ne.s32.totalorder %s166, %s168
    %p172 = scmp.eq.s32.totalorder %s22, 0
    %p173 = por %p171, %p172
    %p174 = scmp.ne.s32.totalorder %s166, %s168
    %p175 = scmp.eq.s32.totalorder %s27, 3
    %p176 = por %p174, %p175
    %p177 = scmp.ne.s32.totalorder %s168, %s169
    %p178 = scmp.eq.s32.totalorder %s27, 0
    %p179 = por %p177, %p178
    %p180 = scmp.ne.s32.totalorder %s168, %s169
    %p181 = scmp.eq.s32.totalorder %s28, 3
    %p182 = por %p180, %p181
    %p184 = scmp.ne.s32.totalorder %s169, %s183
    %p185 = scmp.eq.s32.totalorder %s28, 0
    %p186 = por %p184, %p185
    %s188 = sadd.s32 %s187, 1
    %p191 = scmp.eq.s32.totalorder %s22, 3
    %p192 = scmp.ne.s32.totalorder %s187, %s189
    %p193 = scmp.eq.s32.totalorder %s22, 0
    %p194 = por %p192, %p193
    %p195 = scmp.ne.s32.totalorder %s187, %s189
    %p196 = scmp.eq.s32.totalorder %s27, 3
    %p197 = por %p195, %p196
    %p198 = scmp.ne.s32.totalorder %s189, %s190
    %p199 = scmp.eq.s32.totalorder %s27, 0
    %p200 = por %p198, %p199
    %p201 = scmp.ne.s32.totalorder %s189, %s190
    %p202 = scmp.eq.s32.totalorder %s28, 3
    %p203 = por %p201, %p202
    %p205 = scmp.ne.s32.totalorder %s190, %s204
    %p206 = scmp.eq.s32.totalorder %s28, 0
    %p207 = por %p205, %p206
    %s209 = sadd.s32 %s208, 1
    %p212 = scmp.eq.s32.totalorder %s22, 3
    %p213 = scmp.ne.s32.totalorder %s208, %s210
    %p214 = scmp.eq.s32.totalorder %s22, 0
    %p215 = por %p213, %p214
    %p216 = scmp.ne.s32.totalorder %s208, %s210
    %p217 = scmp.eq.s32.totalorder %s27, 3
    %p218 = por %p216, %p217
    %p219 = scmp.ne.s32.totalorder %s210, %s211
    %p220 = scmp.eq.s32.totalorder %s27, 0
    %p221 = por %p219, %p220
    %p222 = scmp.ne.s32.totalorder %s210, %s211
    %p223 = scmp.eq.s32.totalorder %s28, 3
    %p224 = por %p222, %p223
    %p226 = scmp.ne.s32.totalorder %s211, %s225
    %p227 = scmp.eq.s32.totalorder %s28, 0
    %p228 = por %p226, %p227
    %s230 = sadd.s32 %s229, 1
    %p233 = scmp.eq.s32.totalorder %s22, 3
    %p234 = scmp.ne.s32.totalorder %s229, %s231
    %p235 = scmp.eq.s32.totalorder %s22, 0
    %p236 = por %p234, %p235
    %p237 = scmp.ne.s32.totalorder %s229, %s231
    %p238 = scmp.eq.s32.totalorder %s27, 3
    %p239 = por %p237, %p238
    %p240 = scmp.ne.s32.totalorder %s231, %s232
    %p241 = scmp.eq.s32.totalorder %s27, 0
    %p242 = por %p240, %p241
    %p243 = scmp.ne.s32.totalorder %s231, %s232
    %p244 = scmp.eq.s32.totalorder %s28, 3
    %p245 = por %p243, %p244
    %p247 = scmp.ne.s32.totalorder %s232, %s246
    %p248 = scmp.eq.s32.totalorder %s28, 0
    %p249 = por %p247, %p248
    %s251 = sadd.s32 %s250, 1
    %p254 = scmp.eq.s32.totalorder %s22, 3
    %p255 = scmp.ne.s32.totalorder %s250, %s252
    %p256 = scmp.eq.s32.totalorder %s22, 0
    %p257 = por %p255, %p256
    %p258 = scmp.ne.s32.totalorder %s250, %s252
    %p259 = scmp.eq.s32.totalorder %s27, 3
    %p260 = por %p258, %p259
    %p261 = scmp.ne.s32.totalorder %s252, %s253
    %p262 = scmp.eq.s32.totalorder %s27, 0
    %p263 = por %p261, %p262
    %p264 = scmp.ne.s32.totalorder %s252, %s253
    %p265 = scmp.eq.s32.totalorder %s28, 3
    %p266 = por %p264, %p265
    %p268 = scmp.ne.s32.totalorder %s253, %s267
    %p269 = scmp.eq.s32.totalorder %s28, 0
    %p270 = por %p268, %p269
    %s272 = sadd.s32 %s271, 1
    %p275 = scmp.eq.s32.totalorder %s22, 3
    %p276 = scmp.ne.s32.totalorder %s271, %s273
    %p277 = scmp.eq.s32.totalorder %s22, 0
    %p278 = por %p276, %p277
    %p279 = scmp.ne.s32.totalorder %s271, %s273
    %p280 = scmp.eq.s32.totalorder %s27, 3
    %p281 = por %p279, %p280
    %p282 = scmp.ne.s32.totalorder %s273, %s274
    %p283 = scmp.eq.s32.totalorder %s27, 0
    %p284 = por %p282, %p283
    %p285 = scmp.ne.s32.totalorder %s273, %s274
    %p286 = scmp.eq.s32.totalorder %s28, 3
    %p287 = por %p285, %p286
    %p289 = scmp.ne.s32.totalorder %s274, %s288
    %p290 = scmp.eq.s32.totalorder %s28, 0
    %p291 = por %p289, %p290
    %s293 = sadd.s32 %s292, 1
    %p296 = scmp.eq.s32.totalorder %s22, 3
    %p297 = scmp.ne.s32.totalorder %s292, %s294
    %p298 = scmp.eq.s32.totalorder %s22, 0
    %p299 = por %p297, %p298
    %p300 = scmp.ne.s32.totalorder %s292, %s294
    %p301 = scmp.eq.s32.totalorder %s27, 3
    %p302 = por %p300, %p301
    %p303 = scmp.ne.s32.totalorder %s294, %s295
    %p304 = scmp.eq.s32.totalorder %s27, 0
    %p305 = por %p303, %p304
    %p306 = scmp.ne.s32.totalorder %s294, %s295
    %p307 = scmp.eq.s32.totalorder %s28, 3
    %p308 = por %p306, %p307
    %p310 = scmp.ne.s32.totalorder %s295, %s309
    %p311 = scmp.eq.s32.totalorder %s28, 0
    %p312 = por %p310, %p311
    %s314 = sadd.s32 %s313, 1
    %p317 = scmp.eq.s32.totalorder %s22, 3
    %p318 = scmp.ne.s32.totalorder %s313, %s315
    %p319 = scmp.eq.s32.totalorder %s22, 0
    %p320 = por %p318, %p319
    %p321 = scmp.ne.s32.totalorder %s313, %s315
    %p322 = scmp.eq.s32.totalorder %s27, 3
    %p323 = por %p321, %p322
    %p324 = scmp.ne.s32.totalorder %s315, %s316
    %p325 = scmp.eq.s32.totalorder %s27, 0
    %p326 = por %p324, %p325
    %p327 = scmp.ne.s32.totalorder %s315, %s316
    %p328 = scmp.eq.s32.totalorder %s28, 3
    %p329 = por %p327, %p328
    %p331 = scmp.ne.s32.totalorder %s316, %s330
    %p332 = scmp.eq.s32.totalorder %s28, 0
    %p333 = por %p331, %p332
    %s335 = sadd.s32 %s334, 1
    %p338 = scmp.eq.s32.totalorder %s22, 3
    %p339 = scmp.ne.s32.totalorder %s334, %s336
    %p340 = scmp.eq.s32.totalorder %s22, 0
    %p341 = por %p339, %p340
    %p342 = scmp.ne.s32.totalorder %s334, %s336
    %p343 = scmp.eq.s32.totalorder %s27, 3
    %p344 = por %p342, %p343
    %p345 = scmp.ne.s32.totalorder %s336, %s337
    %p346 = scmp.eq.s32.totalorder %s27, 0
    %p347 = por %p345, %p346
    %p348 = scmp.ne.s32.totalorder %s336, %s337
    %p349 = scmp.eq.s32.totalorder %s28, 3
    %p350 = por %p348, %p349
    %p352 = scmp.ne.s32.totalorder %s337, %s351
    %p353 = scmp.eq.s32.totalorder %s28, 0
    %p354 = por %p352, %p353
    %s356 = sadd.s32 %s355, 1
    %p359 = scmp.eq.s32.totalorder %s22, 3
    %p360 = scmp.ne.s32.totalorder %s355, %s357
    %p361 = scmp.eq.s32.totalorder %s22, 0
    %p362 = por %p360, %p361
    %p363 = scmp.ne.s32.totalorder %s355, %s357
    %p364 = scmp.eq.s32.totalorder %s27, 3
    %p365 = por %p363, %p364
    %p366 = scmp.ne.s32.totalorder %s357, %s358
    %p367 = scmp.eq.s32.totalorder %s27, 0
    %p368 = por %p366, %p367
    %p369 = scmp.ne.s32.totalorder %s357, %s358
    %p370 = scmp.eq.s32.totalorder %s28, 3
    %p371 = por %p369, %p370
    %p373 = scmp.ne.s32.totalorder %s358, %s372
    %p374 = scmp.eq.s32.totalorder %s28, 0
    %p375 = por %p373, %p374
    %s377 = sadd.s32 %s376, 1
    %p380 = scmp.eq.s32.totalorder %s22, 3
    %p381 = scmp.ne.s32.totalorder %s376, %s378
    %p382 = scmp.eq.s32.totalorder %s22, 0
    %p383 = por %p381, %p382
    %p384 = scmp.ne.s32.totalorder %s376, %s378
    %p385 = scmp.eq.s32.totalorder %s27, 3
    %p386 = por %p384, %p385
    %p387 = scmp.ne.s32.totalorder %s378, %s379
    %p388 = scmp.eq.s32.totalorder %s27, 0
    %p389 = por %p387, %p388
    %p390 = scmp.ne.s32.totalorder %s378, %s379
    %p391 = scmp.eq.s32.totalorder %s28, 3
    %p392 = por %p390, %p391
    %p394 = scmp.ne.s32.totalorder %s379, %s393
    %p395 = scmp.eq.s32.totalorder %s28, 0
    %p396 = por %p394, %p395
    %s397 = ssub.s32 %s29, %s41
    %s398 = ssub.s32 %s30, %s37
    %s399 = sor.u32 %s397, %s398
    %p400 = scmp.eq.s32.totalorder %s399, 0
    %s402 = sadd.s32 %s401, 1
    %s403 = scalar_select %p400, %s401, %s402
    %p406 = pneg %p400
    %p407 = scmp.eq.s32.totalorder %s22, 3
    %p408 = por %p406, %p407
    %p409 = scmp.ne.s32.totalorder %s401, %s404
    %p410 = scmp.eq.s32.totalorder %s22, 0
    %p411 = por %p409, %p410
    %p412 = scmp.ne.s32.totalorder %s401, %s404
    %p413 = scmp.eq.s32.totalorder %s27, 3
    %p414 = por %p412, %p413
    %p415 = scmp.ne.s32.totalorder %s404, %s405
    %p416 = scmp.eq.s32.totalorder %s27, 0
    %p417 = por %p415, %p416
    %p418 = scmp.ne.s32.totalorder %s404, %s405
    %p419 = scmp.eq.s32.totalorder %s28, 3
    %p420 = por %p418, %p419
    %p422 = scmp.ne.s32.totalorder %s405, %s421
    %p423 = scmp.eq.s32.totalorder %s28, 0
    %p424 = por %p422, %p423
    %p425 = scmp.le.s32.totalorder 1, %s22
    %p426 = scmp.lt.s32.totalorder %s22, 5
    %p427 = pnand %p425, %p426
    %p428 = pneg %p427
    // Predicated region
    $region9: #{swin_block_forward.1} parent=5 // pred_check
      _
    $region10: #{swin_block_forward.1} parent=5 // pred_check_branch
      %430 = sbr.rel (%p427) target = $region12
    $region11: #{swin_block_forward.1} parent=5 // pred_region
      %s431 = ssub.s32 %s22, 1
      // Predicated region
      $region13: #{swin_block_forward.1} parent=11 // pred_check
        %p432 = pneg %p137
      $region14: #{swin_block_forward.1} parent=11 // pred_check_branch
        %434 = sbr.rel (%p432) target = $region16
      $region15: #{swin_block_forward.1} parent=11 // pred_region
        _
      $region16: #{swin_block_forward.1} parent=11 // pred_fallthru
        _
      // Predicated region
      $region17: #{swin_block_forward.1} parent=11 // pred_check
        %p435 = pneg %p158
      $region18: #{swin_block_forward.1} parent=11 // pred_check_branch
        %437 = sbr.rel (%p435) target = $region20
      $region19: #{swin_block_forward.1} parent=11 // pred_region
        _
      $region20: #{swin_block_forward.1} parent=11 // pred_fallthru
        _
      // Predicated region
      $region21: #{swin_block_forward.1} parent=11 // pred_check
        %p438 = pneg %p179
      $region22: #{swin_block_forward.1} parent=11 // pred_check_branch
        %440 = sbr.rel (%p438) target = $region24
      $region23: #{swin_block_forward.1} parent=11 // pred_region
        _
      $region24: #{swin_block_forward.1} parent=11 // pred_fallthru
        _
      // Predicated region
      $region25: #{swin_block_forward.1} parent=11 // pred_check
        %p441 = pneg %p200
      $region26: #{swin_block_forward.1} parent=11 // pred_check_branch
        %443 = sbr.rel (%p441) target = $region28
      $region27: #{swin_block_forward.1} parent=11 // pred_region
        _
      $region28: #{swin_block_forward.1} parent=11 // pred_fallthru
        _
      // Predicated region
      $region29: #{swin_block_forward.1} parent=11 // pred_check
        %p444 = pneg %p221
      $region30: #{swin_block_forward.1} parent=11 // pred_check_branch
        %446 = sbr.rel (%p444) target = $region32
      $region31: #{swin_block_forward.1} parent=11 // pred_region
        _
      $region32: #{swin_block_forward.1} parent=11 // pred_fallthru
        _
      // Predicated region
      $region33: #{swin_block_forward.1} parent=11 // pred_check
        %p447 = pneg %p242
      $region34: #{swin_block_forward.1} parent=11 // pred_check_branch
        %449 = sbr.rel (%p447) target = $region36
      $region35: #{swin_block_forward.1} parent=11 // pred_region
        _
      $region36: #{swin_block_forward.1} parent=11 // pred_fallthru
        _
      // Predicated region
      $region37: #{swin_block_forward.1} parent=11 // pred_check
        %p450 = pneg %p263
      $region38: #{swin_block_forward.1} parent=11 // pred_check_branch
        %452 = sbr.rel (%p450) target = $region40
      $region39: #{swin_block_forward.1} parent=11 // pred_region
        _
      $region40: #{swin_block_forward.1} parent=11 // pred_fallthru
        _
      // Predicated region
      $region41: #{swin_block_forward.1} parent=11 // pred_check
        %p453 = pneg %p284
      $region42: #{swin_block_forward.1} parent=11 // pred_check_branch
        %455 = sbr.rel (%p453) target = $region44
      $region43: #{swin_block_forward.1} parent=11 // pred_region
        _
      $region44: #{swin_block_forward.1} parent=11 // pred_fallthru
        _
      // Predicated region
      $region45: #{swin_block_forward.1} parent=11 // pred_check
        %p456 = pneg %p305
      $region46: #{swin_block_forward.1} parent=11 // pred_check_branch
        %458 = sbr.rel (%p456) target = $region48
      $region47: #{swin_block_forward.1} parent=11 // pred_region
        _
      $region48: #{swin_block_forward.1} parent=11 // pred_fallthru
        _
      // Predicated region
      $region49: #{swin_block_forward.1} parent=11 // pred_check
        %p459 = pneg %p326
      $region50: #{swin_block_forward.1} parent=11 // pred_check_branch
        %461 = sbr.rel (%p459) target = $region52
      $region51: #{swin_block_forward.1} parent=11 // pred_region
        _
      $region52: #{swin_block_forward.1} parent=11 // pred_fallthru
        _
      // Predicated region
      $region53: #{swin_block_forward.1} parent=11 // pred_check
        %p462 = pneg %p347
      $region54: #{swin_block_forward.1} parent=11 // pred_check_branch
        %464 = sbr.rel (%p462) target = $region56
      $region55: #{swin_block_forward.1} parent=11 // pred_region
        _
      $region56: #{swin_block_forward.1} parent=11 // pred_fallthru
        _
      // Predicated region
      $region57: #{swin_block_forward.1} parent=11 // pred_check
        %p465 = pneg %p368
      $region58: #{swin_block_forward.1} parent=11 // pred_check_branch
        %467 = sbr.rel (%p465) target = $region60
      $region59: #{swin_block_forward.1} parent=11 // pred_region
        _
      $region60: #{swin_block_forward.1} parent=11 // pred_fallthru
        _
      // Predicated region
      $region61: #{swin_block_forward.1} parent=11 // pred_check
        %p468 = pneg %p389
      $region62: #{swin_block_forward.1} parent=11 // pred_check_branch
        %470 = sbr.rel (%p468) target = $region64
      $region63: #{swin_block_forward.1} parent=11 // pred_region
        _
      $region64: #{swin_block_forward.1} parent=11 // pred_fallthru
        _
    $region12: #{swin_block_forward.1} parent=5 // pred_fallthru
      _
    %p471 = scmp.lt.s32.totalorder %s22, 4
    // Predicated region
    $region65: #{swin_block_forward.1} parent=5 // pred_check
      %p472 = pneg %p471
    $region66: #{swin_block_forward.1} parent=5 // pred_check_branch
      %474 = sbr.rel (%p472) target = $region68
    $region67: #{swin_block_forward.1} parent=5 // pred_region
      // Predicated region
      $region69: #{swin_block_forward.1} parent=67 // pred_check
        %p475 = pneg %p56
      $region70: #{swin_block_forward.1} parent=67 // pred_check_branch
        %477 = sbr.rel (%p475) target = $region72
      $region71: #{swin_block_forward.1} parent=67 // pred_region
        %s478 = smul.u32 4, %s30
        %p479 = scmp.lt.s32.totalorder %s29, 1
        %s480 = scalar_select %p479, %s29, 1
        %p481 = scmp.lt.s32.totalorder %s478, 7
        %s482 = scalar_select %p481, %s478, 7
        %s483 = smul.addr %s480, 8
        %s484 = sadd.s32 %s482, %s483
        %s485 = smul.addr %s484, 8
        %s486 = scalar_lea.vmem %s0, %s485
        %s487 = smul.u32 4, %s30
      $region72: #{swin_block_forward.1} parent=67 // pred_fallthru
        _
      // Predicated region
      $region73: #{swin_block_forward.1} parent=67 // pred_check
        %p488 = pneg %p84
      $region74: #{swin_block_forward.1} parent=67 // pred_check_branch
        %490 = sbr.rel (%p488) target = $region76
      $region75: #{swin_block_forward.1} parent=67 // pred_region
        %s491 = smul.u32 4, %s30
        %p492 = scmp.lt.s32.totalorder %s29, 1
        %s493 = scalar_select %p492, %s29, 1
        %p494 = scmp.lt.s32.totalorder %s491, 7
        %s495 = scalar_select %p494, %s491, 7
        %s496 = smul.addr %s493, 8
        %s497 = sadd.s32 %s495, %s496
        %s498 = smul.addr %s497, 8
        %s499 = scalar_lea.vmem %s1, %s498
        %s500 = smul.u32 4, %s30
      $region76: #{swin_block_forward.1} parent=67 // pred_fallthru
        _
      // Predicated region
      $region77: #{swin_block_forward.1} parent=67 // pred_check
        %p501 = pneg %p110
      $region78: #{swin_block_forward.1} parent=67 // pred_check_branch
        %503 = sbr.rel (%p501) target = $region80
      $region79: #{swin_block_forward.1} parent=67 // pred_region
        %s504 = smul.u32 2, %s30
        %p505 = scmp.lt.s32.totalorder %s504, 3
        %s506 = scalar_select %p505, %s504, 3
        %s507 = smul.addr %s506, 2
        %s508 = smul.addr %s507, 8
        %s509 = scalar_lea.vmem %s2, %s508
        %s510 = smul.u32 2, %s30
      $region80: #{swin_block_forward.1} parent=67 // pred_fallthru
        _
    $region68: #{swin_block_forward.1} parent=5 // pred_fallthru
      _
    %p511 = scmp.le.s32.totalorder 1, %s22
    %p512 = scmp.lt.s32.totalorder %s22, 5
    %p513 = pnand %p511, %p512
    %p514 = pneg %p513
    // Predicated region
    $region81: #{swin_block_forward.1} parent=5 // pred_check
      _
    $region82: #{swin_block_forward.1} parent=5 // pred_check_branch
      %516 = sbr.rel (%p513) target = $region84
    $region83: #{swin_block_forward.1} parent=5 // pred_region
      %s517 = ssub.s32 %s22, 1
      %s518 = smul.u32 4, %s32
      %p519 = scmp.lt.s32.totalorder %s31, 1
      %s520 = scalar_select %p519, %s31, 1
      %p521 = scmp.lt.s32.totalorder %s518, 7
      %s522 = scalar_select %p521, %s518, 7
      %s523 = smul.addr %s520, 8
      %s524 = sadd.s32 %s522, %s523
      %s525 = smul.addr %s524, 8
      %s526 = scalar_lea.vmem %s0, %s525
      %p527 = pneg %p62
      %p528 = pneg %p59
      %s529 = smul.u32 4, %s32
      %p530 = scmp.lt.s32.totalorder %s31, 1
      %s531 = scalar_select %p530, %s31, 1
      %p532 = scmp.lt.s32.totalorder %s529, 7
      %s533 = scalar_select %p532, %s529, 7
      %s534 = smul.addr %s531, 8
      %s535 = sadd.s32 %s533, %s534
      %s536 = smul.addr %s535, 8
      %s537 = scalar_lea.vmem %s1, %s536
      %p538 = pneg %p90
      %p539 = pneg %p87
      %s540 = smul.u32 2, %s32
      %p541 = scmp.lt.s32.totalorder %s540, 3
      %s542 = scalar_select %p541, %s540, 3
      %s543 = smul.addr %s542, 2
      %s544 = smul.addr %s543, 8
      %s545 = scalar_lea.vmem %s2, %s544
      %p546 = pneg %p116
      %p547 = pneg %p113
      %p548 = pneg %p137
      %p549 = pneg %p134
      %p550 = pneg %p158
      %p551 = pneg %p155
      %p552 = pneg %p179
      %p553 = pneg %p176
      %p554 = pneg %p200
      %p555 = pneg %p197
      %p556 = pneg %p221
      %p557 = pneg %p218
      %p558 = pneg %p242
      %p559 = pneg %p239
      %p560 = pneg %p263
      %p561 = pneg %p260
      %p562 = pneg %p284
      %p563 = pneg %p281
      %p564 = pneg %p305
      %p565 = pneg %p302
      %p566 = pneg %p326
      %p567 = pneg %p323
      %p568 = pneg %p347
      %p569 = pneg %p344
      %p570 = pneg %p368
      %p571 = pneg %p365
      %p572 = pneg %p389
      %p573 = pneg %p386
      %p574 = pneg %p417
      %p575 = pneg %p414
      %s576 = smul.u32 4, %s32
      %p577 = scmp.lt.s32.totalorder %s31, 1
      %s578 = scalar_select %p577, %s31, 1
      %p579 = scmp.lt.s32.totalorder %s576, 7
      %s580 = scalar_select %p579, %s576, 7
      %s581 = smul.addr %s578, 8
      %s582 = sadd.s32 %s580, %s581
      %s583 = smul.addr %s582, 8
      %s584 = scalar_lea.vmem %s16, %s583
      %s585 = smul.u32 4, %s32
      %p586 = scmp.lt.s32.totalorder %s31, 1
      %s587 = scalar_select %p586, %s31, 1
      %p588 = scmp.lt.s32.totalorder %s585, 7
      %s589 = scalar_select %p588, %s585, 7
      %s590 = smul.addr %s587, 8
      %s591 = sadd.s32 %s589, %s590
      %s592 = smul.addr %s591, 8
      %s593 = scalar_lea.vmem %s0, %s592
      %s594 = smul.u32 4, %s32
      %s595 = smul.u32 4, %s32
      %p596 = scmp.lt.s32.totalorder %s31, 1
      %s597 = scalar_select %p596, %s31, 1
      %p598 = scmp.lt.s32.totalorder %s595, 7
      %s599 = scalar_select %p598, %s595, 7
      %s600 = smul.addr %s597, 8
      %s601 = sadd.s32 %s599, %s600
      %s602 = smul.addr %s601, 8
      %s603 = scalar_lea.vmem %s1, %s602
      %s604 = smul.u32 4, %s32
      %s605 = smul.u32 2, %s32
      %p606 = scmp.lt.s32.totalorder %s605, 3
      %s607 = scalar_select %p606, %s605, 3
      %s608 = smul.addr %s607, 2
      %s609 = smul.addr %s608, 8
      %s610 = scalar_lea.vmem %s2, %s609
      %s611 = smul.u32 2, %s32
      %s612 = smul.u32 4, %s32
      %p613 = scmp.lt.s32.totalorder %s31, 1
      %s614 = scalar_select %p613, %s31, 1
      %p615 = scmp.lt.s32.totalorder %s612, 7
      %s616 = scalar_select %p615, %s612, 7
      %s617 = smul.addr %s614, 8
      %s618 = sadd.s32 %s616, %s617
      %s619 = smul.addr %s618, 8
      %s620 = scalar_lea.vmem %s16, %s619
      %s621 = smul.u32 4, %s32
      %v622 = vld [vmem:[%s593] sm:$0xff]
      %v623 = vld [vmem:[%s593 + $0x8] sm:$0xff]
      %v624 = vld [vmem:[%s593 + $0x10] sm:$0xff]
      %v625 = vld [vmem:[%s593 + $0x18] sm:$0xff]
      %vm626 = vcmask 261120
      %v627 = vsel %vm626, %v622, 0.0
      %628 = vadd.xlane.f32.xlu0 %v627
      %v629 = vpop.xlane.xlu0 %628
      %v630 = vsel %vm626, %v623, 0.0
      %631 = vadd.xlane.f32.xlu0 %v630
      %v632 = vpop.xlane.xlu0 %631
      %v633 = vsel %vm626, %v624, 0.0
      %634 = vadd.xlane.f32.xlu0 %v633
      %v635 = vpop.xlane.xlu0 %634
      %v636 = vsel %vm626, %v625, 0.0
      %637 = vadd.xlane.f32.xlu0 %v636
      %v638 = vpop.xlane.xlu0 %637
      %v639 = vrcp.pop 32.0
      %v640 = vmul.f32 %v629, %v639
      %v641 = vmul.f32 %v632, %v639
      %v642 = vmul.f32 %v635, %v639
      %v643 = vmul.f32 %v638, %v639
      %v644 = vsub.f32 %v622, %v640
      %v645 = vsub.f32 %v623, %v641
      %v646 = vsub.f32 %v624, %v642
      %v647 = vsub.f32 %v625, %v643
      %v648 = vmul.f32 %v644, %v644
      %v649 = vmul.f32 %v645, %v645
      %v650 = vmul.f32 %v646, %v646
      %v651 = vmul.f32 %v647, %v647
      %v652 = vsel %vm626, %v648, 0.0
      %653 = vadd.xlane.f32.xlu0 %v652
      %v654 = vpop.xlane.xlu0 %653
      %v655 = vsel %vm626, %v649, 0.0
      %656 = vadd.xlane.f32.xlu0 %v655
      %v657 = vpop.xlane.xlu0 %656
      %v658 = vsel %vm626, %v650, 0.0
      %659 = vadd.xlane.f32.xlu0 %v658
      %v660 = vpop.xlane.xlu0 %659
      %v661 = vsel %vm626, %v651, 0.0
      %662 = vadd.xlane.f32.xlu0 %v661
      %v663 = vpop.xlane.xlu0 %662
      %v664 = vmul.f32 %v654, %v639
      %v665 = vmul.f32 %v657, %v639
      %v666 = vmul.f32 %v660, %v639
      %v667 = vmul.f32 %v663, %v639
      %v668 = vadd.f32 %v664, 1e-05
      %v669 = vadd.f32 %v665, 1e-05
      %v670 = vadd.f32 %v666, 1e-05
      %v671 = vadd.f32 %v667, 1e-05
      %v672 = vrsqrt.pop %v668
      %v673 = vrsqrt.pop %v669
      %v674 = vrsqrt.pop %v670
      %v675 = vrsqrt.pop %v671
      %v676 = vmul.f32 %v644, %v672
      %v677 = vmul.f32 %v645, %v673
      %v678 = vmul.f32 %v646, %v674
      %v679 = vmul.f32 %v647, %v675
      %v680 = vld [vmem:[%s4] sm:$0x1]
      %v682 = vlaneseq
      %v683 = vshrl.u32 %v682, 7
      %v684 = vsub.s32 0, %v683
      %v685 = vrot.slane %v680, %v684
      %v687 = vmul.f32 %v676, %v685
      %v688 = vmul.f32 %v677, %v685
      %v689 = vmul.f32 %v678, %v685
      %v690 = vmul.f32 %v679, %v685
      %v691 = vld [vmem:[%s5] sm:$0x1]
      %v693 = vlaneseq
      %v694 = vshrl.u32 %v693, 7
      %v695 = vsub.s32 0, %v694
      %v696 = vrot.slane %v691, %v695
      %v698 = vadd.f32 %v687, %v696
      %v699 = vadd.f32 %v688, %v696
      %v700 = vadd.f32 %v689, %v696
      %v701 = vadd.f32 %v690, %v696
      %v702 = vld [vmem:[%s6] sm:$0xff]
      %v703 = vld [vmem:[%s6 + $0x8] sm:$0xff]
      %v704 = vld [vmem:[%s6 + $0x10] sm:$0xff]
      %v705 = vld [vmem:[%s6 + $0x18] sm:$0xff]
      %v706 = vld [vmem:[%s7] sm:$0x1]
      %v708 = vlaneseq
      %v709 = vshrl.u32 %v708, 7
      %v710 = vsub.s32 0, %v709
      %v711 = vrot.slane %v706, %v710
      %v714 = vsel %vm626, %v698, 0
      %v717 = vsel %vm626, %v699, 0
      %v720 = vsel %vm626, %v700, 0
      %v723 = vsel %vm626, %v701, 0
      %725 = vmatprep.subr.mxu0 0.0
      %726 = vmatpush1.msra.mxu0 %v702
      %727 = vmatprep.subr.mxu0 0.0
      %728 = vmatpush1.msra.mxu0 %v703
      %729 = vmatprep.subr.mxu0 0.0
      %730 = vmatpush1.msra.mxu0 %v704
      %731 = vmatprep.subr.mxu0 0.0
      %732 = vmatpush1.msra.mxu0 %v705
      %733 = vmatprep.subr.mxu0 0.0
      %734 = vmatpush1.msra.mxu0 0.0
      %735 = vmatprep.subr.mxu0 0.0
      %736 = vmatpush1.msra.mxu0 0.0
      %737 = vmatprep.subr.mxu0 0.0
      %738 = vmatpush1.msra.mxu0 0.0
      %739 = vmatprep.subr.mxu0 0.0
      %740 = vmatpush1.msra.mxu0 0.0
      %741 = vmatprep.subr.mxu0 0.0
      %742 = vmatpush1.msra.mxu0 0.0
      %743 = vmatprep.subr.mxu0 0.0
      %744 = vmatpush1.msra.mxu0 0.0
      %745 = vmatprep.subr.mxu0 0.0
      %746 = vmatpush1.msra.mxu0 0.0
      %747 = vmatprep.subr.mxu0 0.0
      %748 = vmatpush1.msra.mxu0 0.0
      %749 = vmatprep.subr.mxu0 0.0
      %750 = vmatpush1.msra.mxu0 0.0
      %751 = vmatprep.subr.mxu0 0.0
      %752 = vmatpush1.msra.mxu0 0.0
      %753 = vmatprep.subr.mxu0 0.0
      %754 = vmatpush1.msra.mxu0 0.0
      %755 = vmatprep.subr.mxu0 0.0
      %756 = vmatpush1.msra.mxu0 0.0
      %757 = vmatprep.subr.mxu0 0.0
      %758 = vmatpush1.msra.mxu0 0.0
      %759 = vmatprep.subr.mxu0 0.0
      %760 = vmatpush1.msra.mxu0 0.0
      %761 = vmatprep.subr.mxu0 0.0
      %762 = vmatpush1.msra.mxu0 0.0
      %763 = vmatprep.subr.mxu0 0.0
      %764 = vmatpush1.msra.mxu0 0.0
      %765 = vmatprep.subr.mxu0 0.0
      %766 = vmatpush1.msra.mxu0 0.0
      %767 = vmatprep.subr.mxu0 0.0
      %768 = vmatpush1.msra.mxu0 0.0
      %769 = vmatprep.subr.mxu0 0.0
      %770 = vmatpush1.msra.mxu0 0.0
      %771 = vmatprep.subr.mxu0 0.0
      %772 = vmatpush1.msra.mxu0 0.0
      %773 = vmatprep.subr.mxu0 0.0
      %774 = vmatpush1.msra.mxu0 0.0
      %775 = vmatprep.subr.mxu0 0.0
      %776 = vmatpush1.msra.mxu0 0.0
      %777 = vmatprep.subr.mxu0 0.0
      %778 = vmatpush1.msra.mxu0 0.0
      %779 = vmatprep.subr.mxu0 0.0
      %780 = vmatpush1.msra.mxu0 0.0
      %781 = vmatprep.subr.mxu0 0.0
      %782 = vmatpush1.msra.mxu0 0.0
      %783 = vmatprep.subr.mxu0 0.0
      %784 = vmatpush1.msra.mxu0 0.0
      %785 = vmatprep.subr.mxu0 0.0
      %786 = vmatpush1.msra.mxu0 0.0
      %787 = vmatprep.subr.mxu0 0.0
      %788 = vmatpush1.msra.mxu0 0.0
      %789 = vmatprep.mubr.f32.mxu0 0.0
      %790 = vmatmul.mubr.f32.gmra.mrb[0].mxu0 %v714
      %v791 = vpop.f32.mrb[0].mxu0
      %v792 = vadd.f32 %v711, %v791
      %v793 = vpop.f32.mrb[0].mxu0
      %794 = vmatprep.mubr.f32.mxu0 0.0
      %795 = vmatmul.mubr.f32.gmra.mrb[0].mxu0 %v717
      %v796 = vpop.f32.mrb[0].mxu0
      %v797 = vadd.f32 %v711, %v796
      %v798 = vpop.f32.mrb[0].mxu0
      %799 = vmatprep.mubr.f32.mxu0 0.0
      %800 = vmatmul.mubr.f32.gmra.mrb[0].mxu0 %v720
      %v801 = vpop.f32.mrb[0].mxu0
      %v802 = vadd.f32 %v711, %v801
      %v803 = vpop.f32.mrb[0].mxu0
      %804 = vmatprep.mubr.f32.mxu0 0.0
      %805 = vmatmul.mubr.f32.gmra.mrb[0].mxu0 %v723
      %v806 = vpop.f32.mrb[0].mxu0
      %v807 = vadd.f32 %v711, %v806
      %v808 = vpop.f32.mrb[0].mxu0
      %809 = vdwg.mxu0
      %v810 = vld [vmem:[%s610] sm:$0xff]
      %v811 = vld [vmem:[%s610 + $0x8] sm:$0xff]
      %v812 = vld [vmem:[%s610 + $0x10] sm:$0xff]
      %v813 = vld [vmem:[%s610 + $0x18] sm:$0xff]
      %v814 = vld [vmem:[%s3] sm:$0xff]
      %v815 = vld [vmem:[%s3 + $0x8] sm:$0xff]
      %818 = vrot.lane.b32.xlu0 %v792, 96
      %v819 = vpop.permute.xlu0 %818
      %820 = vrot.lane.b32.xlu0 %v797, 96
      %v821 = vpop.permute.xlu0 %820
      %vm822 = vcmask 64512
      %v823 = vsel %vm822, %v792, 0
      %v825 = vsel %vm822, %v797, 0
      %v827 = vsel %vm822, %v819, 0
      %v829 = vsel %vm822, %v821, 0
      %831 = vmatprep.subr.mxu0 0.0
      %832 = vmatpush1.xpose.msra.mxu0 %v827
      %833 = vmatprep.subr.mxu0 0.0
      %834 = vmatpush1.xpose.msra.mxu0 %v829
      %835 = vmatprep.subr.mxu0 0.0
      %836 = vmatpush1.xpose.msra.mxu0 0.0
      %837 = vmatprep.subr.mxu0 0.0
      %838 = vmatpush1.xpose.msra.mxu0 0.0
      %839 = vmatprep.subr.mxu0 0.0
      %840 = vmatpush1.xpose.msra.mxu0 0.0
      %841 = vmatprep.subr.mxu0 0.0
      %842 = vmatpush1.xpose.msra.mxu0 0.0
      %843 = vmatprep.subr.mxu0 0.0
      %844 = vmatpush1.xpose.msra.mxu0 0.0
      %845 = vmatprep.subr.mxu0 0.0
      %846 = vmatpush1.xpose.msra.mxu0 0.0
      %847 = vmatprep.subr.mxu0 0.0
      %848 = vmatpush1.xpose.msra.mxu0 0.0
      %849 = vmatprep.subr.mxu0 0.0
      %850 = vmatpush1.xpose.msra.mxu0 0.0
      %851 = vmatprep.subr.mxu0 0.0
      %852 = vmatpush1.xpose.msra.mxu0 0.0
      %853 = vmatprep.subr.mxu0 0.0
      %854 = vmatpush1.xpose.msra.mxu0 0.0
      %855 = vmatprep.subr.mxu0 0.0
      %856 = vmatpush1.xpose.msra.mxu0 0.0
      %857 = vmatprep.subr.mxu0 0.0
      %858 = vmatpush1.xpose.msra.mxu0 0.0
      %859 = vmatprep.subr.mxu0 0.0
      %860 = vmatpush1.xpose.msra.mxu0 0.0
      %861 = vmatprep.subr.mxu0 0.0
      %862 = vmatpush1.xpose.msra.mxu0 0.0
      %863 = vmatprep.subr.mxu0 0.0
      %864 = vmatpush1.xpose.msra.mxu0 0.0
      %865 = vmatprep.subr.mxu0 0.0
      %866 = vmatpush1.xpose.msra.mxu0 0.0
      %867 = vmatprep.subr.mxu0 0.0
      %868 = vmatpush1.xpose.msra.mxu0 0.0
      %869 = vmatprep.subr.mxu0 0.0
      %870 = vmatpush1.xpose.msra.mxu0 0.0
      %871 = vmatprep.subr.mxu0 0.0
      %872 = vmatpush1.xpose.msra.mxu0 0.0
      %873 = vmatprep.subr.mxu0 0.0
      %874 = vmatpush1.xpose.msra.mxu0 0.0
      %875 = vmatprep.subr.mxu0 0.0
      %876 = vmatpush1.xpose.msra.mxu0 0.0
      %877 = vmatprep.subr.mxu0 0.0
      %878 = vmatpush1.xpose.msra.mxu0 0.0
      %879 = vmatprep.subr.mxu0 0.0
      %880 = vmatpush1.xpose.msra.mxu0 0.0
      %881 = vmatprep.subr.mxu0 0.0
      %882 = vmatpush1.xpose.msra.mxu0 0.0
      %883 = vmatprep.subr.mxu0 0.0
      %884 = vmatpush1.xpose.msra.mxu0 0.0
      %885 = vmatprep.subr.mxu0 0.0
      %886 = vmatpush1.xpose.msra.mxu0 0.0
      %887 = vmatprep.subr.mxu0 0.0
      %888 = vmatpush1.xpose.msra.mxu0 0.0
      %889 = vmatprep.subr.mxu0 0.0
      %890 = vmatpush1.xpose.msra.mxu0 0.0
      %891 = vmatprep.subr.mxu0 0.0
      %892 = vmatpush1.xpose.msra.mxu0 0.0
      %893 = vmatprep.subr.mxu0 0.0
      %894 = vmatpush1.xpose.msra.mxu0 0.0
      %895 = vmatprep.mubr.f32.mxu0 0.0
      %896 = vmatmul.mubr.f32.gmra.mrb[0].mxu0 %v823
      %v897 = vpop.f32.mrb[0].mxu0
      %v898 = vadd.f32 %v814, %v897
      %v899 = vpop.f32.mrb[0].mxu0
      %900 = vmatprep.mubr.f32.mxu0 0.0
      %901 = vmatmul.mubr.f32.gmra.mrb[0].mxu0 %v825
      %v902 = vpop.f32.mrb[0].mxu0
      %v903 = vadd.f32 %v815, %v902
      %v904 = vpop.f32.mrb[0].mxu0
      %905 = vdwg.mxu0
      %908 = vrot.lane.b32.xlu0 %v802, 96
      %v909 = vpop.permute.xlu0 %908
      %910 = vrot.lane.b32.xlu0 %v807, 96
      %v911 = vpop.permute.xlu0 %910
      %v912 = vsel %vm822, %v802, 0
      %v914 = vsel %vm822, %v807, 0
      %v916 = vsel %vm822, %v909, 0
      %v918 = vsel %vm822, %v911, 0
      %920 = vmatprep.subr.mxu0 0.0
      %921 = vmatpush1.xpose.msra.mxu0 %v916
      %922 = vmatprep.subr.mxu0 0.0
      %923 = vmatpush1.xpose.msra.mxu0 %v918
      %924 = vmatprep.subr.mxu0 0.0
      %925 = vmatpush1.xpose.msra.mxu0 0.0
      %926 = vmatprep.subr.mxu0 0.0
      %927 = vmatpush1.xpose.msra.mxu0 0.0
      %928 = vmatprep.subr.mxu0 0.0
      %929 = vmatpush1.xpose.msra.mxu0 0.0
      %930 = vmatprep.subr.mxu0 0.0
      %931 = vmatpush1.xpose.msra.mxu0 0.0
      %932 = vmatprep.subr.mxu0 0.0
      %933 = vmatpush1.xpose.msra.mxu0 0.0
      %934 = vmatprep.subr.mxu0 0.0
      %935 = vmatpush1.xpose.msra.mxu0 0.0
      %936 = vmatprep.subr.mxu0 0.0
      %937 = vmatpush1.xpose.msra.mxu0 0.0
      %938 = vmatprep.subr.mxu0 0.0
      %939 = vmatpush1.xpose.msra.mxu0 0.0
      %940 = vmatprep.subr.mxu0 0.0
      %941 = vmatpush1.xpose.msra.mxu0 0.0
      %942 = vmatprep.subr.mxu0 0.0
      %943 = vmatpush1.xpose.msra.mxu0 0.0
      %944 = vmatprep.subr.mxu0 0.0
      %945 = vmatpush1.xpose.msra.mxu0 0.0
      %946 = vmatprep.subr.mxu0 0.0
      %947 = vmatpush1.xpose.msra.mxu0 0.0
      %948 = vmatprep.subr.mxu0 0.0
      %949 = vmatpush1.xpose.msra.mxu0 0.0
      %950 = vmatprep.subr.mxu0 0.0
      %951 = vmatpush1.xpose.msra.mxu0 0.0
      %952 = vmatprep.subr.mxu0 0.0
      %953 = vmatpush1.xpose.msra.mxu0 0.0
      %954 = vmatprep.subr.mxu0 0.0
      %955 = vmatpush1.xpose.msra.mxu0 0.0
      %956 = vmatprep.subr.mxu0 0.0
      %957 = vmatpush1.xpose.msra.mxu0 0.0
      %958 = vmatprep.subr.mxu0 0.0
      %959 = vmatpush1.xpose.msra.mxu0 0.0
      %960 = vmatprep.subr.mxu0 0.0
      %961 = vmatpush1.xpose.msra.mxu0 0.0
      %962 = vmatprep.subr.mxu0 0.0
      %963 = vmatpush1.xpose.msra.mxu0 0.0
      %964 = vmatprep.subr.mxu0 0.0
      %965 = vmatpush1.xpose.msra.mxu0 0.0
      %966 = vmatprep.subr.mxu0 0.0
      %967 = vmatpush1.xpose.msra.mxu0 0.0
      %968 = vmatprep.subr.mxu0 0.0
      %969 = vmatpush1.xpose.msra.mxu0 0.0
      %970 = vmatprep.subr.mxu0 0.0
      %971 = vmatpush1.xpose.msra.mxu0 0.0
      %972 = vmatprep.subr.mxu0 0.0
      %973 = vmatpush1.xpose.msra.mxu0 0.0
      %974 = vmatprep.subr.mxu0 0.0
      %975 = vmatpush1.xpose.msra.mxu0 0.0
      %976 = vmatprep.subr.mxu0 0.0
      %977 = vmatpush1.xpose.msra.mxu0 0.0
      %978 = vmatprep.subr.mxu0 0.0
      %979 = vmatpush1.xpose.msra.mxu0 0.0
      %980 = vmatprep.subr.mxu0 0.0
      %981 = vmatpush1.xpose.msra.mxu0 0.0
      %982 = vmatprep.subr.mxu0 0.0
      %983 = vmatpush1.xpose.msra.mxu0 0.0
      %984 = vmatprep.mubr.f32.mxu0 0.0
      %985 = vmatmul.mubr.f32.gmra.mrb[0].mxu0 %v912
      %v986 = vpop.f32.mrb[0].mxu0
      %v987 = vadd.f32 %v814, %v986
      %v988 = vpop.f32.mrb[0].mxu0
      %989 = vmatprep.mubr.f32.mxu0 0.0
      %990 = vmatmul.mubr.f32.gmra.mrb[0].mxu0 %v914
      %v991 = vpop.f32.mrb[0].mxu0
      %v992 = vadd.f32 %v815, %v991
      %v993 = vpop.f32.mrb[0].mxu0
      %994 = vdwg.mxu0
      %v995 = vadd.f32 %v898, %v810
      %v996 = vadd.f32 %v903, %v811
      %v997 = vadd.f32 %v987, %v812
      %v998 = vadd.f32 %v992, %v813
      %vm999 = vcmask 130048
      %v1000 = vsel %vm999, %v995, -inf
      %1001 = vmax.xlane.f32.xlu0 %v1000
      %v1002 = vpop.xlane.xlu0 %1001
      %v1003 = vsel %vm999, %v996, -inf
      %1004 = vmax.xlane.f32.xlu0 %v1003
      %v1005 = vpop.xlane.xlu0 %1004
      %v1006 = vsel %vm999, %v997, -inf
      %1007 = vmax.xlane.f32.xlu0 %v1006
      %v1008 = vpop.xlane.xlu0 %1007
      %v1009 = vsel %vm999, %v998, -inf
      %1010 = vmax.xlane.f32.xlu0 %v1009
      %v1011 = vpop.xlane.xlu0 %1010
      %v1012 = vsub.f32 %v995, %v1002
      %v1013 = vsub.f32 %v996, %v1005
      %v1014 = vsub.f32 %v997, %v1008
      %v1015 = vsub.f32 %v998, %v1011
      %v1016 = vmul.f32 %v1012, 1.442695
      %v1017 = vpow.pop %v1016
      %v1018 = vmul.f32 %v1013, 1.442695
      %v1019 = vpow.pop %v1018
      %v1020 = vmul.f32 %v1014, 1.442695
      %v1021 = vpow.pop %v1020
      %v1022 = vmul.f32 %v1015, 1.442695
      %v1023 = vpow.pop %v1022
      %v1024 = vsel %vm999, %v1017, 0.0
      %1025 = vadd.xlane.f32.xlu0 %v1024
      %v1026 = vpop.xlane.xlu0 %1025
      %v1027 = vsel %vm999, %v1019, 0.0
      %1028 = vadd.xlane.f32.xlu0 %v1027
      %v1029 = vpop.xlane.xlu0 %1028
      %v1030 = vsel %vm999, %v1021, 0.0
      %1031 = vadd.xlane.f32.xlu0 %v1030
      %v1032 = vpop.xlane.xlu0 %1031
      %v1033 = vsel %vm999, %v1023, 0.0
      %1034 = vadd.xlane.f32.xlu0 %v1033
      %v1035 = vpop.xlane.xlu0 %1034
      %v1036 = vrcp.pop %v1026
      %v1037 = vrcp.pop %v1029
      %v1038 = vrcp.pop %v1032
      %v1039 = vrcp.pop %v1035
      %v1040 = vmul.f32 %v1026, %v1036
      %v1041 = vmul.f32 %v1029, %v1037
      %v1042 = vmul.f32 %v1032, %v1038
      %v1043 = vmul.f32 %v1035, %v1039
      %v1044 = vsub.f32 2.0, %v1040
      %v1045 = vsub.f32 2.0, %v1041
      %v1046 = vsub.f32 2.0, %v1042
      %v1047 = vsub.f32 2.0, %v1043
      %v1048 = vmul.f32 %v1036, %v1044
      %v1049 = vmul.f32 %v1037, %v1045
      %v1050 = vmul.f32 %v1038, %v1046
      %v1051 = vmul.f32 %v1039, %v1047
      %v1052 = vmul.f32 %v1017, %v1048
      %v1053 = vmul.f32 %v1019, %v1049
      %v1054 = vmul.f32 %v1021, %v1050
      %v1055 = vmul.f32 %v1023, %v1051
      %1056 = vrot.lane.b32.xlu0 %v792, 64
      %v1057 = vpop.permute.xlu0 %1056
      %1058 = vrot.lane.b32.xlu0 %v797, 64
      %v1059 = vpop.permute.xlu0 %1058
      %v1063 = vsel %vm999, %v1052, 0
      %v1066 = vsel %vm999, %v1053, 0
      %1068 = vmatprep.subr.mxu0 0.0
      %1069 = vmatpush1.msra.mxu0 %v1057
      %1070 = vmatprep.subr.mxu0 0.0
      %1071 = vmatpush1.msra.mxu0 %v1059
      %1072 = vmatprep.subr.mxu0 0.0
      %1073 = vmatpush1.msra.mxu0 0.0
      %1074 = vmatprep.subr.mxu0 0.0
      %1075 = vmatpush1.msra.mxu0 0.0
      %1076 = vmatprep.subr.mxu0 0.0
      %1077 = vmatpush1.msra.mxu0 0.0
      %1078 = vmatprep.subr.mxu0 0.0
      %1079 = vmatpush1.msra.mxu0 0.0
      %1080 = vmatprep.subr.mxu0 0.0
      %1081 = vmatpush1.msra.mxu0 0.0
      %1082 = vmatprep.subr.mxu0 0.0
      %1083 = vmatpush1.msra.mxu0 0.0
      %1084 = vmatprep.subr.mxu0 0.0
      %1085 = vmatpush1.msra.mxu0 0.0
      %1086 = vmatprep.subr.mxu0 0.0
      %1087 = vmatpush1.msra.mxu0 0.0
      %1088 = vmatprep.subr.mxu0 0.0
      %1089 = vmatpush1.msra.mxu0 0.0
      %1090 = vmatprep.subr.mxu0 0.0
      %1091 = vmatpush1.msra.mxu0 0.0
      %1092 = vmatprep.subr.mxu0 0.0
      %1093 = vmatpush1.msra.mxu0 0.0
      %1094 = vmatprep.subr.mxu0 0.0
      %1095 = vmatpush1.msra.mxu0 0.0
      %1096 = vmatprep.subr.mxu0 0.0
      %1097 = vmatpush1.msra.mxu0 0.0
      %1098 = vmatprep.subr.mxu0 0.0
      %1099 = vmatpush1.msra.mxu0 0.0
      %1100 = vmatprep.subr.mxu0 0.0
      %1101 = vmatpush1.msra.mxu0 0.0
      %1102 = vmatprep.subr.mxu0 0.0
      %1103 = vmatpush1.msra.mxu0 0.0
      %1104 = vmatprep.subr.mxu0 0.0
      %1105 = vmatpush1.msra.mxu0 0.0
      %1106 = vmatprep.subr.mxu0 0.0
      %1107 = vmatpush1.msra.mxu0 0.0
      %1108 = vmatprep.subr.mxu0 0.0
      %1109 = vmatpush1.msra.mxu0 0.0
      %1110 = vmatprep.subr.mxu0 0.0
      %1111 = vmatpush1.msra.mxu0 0.0
      %1112 = vmatprep.subr.mxu0 0.0
      %1113 = vmatpush1.msra.mxu0 0.0
      %1114 = vmatprep.subr.mxu0 0.0
      %1115 = vmatpush1.msra.mxu0 0.0
      %1116 = vmatprep.subr.mxu0 0.0
      %1117 = vmatpush1.msra.mxu0 0.0
      %1118 = vmatprep.subr.mxu0 0.0
      %1119 = vmatpush1.msra.mxu0 0.0
      %1120 = vmatprep.subr.mxu0 0.0
      %1121 = vmatpush1.msra.mxu0 0.0
      %1122 = vmatprep.subr.mxu0 0.0
      %1123 = vmatpush1.msra.mxu0 0.0
      %1124 = vmatprep.subr.mxu0 0.0
      %1125 = vmatpush1.msra.mxu0 0.0
      %1126 = vmatprep.subr.mxu0 0.0
      %1127 = vmatpush1.msra.mxu0 0.0
      %1128 = vmatprep.subr.mxu0 0.0
      %1129 = vmatpush1.msra.mxu0 0.0
      %1130 = vmatprep.subr.mxu0 0.0
      %1131 = vmatpush1.msra.mxu0 0.0
      %1132 = vmatprep.mubr.f32.mxu0 0.0
      %1133 = vmatmul.mubr.f32.gmra.mrb[0].mxu0 %v1063
      %v1134 = vpop.f32.mrb[0].mxu0
      %v1135 = vadd.f32 0.0, %v1134
      %v1136 = vpop.f32.mrb[0].mxu0
      %1137 = vmatprep.mubr.f32.mxu0 0.0
      %1138 = vmatmul.mubr.f32.gmra.mrb[0].mxu0 %v1066
      %v1139 = vpop.f32.mrb[0].mxu0
      %v1140 = vadd.f32 0.0, %v1139
      %v1141 = vpop.f32.mrb[0].mxu0
      %1142 = vdwg.mxu0
      %1143 = vrot.lane.b32.xlu0 %v802, 64
      %v1144 = vpop.permute.xlu0 %1143
      %1145 = vrot.lane.b32.xlu0 %v807, 64
      %v1146 = vpop.permute.xlu0 %1145
      %v1150 = vsel %vm999, %v1054, 0
      %v1153 = vsel %vm999, %v1055, 0
      %1155 = vmatprep.subr.mxu0 0.0
      %1156 = vmatpush1.msra.mxu0 %v1144
      %1157 = vmatprep.subr.mxu0 0.0
      %1158 = vmatpush1.msra.mxu0 %v1146
      %1159 = vmatprep.subr.mxu0 0.0
      %1160 = vmatpush1.msra.mxu0 0.0
      %1161 = vmatprep.subr.mxu0 0.0
      %1162 = vmatpush1.msra.mxu0 0.0
      %1163 = vmatprep.subr.mxu0 0.0
      %1164 = vmatpush1.msra.mxu0 0.0
      %1165 = vmatprep.subr.mxu0 0.0
      %1166 = vmatpush1.msra.mxu0 0.0
      %1167 = vmatprep.subr.mxu0 0.0
      %1168 = vmatpush1.msra.mxu0 0.0
      %1169 = vmatprep.subr.mxu0 0.0
      %1170 = vmatpush1.msra.mxu0 0.0
      %1171 = vmatprep.subr.mxu0 0.0
      %1172 = vmatpush1.msra.mxu0 0.0
      %1173 = vmatprep.subr.mxu0 0.0
      %1174 = vmatpush1.msra.mxu0 0.0
      %1175 = vmatprep.subr.mxu0 0.0
      %1176 = vmatpush1.msra.mxu0 0.0
      %1177 = vmatprep.subr.mxu0 0.0
      %1178 = vmatpush1.msra.mxu0 0.0
      %1179 = vmatprep.subr.mxu0 0.0
      %1180 = vmatpush1.msra.mxu0 0.0
      %1181 = vmatprep.subr.mxu0 0.0
      %1182 = vmatpush1.msra.mxu0 0.0
      %1183 = vmatprep.subr.mxu0 0.0
      %1184 = vmatpush1.msra.mxu0 0.0
      %1185 = vmatprep.subr.mxu0 0.0
      %1186 = vmatpush1.msra.mxu0 0.0
      %1187 = vmatprep.subr.mxu0 0.0
      %1188 = vmatpush1.msra.mxu0 0.0
      %1189 = vmatprep.subr.mxu0 0.0
      %1190 = vmatpush1.msra.mxu0 0.0
      %1191 = vmatprep.subr.mxu0 0.0
      %1192 = vmatpush1.msra.mxu0 0.0
      %1193 = vmatprep.subr.mxu0 0.0
      %1194 = vmatpush1.msra.mxu0 0.0
      %1195 = vmatprep.subr.mxu0 0.0
      %1196 = vmatpush1.msra.mxu0 0.0
      %1197 = vmatprep.subr.mxu0 0.0
      %1198 = vmatpush1.msra.mxu0 0.0
      %1199 = vmatprep.subr.mxu0 0.0
      %1200 = vmatpush1.msra.mxu0 0.0
      %1201 = vmatprep.subr.mxu0 0.0
      %1202 = vmatpush1.msra.mxu0 0.0
      %1203 = vmatprep.subr.mxu0 0.0
      %1204 = vmatpush1.msra.mxu0 0.0
      %1205 = vmatprep.subr.mxu0 0.0
      %1206 = vmatpush1.msra.mxu0 0.0
      %1207 = vmatprep.subr.mxu0 0.0
      %1208 = vmatpush1.msra.mxu0 0.0
      %1209 = vmatprep.subr.mxu0 0.0
      %1210 = vmatpush1.msra.mxu0 0.0
      %1211 = vmatprep.subr.mxu0 0.0
      %1212 = vmatpush1.msra.mxu0 0.0
      %1213 = vmatprep.subr.mxu0 0.0
      %1214 = vmatpush1.msra.mxu0 0.0
      %1215 = vmatprep.subr.mxu0 0.0
      %1216 = vmatpush1.msra.mxu0 0.0
      %1217 = vmatprep.subr.mxu0 0.0
      %1218 = vmatpush1.msra.mxu0 0.0
      %1219 = vmatprep.mubr.f32.mxu0 0.0
      %1220 = vmatmul.mubr.f32.gmra.mrb[0].mxu0 %v1150
      %v1221 = vpop.f32.mrb[0].mxu0
      %v1222 = vadd.f32 0.0, %v1221
      %v1223 = vpop.f32.mrb[0].mxu0
      %1224 = vmatprep.mubr.f32.mxu0 0.0
      %1225 = vmatmul.mubr.f32.gmra.mrb[0].mxu0 %v1153
      %v1226 = vpop.f32.mrb[0].mxu0
      %v1227 = vadd.f32 0.0, %v1226
      %v1228 = vpop.f32.mrb[0].mxu0
      %1229 = vdwg.mxu0
      %1230 = vst.msk [vmem:[#allocation2] sm:$0xff] %vm822, %v1135
      %1231 = vst.msk [vmem:[#allocation2 + $0x8] sm:$0xff] %vm822, %v1140
      %1232 = vst.msk [vmem:[#allocation2 + $0x10] sm:$0xff] %vm822, %v1222
      %1233 = vst.msk [vmem:[#allocation2 + $0x18] sm:$0xff] %vm822, %v1227
      %s1234 = scalar_lea.vmem %s3, 16
      %v1235 = vld [vmem:[%s1234] sm:$0xff]
      %v1236 = vld [vmem:[%s1234 + $0x8] sm:$0xff]
      %1237 = vrot.lane.b32.xlu0 %v792, 120
      %v1238 = vpop.permute.xlu0 %1237
      %1239 = vrot.lane.b32.xlu0 %v797, 120
      %v1240 = vpop.permute.xlu0 %1239
      %1241 = vrot.lane.b32.xlu0 %v792, 88
      %v1242 = vpop.permute.xlu0 %1241
      %1243 = vrot.lane.b32.xlu0 %v797, 88
      %v1244 = vpop.permute.xlu0 %1243
      %v1245 = vsel %vm822, %v1238, 0
      %v1247 = vsel %vm822, %v1240, 0
      %v1249 = vsel %vm822, %v1242, 0
      %v1251 = vsel %vm822, %v1244, 0
      %1253 = vmatprep.subr.mxu0 0.0
      %1254 = vmatpush1.xpose.msra.mxu0 %v1249
      %1255 = vmatprep.subr.mxu0 0.0
      %1256 = vmatpush1.xpose.msra.mxu0 %v1251
      %1257 = vmatprep.subr.mxu0 0.0
      %1258 = vmatpush1.xpose.msra.mxu0 0.0
      %1259 = vmatprep.subr.mxu0 0.0
      %1260 = vmatpush1.xpose.msra.mxu0 0.0
      %1261 = vmatprep.subr.mxu0 0.0
      %1262 = vmatpush1.xpose.msra.mxu0 0.0
      %1263 = vmatprep.subr.mxu0 0.0
      %1264 = vmatpush1.xpose.msra.mxu0 0.0
      %1265 = vmatprep.subr.mxu0 0.0
      %1266 = vmatpush1.xpose.msra.mxu0 0.0
      %1267 = vmatprep.subr.mxu0 0.0
      %1268 = vmatpush1.xpose.msra.mxu0 0.0
      %1269 = vmatprep.subr.mxu0 0.0
      %1270 = vmatpush1.xpose.msra.mxu0 0.0
      %1271 = vmatprep.subr.mxu0 0.0
      %1272 = vmatpush1.xpose.msra.mxu0 0.0
      %1273 = vmatprep.subr.mxu0 0.0
      %1274 = vmatpush1.xpose.msra.mxu0 0.0
      %1275 = vmatprep.subr.mxu0 0.0
      %1276 = vmatpush1.xpose.msra.mxu0 0.0
      %1277 = vmatprep.subr.mxu0 0.0
      %1278 = vmatpush1.xpose.msra.mxu0 0.0
      %1279 = vmatprep.subr.mxu0 0.0
      %1280 = vmatpush1.xpose.msra.mxu0 0.0
      %1281 = vmatprep.subr.mxu0 0.0
      %1282 = vmatpush1.xpose.msra.mxu0 0.0
      %1283 = vmatprep.subr.mxu0 0.0
      %1284 = vmatpush1.xpose.msra.mxu0 0.0
      %1285 = vmatprep.subr.mxu0 0.0
      %1286 = vmatpush1.xpose.msra.mxu0 0.0
      %1287 = vmatprep.subr.mxu0 0.0
      %1288 = vmatpush1.xpose.msra.mxu0 0.0
      %1289 = vmatprep.subr.mxu0 0.0
      %1290 = vmatpush1.xpose.msra.mxu0 0.0
      %1291 = vmatprep.subr.mxu0 0.0
      %1292 = vmatpush1.xpose.msra.mxu0 0.0
      %1293 = vmatprep.subr.mxu0 0.0
      %1294 = vmatpush1.xpose.msra.mxu0 0.0
      %1295 = vmatprep.subr.mxu0 0.0
      %1296 = vmatpush1.xpose.msra.mxu0 0.0
      %1297 = vmatprep.subr.mxu0 0.0
      %1298 = vmatpush1.xpose.msra.mxu0 0.0
      %1299 = vmatprep.subr.mxu0 0.0
      %1300 = vmatpush1.xpose.msra.mxu0 0.0
      %1301 = vmatprep.subr.mxu0 0.0
      %1302 = vmatpush1.xpose.msra.mxu0 0.0
      %1303 = vmatprep.subr.mxu0 0.0
      %1304 = vmatpush1.xpose.msra.mxu0 0.0
      %1305 = vmatprep.subr.mxu0 0.0
      %1306 = vmatpush1.xpose.msra.mxu0 0.0
      %1307 = vmatprep.subr.mxu0 0.0
      %1308 = vmatpush1.xpose.msra.mxu0 0.0
      %1309 = vmatprep.subr.mxu0 0.0
      %1310 = vmatpush1.xpose.msra.mxu0 0.0
      %1311 = vmatprep.subr.mxu0 0.0
      %1312 = vmatpush1.xpose.msra.mxu0 0.0
      %1313 = vmatprep.subr.mxu0 0.0
      %1314 = vmatpush1.xpose.msra.mxu0 0.0
      %1315 = vmatprep.subr.mxu0 0.0
      %1316 = vmatpush1.xpose.msra.mxu0 0.0
      %1317 = vmatprep.mubr.f32.mxu0 0.0
      %1318 = vmatmul.mubr.f32.gmra.mrb[0].mxu0 %v1245
      %v1319 = vpop.f32.mrb[0].mxu0
      %v1320 = vadd.f32 %v1235, %v1319
      %v1321 = vpop.f32.mrb[0].mxu0
      %1322 = vmatprep.mubr.f32.mxu0 0.0
      %1323 = vmatmul.mubr.f32.gmra.mrb[0].mxu0 %v1247
      %v1324 = vpop.f32.mrb[0].mxu0
      %v1325 = vadd.f32 %v1236, %v1324
      %v1326 = vpop.f32.mrb[0].mxu0
      %1327 = vdwg.mxu0
      %1328 = vrot.lane.b32.xlu0 %v802, 120
      %v1329 = vpop.permute.xlu0 %1328
      %1330 = vrot.lane.b32.xlu0 %v807, 120
      %v1331 = vpop.permute.xlu0 %1330
      %1332 = vrot.lane.b32.xlu0 %v802, 88
      %v1333 = vpop.permute.xlu0 %1332
      %1334 = vrot.lane.b32.xlu0 %v807, 88
      %v1335 = vpop.permute.xlu0 %1334
      %v1336 = vsel %vm822, %v1329, 0
      %v1338 = vsel %vm822, %v1331, 0
      %v1340 = vsel %vm822, %v1333, 0
      %v1342 = vsel %vm822, %v1335, 0
      %1344 = vmatprep.subr.mxu0 0.0
      %1345 = vmatpush1.xpose.msra.mxu0 %v1340
      %1346 = vmatprep.subr.mxu0 0.0
      %1347 = vmatpush1.xpose.msra.mxu0 %v1342
      %1348 = vmatprep.subr.mxu0 0.0
      %1349 = vmatpush1.xpose.msra.mxu0 0.0
      %1350 = vmatprep.subr.mxu0 0.0
      %1351 = vmatpush1.xpose.msra.mxu0 0.0
      %1352 = vmatprep.subr.mxu0 0.0
      %1353 = vmatpush1.xpose.msra.mxu0 0.0
      %1354 = vmatprep.subr.mxu0 0.0
      %1355 = vmatpush1.xpose.msra.mxu0 0.0
      %1356 = vmatprep.subr.mxu0 0.0
      %1357 = vmatpush1.xpose.msra.mxu0 0.0
      %1358 = vmatprep.subr.mxu0 0.0
      %1359 = vmatpush1.xpose.msra.mxu0 0.0
      %1360 = vmatprep.subr.mxu0 0.0
      %1361 = vmatpush1.xpose.msra.mxu0 0.0
      %1362 = vmatprep.subr.mxu0 0.0
      %1363 = vmatpush1.xpose.msra.mxu0 0.0
      %1364 = vmatprep.subr.mxu0 0.0
      %1365 = vmatpush1.xpose.msra.mxu0 0.0
      %1366 = vmatprep.subr.mxu0 0.0
      %1367 = vmatpush1.xpose.msra.mxu0 0.0
      %1368 = vmatprep.subr.mxu0 0.0
      %1369 = vmatpush1.xpose.msra.mxu0 0.0
      %1370 = vmatprep.subr.mxu0 0.0
      %1371 = vmatpush1.xpose.msra.mxu0 0.0
      %1372 = vmatprep.subr.mxu0 0.0
      %1373 = vmatpush1.xpose.msra.mxu0 0.0
      %1374 = vmatprep.subr.mxu0 0.0
      %1375 = vmatpush1.xpose.msra.mxu0 0.0
      %1376 = vmatprep.subr.mxu0 0.0
      %1377 = vmatpush1.xpose.msra.mxu0 0.0
      %1378 = vmatprep.subr.mxu0 0.0
      %1379 = vmatpush1.xpose.msra.mxu0 0.0
      %1380 = vmatprep.subr.mxu0 0.0
      %1381 = vmatpush1.xpose.msra.mxu0 0.0
      %1382 = vmatprep.subr.mxu0 0.0
      %1383 = vmatpush1.xpose.msra.mxu0 0.0
      %1384 = vmatprep.subr.mxu0 0.0
      %1385 = vmatpush1.xpose.msra.mxu0 0.0
      %1386 = vmatprep.subr.mxu0 0.0
      %1387 = vmatpush1.xpose.msra.mxu0 0.0
      %1388 = vmatprep.subr.mxu0 0.0
      %1389 = vmatpush1.xpose.msra.mxu0 0.0
      %1390 = vmatprep.subr.mxu0 0.0
      %1391 = vmatpush1.xpose.msra.mxu0 0.0
      %1392 = vmatprep.subr.mxu0 0.0
      %1393 = vmatpush1.xpose.msra.mxu0 0.0
      %1394 = vmatprep.subr.mxu0 0.0
      %1395 = vmatpush1.xpose.msra.mxu0 0.0
      %1396 = vmatprep.subr.mxu0 0.0
      %1397 = vmatpush1.xpose.msra.mxu0 0.0
      %1398 = vmatprep.subr.mxu0 0.0
      %1399 = vmatpush1.xpose.msra.mxu0 0.0
      %1400 = vmatprep.subr.mxu0 0.0
      %1401 = vmatpush1.xpose.msra.mxu0 0.0
      %1402 = vmatprep.subr.mxu0 0.0
      %1403 = vmatpush1.xpose.msra.mxu0 0.0
      %1404 = vmatprep.subr.mxu0 0.0
      %1405 = vmatpush1.xpose.msra.mxu0 0.0
      %1406 = vmatprep.subr.mxu0 0.0
      %1407 = vmatpush1.xpose.msra.mxu0 0.0
      %1408 = vmatprep.mubr.f32.mxu0 0.0
      %1409 = vmatmul.mubr.f32.gmra.mrb[0].mxu0 %v1336
      %v1410 = vpop.f32.mrb[0].mxu0
      %v1411 = vadd.f32 %v1235, %v1410
      %v1412 = vpop.f32.mrb[0].mxu0
      %1413 = vmatprep.mubr.f32.mxu0 0.0
      %1414 = vmatmul.mubr.f32.gmra.mrb[0].mxu0 %v1338
      %v1415 = vpop.f32.mrb[0].mxu0
      %v1416 = vadd.f32 %v1236, %v1415
      %v1417 = vpop.f32.mrb[0].mxu0
      %1418 = vdwg.mxu0
      %v1419 = vadd.f32 %v1320, %v810
      %v1420 = vadd.f32 %v1325, %v811
      %v1421 = vadd.f32 %v1411, %v812
      %v1422 = vadd.f32 %v1416, %v813
      %v1423 = vsel %vm999, %v1419, -inf
      %1424 = vmax.xlane.f32.xlu0 %v1423
      %v1425 = vpop.xlane.xlu0 %1424
      %v1426 = vsel %vm999, %v1420, -inf
      %1427 = vmax.xlane.f32.xlu0 %v1426
      %v1428 = vpop.xlane.xlu0 %1427
      %v1429 = vsel %vm999, %v1421, -inf
      %1430 = vmax.xlane.f32.xlu0 %v1429
      %v1431 = vpop.xlane.xlu0 %1430
      %v1432 = vsel %vm999, %v1422, -inf
      %1433 = vmax.xlane.f32.xlu0 %v1432
      %v1434 = vpop.xlane.xlu0 %1433
      %v1435 = vsub.f32 %v1419, %v1425
      %v1436 = vsub.f32 %v1420, %v1428
      %v1437 = vsub.f32 %v1421, %v1431
      %v1438 = vsub.f32 %v1422, %v1434
      %v1439 = vmul.f32 %v1435, 1.442695
      %v1440 = vpow.pop %v1439
      %v1441 = vmul.f32 %v1436, 1.442695
      %v1442 = vpow.pop %v1441
      %v1443 = vmul.f32 %v1437, 1.442695
      %v1444 = vpow.pop %v1443
      %v1445 = vmul.f32 %v1438, 1.442695
      %v1446 = vpow.pop %v1445
      %v1447 = vsel %vm999, %v1440, 0.0
      %1448 = vadd.xlane.f32.xlu0 %v1447
      %v1449 = vpop.xlane.xlu0 %1448
      %v1450 = vsel %vm999, %v1442, 0.0
      %1451 = vadd.xlane.f32.xlu0 %v1450
      %v1452 = vpop.xlane.xlu0 %1451
      %v1453 = vsel %vm999, %v1444, 0.0
      %1454 = vadd.xlane.f32.xlu0 %v1453
      %v1455 = vpop.xlane.xlu0 %1454
      %v1456 = vsel %vm999, %v1446, 0.0
      %1457 = vadd.xlane.f32.xlu0 %v1456
      %v1458 = vpop.xlane.xlu0 %1457
      %v1459 = vrcp.pop %v1449
      %v1460 = vrcp.pop %v1452
      %v1461 = vrcp.pop %v1455
      %v1462 = vrcp.pop %v1458
      %v1463 = vmul.f32 %v1449, %v1459
      %v1464 = vmul.f32 %v1452, %v1460
      %v1465 = vmul.f32 %v1455, %v1461
      %v1466 = vmul.f32 %v1458, %v1462
      %v1467 = vsub.f32 2.0, %v1463
      %v1468 = vsub.f32 2.0, %v1464
      %v1469 = vsub.f32 2.0, %v1465
      %v1470 = vsub.f32 2.0, %v1466
      %v1471 = vmul.f32 %v1459, %v1467
      %v1472 = vmul.f32 %v1460, %v1468
      %v1473 = vmul.f32 %v1461, %v1469
      %v1474 = vmul.f32 %v1462, %v1470
      %v1475 = vmul.f32 %v1440, %v1471
      %v1476 = vmul.f32 %v1442, %v1472
      %v1477 = vmul.f32 %v1444, %v1473
      %v1478 = vmul.f32 %v1446, %v1474
      %1479 = vrot.lane.b32.xlu0 %v792, 56
      %v1480 = vpop.permute.xlu0 %1479
      %1481 = vrot.lane.b32.xlu0 %v797, 56
      %v1482 = vpop.permute.xlu0 %1481
      %v1486 = vsel %vm999, %v1475, 0
      %v1489 = vsel %vm999, %v1476, 0
      %1491 = vmatprep.subr.mxu0 0.0
      %1492 = vmatpush1.msra.mxu0 %v1480
      %1493 = vmatprep.subr.mxu0 0.0
      %1494 = vmatpush1.msra.mxu0 %v1482
      %1495 = vmatprep.subr.mxu0 0.0
      %1496 = vmatpush1.msra.mxu0 0.0
      %1497 = vmatprep.subr.mxu0 0.0
      %1498 = vmatpush1.msra.mxu0 0.0
      %1499 = vmatprep.subr.mxu0 0.0
      %1500 = vmatpush1.msra.mxu0 0.0
      %1501 = vmatprep.subr.mxu0 0.0
      %1502 = vmatpush1.msra.mxu0 0.0
      %1503 = vmatprep.subr.mxu0 0.0
      %1504 = vmatpush1.msra.mxu0 0.0
      %1505 = vmatprep.subr.mxu0 0.0
      %1506 = vmatpush1.msra.mxu0 0.0
      %1507 = vmatprep.subr.mxu0 0.0
      %1508 = vmatpush1.msra.mxu0 0.0
      %1509 = vmatprep.subr.mxu0 0.0
      %1510 = vmatpush1.msra.mxu0 0.0
      %1511 = vmatprep.subr.mxu0 0.0
      %1512 = vmatpush1.msra.mxu0 0.0
      %1513 = vmatprep.subr.mxu0 0.0
      %1514 = vmatpush1.msra.mxu0 0.0
      %1515 = vmatprep.subr.mxu0 0.0
      %1516 = vmatpush1.msra.mxu0 0.0
      %1517 = vmatprep.subr.mxu0 0.0
      %1518 = vmatpush1.msra.mxu0 0.0
      %1519 = vmatprep.subr.mxu0 0.0
      %1520 = vmatpush1.msra.mxu0 0.0
      %1521 = vmatprep.subr.mxu0 0.0
      %1522 = vmatpush1.msra.mxu0 0.0
      %1523 = vmatprep.subr.mxu0 0.0
      %1524 = vmatpush1.msra.mxu0 0.0
      %1525 = vmatprep.subr.mxu0 0.0
      %1526 = vmatpush1.msra.mxu0 0.0
      %1527 = vmatprep.subr.mxu0 0.0
      %1528 = vmatpush1.msra.mxu0 0.0
      %1529 = vmatprep.subr.mxu0 0.0
      %1530 = vmatpush1.msra.mxu0 0.0
      %1531 = vmatprep.subr.mxu0 0.0
      %1532 = vmatpush1.msra.mxu0 0.0
      %1533 = vmatprep.subr.mxu0 0.0
      %1534 = vmatpush1.msra.mxu0 0.0
      %1535 = vmatprep.subr.mxu0 0.0
      %1536 = vmatpush1.msra.mxu0 0.0
      %1537 = vmatprep.subr.mxu0 0.0
      %1538 = vmatpush1.msra.mxu0 0.0
      %1539 = vmatprep.subr.mxu0 0.0
      %1540 = vmatpush1.msra.mxu0 0.0
      %1541 = vmatprep.subr.mxu0 0.0
      %1542 = vmatpush1.msra.mxu0 0.0
      %1543 = vmatprep.subr.mxu0 0.0
      %1544 = vmatpush1.msra.mxu0 0.0
      %1545 = vmatprep.subr.mxu0 0.0
      %1546 = vmatpush1.msra.mxu0 0.0
      %1547 = vmatprep.subr.mxu0 0.0
      %1548 = vmatpush1.msra.mxu0 0.0
      %1549 = vmatprep.subr.mxu0 0.0
      %1550 = vmatpush1.msra.mxu0 0.0
      %1551 = vmatprep.subr.mxu0 0.0
      %1552 = vmatpush1.msra.mxu0 0.0
      %1553 = vmatprep.subr.mxu0 0.0
      %1554 = vmatpush1.msra.mxu0 0.0
      %1555 = vmatprep.mubr.f32.mxu0 0.0
      %1556 = vmatmul.mubr.f32.gmra.mrb[0].mxu0 %v1486
      %v1557 = vpop.f32.mrb[0].mxu0
      %v1558 = vadd.f32 0.0, %v1557
      %v1559 = vpop.f32.mrb[0].mxu0
      %1560 = vmatprep.mubr.f32.mxu0 0.0
      %1561 = vmatmul.mubr.f32.gmra.mrb[0].mxu0 %v1489
      %v1562 = vpop.f32.mrb[0].mxu0
      %v1563 = vadd.f32 0.0, %v1562
      %v1564 = vpop.f32.mrb[0].mxu0
      %1565 = vdwg.mxu0
      %1566 = vrot.lane.b32.xlu0 %v802, 56
      %v1567 = vpop.permute.xlu0 %1566
      %1568 = vrot.lane.b32.xlu0 %v807, 56
      %v1569 = vpop.permute.xlu0 %1568
      %v1573 = vsel %vm999, %v1477, 0
      %v1576 = vsel %vm999, %v1478, 0
      %1578 = vmatprep.subr.mxu0 0.0
      %1579 = vmatpush1.msra.mxu0 %v1567
      %1580 = vmatprep.subr.mxu0 0.0
      %1581 = vmatpush1.msra.mxu0 %v1569
      %1582 = vmatprep.subr.mxu0 0.0
      %1583 = vmatpush1.msra.mxu0 0.0
      %1584 = vmatprep.subr.mxu0 0.0
      %1585 = vmatpush1.msra.mxu0 0.0
      %1586 = vmatprep.subr.mxu0 0.0
      %1587 = vmatpush1.msra.mxu0 0.0
      %1588 = vmatprep.subr.mxu0 0.0
      %1589 = vmatpush1.msra.mxu0 0.0
      %1590 = vmatprep.subr.mxu0 0.0
      %1591 = vmatpush1.msra.mxu0 0.0
      %1592 = vmatprep.subr.mxu0 0.0
      %1593 = vmatpush1.msra.mxu0 0.0
      %1594 = vmatprep.subr.mxu0 0.0
      %1595 = vmatpush1.msra.mxu0 0.0
      %1596 = vmatprep.subr.mxu0 0.0
      %1597 = vmatpush1.msra.mxu0 0.0
      %1598 = vmatprep.subr.mxu0 0.0
      %1599 = vmatpush1.msra.mxu0 0.0
      %1600 = vmatprep.subr.mxu0 0.0
      %1601 = vmatpush1.msra.mxu0 0.0
      %1602 = vmatprep.subr.mxu0 0.0
      %1603 = vmatpush1.msra.mxu0 0.0
      %1604 = vmatprep.subr.mxu0 0.0
      %1605 = vmatpush1.msra.mxu0 0.0
      %1606 = vmatprep.subr.mxu0 0.0
      %1607 = vmatpush1.msra.mxu0 0.0
      %1608 = vmatprep.subr.mxu0 0.0
      %1609 = vmatpush1.msra.mxu0 0.0
      %1610 = vmatprep.subr.mxu0 0.0
      %1611 = vmatpush1.msra.mxu0 0.0
      %1612 = vmatprep.subr.mxu0 0.0
      %1613 = vmatpush1.msra.mxu0 0.0
      %1614 = vmatprep.subr.mxu0 0.0
      %1615 = vmatpush1.msra.mxu0 0.0
      %1616 = vmatprep.subr.mxu0 0.0
      %1617 = vmatpush1.msra.mxu0 0.0
      %1618 = vmatprep.subr.mxu0 0.0
      %1619 = vmatpush1.msra.mxu0 0.0
      %1620 = vmatprep.subr.mxu0 0.0
      %1621 = vmatpush1.msra.mxu0 0.0
      %1622 = vmatprep.subr.mxu0 0.0
      %1623 = vmatpush1.msra.mxu0 0.0
      %1624 = vmatprep.subr.mxu0 0.0
      %1625 = vmatpush1.msra.mxu0 0.0
      %1626 = vmatprep.subr.mxu0 0.0
      %1627 = vmatpush1.msra.mxu0 0.0
      %1628 = vmatprep.subr.mxu0 0.0
      %1629 = vmatpush1.msra.mxu0 0.0
      %1630 = vmatprep.subr.mxu0 0.0
      %1631 = vmatpush1.msra.mxu0 0.0
      %1632 = vmatprep.subr.mxu0 0.0
      %1633 = vmatpush1.msra.mxu0 0.0
      %1634 = vmatprep.subr.mxu0 0.0
      %1635 = vmatpush1.msra.mxu0 0.0
      %1636 = vmatprep.subr.mxu0 0.0
      %1637 = vmatpush1.msra.mxu0 0.0
      %1638 = vmatprep.subr.mxu0 0.0
      %1639 = vmatpush1.msra.mxu0 0.0
      %1640 = vmatprep.subr.mxu0 0.0
      %1641 = vmatpush1.msra.mxu0 0.0
      %1642 = vmatprep.mubr.f32.mxu0 0.0
      %1643 = vmatmul.mubr.f32.gmra.mrb[0].mxu0 %v1573
      %v1644 = vpop.f32.mrb[0].mxu0
      %v1645 = vadd.f32 0.0, %v1644
      %v1646 = vpop.f32.mrb[0].mxu0
      %1647 = vmatprep.mubr.f32.mxu0 0.0
      %1648 = vmatmul.mubr.f32.gmra.mrb[0].mxu0 %v1576
      %v1649 = vpop.f32.mrb[0].mxu0
      %v1650 = vadd.f32 0.0, %v1649
      %v1651 = vpop.f32.mrb[0].mxu0
      %1652 = vdwg.mxu0
      %1657 = vrot.lane.b32.xlu0 %v1558, 8
      %v1658 = vpop.permute.xlu0 %1657
      %1659 = vrot.lane.b32.xlu0 %v1563, 8
      %v1660 = vpop.permute.xlu0 %1659
      %1661 = vrot.lane.b32.xlu0 %v1645, 8
      %v1662 = vpop.permute.xlu0 %1661
      %1663 = vrot.lane.b32.xlu0 %v1650, 8
      %v1664 = vpop.permute.xlu0 %1663
      %vm1669 = vcmask 130112
      %1670 = vst.msk [vmem:[#allocation2] sm:$0xff] %vm1669, %v1658
      %1671 = vst.msk [vmem:[#allocation2 + $0x8] sm:$0xff] %vm1669, %v1660
      %1672 = vst.msk [vmem:[#allocation2 + $0x10] sm:$0xff] %vm1669, %v1662
      %1673 = vst.msk [vmem:[#allocation2 + $0x18] sm:$0xff] %vm1669, %v1664
      %s1674 = scalar_lea.vmem %s3, 32
      %v1675 = vld [vmem:[%s1674] sm:$0xff]
      %v1676 = vld [vmem:[%s1674 + $0x8] sm:$0xff]
      %1677 = vrot.lane.b32.xlu0 %v792, 112
      %v1678 = vpop.permute.xlu0 %1677
      %1679 = vrot.lane.b32.xlu0 %v797, 112
      %v1680 = vpop.permute.xlu0 %1679
      %1681 = vrot.lane.b32.xlu0 %v792, 80
      %v1682 = vpop.permute.xlu0 %1681
      %1683 = vrot.lane.b32.xlu0 %v797, 80
      %v1684 = vpop.permute.xlu0 %1683
      %v1685 = vsel %vm822, %v1678, 0
      %v1687 = vsel %vm822, %v1680, 0
      %v1689 = vsel %vm822, %v1682, 0
      %v1691 = vsel %vm822, %v1684, 0
      %1693 = vmatprep.subr.mxu0 0.0
      %1694 = vmatpush1.xpose.msra.mxu0 %v1689
      %1695 = vmatprep.subr.mxu0 0.0
      %1696 = vmatpush1.xpose.msra.mxu0 %v1691
      %1697 = vmatprep.subr.mxu0 0.0
      %1698 = vmatpush1.xpose.msra.mxu0 0.0
      %1699 = vmatprep.subr.mxu0 0.0
      %1700 = vmatpush1.xpose.msra.mxu0 0.0
      %1701 = vmatprep.subr.mxu0 0.0
      %1702 = vmatpush1.xpose.msra.mxu0 0.0
      %1703 = vmatprep.subr.mxu0 0.0
      %1704 = vmatpush1.xpose.msra.mxu0 0.0
      %1705 = vmatprep.subr.mxu0 0.0
      %1706 = vmatpush1.xpose.msra.mxu0 0.0
      %1707 = vmatprep.subr.mxu0 0.0
      %1708 = vmatpush1.xpose.msra.mxu0 0.0
      %1709 = vmatprep.subr.mxu0 0.0
      %1710 = vmatpush1.xpose.msra.mxu0 0.0
      %1711 = vmatprep.subr.mxu0 0.0
      %1712 = vmatpush1.xpose.msra.mxu0 0.0
      %1713 = vmatprep.subr.mxu0 0.0
      %1714 = vmatpush1.xpose.msra.mxu0 0.0
      %1715 = vmatprep.subr.mxu0 0.0
      %1716 = vmatpush1.xpose.msra.mxu0 0.0
      %1717 = vmatprep.subr.mxu0 0.0
      %1718 = vmatpush1.xpose.msra.mxu0 0.0
      %1719 = vmatprep.subr.mxu0 0.0
      %1720 = vmatpush1.xpose.msra.mxu0 0.0
      %1721 = vmatprep.subr.mxu0 0.0
      %1722 = vmatpush1.xpose.msra.mxu0 0.0
      %1723 = vmatprep.subr.mxu0 0.0
      %1724 = vmatpush1.xpose.msra.mxu0 0.0
      %1725 = vmatprep.subr.mxu0 0.0
      %1726 = vmatpush1.xpose.msra.mxu0 0.0
      %1727 = vmatprep.subr.mxu0 0.0
      %1728 = vmatpush1.xpose.msra.mxu0 0.0
      %1729 = vmatprep.subr.mxu0 0.0
      %1730 = vmatpush1.xpose.msra.mxu0 0.0
      %1731 = vmatprep.subr.mxu0 0.0
      %1732 = vmatpush1.xpose.msra.mxu0 0.0
      %1733 = vmatprep.subr.mxu0 0.0
      %1734 = vmatpush1.xpose.msra.mxu0 0.0
      %1735 = vmatprep.subr.mxu0 0.0
      %1736 = vmatpush1.xpose.msra.mxu0 0.0
      %1737 = vmatprep.subr.mxu0 0.0
      %1738 = vmatpush1.xpose.msra.mxu0 0.0
      %1739 = vmatprep.subr.mxu0 0.0
      %1740 = vmatpush1.xpose.msra.mxu0 0.0
      %1741 = vmatprep.subr.mxu0 0.0
      %1742 = vmatpush1.xpose.msra.mxu0 0.0
      %1743 = vmatprep.subr.mxu0 0.0
      %1744 = vmatpush1.xpose.msra.mxu0 0.0
      %1745 = vmatprep.subr.mxu0 0.0
      %1746 = vmatpush1.xpose.msra.mxu0 0.0
      %1747 = vmatprep.subr.mxu0 0.0
      %1748 = vmatpush1.xpose.msra.mxu0 0.0
      %1749 = vmatprep.subr.mxu0 0.0
      %1750 = vmatpush1.xpose.msra.mxu0 0.0
      %1751 = vmatprep.subr.mxu0 0.0
      %1752 = vmatpush1.xpose.msra.mxu0 0.0
      %1753 = vmatprep.subr.mxu0 0.0
      %1754 = vmatpush1.xpose.msra.mxu0 0.0
      %1755 = vmatprep.subr.mxu0 0.0
      %1756 = vmatpush1.xpose.msra.mxu0 0.0
      %1757 = vmatprep.mubr.f32.mxu0 0.0
      %1758 = vmatmul.mubr.f32.gmra.mrb[0].mxu0 %v1685
      %v1759 = vpop.f32.mrb[0].mxu0
      %v1760 = vadd.f32 %v1675, %v1759
      %v1761 = vpop.f32.mrb[0].mxu0
      %1762 = vmatprep.mubr.f32.mxu0 0.0
      %1763 = vmatmul.mubr.f32.gmra.mrb[0].mxu0 %v1687
      %v1764 = vpop.f32.mrb[0].mxu0
      %v1765 = vadd.f32 %v1676, %v1764
      %v1766 = vpop.f32.mrb[0].mxu0
      %1767 = vdwg.mxu0
      %1768 = vrot.lane.b32.xlu0 %v802, 112
      %v1769 = vpop.permute.xlu0 %1768
      %1770 = vrot.lane.b32.xlu0 %v807, 112
      %v1771 = vpop.permute.xlu0 %1770
      %1772 = vrot.lane.b32.xlu0 %v802, 80
      %v1773 = vpop.permute.xlu0 %1772
      %1774 = vrot.lane.b32.xlu0 %v807, 80
      %v1775 = vpop.permute.xlu0 %1774
      %v1776 = vsel %vm822, %v1769, 0
      %v1778 = vsel %vm822, %v1771, 0
      %v1780 = vsel %vm822, %v1773, 0
      %v1782 = vsel %vm822, %v1775, 0
      %1784 = vmatprep.subr.mxu0 0.0
      %1785 = vmatpush1.xpose.msra.mxu0 %v1780
      %1786 = vmatprep.subr.mxu0 0.0
      %1787 = vmatpush1.xpose.msra.mxu0 %v1782
      %1788 = vmatprep.subr.mxu0 0.0
      %1789 = vmatpush1.xpose.msra.mxu0 0.0
      %1790 = vmatprep.subr.mxu0 0.0
      %1791 = vmatpush1.xpose.msra.mxu0 0.0
      %1792 = vmatprep.subr.mxu0 0.0
      %1793 = vmatpush1.xpose.msra.mxu0 0.0
      %1794 = vmatprep.subr.mxu0 0.0
      %1795 = vmatpush1.xpose.msra.mxu0 0.0
      %1796 = vmatprep.subr.mxu0 0.0
      %1797 = vmatpush1.xpose.msra.mxu0 0.0
      %1798 = vmatprep.subr.mxu0 0.0
      %1799 = vmatpush1.xpose.msra.mxu0 0.0
      %1800 = vmatprep.subr.mxu0 0.0
      %1801 = vmatpush1.xpose.msra.mxu0 0.0
      %1802 = vmatprep.subr.mxu0 0.0
      %1803 = vmatpush1.xpose.msra.mxu0 0.0
      %1804 = vmatprep.subr.mxu0 0.0
      %1805 = vmatpush1.xpose.msra.mxu0 0.0
      %1806 = vmatprep.subr.mxu0 0.0
      %1807 = vmatpush1.xpose.msra.mxu0 0.0
      %1808 = vmatprep.subr.mxu0 0.0
      %1809 = vmatpush1.xpose.msra.mxu0 0.0
      %1810 = vmatprep.subr.mxu0 0.0
      %1811 = vmatpush1.xpose.msra.mxu0 0.0
      %1812 = vmatprep.subr.mxu0 0.0
      %1813 = vmatpush1.xpose.msra.mxu0 0.0
      %1814 = vmatprep.subr.mxu0 0.0
      %1815 = vmatpush1.xpose.msra.mxu0 0.0
      %1816 = vmatprep.subr.mxu0 0.0
      %1817 = vmatpush1.xpose.msra.mxu0 0.0
      %1818 = vmatprep.subr.mxu0 0.0
      %1819 = vmatpush1.xpose.msra.mxu0 0.0
      %1820 = vmatprep.subr.mxu0 0.0
      %1821 = vmatpush1.xpose.msra.mxu0 0.0
      %1822 = vmatprep.subr.mxu0 0.0
      %1823 = vmatpush1.xpose.msra.mxu0 0.0
      %1824 = vmatprep.subr.mxu0 0.0
      %1825 = vmatpush1.xpose.msra.mxu0 0.0
      %1826 = vmatprep.subr.mxu0 0.0
      %1827 = vmatpush1.xpose.msra.mxu0 0.0
      %1828 = vmatprep.subr.mxu0 0.0
      %1829 = vmatpush1.xpose.msra.mxu0 0.0
      %1830 = vmatprep.subr.mxu0 0.0
      %1831 = vmatpush1.xpose.msra.mxu0 0.0
      %1832 = vmatprep.subr.mxu0 0.0
      %1833 = vmatpush1.xpose.msra.mxu0 0.0
      %1834 = vmatprep.subr.mxu0 0.0
      %1835 = vmatpush1.xpose.msra.mxu0 0.0
      %1836 = vmatprep.subr.mxu0 0.0
      %1837 = vmatpush1.xpose.msra.mxu0 0.0
      %1838 = vmatprep.subr.mxu0 0.0
      %1839 = vmatpush1.xpose.msra.mxu0 0.0
      %1840 = vmatprep.subr.mxu0 0.0
      %1841 = vmatpush1.xpose.msra.mxu0 0.0
      %1842 = vmatprep.subr.mxu0 0.0
      %1843 = vmatpush1.xpose.msra.mxu0 0.0
      %1844 = vmatprep.subr.mxu0 0.0
      %1845 = vmatpush1.xpose.msra.mxu0 0.0
      %1846 = vmatprep.subr.mxu0 0.0
      %1847 = vmatpush1.xpose.msra.mxu0 0.0
      %1848 = vmatprep.mubr.f32.mxu0 0.0
      %1849 = vmatmul.mubr.f32.gmra.mrb[0].mxu0 %v1776
      %v1850 = vpop.f32.mrb[0].mxu0
      %v1851 = vadd.f32 %v1675, %v1850
      %v1852 = vpop.f32.mrb[0].mxu0
      %1853 = vmatprep.mubr.f32.mxu0 0.0
      %1854 = vmatmul.mubr.f32.gmra.mrb[0].mxu0 %v1778
      %v1855 = vpop.f32.mrb[0].mxu0
      %v1856 = vadd.f32 %v1676, %v1855
      %v1857 = vpop.f32.mrb[0].mxu0
      %1858 = vdwg.mxu0
      %v1859 = vadd.f32 %v1760, %v810
      %v1860 = vadd.f32 %v1765, %v811
      %v1861 = vadd.f32 %v1851, %v812
      %v1862 = vadd.f32 %v1856, %v813
      %v1863 = vsel %vm999, %v1859, -inf
      %1864 = vmax.xlane.f32.xlu0 %v1863
      %v1865 = vpop.xlane.xlu0 %1864
      %v1866 = vsel %vm999, %v1860, -inf
      %1867 = vmax.xlane.f32.xlu0 %v1866
      %v1868 = vpop.xlane.xlu0 %1867
      %v1869 = vsel %vm999, %v1861, -inf
      %1870 = vmax.xlane.f32.xlu0 %v1869
      %v1871 = vpop.xlane.xlu0 %1870
      %v1872 = vsel %vm999, %v1862, -inf
      %1873 = vmax.xlane.f32.xlu0 %v1872
      %v1874 = vpop.xlane.xlu0 %1873
      %v1875 = vsub.f32 %v1859, %v1865
      %v1876 = vsub.f32 %v1860, %v1868
      %v1877 = vsub.f32 %v1861, %v1871
      %v1878 = vsub.f32 %v1862, %v1874
      %v1879 = vmul.f32 %v1875, 1.442695
      %v1880 = vpow.pop %v1879
      %v1881 = vmul.f32 %v1876, 1.442695
      %v1882 = vpow.pop %v1881
      %v1883 = vmul.f32 %v1877, 1.442695
      %v1884 = vpow.pop %v1883
      %v1885 = vmul.f32 %v1878, 1.442695
      %v1886 = vpow.pop %v1885
      %v1887 = vsel %vm999, %v1880, 0.0
      %1888 = vadd.xlane.f32.xlu0 %v1887
      %v1889 = vpop.xlane.xlu0 %1888
      %v1890 = vsel %vm999, %v1882, 0.0
      %1891 = vadd.xlane.f32.xlu0 %v1890
      %v1892 = vpop.xlane.xlu0 %1891
      %v1893 = vsel %vm999, %v1884, 0.0
      %1894 = vadd.xlane.f32.xlu0 %v1893
      %v1895 = vpop.xlane.xlu0 %1894
      %v1896 = vsel %vm999, %v1886, 0.0
      %1897 = vadd.xlane.f32.xlu0 %v1896
      %v1898 = vpop.xlane.xlu0 %1897
      %v1899 = vrcp.pop %v1889
      %v1900 = vrcp.pop %v1892
      %v1901 = vrcp.pop %v1895
      %v1902 = vrcp.pop %v1898
      %v1903 = vmul.f32 %v1889, %v1899
      %v1904 = vmul.f32 %v1892, %v1900
      %v1905 = vmul.f32 %v1895, %v1901
      %v1906 = vmul.f32 %v1898, %v1902
      %v1907 = vsub.f32 2.0, %v1903
      %v1908 = vsub.f32 2.0, %v1904
      %v1909 = vsub.f32 2.0, %v1905
      %v1910 = vsub.f32 2.0, %v1906
      %v1911 = vmul.f32 %v1899, %v1907
      %v1912 = vmul.f32 %v1900, %v1908
      %v1913 = vmul.f32 %v1901, %v1909
      %v1914 = vmul.f32 %v1902, %v1910
      %v1915 = vmul.f32 %v1880, %v1911
      %v1916 = vmul.f32 %v1882, %v1912
      %v1917 = vmul.f32 %v1884, %v1913
      %v1918 = vmul.f32 %v1886, %v1914
      %1919 = vrot.lane.b32.xlu0 %v792, 48
      %v1920 = vpop.permute.xlu0 %1919
      %1921 = vrot.lane.b32.xlu0 %v797, 48
      %v1922 = vpop.permute.xlu0 %1921
      %v1926 = vsel %vm999, %v1915, 0
      %v1929 = vsel %vm999, %v1916, 0
      %1931 = vmatprep.subr.mxu0 0.0
      %1932 = vmatpush1.msra.mxu0 %v1920
      %1933 = vmatprep.subr.mxu0 0.0
      %1934 = vmatpush1.msra.mxu0 %v1922
      %1935 = vmatprep.subr.mxu0 0.0
      %1936 = vmatpush1.msra.mxu0 0.0
      %1937 = vmatprep.subr.mxu0 0.0
      %1938 = vmatpush1.msra.mxu0 0.0
      %1939 = vmatprep.subr.mxu0 0.0
      %1940 = vmatpush1.msra.mxu0 0.0
      %1941 = vmatprep.subr.mxu0 0.0
      %1942 = vmatpush1.msra.mxu0 0.0
      %1943 = vmatprep.subr.mxu0 0.0
      %1944 = vmatpush1.msra.mxu0 0.0
      %1945 = vmatprep.subr.mxu0 0.0
      %1946 = vmatpush1.msra.mxu0 0.0
      %1947 = vmatprep.subr.mxu0 0.0
      %1948 = vmatpush1.msra.mxu0 0.0
      %1949 = vmatprep.subr.mxu0 0.0
      %1950 = vmatpush1.msra.mxu0 0.0
      %1951 = vmatprep.subr.mxu0 0.0
      %1952 = vmatpush1.msra.mxu0 0.0
      %1953 = vmatprep.subr.mxu0 0.0
      %1954 = vmatpush1.msra.mxu0 0.0
      %1955 = vmatprep.subr.mxu0 0.0
      %1956 = vmatpush1.msra.mxu0 0.0
      %1957 = vmatprep.subr.mxu0 0.0
      %1958 = vmatpush1.msra.mxu0 0.0
      %1959 = vmatprep.subr.mxu0 0.0
      %1960 = vmatpush1.msra.mxu0 0.0
      %1961 = vmatprep.subr.mxu0 0.0
      %1962 = vmatpush1.msra.mxu0 0.0
      %1963 = vmatprep.subr.mxu0 0.0
      %1964 = vmatpush1.msra.mxu0 0.0
      %1965 = vmatprep.subr.mxu0 0.0
      %1966 = vmatpush1.msra.mxu0 0.0
      %1967 = vmatprep.subr.mxu0 0.0
      %1968 = vmatpush1.msra.mxu0 0.0
      %1969 = vmatprep.subr.mxu0 0.0
      %1970 = vmatpush1.msra.mxu0 0.0
      %1971 = vmatprep.subr.mxu0 0.0
      %1972 = vmatpush1.msra.mxu0 0.0
      %1973 = vmatprep.subr.mxu0 0.0
      %1974 = vmatpush1.msra.mxu0 0.0
      %1975 = vmatprep.subr.mxu0 0.0
      %1976 = vmatpush1.msra.mxu0 0.0
      %1977 = vmatprep.subr.mxu0 0.0
      %1978 = vmatpush1.msra.mxu0 0.0
      %1979 = vmatprep.subr.mxu0 0.0
      %1980 = vmatpush1.msra.mxu0 0.0
      %1981 = vmatprep.subr.mxu0 0.0
      %1982 = vmatpush1.msra.mxu0 0.0
      %1983 = vmatprep.subr.mxu0 0.0
      %1984 = vmatpush1.msra.mxu0 0.0
      %1985 = vmatprep.subr.mxu0 0.0
      %1986 = vmatpush1.msra.mxu0 0.0
      %1987 = vmatprep.subr.mxu0 0.0
      %1988 = vmatpush1.msra.mxu0 0.0
      %1989 = vmatprep.subr.mxu0 0.0
      %1990 = vmatpush1.msra.mxu0 0.0
      %1991 = vmatprep.subr.mxu0 0.0
      %1992 = vmatpush1.msra.mxu0 0.0
      %1993 = vmatprep.subr.mxu0 0.0
      %1994 = vmatpush1.msra.mxu0 0.0
      %1995 = vmatprep.mubr.f32.mxu0 0.0
      %1996 = vmatmul.mubr.f32.gmra.mrb[0].mxu0 %v1926
      %v1997 = vpop.f32.mrb[0].mxu0
      %v1998 = vadd.f32 0.0, %v1997
      %v1999 = vpop.f32.mrb[0].mxu0
      %2000 = vmatprep.mubr.f32.mxu0 0.0
      %2001 = vmatmul.mubr.f32.gmra.mrb[0].mxu0 %v1929
      %v2002 = vpop.f32.mrb[0].mxu0
      %v2003 = vadd.f32 0.0, %v2002
      %v2004 = vpop.f32.mrb[0].mxu0
      %2005 = vdwg.mxu0
      %2006 = vrot.lane.b32.xlu0 %v802, 48
      %v2007 = vpop.permute.xlu0 %2006
      %2008 = vrot.lane.b32.xlu0 %v807, 48
      %v2009 = vpop.permute.xlu0 %2008
      %v2013 = vsel %vm999, %v1917, 0
      %v2016 = vsel %vm999, %v1918, 0
      %2018 = vmatprep.subr.mxu0 0.0
      %2019 = vmatpush1.msra.mxu0 %v2007
      %2020 = vmatprep.subr.mxu0 0.0
      %2021 = vmatpush1.msra.mxu0 %v2009
      %2022 = vmatprep.subr.mxu0 0.0
      %2023 = vmatpush1.msra.mxu0 0.0
      %2024 = vmatprep.subr.mxu0 0.0
      %2025 = vmatpush1.msra.mxu0 0.0
      %2026 = vmatprep.subr.mxu0 0.0
      %2027 = vmatpush1.msra.mxu0 0.0
      %2028 = vmatprep.subr.mxu0 0.0
      %2029 = vmatpush1.msra.mxu0 0.0
      %2030 = vmatprep.subr.mxu0 0.0
      %2031 = vmatpush1.msra.mxu0 0.0
      %2032 = vmatprep.subr.mxu0 0.0
      %2033 = vmatpush1.msra.mxu0 0.0
      %2034 = vmatprep.subr.mxu0 0.0
      %2035 = vmatpush1.msra.mxu0 0.0
      %2036 = vmatprep.subr.mxu0 0.0
      %2037 = vmatpush1.msra.mxu0 0.0
      %2038 = vmatprep.subr.mxu0 0.0
      %2039 = vmatpush1.msra.mxu0 0.0
      %2040 = vmatprep.subr.mxu0 0.0
      %2041 = vmatpush1.msra.mxu0 0.0
      %2042 = vmatprep.subr.mxu0 0.0
      %2043 = vmatpush1.msra.mxu0 0.0
      %2044 = vmatprep.subr.mxu0 0.0
      %2045 = vmatpush1.msra.mxu0 0.0
      %2046 = vmatprep.subr.mxu0 0.0
      %2047 = vmatpush1.msra.mxu0 0.0
      %2048 = vmatprep.subr.mxu0 0.0
      %2049 = vmatpush1.msra.mxu0 0.0
      %2050 = vmatprep.subr.mxu0 0.0
      %2051 = vmatpush1.msra.mxu0 0.0
      %2052 = vmatprep.subr.mxu0 0.0
      %2053 = vmatpush1.msra.mxu0 0.0
      %2054 = vmatprep.subr.mxu0 0.0
      %2055 = vmatpush1.msra.mxu0 0.0
      %2056 = vmatprep.subr.mxu0 0.0
      %2057 = vmatpush1.msra.mxu0 0.0
      %2058 = vmatprep.subr.mxu0 0.0
      %2059 = vmatpush1.msra.mxu0 0.0
      %2060 = vmatprep.subr.mxu0 0.0
      %2061 = vmatpush1.msra.mxu0 0.0
      %2062 = vmatprep.subr.mxu0 0.0
      %2063 = vmatpush1.msra.mxu0 0.0
      %2064 = vmatprep.subr.mxu0 0.0
      %2065 = vmatpush1.msra.mxu0 0.0
      %2066 = vmatprep.subr.mxu0 0.0
      %2067 = vmatpush1.msra.mxu0 0.0
      %2068 = vmatprep.subr.mxu0 0.0
      %2069 = vmatpush1.msra.mxu0 0.0
      %2070 = vmatprep.subr.mxu0 0.0
      %2071 = vmatpush1.msra.mxu0 0.0
      %2072 = vmatprep.subr.mxu0 0.0
      %2073 = vmatpush1.msra.mxu0 0.0
      %2074 = vmatprep.subr.mxu0 0.0
      %2075 = vmatpush1.msra.mxu0 0.0
      %2076 = vmatprep.subr.mxu0 0.0
      %2077 = vmatpush1.msra.mxu0 0.0
      %2078 = vmatprep.subr.mxu0 0.0
      %2079 = vmatpush1.msra.mxu0 0.0
      %2080 = vmatprep.subr.mxu0 0.0
      %2081 = vmatpush1.msra.mxu0 0.0
      %2082 = vmatprep.mubr.f32.mxu0 0.0
      %2083 = vmatmul.mubr.f32.gmra.mrb[0].mxu0 %v2013
      %v2084 = vpop.f32.mrb[0].mxu0
      %v2085 = vadd.f32 0.0, %v2084
      %v2086 = vpop.f32.mrb[0].mxu0
      %2087 = vmatprep.mubr.f32.mxu0 0.0
      %2088 = vmatmul.mubr.f32.gmra.mrb[0].mxu0 %v2016
      %v2089 = vpop.f32.mrb[0].mxu0
      %v2090 = vadd.f32 0.0, %v2089
      %v2091 = vpop.f32.mrb[0].mxu0
      %2092 = vdwg.mxu0
      %2097 = vrot.lane.b32.xlu0 %v1998, 16
      %v2098 = vpop.permute.xlu0 %2097
      %2099 = vrot.lane.b32.xlu0 %v2003, 16
      %v2100 = vpop.permute.xlu0 %2099
      %2101 = vrot.lane.b32.xlu0 %v2085, 16
      %v2102 = vpop.permute.xlu0 %2101
      %2103 = vrot.lane.b32.xlu0 %v2090, 16
      %v2104 = vpop.permute.xlu0 %2103
      %vm2109 = vcmask 195712
      %2110 = vst.msk [vmem:[#allocation2] sm:$0xff] %vm2109, %v2098
      %2111 = vst.msk [vmem:[#allocation2 + $0x8] sm:$0xff] %vm2109, %v2100
      %2112 = vst.msk [vmem:[#allocation2 + $0x10] sm:$0xff] %vm2109, %v2102
      %2113 = vst.msk [vmem:[#allocation2 + $0x18] sm:$0xff] %vm2109, %v2104
      %s2114 = scalar_lea.vmem %s3, 48
      %v2115 = vld [vmem:[%s2114] sm:$0xff]
      %v2116 = vld [vmem:[%s2114 + $0x8] sm:$0xff]
      %2117 = vrot.lane.b32.xlu0 %v792, 104
      %v2118 = vpop.permute.xlu0 %2117
      %2119 = vrot.lane.b32.xlu0 %v797, 104
      %v2120 = vpop.permute.xlu0 %2119
      %2121 = vrot.lane.b32.xlu0 %v792, 72
      %v2122 = vpop.permute.xlu0 %2121
      %2123 = vrot.lane.b32.xlu0 %v797, 72
      %v2124 = vpop.permute.xlu0 %2123
      %v2125 = vsel %vm822, %v2118, 0
      %v2127 = vsel %vm822, %v2120, 0
      %v2129 = vsel %vm822, %v2122, 0
      %v2131 = vsel %vm822, %v2124, 0
      %2133 = vmatprep.subr.mxu0 0.0
      %2134 = vmatpush1.xpose.msra.mxu0 %v2129
      %2135 = vmatprep.subr.mxu0 0.0
      %2136 = vmatpush1.xpose.msra.mxu0 %v2131
      %2137 = vmatprep.subr.mxu0 0.0
      %2138 = vmatpush1.xpose.msra.mxu0 0.0
      %2139 = vmatprep.subr.mxu0 0.0
      %2140 = vmatpush1.xpose.msra.mxu0 0.0
      %2141 = vmatprep.subr.mxu0 0.0
      %2142 = vmatpush1.xpose.msra.mxu0 0.0
      %2143 = vmatprep.subr.mxu0 0.0
      %2144 = vmatpush1.xpose.msra.mxu0 0.0
      %2145 = vmatprep.subr.mxu0 0.0
      %2146 = vmatpush1.xpose.msra.mxu0 0.0
      %2147 = vmatprep.subr.mxu0 0.0
      %2148 = vmatpush1.xpose.msra.mxu0 0.0
      %2149 = vmatprep.subr.mxu0 0.0
      %2150 = vmatpush1.xpose.msra.mxu0 0.0
      %2151 = vmatprep.subr.mxu0 0.0
      %2152 = vmatpush1.xpose.msra.mxu0 0.0
      %2153 = vmatprep.subr.mxu0 0.0
      %2154 = vmatpush1.xpose.msra.mxu0 0.0
      %2155 = vmatprep.subr.mxu0 0.0
      %2156 = vmatpush1.xpose.msra.mxu0 0.0
      %2157 = vmatprep.subr.mxu0 0.0
      %2158 = vmatpush1.xpose.msra.mxu0 0.0
      %2159 = vmatprep.subr.mxu0 0.0
      %2160 = vmatpush1.xpose.msra.mxu0 0.0
      %2161 = vmatprep.subr.mxu0 0.0
      %2162 = vmatpush1.xpose.msra.mxu0 0.0
      %2163 = vmatprep.subr.mxu0 0.0
      %2164 = vmatpush1.xpose.msra.mxu0 0.0
      %2165 = vmatprep.subr.mxu0 0.0
      %2166 = vmatpush1.xpose.msra.mxu0 0.0
      %2167 = vmatprep.subr.mxu0 0.0
      %2168 = vmatpush1.xpose.msra.mxu0 0.0
      %2169 = vmatprep.subr.mxu0 0.0
      %2170 = vmatpush1.xpose.msra.mxu0 0.0
      %2171 = vmatprep.subr.mxu0 0.0
      %2172 = vmatpush1.xpose.msra.mxu0 0.0
      %2173 = vmatprep.subr.mxu0 0.0
      %2174 = vmatpush1.xpose.msra.mxu0 0.0
      %2175 = vmatprep.subr.mxu0 0.0
      %2176 = vmatpush1.xpose.msra.mxu0 0.0
      %2177 = vmatprep.subr.mxu0 0.0
      %2178 = vmatpush1.xpose.msra.mxu0 0.0
      %2179 = vmatprep.subr.mxu0 0.0
      %2180 = vmatpush1.xpose.msra.mxu0 0.0
      %2181 = vmatprep.subr.mxu0 0.0
      %2182 = vmatpush1.xpose.msra.mxu0 0.0
      %2183 = vmatprep.subr.mxu0 0.0
      %2184 = vmatpush1.xpose.msra.mxu0 0.0
      %2185 = vmatprep.subr.mxu0 0.0
      %2186 = vmatpush1.xpose.msra.mxu0 0.0
      %2187 = vmatprep.subr.mxu0 0.0
      %2188 = vmatpush1.xpose.msra.mxu0 0.0
      %2189 = vmatprep.subr.mxu0 0.0
      %2190 = vmatpush1.xpose.msra.mxu0 0.0
      %2191 = vmatprep.subr.mxu0 0.0
      %2192 = vmatpush1.xpose.msra.mxu0 0.0
      %2193 = vmatprep.subr.mxu0 0.0
      %2194 = vmatpush1.xpose.msra.mxu0 0.0
      %2195 = vmatprep.subr.mxu0 0.0
      %2196 = vmatpush1.xpose.msra.mxu0 0.0
      %2197 = vmatprep.mubr.f32.mxu0 0.0
      %2198 = vmatmul.mubr.f32.gmra.mrb[0].mxu0 %v2125
      %v2199 = vpop.f32.mrb[0].mxu0
      %v2200 = vadd.f32 %v2115, %v2199
      %v2201 = vpop.f32.mrb[0].mxu0
      %2202 = vmatprep.mubr.f32.mxu0 0.0
      %2203 = vmatmul.mubr.f32.gmra.mrb[0].mxu0 %v2127
      %v2204 = vpop.f32.mrb[0].mxu0
      %v2205 = vadd.f32 %v2116, %v2204
      %v2206 = vpop.f32.mrb[0].mxu0
      %2207 = vdwg.mxu0
      %2208 = vrot.lane.b32.xlu0 %v802, 104
      %v2209 = vpop.permute.xlu0 %2208
      %2210 = vrot.lane.b32.xlu0 %v807, 104
      %v2211 = vpop.permute.xlu0 %2210
      %2212 = vrot.lane.b32.xlu0 %v802, 72
      %v2213 = vpop.permute.xlu0 %2212
      %2214 = vrot.lane.b32.xlu0 %v807, 72
      %v2215 = vpop.permute.xlu0 %2214
      %v2216 = vsel %vm822, %v2209, 0
      %v2218 = vsel %vm822, %v2211, 0
      %v2220 = vsel %vm822, %v2213, 0
      %v2222 = vsel %vm822, %v2215, 0
      %2224 = vmatprep.subr.mxu0 0.0
      %2225 = vmatpush1.xpose.msra.mxu0 %v2220
      %2226 = vmatprep.subr.mxu0 0.0
      %2227 = vmatpush1.xpose.msra.mxu0 %v2222
      %2228 = vmatprep.subr.mxu0 0.0
      %2229 = vmatpush1.xpose.msra.mxu0 0.0
      %2230 = vmatprep.subr.mxu0 0.0
      %2231 = vmatpush1.xpose.msra.mxu0 0.0
      %2232 = vmatprep.subr.mxu0 0.0
      %2233 = vmatpush1.xpose.msra.mxu0 0.0
      %2234 = vmatprep.subr.mxu0 0.0
      %2235 = vmatpush1.xpose.msra.mxu0 0.0
      %2236 = vmatprep.subr.mxu0 0.0
      %2237 = vmatpush1.xpose.msra.mxu0 0.0
      %2238 = vmatprep.subr.mxu0 0.0
      %2239 = vmatpush1.xpose.msra.mxu0 0.0
      %2240 = vmatprep.subr.mxu0 0.0
      %2241 = vmatpush1.xpose.msra.mxu0 0.0
      %2242 = vmatprep.subr.mxu0 0.0
      %2243 = vmatpush1.xpose.msra.mxu0 0.0
      %2244 = vmatprep.subr.mxu0 0.0
      %2245 = vmatpush1.xpose.msra.mxu0 0.0
      %2246 = vmatprep.subr.mxu0 0.0
      %2247 = vmatpush1.xpose.msra.mxu0 0.0
      %2248 = vmatprep.subr.mxu0 0.0
      %2249 = vmatpush1.xpose.msra.mxu0 0.0
      %2250 = vmatprep.subr.mxu0 0.0
      %2251 = vmatpush1.xpose.msra.mxu0 0.0
      %2252 = vmatprep.subr.mxu0 0.0
      %2253 = vmatpush1.xpose.msra.mxu0 0.0
      %2254 = vmatprep.subr.mxu0 0.0
      %2255 = vmatpush1.xpose.msra.mxu0 0.0
      %2256 = vmatprep.subr.mxu0 0.0
      %2257 = vmatpush1.xpose.msra.mxu0 0.0
      %2258 = vmatprep.subr.mxu0 0.0
      %2259 = vmatpush1.xpose.msra.mxu0 0.0
      %2260 = vmatprep.subr.mxu0 0.0
      %2261 = vmatpush1.xpose.msra.mxu0 0.0
      %2262 = vmatprep.subr.mxu0 0.0
      %2263 = vmatpush1.xpose.msra.mxu0 0.0
      %2264 = vmatprep.subr.mxu0 0.0
      %2265 = vmatpush1.xpose.msra.mxu0 0.0
      %2266 = vmatprep.subr.mxu0 0.0
      %2267 = vmatpush1.xpose.msra.mxu0 0.0
      %2268 = vmatprep.subr.mxu0 0.0
      %2269 = vmatpush1.xpose.msra.mxu0 0.0
      %2270 = vmatprep.subr.mxu0 0.0
      %2271 = vmatpush1.xpose.msra.mxu0 0.0
      %2272 = vmatprep.subr.mxu0 0.0
      %2273 = vmatpush1.xpose.msra.mxu0 0.0
      %2274 = vmatprep.subr.mxu0 0.0
      %2275 = vmatpush1.xpose.msra.mxu0 0.0
      %2276 = vmatprep.subr.mxu0 0.0
      %2277 = vmatpush1.xpose.msra.mxu0 0.0
      %2278 = vmatprep.subr.mxu0 0.0
      %2279 = vmatpush1.xpose.msra.mxu0 0.0
      %2280 = vmatprep.subr.mxu0 0.0
      %2281 = vmatpush1.xpose.msra.mxu0 0.0
      %2282 = vmatprep.subr.mxu0 0.0
      %2283 = vmatpush1.xpose.msra.mxu0 0.0
      %2284 = vmatprep.subr.mxu0 0.0
      %2285 = vmatpush1.xpose.msra.mxu0 0.0
      %2286 = vmatprep.subr.mxu0 0.0
      %2287 = vmatpush1.xpose.msra.mxu0 0.0
      %2288 = vmatprep.mubr.f32.mxu0 0.0
      %2289 = vmatmul.mubr.f32.gmra.mrb[0].mxu0 %v2216
      %v2290 = vpop.f32.mrb[0].mxu0
      %v2291 = vadd.f32 %v2115, %v2290
      %v2292 = vpop.f32.mrb[0].mxu0
      %2293 = vmatprep.mubr.f32.mxu0 0.0
      %2294 = vmatmul.mubr.f32.gmra.mrb[0].mxu0 %v2218
      %v2295 = vpop.f32.mrb[0].mxu0
      %v2296 = vadd.f32 %v2116, %v2295
      %v2297 = vpop.f32.mrb[0].mxu0
      %2298 = vdwg.mxu0
      %v2299 = vadd.f32 %v2200, %v810
      %v2300 = vadd.f32 %v2205, %v811
      %v2301 = vadd.f32 %v2291, %v812
      %v2302 = vadd.f32 %v2296, %v813
      %v2303 = vsel %vm999, %v2299, -inf
      %2304 = vmax.xlane.f32.xlu0 %v2303
      %v2305 = vpop.xlane.xlu0 %2304
      %v2306 = vsel %vm999, %v2300, -inf
      %2307 = vmax.xlane.f32.xlu0 %v2306
      %v2308 = vpop.xlane.xlu0 %2307
      %v2309 = vsel %vm999, %v2301, -inf
      %2310 = vmax.xlane.f32.xlu0 %v2309
      %v2311 = vpop.xlane.xlu0 %2310
      %v2312 = vsel %vm999, %v2302, -inf
      %2313 = vmax.xlane.f32.xlu0 %v2312
      %v2314 = vpop.xlane.xlu0 %2313
      %v2315 = vsub.f32 %v2299, %v2305
      %v2316 = vsub.f32 %v2300, %v2308
      %v2317 = vsub.f32 %v2301, %v2311
      %v2318 = vsub.f32 %v2302, %v2314
      %v2319 = vmul.f32 %v2315, 1.442695
      %v2320 = vpow.pop %v2319
      %v2321 = vmul.f32 %v2316, 1.442695
      %v2322 = vpow.pop %v2321
      %v2323 = vmul.f32 %v2317, 1.442695
      %v2324 = vpow.pop %v2323
      %v2325 = vmul.f32 %v2318, 1.442695
      %v2326 = vpow.pop %v2325
      %v2327 = vsel %vm999, %v2320, 0.0
      %2328 = vadd.xlane.f32.xlu0 %v2327
      %v2329 = vpop.xlane.xlu0 %2328
      %v2330 = vsel %vm999, %v2322, 0.0
      %2331 = vadd.xlane.f32.xlu0 %v2330
      %v2332 = vpop.xlane.xlu0 %2331
      %v2333 = vsel %vm999, %v2324, 0.0
      %2334 = vadd.xlane.f32.xlu0 %v2333
      %v2335 = vpop.xlane.xlu0 %2334
      %v2336 = vsel %vm999, %v2326, 0.0
      %2337 = vadd.xlane.f32.xlu0 %v2336
      %v2338 = vpop.xlane.xlu0 %2337
      %v2339 = vrcp.pop %v2329
      %v2340 = vrcp.pop %v2332
      %v2341 = vrcp.pop %v2335
      %v2342 = vrcp.pop %v2338
      %v2343 = vmul.f32 %v2329, %v2339
      %v2344 = vmul.f32 %v2332, %v2340
      %v2345 = vmul.f32 %v2335, %v2341
      %v2346 = vmul.f32 %v2338, %v2342
      %v2347 = vsub.f32 2.0, %v2343
      %v2348 = vsub.f32 2.0, %v2344
      %v2349 = vsub.f32 2.0, %v2345
      %v2350 = vsub.f32 2.0, %v2346
      %v2351 = vmul.f32 %v2339, %v2347
      %v2352 = vmul.f32 %v2340, %v2348
      %v2353 = vmul.f32 %v2341, %v2349
      %v2354 = vmul.f32 %v2342, %v2350
      %v2355 = vmul.f32 %v2320, %v2351
      %v2356 = vmul.f32 %v2322, %v2352
      %v2357 = vmul.f32 %v2324, %v2353
      %v2358 = vmul.f32 %v2326, %v2354
      %2359 = vrot.lane.b32.xlu0 %v792, 40
      %v2360 = vpop.permute.xlu0 %2359
      %2361 = vrot.lane.b32.xlu0 %v797, 40
      %v2362 = vpop.permute.xlu0 %2361
      %v2366 = vsel %vm999, %v2355, 0
      %v2369 = vsel %vm999, %v2356, 0
      %2371 = vmatprep.subr.mxu0 0.0
      %2372 = vmatpush1.msra.mxu0 %v2360
      %2373 = vmatprep.subr.mxu0 0.0
      %2374 = vmatpush1.msra.mxu0 %v2362
      %2375 = vmatprep.subr.mxu0 0.0
      %2376 = vmatpush1.msra.mxu0 0.0
      %2377 = vmatprep.subr.mxu0 0.0
      %2378 = vmatpush1.msra.mxu0 0.0
      %2379 = vmatprep.subr.mxu0 0.0
      %2380 = vmatpush1.msra.mxu0 0.0
      %2381 = vmatprep.subr.mxu0 0.0
      %2382 = vmatpush1.msra.mxu0 0.0
      %2383 = vmatprep.subr.mxu0 0.0
      %2384 = vmatpush1.msra.mxu0 0.0
      %2385 = vmatprep.subr.mxu0 0.0
      %2386 = vmatpush1.msra.mxu0 0.0
      %2387 = vmatprep.subr.mxu0 0.0
      %2388 = vmatpush1.msra.mxu0 0.0
      %2389 = vmatprep.subr.mxu0 0.0
      %2390 = vmatpush1.msra.mxu0 0.0
      %2391 = vmatprep.subr.mxu0 0.0
      %2392 = vmatpush1.msra.mxu0 0.0
      %2393 = vmatprep.subr.mxu0 0.0
      %2394 = vmatpush1.msra.mxu0 0.0
      %2395 = vmatprep.subr.mxu0 0.0
      %2396 = vmatpush1.msra.mxu0 0.0
      %2397 = vmatprep.subr.mxu0 0.0
      %2398 = vmatpush1.msra.mxu0 0.0
      %2399 = vmatprep.subr.mxu0 0.0
      %2400 = vmatpush1.msra.mxu0 0.0
      %2401 = vmatprep.subr.mxu0 0.0
      %2402 = vmatpush1.msra.mxu0 0.0
      %2403 = vmatprep.subr.mxu0 0.0
      %2404 = vmatpush1.msra.mxu0 0.0
      %2405 = vmatprep.subr.mxu0 0.0
      %2406 = vmatpush1.msra.mxu0 0.0
      %2407 = vmatprep.subr.mxu0 0.0
      %2408 = vmatpush1.msra.mxu0 0.0
      %2409 = vmatprep.subr.mxu0 0.0
      %2410 = vmatpush1.msra.mxu0 0.0
      %2411 = vmatprep.subr.mxu0 0.0
      %2412 = vmatpush1.msra.mxu0 0.0
      %2413 = vmatprep.subr.mxu0 0.0
      %2414 = vmatpush1.msra.mxu0 0.0
      %2415 = vmatprep.subr.mxu0 0.0
      %2416 = vmatpush1.msra.mxu0 0.0
      %2417 = vmatprep.subr.mxu0 0.0
      %2418 = vmatpush1.msra.mxu0 0.0
      %2419 = vmatprep.subr.mxu0 0.0
      %2420 = vmatpush1.msra.mxu0 0.0
      %2421 = vmatprep.subr.mxu0 0.0
      %2422 = vmatpush1.msra.mxu0 0.0
      %2423 = vmatprep.subr.mxu0 0.0
      %2424 = vmatpush1.msra.mxu0 0.0
      %2425 = vmatprep.subr.mxu0 0.0
      %2426 = vmatpush1.msra.mxu0 0.0
      %2427 = vmatprep.subr.mxu0 0.0
      %2428 = vmatpush1.msra.mxu0 0.0
      %2429 = vmatprep.subr.mxu0 0.0
      %2430 = vmatpush1.msra.mxu0 0.0
      %2431 = vmatprep.subr.mxu0 0.0
      %2432 = vmatpush1.msra.mxu0 0.0
      %2433 = vmatprep.subr.mxu0 0.0
      %2434 = vmatpush1.msra.mxu0 0.0
      %2435 = vmatprep.mubr.f32.mxu0 0.0
      %2436 = vmatmul.mubr.f32.gmra.mrb[0].mxu0 %v2366
      %v2437 = vpop.f32.mrb[0].mxu0
      %v2438 = vadd.f32 0.0, %v2437
      %v2439 = vpop.f32.mrb[0].mxu0
      %2440 = vmatprep.mubr.f32.mxu0 0.0
      %2441 = vmatmul.mubr.f32.gmra.mrb[0].mxu0 %v2369
      %v2442 = vpop.f32.mrb[0].mxu0
      %v2443 = vadd.f32 0.0, %v2442
      %v2444 = vpop.f32.mrb[0].mxu0
      %2445 = vdwg.mxu0
      %2446 = vrot.lane.b32.xlu0 %v802, 40
      %v2447 = vpop.permute.xlu0 %2446
      %2448 = vrot.lane.b32.xlu0 %v807, 40
      %v2449 = vpop.permute.xlu0 %2448
      %v2453 = vsel %vm999, %v2357, 0
      %v2456 = vsel %vm999, %v2358, 0
      %2458 = vmatprep.subr.mxu0 0.0
      %2459 = vmatpush1.msra.mxu0 %v2447
      %2460 = vmatprep.subr.mxu0 0.0
      %2461 = vmatpush1.msra.mxu0 %v2449
      %2462 = vmatprep.subr.mxu0 0.0
      %2463 = vmatpush1.msra.mxu0 0.0
      %2464 = vmatprep.subr.mxu0 0.0
      %2465 = vmatpush1.msra.mxu0 0.0
      %2466 = vmatprep.subr.mxu0 0.0
      %2467 = vmatpush1.msra.mxu0 0.0
      %2468 = vmatprep.subr.mxu0 0.0
      %2469 = vmatpush1.msra.mxu0 0.0
      %2470 = vmatprep.subr.mxu0 0.0
      %2471 = vmatpush1.msra.mxu0 0.0
      %2472 = vmatprep.subr.mxu0 0.0
      %2473 = vmatpush1.msra.mxu0 0.0
      %2474 = vmatprep.subr.mxu0 0.0
      %2475 = vmatpush1.msra.mxu0 0.0
      %2476 = vmatprep.subr.mxu0 0.0
      %2477 = vmatpush1.msra.mxu0 0.0
      %2478 = vmatprep.subr.mxu0 0.0
      %2479 = vmatpush1.msra.mxu0 0.0
      %2480 = vmatprep.subr.mxu0 0.0
      %2481 = vmatpush1.msra.mxu0 0.0
      %2482 = vmatprep.subr.mxu0 0.0
      %2483 = vmatpush1.msra.mxu0 0.0
      %2484 = vmatprep.subr.mxu0 0.0
      %2485 = vmatpush1.msra.mxu0 0.0
      %2486 = vmatprep.subr.mxu0 0.0
      %2487 = vmatpush1.msra.mxu0 0.0
      %2488 = vmatprep.subr.mxu0 0.0
      %2489 = vmatpush1.msra.mxu0 0.0
      %2490 = vmatprep.subr.mxu0 0.0
      %2491 = vmatpush1.msra.mxu0 0.0
      %2492 = vmatprep.subr.mxu0 0.0
      %2493 = vmatpush1.msra.mxu0 0.0
      %2494 = vmatprep.subr.mxu0 0.0
      %2495 = vmatpush1.msra.mxu0 0.0
      %2496 = vmatprep.subr.mxu0 0.0
      %2497 = vmatpush1.msra.mxu0 0.0
      %2498 = vmatprep.subr.mxu0 0.0
      %2499 = vmatpush1.msra.mxu0 0.0
      %2500 = vmatprep.subr.mxu0 0.0
      %2501 = vmatpush1.msra.mxu0 0.0
      %2502 = vmatprep.subr.mxu0 0.0
      %2503 = vmatpush1.msra.mxu0 0.0
      %2504 = vmatprep.subr.mxu0 0.0
      %2505 = vmatpush1.msra.mxu0 0.0
      %2506 = vmatprep.subr.mxu0 0.0
      %2507 = vmatpush1.msra.mxu0 0.0
      %2508 = vmatprep.subr.mxu0 0.0
      %2509 = vmatpush1.msra.mxu0 0.0
      %2510 = vmatprep.subr.mxu0 0.0
      %2511 = vmatpush1.msra.mxu0 0.0
      %2512 = vmatprep.subr.mxu0 0.0
      %2513 = vmatpush1.msra.mxu0 0.0
      %2514 = vmatprep.subr.mxu0 0.0
      %2515 = vmatpush1.msra.mxu0 0.0
      %2516 = vmatprep.subr.mxu0 0.0
      %2517 = vmatpush1.msra.mxu0 0.0
      %2518 = vmatprep.subr.mxu0 0.0
      %2519 = vmatpush1.msra.mxu0 0.0
      %2520 = vmatprep.subr.mxu0 0.0
      %2521 = vmatpush1.msra.mxu0 0.0
      %2522 = vmatprep.mubr.f32.mxu0 0.0
      %2523 = vmatmul.mubr.f32.gmra.mrb[0].mxu0 %v2453
      %v2524 = vpop.f32.mrb[0].mxu0
      %v2525 = vadd.f32 0.0, %v2524
      %v2526 = vpop.f32.mrb[0].mxu0
      %2527 = vmatprep.mubr.f32.mxu0 0.0
      %2528 = vmatmul.mubr.f32.gmra.mrb[0].mxu0 %v2456
      %v2529 = vpop.f32.mrb[0].mxu0
      %v2530 = vadd.f32 0.0, %v2529
      %v2531 = vpop.f32.mrb[0].mxu0
      %2532 = vdwg.mxu0
      %2537 = vrot.lane.b32.xlu0 %v2438, 24
      %v2538 = vpop.permute.xlu0 %2537
      %2539 = vrot.lane.b32.xlu0 %v2443, 24
      %v2540 = vpop.permute.xlu0 %2539
      %2541 = vrot.lane.b32.xlu0 %v2525, 24
      %v2542 = vpop.permute.xlu0 %2541
      %2543 = vrot.lane.b32.xlu0 %v2530, 24
      %v2544 = vpop.permute.xlu0 %2543
      %vm2549 = vcmask 261312
      %2550 = vst.msk [vmem:[#allocation2] sm:$0xff] %vm2549, %v2538
      %2551 = vst.msk [vmem:[#allocation2 + $0x8] sm:$0xff] %vm2549, %v2540
      %2552 = vst.msk [vmem:[#allocation2 + $0x10] sm:$0xff] %vm2549, %v2542
      %2553 = vst.msk [vmem:[#allocation2 + $0x18] sm:$0xff] %vm2549, %v2544
      %v2554 = vld [vmem:[#allocation2] sm:$0xff]
      %v2555 = vld [vmem:[#allocation2 + $0x8] sm:$0xff]
      %v2556 = vld [vmem:[#allocation2 + $0x10] sm:$0xff]
      %v2557 = vld [vmem:[#allocation2 + $0x18] sm:$0xff]
      %v2558 = vld [vmem:[%s8] sm:$0xff]
      %v2559 = vld [vmem:[%s8 + $0x8] sm:$0xff]
      %v2560 = vld [vmem:[%s8 + $0x10] sm:$0xff]
      %v2561 = vld [vmem:[%s8 + $0x18] sm:$0xff]
      %v2562 = vld [vmem:[%s9] sm:$0x1]
      %v2564 = vlaneseq
      %v2565 = vshrl.u32 %v2564, 7
      %v2566 = vsub.s32 0, %v2565
      %v2567 = vrot.slane %v2562, %v2566
      %v2570 = vsel %vm626, %v2554, 0
      %v2573 = vsel %vm626, %v2555, 0
      %v2576 = vsel %vm626, %v2556, 0
      %v2579 = vsel %vm626, %v2557, 0
      %2581 = vmatprep.subr.mxu0 0.0
      %2582 = vmatpush1.msra.mxu0 %v2558
      %2583 = vmatprep.subr.mxu0 0.0
      %2584 = vmatpush1.msra.mxu0 %v2559
      %2585 = vmatprep.subr.mxu0 0.0
      %2586 = vmatpush1.msra.mxu0 %v2560
      %2587 = vmatprep.subr.mxu0 0.0
      %2588 = vmatpush1.msra.mxu0 %v2561
      %2589 = vmatprep.subr.mxu0 0.0
      %2590 = vmatpush1.msra.mxu0 0.0
      %2591 = vmatprep.subr.mxu0 0.0
      %2592 = vmatpush1.msra.mxu0 0.0
      %2593 = vmatprep.subr.mxu0 0.0
      %2594 = vmatpush1.msra.mxu0 0.0
      %2595 = vmatprep.subr.mxu0 0.0
      %2596 = vmatpush1.msra.mxu0 0.0
      %2597 = vmatprep.subr.mxu0 0.0
      %2598 = vmatpush1.msra.mxu0 0.0
      %2599 = vmatprep.subr.mxu0 0.0
      %2600 = vmatpush1.msra.mxu0 0.0
      %2601 = vmatprep.subr.mxu0 0.0
      %2602 = vmatpush1.msra.mxu0 0.0
      %2603 = vmatprep.subr.mxu0 0.0
      %2604 = vmatpush1.msra.mxu0 0.0
      %2605 = vmatprep.subr.mxu0 0.0
      %2606 = vmatpush1.msra.mxu0 0.0
      %2607 = vmatprep.subr.mxu0 0.0
      %2608 = vmatpush1.msra.mxu0 0.0
      %2609 = vmatprep.subr.mxu0 0.0
      %2610 = vmatpush1.msra.mxu0 0.0
      %2611 = vmatprep.subr.mxu0 0.0
      %2612 = vmatpush1.msra.mxu0 0.0
      %2613 = vmatprep.subr.mxu0 0.0
      %2614 = vmatpush1.msra.mxu0 0.0
      %2615 = vmatprep.subr.mxu0 0.0
      %2616 = vmatpush1.msra.mxu0 0.0
      %2617 = vmatprep.subr.mxu0 0.0
      %2618 = vmatpush1.msra.mxu0 0.0
      %2619 = vmatprep.subr.mxu0 0.0
      %2620 = vmatpush1.msra.mxu0 0.0
      %2621 = vmatprep.subr.mxu0 0.0
      %2622 = vmatpush1.msra.mxu0 0.0
      %2623 = vmatprep.subr.mxu0 0.0
      %2624 = vmatpush1.msra.mxu0 0.0
      %2625 = vmatprep.subr.mxu0 0.0
      %2626 = vmatpush1.msra.mxu0 0.0
      %2627 = vmatprep.subr.mxu0 0.0
      %2628 = vmatpush1.msra.mxu0 0.0
      %2629 = vmatprep.subr.mxu0 0.0
      %2630 = vmatpush1.msra.mxu0 0.0
      %2631 = vmatprep.subr.mxu0 0.0
      %2632 = vmatpush1.msra.mxu0 0.0
      %2633 = vmatprep.subr.mxu0 0.0
      %2634 = vmatpush1.msra.mxu0 0.0
      %2635 = vmatprep.subr.mxu0 0.0
      %2636 = vmatpush1.msra.mxu0 0.0
      %2637 = vmatprep.subr.mxu0 0.0
      %2638 = vmatpush1.msra.mxu0 0.0
      %2639 = vmatprep.subr.mxu0 0.0
      %2640 = vmatpush1.msra.mxu0 0.0
      %2641 = vmatprep.subr.mxu0 0.0
      %2642 = vmatpush1.msra.mxu0 0.0
      %2643 = vmatprep.subr.mxu0 0.0
      %2644 = vmatpush1.msra.mxu0 0.0
      %2645 = vmatprep.mubr.f32.mxu0 0.0
      %2646 = vmatmul.mubr.f32.gmra.mrb[0].mxu0 %v2570
      %v2647 = vpop.f32.mrb[0].mxu0
      %v2648 = vadd.f32 %v2567, %v2647
      %v2649 = vpop.f32.mrb[0].mxu0
      %2650 = vmatprep.mubr.f32.mxu0 0.0
      %2651 = vmatmul.mubr.f32.gmra.mrb[0].mxu0 %v2573
      %v2652 = vpop.f32.mrb[0].mxu0
      %v2653 = vadd.f32 %v2567, %v2652
      %v2654 = vpop.f32.mrb[0].mxu0
      %2655 = vmatprep.mubr.f32.mxu0 0.0
      %2656 = vmatmul.mubr.f32.gmra.mrb[0].mxu0 %v2576
      %v2657 = vpop.f32.mrb[0].mxu0
      %v2658 = vadd.f32 %v2567, %v2657
      %v2659 = vpop.f32.mrb[0].mxu0
      %2660 = vmatprep.mubr.f32.mxu0 0.0
      %2661 = vmatmul.mubr.f32.gmra.mrb[0].mxu0 %v2579
      %v2662 = vpop.f32.mrb[0].mxu0
      %v2663 = vadd.f32 %v2567, %v2662
      %v2664 = vpop.f32.mrb[0].mxu0
      %2665 = vdwg.mxu0
      %v2666 = vld [vmem:[%s603] sm:$0xff]
      %v2667 = vld [vmem:[%s603 + $0x8] sm:$0xff]
      %v2668 = vld [vmem:[%s603 + $0x10] sm:$0xff]
      %v2669 = vld [vmem:[%s603 + $0x18] sm:$0xff]
      %v2670 = vadd.f32 %v2666, %v2648
      %v2671 = vadd.f32 %v2667, %v2653
      %v2672 = vadd.f32 %v2668, %v2658
      %v2673 = vadd.f32 %v2669, %v2663
      %v2674 = vsel %vm626, %v2670, 0.0
      %2675 = vadd.xlane.f32.xlu0 %v2674
      %v2676 = vpop.xlane.xlu0 %2675
      %v2677 = vsel %vm626, %v2671, 0.0
      %2678 = vadd.xlane.f32.xlu0 %v2677
      %v2679 = vpop.xlane.xlu0 %2678
      %v2680 = vsel %vm626, %v2672, 0.0
      %2681 = vadd.xlane.f32.xlu0 %v2680
      %v2682 = vpop.xlane.xlu0 %2681
      %v2683 = vsel %vm626, %v2673, 0.0
      %2684 = vadd.xlane.f32.xlu0 %v2683
      %v2685 = vpop.xlane.xlu0 %2684
      %v2686 = vmul.f32 %v2676, %v639
      %v2687 = vmul.f32 %v2679, %v639
      %v2688 = vmul.f32 %v2682, %v639
      %v2689 = vmul.f32 %v2685, %v639
      %v2690 = vsub.f32 %v2670, %v2686
      %v2691 = vsub.f32 %v2671, %v2687
      %v2692 = vsub.f32 %v2672, %v2688
      %v2693 = vsub.f32 %v2673, %v2689
      %v2694 = vmul.f32 %v2690, %v2690
      %v2695 = vmul.f32 %v2691, %v2691
      %v2696 = vmul.f32 %v2692, %v2692
      %v2697 = vmul.f32 %v2693, %v2693
      %v2698 = vsel %vm626, %v2694, 0.0
      %2699 = vadd.xlane.f32.xlu0 %v2698
      %v2700 = vpop.xlane.xlu0 %2699
      %v2701 = vsel %vm626, %v2695, 0.0
      %2702 = vadd.xlane.f32.xlu0 %v2701
      %v2703 = vpop.xlane.xlu0 %2702
      %v2704 = vsel %vm626, %v2696, 0.0
      %2705 = vadd.xlane.f32.xlu0 %v2704
      %v2706 = vpop.xlane.xlu0 %2705
      %v2707 = vsel %vm626, %v2697, 0.0
      %2708 = vadd.xlane.f32.xlu0 %v2707
      %v2709 = vpop.xlane.xlu0 %2708
      %v2710 = vmul.f32 %v2700, %v639
      %v2711 = vmul.f32 %v2703, %v639
      %v2712 = vmul.f32 %v2706, %v639
      %v2713 = vmul.f32 %v2709, %v639
      %v2714 = vadd.f32 %v2710, 1e-05
      %v2715 = vadd.f32 %v2711, 1e-05
      %v2716 = vadd.f32 %v2712, 1e-05
      %v2717 = vadd.f32 %v2713, 1e-05
      %v2718 = vrsqrt.pop %v2714
      %v2719 = vrsqrt.pop %v2715
      %v2720 = vrsqrt.pop %v2716
      %v2721 = vrsqrt.pop %v2717
      %v2722 = vmul.f32 %v2690, %v2718
      %v2723 = vmul.f32 %v2691, %v2719
      %v2724 = vmul.f32 %v2692, %v2720
      %v2725 = vmul.f32 %v2693, %v2721
      %v2726 = vld [vmem:[%s10] sm:$0x1]
      %v2728 = vlaneseq
      %v2729 = vshrl.u32 %v2728, 7
      %v2730 = vsub.s32 0, %v2729
      %v2731 = vrot.slane %v2726, %v2730
      %v2733 = vmul.f32 %v2722, %v2731
      %v2734 = vmul.f32 %v2723, %v2731
      %v2735 = vmul.f32 %v2724, %v2731
      %v2736 = vmul.f32 %v2725, %v2731
      %v2737 = vld [vmem:[%s11] sm:$0x1]
      %v2739 = vlaneseq
      %v2740 = vshrl.u32 %v2739, 7
      %v2741 = vsub.s32 0, %v2740
      %v2742 = vrot.slane %v2737, %v2741
      %v2744 = vadd.f32 %v2733, %v2742
      %v2745 = vadd.f32 %v2734, %v2742
      %v2746 = vadd.f32 %v2735, %v2742
      %v2747 = vadd.f32 %v2736, %v2742
      %v2748 = vld [vmem:[%s12] sm:$0xff]
      %v2749 = vld [vmem:[%s12 + $0x8] sm:$0xff]
      %v2750 = vld [vmem:[%s12 + $0x10] sm:$0xff]
      %v2751 = vld [vmem:[%s12 + $0x18] sm:$0xff]
      %v2752 = vld [vmem:[%s13] sm:$0x1]
      %v2754 = vlaneseq
      %v2755 = vshrl.u32 %v2754, 7
      %v2756 = vsub.s32 0, %v2755
      %v2757 = vrot.slane %v2752, %v2756
      %v2760 = vsel %vm626, %v2744, 0
      %v2763 = vsel %vm626, %v2745, 0
      %v2766 = vsel %vm626, %v2746, 0
      %v2769 = vsel %vm626, %v2747, 0
      %2771 = vmatprep.subr.mxu0 0.0
      %2772 = vmatpush1.msra.mxu0 %v2748
      %2773 = vmatprep.subr.mxu0 0.0
      %2774 = vmatpush1.msra.mxu0 %v2749
      %2775 = vmatprep.subr.mxu0 0.0
      %2776 = vmatpush1.msra.mxu0 %v2750
      %2777 = vmatprep.subr.mxu0 0.0
      %2778 = vmatpush1.msra.mxu0 %v2751
      %2779 = vmatprep.subr.mxu0 0.0
      %2780 = vmatpush1.msra.mxu0 0.0
      %2781 = vmatprep.subr.mxu0 0.0
      %2782 = vmatpush1.msra.mxu0 0.0
      %2783 = vmatprep.subr.mxu0 0.0
      %2784 = vmatpush1.msra.mxu0 0.0
      %2785 = vmatprep.subr.mxu0 0.0
      %2786 = vmatpush1.msra.mxu0 0.0
      %2787 = vmatprep.subr.mxu0 0.0
      %2788 = vmatpush1.msra.mxu0 0.0
      %2789 = vmatprep.subr.mxu0 0.0
      %2790 = vmatpush1.msra.mxu0 0.0
      %2791 = vmatprep.subr.mxu0 0.0
      %2792 = vmatpush1.msra.mxu0 0.0
      %2793 = vmatprep.subr.mxu0 0.0
      %2794 = vmatpush1.msra.mxu0 0.0
      %2795 = vmatprep.subr.mxu0 0.0
      %2796 = vmatpush1.msra.mxu0 0.0
      %2797 = vmatprep.subr.mxu0 0.0
      %2798 = vmatpush1.msra.mxu0 0.0
      %2799 = vmatprep.subr.mxu0 0.0
      %2800 = vmatpush1.msra.mxu0 0.0
      %2801 = vmatprep.subr.mxu0 0.0
      %2802 = vmatpush1.msra.mxu0 0.0
      %2803 = vmatprep.subr.mxu0 0.0
      %2804 = vmatpush1.msra.mxu0 0.0
      %2805 = vmatprep.subr.mxu0 0.0
      %2806 = vmatpush1.msra.mxu0 0.0
      %2807 = vmatprep.subr.mxu0 0.0
      %2808 = vmatpush1.msra.mxu0 0.0
      %2809 = vmatprep.subr.mxu0 0.0
      %2810 = vmatpush1.msra.mxu0 0.0
      %2811 = vmatprep.subr.mxu0 0.0
      %2812 = vmatpush1.msra.mxu0 0.0
      %2813 = vmatprep.subr.mxu0 0.0
      %2814 = vmatpush1.msra.mxu0 0.0
      %2815 = vmatprep.subr.mxu0 0.0
      %2816 = vmatpush1.msra.mxu0 0.0
      %2817 = vmatprep.subr.mxu0 0.0
      %2818 = vmatpush1.msra.mxu0 0.0
      %2819 = vmatprep.subr.mxu0 0.0
      %2820 = vmatpush1.msra.mxu0 0.0
      %2821 = vmatprep.subr.mxu0 0.0
      %2822 = vmatpush1.msra.mxu0 0.0
      %2823 = vmatprep.subr.mxu0 0.0
      %2824 = vmatpush1.msra.mxu0 0.0
      %2825 = vmatprep.subr.mxu0 0.0
      %2826 = vmatpush1.msra.mxu0 0.0
      %2827 = vmatprep.subr.mxu0 0.0
      %2828 = vmatpush1.msra.mxu0 0.0
      %2829 = vmatprep.subr.mxu0 0.0
      %2830 = vmatpush1.msra.mxu0 0.0
      %2831 = vmatprep.subr.mxu0 0.0
      %2832 = vmatpush1.msra.mxu0 0.0
      %2833 = vmatprep.subr.mxu0 0.0
      %2834 = vmatpush1.msra.mxu0 0.0
      %2835 = vmatprep.mubr.f32.mxu0 0.0
      %2836 = vmatmul.mubr.f32.gmra.mrb[0].mxu0 %v2760
      %v2837 = vpop.f32.mrb[0].mxu0
      %v2838 = vadd.f32 %v2757, %v2837
      %v2839 = vpop.f32.mrb[0].mxu0
      %2840 = vmatprep.mubr.f32.mxu0 0.0
      %2841 = vmatmul.mubr.f32.gmra.mrb[0].mxu0 %v2763
      %v2842 = vpop.f32.mrb[0].mxu0
      %v2843 = vadd.f32 %v2757, %v2842
      %v2844 = vpop.f32.mrb[0].mxu0
      %2845 = vmatprep.mubr.f32.mxu0 0.0
      %2846 = vmatmul.mubr.f32.gmra.mrb[0].mxu0 %v2766
      %v2847 = vpop.f32.mrb[0].mxu0
      %v2848 = vadd.f32 %v2757, %v2847
      %v2849 = vpop.f32.mrb[0].mxu0
      %2850 = vmatprep.mubr.f32.mxu0 0.0
      %2851 = vmatmul.mubr.f32.gmra.mrb[0].mxu0 %v2769
      %v2852 = vpop.f32.mrb[0].mxu0
      %v2853 = vadd.f32 %v2757, %v2852
      %v2854 = vpop.f32.mrb[0].mxu0
      %2855 = vdwg.mxu0
      %v2856 = vmul.f32 %v2838, 0.5
      %v2857 = vmul.f32 %v2843, 0.5
      %v2858 = vmul.f32 %v2848, 0.5
      %v2859 = vmul.f32 %v2853, 0.5
      %v2860 = vmul.f32 %v2838, 0.70710677
      %v2861 = vmul.f32 %v2843, 0.70710677
      %v2862 = vmul.f32 %v2848, 0.70710677
      %v2863 = vmul.f32 %v2853, 0.70710677
      %v2864 = verf.f32.pop %v2860
      %v2865 = verf.f32.pop %v2861
      %v2866 = verf.f32.pop %v2862
      %v2867 = verf.f32.pop %v2863
      %v2868 = vadd.f32 %v2864, 1.0
      %v2869 = vadd.f32 %v2865, 1.0
      %v2870 = vadd.f32 %v2866, 1.0
      %v2871 = vadd.f32 %v2867, 1.0
      %v2872 = vmul.f32 %v2856, %v2868
      %v2873 = vmul.f32 %v2857, %v2869
      %v2874 = vmul.f32 %v2858, %v2870
      %v2875 = vmul.f32 %v2859, %v2871
      %v2876 = vld [vmem:[%s14] sm:$0xff]
      %v2877 = vld [vmem:[%s14 + $0x8] sm:$0xff]
      %v2878 = vld [vmem:[%s14 + $0x10] sm:$0xff]
      %v2879 = vld [vmem:[%s14 + $0x18] sm:$0xff]
      %v2880 = vld [vmem:[%s14 + $0x20] sm:$0xff]
      %v2881 = vld [vmem:[%s14 + $0x28] sm:$0xff]
      %v2882 = vld [vmem:[%s14 + $0x30] sm:$0xff]
      %v2883 = vld [vmem:[%s14 + $0x38] sm:$0xff]
      %v2884 = vld [vmem:[%s15] sm:$0x1]
      %v2886 = vlaneseq
      %v2887 = vshrl.u32 %v2886, 7
      %v2888 = vsub.s32 0, %v2887
      %v2889 = vrot.slane %v2884, %v2888
      %vm2891 = vcmask 523264
      %v2893 = vsel %vm2891, %v2872, 0
      %v2896 = vsel %vm2891, %v2873, 0
      %v2899 = vsel %vm2891, %v2874, 0
      %v2902 = vsel %vm2891, %v2875, 0
      %2904 = vmatprep.subr.mxu0 0.0
      %2905 = vmatpush1.msra.mxu0 %v2876
      %2906 = vmatprep.subr.mxu0 0.0
      %2907 = vmatpush1.msra.mxu0 %v2877
      %2908 = vmatprep.subr.mxu0 0.0
      %2909 = vmatpush1.msra.mxu0 %v2878
      %2910 = vmatprep.subr.mxu0 0.0
      %2911 = vmatpush1.msra.mxu0 %v2879
      %2912 = vmatprep.subr.mxu0 0.0
      %2913 = vmatpush1.msra.mxu0 %v2880
      %2914 = vmatprep.subr.mxu0 0.0
      %2915 = vmatpush1.msra.mxu0 %v2881
      %2916 = vmatprep.subr.mxu0 0.0
      %2917 = vmatpush1.msra.mxu0 %v2882
      %2918 = vmatprep.subr.mxu0 0.0
      %2919 = vmatpush1.msra.mxu0 %v2883
      %2920 = vmatprep.subr.mxu0 0.0
      %2921 = vmatpush1.msra.mxu0 0.0
      %2922 = vmatprep.subr.mxu0 0.0
      %2923 = vmatpush1.msra.mxu0 0.0
      %2924 = vmatprep.subr.mxu0 0.0
      %2925 = vmatpush1.msra.mxu0 0.0
      %2926 = vmatprep.subr.mxu0 0.0
      %2927 = vmatpush1.msra.mxu0 0.0
      %2928 = vmatprep.subr.mxu0 0.0
      %2929 = vmatpush1.msra.mxu0 0.0
      %2930 = vmatprep.subr.mxu0 0.0
      %2931 = vmatpush1.msra.mxu0 0.0
      %2932 = vmatprep.subr.mxu0 0.0
      %2933 = vmatpush1.msra.mxu0 0.0
      %2934 = vmatprep.subr.mxu0 0.0
      %2935 = vmatpush1.msra.mxu0 0.0
      %2936 = vmatprep.subr.mxu0 0.0
      %2937 = vmatpush1.msra.mxu0 0.0
      %2938 = vmatprep.subr.mxu0 0.0
      %2939 = vmatpush1.msra.mxu0 0.0
      %2940 = vmatprep.subr.mxu0 0.0
      %2941 = vmatpush1.msra.mxu0 0.0
      %2942 = vmatprep.subr.mxu0 0.0
      %2943 = vmatpush1.msra.mxu0 0.0
      %2944 = vmatprep.subr.mxu0 0.0
      %2945 = vmatpush1.msra.mxu0 0.0
      %2946 = vmatprep.subr.mxu0 0.0
      %2947 = vmatpush1.msra.mxu0 0.0
      %2948 = vmatprep.subr.mxu0 0.0
      %2949 = vmatpush1.msra.mxu0 0.0
      %2950 = vmatprep.subr.mxu0 0.0
      %2951 = vmatpush1.msra.mxu0 0.0
      %2952 = vmatprep.subr.mxu0 0.0
      %2953 = vmatpush1.msra.mxu0 0.0
      %2954 = vmatprep.subr.mxu0 0.0
      %2955 = vmatpush1.msra.mxu0 0.0
      %2956 = vmatprep.subr.mxu0 0.0
      %2957 = vmatpush1.msra.mxu0 0.0
      %2958 = vmatprep.subr.mxu0 0.0
      %2959 = vmatpush1.msra.mxu0 0.0
      %2960 = vmatprep.subr.mxu0 0.0
      %2961 = vmatpush1.msra.mxu0 0.0
      %2962 = vmatprep.subr.mxu0 0.0
      %2963 = vmatpush1.msra.mxu0 0.0
      %2964 = vmatprep.subr.mxu0 0.0
      %2965 = vmatpush1.msra.mxu0 0.0
      %2966 = vmatprep.subr.mxu0 0.0
      %2967 = vmatpush1.msra.mxu0 0.0
      %2968 = vmatprep.mubr.f32.mxu0 0.0
      %2969 = vmatmul.mubr.f32.gmra.mrb[0].mxu0 %v2893
      %v2970 = vpop.f32.mrb[0].mxu0
      %v2971 = vadd.f32 %v2889, %v2970
      %v2972 = vpop.f32.mrb[0].mxu0
      %2973 = vmatprep.mubr.f32.mxu0 0.0
      %2974 = vmatmul.mubr.f32.gmra.mrb[0].mxu0 %v2896
      %v2975 = vpop.f32.mrb[0].mxu0
      %v2976 = vadd.f32 %v2889, %v2975
      %v2977 = vpop.f32.mrb[0].mxu0
      %2978 = vmatprep.mubr.f32.mxu0 0.0
      %2979 = vmatmul.mubr.f32.gmra.mrb[0].mxu0 %v2899
      %v2980 = vpop.f32.mrb[0].mxu0
      %v2981 = vadd.f32 %v2889, %v2980
      %v2982 = vpop.f32.mrb[0].mxu0
      %2983 = vmatprep.mubr.f32.mxu0 0.0
      %2984 = vmatmul.mubr.f32.gmra.mrb[0].mxu0 %v2902
      %v2985 = vpop.f32.mrb[0].mxu0
      %v2986 = vadd.f32 %v2889, %v2985
      %v2987 = vpop.f32.mrb[0].mxu0
      %2988 = vdwg.mxu0
      %v2989 = vadd.f32 %v2971, %v2670
      %v2990 = vadd.f32 %v2976, %v2671
      %v2991 = vadd.f32 %v2981, %v2672
      %v2992 = vadd.f32 %v2986, %v2673
      %2993 = vst.msk [vmem:[%s620] sm:$0xff] %vm626, %v2989
      %2994 = vst.msk [vmem:[%s620 + $0x8] sm:$0xff] %vm626, %v2990
      %2995 = vst.msk [vmem:[%s620 + $0x10] sm:$0xff] %vm626, %v2991
      %2996 = vst.msk [vmem:[%s620 + $0x18] sm:$0xff] %vm626, %v2992
      %s2997 = smul.u32 4, %s32
      %p2998 = scmp.lt.s32.totalorder %s31, 1
      %s2999 = scalar_select %p2998, %s31, 1
      %p3000 = scmp.lt.s32.totalorder %s2997, 7
      %s3001 = scalar_select %p3000, %s2997, 7
      %s3002 = smul.addr %s2999, 8
      %s3003 = sadd.s32 %s3001, %s3002
      %s3004 = smul.addr %s3003, 8
      %s3005 = scalar_lea.vmem %s16, %s3004
      // Predicated region
      $region85: #{swin_block_forward.1} parent=83 // pred_check
        %p3006 = pneg %p414
      $region86: #{swin_block_forward.1} parent=83 // pred_check_branch
        %3008 = sbr.rel (%p3006) target = $region88
      $region87: #{swin_block_forward.1} parent=83 // pred_region
        %s3009 = smul.u32 4, %s32
      $region88: #{swin_block_forward.1} parent=83 // pred_fallthru
        _
    $region84: #{swin_block_forward.1} parent=5 // pred_fallthru
      _
    %p3010 = scmp.le.s32.totalorder 2, %s22
    // Predicated region
    $region89: #{swin_block_forward.1} parent=5 // pred_check
      %p3011 = pneg %p3010
    $region90: #{swin_block_forward.1} parent=5 // pred_check_branch
      %3013 = sbr.rel (%p3011) target = $region92
    $region91: #{swin_block_forward.1} parent=5 // pred_region
      %s3014 = ssub.s32 %s22, 2
      // Predicated region
      $region93: #{swin_block_forward.1} parent=91 // pred_check
        %p3015 = pneg %p420
      $region94: #{swin_block_forward.1} parent=91 // pred_check_branch
        %3017 = sbr.rel (%p3015) target = $region96
      $region95: #{swin_block_forward.1} parent=91 // pred_region
        %s3018 = smul.u32 4, %s34
        %p3019 = scmp.lt.s32.totalorder %s33, 1
        %s3020 = scalar_select %p3019, %s33, 1
        %p3021 = scmp.lt.s32.totalorder %s3018, 7
        %s3022 = scalar_select %p3021, %s3018, 7
        %s3023 = smul.addr %s3020, 8
        %s3024 = sadd.s32 %s3022, %s3023
        %s3025 = smul.addr %s3024, 8
        %s3026 = scalar_lea.vmem %s16, %s3025
      $region96: #{swin_block_forward.1} parent=91 // pred_fallthru
        _
    $region92: #{swin_block_forward.1} parent=5 // pred_fallthru
      _
  $region6: #{swin_block_forward.1} parent=0 // loop_footer
    %s26 = sadd.s32 1, %s22
  $region7: #{swin_block_forward.1} parent=0 // loop_footer_branch
    %21 = sbr.rel target = $region3
  $region8: #{swin_block_forward.1} parent=0 // loop_exit
    _

</llo_original>
